<compile_context>
chip_gen: v5e
topology: v5e:2x2
jax: 0.10.0
libtpu: 0.0.40
codegen_flags: <defaults>
</compile_context>

<pallas_src>
import functools

import jax
import jax.numpy as jnp
from jax.experimental import pallas as pl
from jax.experimental.pallas import tpu as pltpu

MXU_DTYPE = jnp.bfloat16   # matmul input dtype (MXU-friendly, halves DMA bytes)
ACT_DTYPE = jnp.bfloat16   # intermediate activations stored in HBM

# Tile caps: 256-multiples keep the 2x256 MXU of v6e/v7x fed; total double-
# buffered VMEM footprint stays < ~4 MiB so it fits every generation
# (including v7x's 64 MiB VMEM).
_TM, _TN, _TK = 256, 256, 256


def _round_up(v, m):
    return (v + m - 1) // m * m


def _vmem_limit():
    per_call = (2 * (_TM * _TK + 2 * _TK * _TN) * 2   # x + (up to) two w tiles, bf16, 2-deep
                + 2 * _TM * _TN * 4                   # f32 accumulators (mix-kernel worst case)
                + 2 * _TM * _TN * 4)                  # double-buffered f32 output tile
    # Floor at 32 MiB (lifts v5e's 16 MiB scoped default), cap at 48 MiB
    # (stays under v7x's 64 MiB physical VMEM).
    return int(min(max(4 * per_call, 32 * 2 ** 20), 48 * 2 ** 20))


_VMEM_LIMIT = _vmem_limit()


def _pad2(a, rows, cols):
    r, c = a.shape
    if r == rows and c == cols:
        return a
    return jnp.pad(a, ((0, rows - r), (0, cols - c)))


def _vec(v, n):
    v = v.reshape(-1).astype(jnp.float32)
    if v.shape[0] != n:
        v = jnp.pad(v, (0, n - v.shape[0]))
    return v.reshape(1, n)


# --------------------------- Pallas kernels ---------------------------------

def _mm_kernel(x_ref, w_ref, ps_ref, pb_ref, es_ref, eb_ref, o_ref, acc_ref,
               *, use_pro, pro_relu, use_epi, epi_relu):
    """out = epi(pro(x) @ w): tiled matmul with fused BN/ReLU prologue+epilogue."""
    @pl.when(pl.program_id(2) == 0)
    def _init():
        acc_ref[...] = jnp.zeros_like(acc_ref)

    xt = x_ref[...]
    if use_pro:
        xf = xt.astype(jnp.float32) * ps_ref[...] + pb_ref[...]
        if pro_relu:
            xf = jnp.maximum(xf, 0.0)
        xt = xf.astype(x_ref.dtype)
    acc_ref[...] += jnp.dot(xt, w_ref[...], preferred_element_type=jnp.float32)

    @pl.when(pl.program_id(2) == pl.num_programs(2) - 1)
    def _fin():
        y = acc_ref[...]
        if use_epi:
            y = y * es_ref[...] + eb_ref[...]
        if epi_relu:
            y = jnp.maximum(y, 0.0)
        o_ref[...] = y.astype(o_ref.dtype)


def _mm_mix_kernel(x_ref, w0_ref, w1_ref, ps_ref, pb_ref,
                   es0_ref, eb0_ref, es1_ref, eb1_ref, m0_ref, m1_ref,
                   o_ref, acc0_ref, acc1_ref):
    """Dual-head tail kernel: final BN prologue, two 1x1-conv heads (nddr3),
    per-head BN+ReLU epilogue, and the WeightMixtures blend, all fused."""
    @pl.when(pl.program_id(2) == 0)
    def _init():
        acc0_ref[...] = jnp.zeros_like(acc0_ref)
        acc1_ref[...] = jnp.zeros_like(acc1_ref)

    xt = (x_ref[...].astype(jnp.float32) * ps_ref[...] + pb_ref[...]).astype(x_ref.dtype)
    acc0_ref[...] += jnp.dot(xt, w0_ref[...], preferred_element_type=jnp.float32)
    acc1_ref[...] += jnp.dot(xt, w1_ref[...], preferred_element_type=jnp.float32)

    @pl.when(pl.program_id(2) == pl.num_programs(2) - 1)
    def _fin():
        y0 = jnp.maximum(acc0_ref[...] * es0_ref[...] + eb0_ref[...], 0.0)
        y1 = jnp.maximum(acc1_ref[...] * es1_ref[...] + eb1_ref[...], 0.0)
        o_ref[...] = (y0 * m0_ref[...] + y1 * m1_ref[...]).astype(o_ref.dtype)


def _pool_bn_relu_kernel(x_ref, s_ref, b_ref, o_ref, *, c):
    """2x2 average pool with fused BN+ReLU applied to each tap.
    x_ref block: [tm, 2, Wo, 2*C] (free reshape of NHWC), out: [tm, Wo, C]."""
    s = s_ref[...]   # [1, C] f32
    b = b_ref[...]

    def act(t):
        return jnp.maximum(t.astype(jnp.float32) * s + b, 0.0)

    top = x_ref[:, 0]   # [tm, Wo, 2C]   (dw-major, c-minor in the last axis)
    bot = x_ref[:, 1]
    acc = (act(top[:, :, :c]) + act(top[:, :, c:]) +
           act(bot[:, :, :c]) + act(bot[:, :, c:]))
    o_ref[...] = (acc * 0.25).astype(o_ref.dtype)


# --------------------------- kernel wrappers ---------------------------------

def matmul_fused(x, w, *, prologue=None, epilogue=None, out_dtype=ACT_DTYPE):
    """x:[M,K] @ w:[K,N] with optional per-K-column (scale, shift, relu)
    prologue and per-N-column (scale, shift, relu) epilogue."""
    M, K = x.shape
    K2, N = w.shape
    assert K == K2
    tm = min(_TM, _round_up(M, 8))
    tk = min(_TK, _round_up(K, 128))
    tn = min(_TN, _round_up(N, 128))
    Mp, Kp, Np = _round_up(M, tm), _round_up(K, tk), _round_up(N, tn)

    xp = _pad2(x.astype(MXU_DTYPE), Mp, Kp)
    wp = _pad2(w.astype(MXU_DTYPE), Kp, Np)

    use_pro = prologue is not None
    use_epi = epilogue is not None
    if use_pro:
        ps, pb, pro_relu = prologue
    else:
        ps, pb, pro_relu = jnp.ones((K,), jnp.float32), jnp.zeros((K,), jnp.float32), False
    if use_epi:
        es, eb, epi_relu = epilogue
    else:
        es, eb, epi_relu = jnp.ones((N,), jnp.float32), jnp.zeros((N,), jnp.float32), False

    kernel = functools.partial(_mm_kernel, use_pro=use_pro, pro_relu=bool(pro_relu),
                               use_epi=use_epi, epi_relu=bool(epi_relu))
    grid = (Mp // tm, Np // tn, Kp // tk)
    out = pl.pallas_call(
        kernel,
        out_shape=jax.ShapeDtypeStruct((Mp, Np), out_dtype),
        grid_spec=pltpu.PrefetchScalarGridSpec(
            num_scalar_prefetch=0,
            grid=grid,
            in_specs=[
                pl.BlockSpec((tm, tk), lambda i, j, k: (i, k)),
                pl.BlockSpec((tk, tn), lambda i, j, k: (k, j)),
                pl.BlockSpec((1, tk), lambda i, j, k: (0, k)),
                pl.BlockSpec((1, tk), lambda i, j, k: (0, k)),
                pl.BlockSpec((1, tn), lambda i, j, k: (0, j)),
                pl.BlockSpec((1, tn), lambda i, j, k: (0, j)),
            ],
            out_specs=pl.BlockSpec((tm, tn), lambda i, j, k: (i, j)),
            scratch_shapes=[pltpu.VMEM((tm, tn), jnp.float32)],
        ),
        compiler_params=pltpu.CompilerParams(
            dimension_semantics=("parallel", "parallel", "arbitrary"),
            vmem_limit_bytes=_VMEM_LIMIT),
    )(xp, wp, _vec(ps, Kp), _vec(pb, Kp), _vec(es, Np), _vec(eb, Np))
    return out[:M, :N]


def matmul_mix(x, w0, w1, ps, pb, es0, eb0, es1, eb1, betas, out_dtype=jnp.float32):
    M, K = x.shape
    N = w0.shape[1]
    tm = min(_TM, _round_up(M, 8))
    tk = min(_TK, _round_up(K, 128))
    tn = min(_TN, _round_up(N, 128))
    Mp, Kp, Np = _round_up(M, tm), _round_up(K, tk), _round_up(N, tn)

    xp = _pad2(x.astype(MXU_DTYPE), Mp, Kp)
    w0p = _pad2(w0.astype(MXU_DTYPE), Kp, Np)
    w1p = _pad2(w1.astype(MXU_DTYPE), Kp, Np)
    m0 = jnp.broadcast_to(betas[0].astype(jnp.float32), (Np,))
    m1 = jnp.broadcast_to(betas[1].astype(jnp.float32), (Np,))

    grid = (Mp // tm, Np // tn, Kp // tk)
    vspec_k = pl.BlockSpec((1, tk), lambda i, j, k: (0, k))
    vspec_n = pl.BlockSpec((1, tn), lambda i, j, k: (0, j))
    out = pl.pallas_call(
        _mm_mix_kernel,
        out_shape=jax.ShapeDtypeStruct((Mp, Np), out_dtype),
        grid_spec=pltpu.PrefetchScalarGridSpec(
            num_scalar_prefetch=0,
            grid=grid,
            in_specs=[
                pl.BlockSpec((tm, tk), lambda i, j, k: (i, k)),
                pl.BlockSpec((tk, tn), lambda i, j, k: (k, j)),
                pl.BlockSpec((tk, tn), lambda i, j, k: (k, j)),
                vspec_k, vspec_k,
                vspec_n, vspec_n, vspec_n, vspec_n, vspec_n, vspec_n,
            ],
            out_specs=pl.BlockSpec((tm, tn), lambda i, j, k: (i, j)),
            scratch_shapes=[pltpu.VMEM((tm, tn), jnp.float32),
                            pltpu.VMEM((tm, tn), jnp.float32)],
        ),
        compiler_params=pltpu.CompilerParams(
            dimension_semantics=("parallel", "parallel", "arbitrary"),
            vmem_limit_bytes=_VMEM_LIMIT),
    )(xp, w0p, w1p, _vec(ps, Kp), _vec(pb, Kp),
      _vec(es0, Np), _vec(eb0, Np), _vec(es1, Np), _vec(eb1, Np),
      _vec(m0, Np), _vec(m1, Np))
    return out[:M, :N]


def pool_bn_relu(x, scale, shift, out_dtype=ACT_DTYPE):
    """2x2/stride-2 average pool of relu(x*scale+shift).  The [N,H,W,C] ->
    [N*Ho, 2, Wo, 2C] view is a free reshape; the 4-tap reduction is in-kernel."""
    N, H, W, C = x.shape
    Ho, Wo = H // 2, W // 2
    M = N * Ho
    xv = x.reshape(M, 2, Wo, 2 * C)
    tm = M if M <= 256 else 256
    Mp = _round_up(M, tm)
    if Mp != M:
        xv = jnp.pad(xv, ((0, Mp - M), (0, 0), (0, 0), (0, 0)))

    out = pl.pallas_call(
        functools.partial(_pool_bn_relu_kernel, c=C),
        out_shape=jax.ShapeDtypeStruct((Mp, Wo, C), out_dtype),
        grid_spec=pltpu.PrefetchScalarGridSpec(
            num_scalar_prefetch=0,
            grid=(Mp // tm,),
            in_specs=[
                pl.BlockSpec((tm, 2, Wo, 2 * C), lambda i: (i, 0, 0, 0)),
                pl.BlockSpec((1, C), lambda i: (0, 0)),
                pl.BlockSpec((1, C), lambda i: (0, 0)),
            ],
            out_specs=pl.BlockSpec((tm, Wo, C), lambda i: (i, 0, 0)),
        ),
        compiler_params=pltpu.CompilerParams(
            dimension_semantics=("parallel",),
            vmem_limit_bytes=_VMEM_LIMIT),
    )(xv, scale.reshape(1, C).astype(jnp.float32),
      shift.reshape(1, C).astype(jnp.float32))
    return out[:M].reshape(N, Ho, Wo, C)


# --------------------------- conv glue ---------------------------------------

def _conv_w_to_mat(w_oihw):
    O, I, kh, kw = w_oihw.shape
    return jnp.transpose(w_oihw, (2, 3, 1, 0)).reshape(kh * kw * I, O)


def _im2col(x, ksize, stride, pad):
    N, H, W, C = x.shape
    if pad:
        x = jnp.pad(x, ((0, 0), (pad, pad), (pad, pad), (0, 0)))
    Hp, Wp = H + 2 * pad, W + 2 * pad
    Ho = (Hp - ksize) // stride + 1
    Wo = (Wp - ksize) // stride + 1
    cols = []
    for i in range(ksize):
        for j in range(ksize):
            cols.append(x[:, i:i + stride * Ho:stride, j:j + stride * Wo:stride, :])
    cols = jnp.concatenate(cols, axis=-1)   # taps-major, C-minor (matches weight reshape)
    return cols.reshape(N * Ho * Wo, ksize * ksize * C), (N, Ho, Wo)


def conv1x1(x, w_oihw, prologue=None, epilogue=None, out_dtype=ACT_DTYPE):
    N, H, W, C = x.shape
    O = w_oihw.shape[0]
    out = matmul_fused(x.reshape(-1, C), _conv_w_to_mat(w_oihw),
                       prologue=prologue, epilogue=epilogue, out_dtype=out_dtype)
    return out.reshape(N, H, W, O)


def conv_kxk(x, w_oihw, stride, pad, epilogue=None, out_dtype=ACT_DTYPE):
    # TODO(synk): lower kxk convs without an HBM im2col (tap accumulation over a
    # grid axis with halo blocks); for now im2col runs on bf16 to halve its bytes.
    O = w_oihw.shape[0]
    kh = w_oihw.shape[2]
    cols, (N, Ho, Wo) = _im2col(x.astype(MXU_DTYPE), kh, stride, pad)
    out = matmul_fused(cols, _conv_w_to_mat(w_oihw), epilogue=epilogue,
                       out_dtype=out_dtype)
    return out.reshape(N, Ho, Wo, O)


def bn_scale_shift(bn, eps=1e-5):
    s = bn['gamma'] / jnp.sqrt(bn['var'] + eps)
    b = bn['beta'] - bn['mean'] * s
    return s, b


# --------------------------- model components -------------------------------

def stem(x, p):
    # Conv2d(k=7, s=2, p=3, bias=False) -> BN -> ReLU  (BN+ReLU = matmul epilogue)
    s, b = bn_scale_shift(p['bn'])
    return conv_kxk(x, p['conv'], stride=2, pad=3, epilogue=(s, b, True))


def nddr(x0, x1, p):
    # concat -> two per-branch 1x1 convs computed as ONE matmul (W=[W0|W1]) with
    # concatenated BN+ReLU epilogue, then a channel split.
    C = x0.shape[-1]
    N, H, W, _ = x0.shape
    cat = jnp.concatenate([x0, x1], axis=-1).reshape(-1, 2 * C)
    w = jnp.concatenate([_conv_w_to_mat(p['conv0']), _conv_w_to_mat(p['conv1'])], axis=1)
    s0, b0 = bn_scale_shift(p['bn0'])
    s1, b1 = bn_scale_shift(p['bn1'])
    es = jnp.concatenate([s0, s1])
    eb = jnp.concatenate([b0, b1])
    out = matmul_fused(cat, w, epilogue=(es, eb, True)).reshape(N, H, W, 2 * C)
    return out[..., :C], out[..., C:]


def dense_layer(x, p):
    # BN1->ReLU->conv1x1->BN2->ReLU fused into one matmul (prologue + epilogue),
    # then the 3x3 conv (drop_rate=0 -> no dropout).
    s1, b1 = bn_scale_shift(p['bn1'])
    s2, b2 = bn_scale_shift(p['bn2'])
    h = conv1x1(x, p['conv1'], prologue=(s1, b1, True), epilogue=(s2, b2, True))
    # zero padding is applied to the already-activated tensor, as in PyTorch.
    return conv_kxk(h, p['conv2'], stride=1, pad=1)


def dense_block(x, layers):
    feats = x
    for p in layers:
        new = dense_layer(feats, p)
        feats = jnp.concatenate([feats, new], axis=-1)
    return feats


def transition(x, p):
    # BN+ReLU fused into the pool; the (linear) 1x1 conv commutes with the
    # 2x2 average pool, so it runs on the pooled tensor (4x less matmul work).
    s, b = bn_scale_shift(p['bn'])
    pooled = pool_bn_relu(x, s, b)
    return conv1x1(pooled, p['conv'])


def tail_weight_mixture(b3, b3a, params):
    # final_bn / final_bn_aux -> nddr3 (both heads) -> WeightMixtures blend,
    # all inside one dual-head Pallas matmul kernel.
    N, H, W, C = b3.shape
    s, b = bn_scale_shift(params['final_bn'])
    sa, ba = bn_scale_shift(params['final_bn_aux'])
    ps = jnp.concatenate([s, sa])
    pb = jnp.concatenate([b, ba])
    p3 = params['nddr3']
    es0, eb0 = bn_scale_shift(p3['bn0'])
    es1, eb1 = bn_scale_shift(p3['bn1'])
    cat = jnp.concatenate([b3, b3a], axis=-1).reshape(-1, 2 * C)
    out = matmul_mix(cat, _conv_w_to_mat(p3['conv0']), _conv_w_to_mat(p3['conv1']),
                     ps, pb, es0, eb0, es1, eb1, params['betas_2layer'],
                     out_dtype=jnp.float32)
    return out.reshape(N, H, W, C)


# --------------------------- full forward -----------------------------------

def forward(params, x_nchw, y_nchw):
    x = jnp.transpose(x_nchw, (0, 2, 3, 1)).astype(ACT_DTYPE)
    y = jnp.transpose(y_nchw, (0, 2, 3, 1)).astype(ACT_DTYPE)

    f = stem(x, params['features'])
    fa = stem(y, params['features_aux'])
    f, fa = nddr(f, fa, params['nddrf'])

    # TODO(synk): the main/aux branches could be batched into a single
    # stacked-M matmul per layer to halve kernel launches.
    b0 = dense_block(f, params['block0'])
    t0 = transition(b0, params['transition0'])
    b0a = dense_block(fa, params['block0_aux'])
    t0a = transition(b0a, params['transition0_aux'])
    t0, t0a = nddr(t0, t0a, params['nddr0'])

    b1 = dense_block(t0, params['block1'])
    t1 = transition(b1, params['transition1'])
    b1a = dense_block(t0a, params['block1_aux'])
    t1a = transition(b1a, params['transition1_aux'])
    fine_grained = b1  # clf == 'PointRendBiased'
    t1, t1a = nddr(t1, t1a, params['nddr1'])

    b2 = dense_block(t1, params['block2'])
    t2 = transition(b2, params['transition2'])
    b2a = dense_block(t1a, params['block2_aux'])
    t2a = transition(b2a, params['transition2_aux'])
    t2, t2a = nddr(t2, t2a, params['nddr2'])

    b3 = dense_block(t2, params['block3'])
    b3a = dense_block(t2a, params['block3_aux'])
    out = tail_weight_mixture(b3, b3a, params)   # mode == 'WeightMixtures'

    return {
        'fine_grained': jnp.transpose(fine_grained, (0, 3, 1, 2)).astype(jnp.float32),
        'out': jnp.transpose(out, (0, 3, 1, 2)).astype(jnp.float32),
    }


# --------------------------- deterministic parameter init -------------------

class _PRNG:
    def __init__(self, seed):
        self.key = jax.random.PRNGKey(seed)

    def next(self):
        self.key, sub = jax.random.split(self.key)
        return sub


def conv_w(rng, o, i, k):
    fan_in = i * k * k
    return jax.random.normal(rng.next(), (o, i, k, k), jnp.float32) / jnp.sqrt(fan_in)


def bn_p(rng, c):
    return {
        'gamma': 1.0 + 0.1 * jax.random.normal(rng.next(), (c,), jnp.float32),
        'beta': 0.05 * jax.random.normal(rng.next(), (c,), jnp.float32),
        'mean': 0.05 * jax.random.normal(rng.next(), (c,), jnp.float32),
        'var': 1.0 + 0.1 * jax.random.uniform(rng.next(), (c,), jnp.float32),
    }


def init_params(rng, in_channels, in_aux_channels, growth_rate, block_config,
                num_init_features, bn_size):
    p = {}
    p['features'] = {'conv': conv_w(rng, num_init_features, in_channels, 7),
                     'bn': bn_p(rng, num_init_features)}
    p['features_aux'] = {'conv': conv_w(rng, num_init_features, in_aux_channels, 7),
                         'bn': bn_p(rng, num_init_features)}

    def nddr_p(c):
        return {'conv0': conv_w(rng, c, 2 * c, 1), 'bn0': bn_p(rng, c),
                'conv1': conv_w(rng, c, 2 * c, 1), 'bn1': bn_p(rng, c)}

    p['nddrf'] = nddr_p(num_init_features)

    num_features = num_init_features
    for i, num_layers in enumerate(block_config):
        def make_block(nf):
            layers = []
            for l in range(num_layers):
                cin = nf + l * growth_rate
                layers.append({
                    'bn1': bn_p(rng, cin),
                    'conv1': conv_w(rng, bn_size * growth_rate, cin, 1),
                    'bn2': bn_p(rng, bn_size * growth_rate),
                    'conv2': conv_w(rng, growth_rate, bn_size * growth_rate, 3),
                })
            return layers

        p[f'block{i}'] = make_block(num_features)
        p[f'block{i}_aux'] = make_block(num_features)
        num_features = num_features + num_layers * growth_rate
        if i != len(block_config) - 1:
            def make_trans(nf):
                return {'bn': bn_p(rng, nf), 'conv': conv_w(rng, nf // 2, nf, 1)}

            p[f'transition{i}'] = make_trans(num_features)
            p[f'transition{i}_aux'] = make_trans(num_features)
            p[f'nddr{i}'] = nddr_p(num_features // 2)
            num_features = num_features // 2

    p['final_bn'] = bn_p(rng, num_features)
    p['final_bn_aux'] = bn_p(rng, num_features)
    p['nddr3'] = nddr_p(num_features)
    p['betas_2layer'] = jnp.array([0.7, 0.3], jnp.float32)
    # cross3/cross4/cross5 and sluice*_conv1 are unused in mode='WeightMixtures'
    return p


# --------------------------- demo -------------------------------------------

if __name__ == "__main__":
    # Small, shape-consistent hyperparameters (same architecture family).
    in_channels, in_aux_channels = 3, 3
    growth_rate = 4
    block_config = (2, 2, 2, 2)
    num_init_features = 8
    bn_size = 2

    prng = _PRNG(0)
    params = init_params(prng, in_channels, in_aux_channels, growth_rate,
                         block_config, num_init_features, bn_size)

    key = jax.random.PRNGKey(0)
    kx, ky = jax.random.split(key)
    x = jax.random.normal(kx, (2, in_channels, 32, 32), jnp.float32)      # NCHW
    y = jax.random.normal(ky, (2, in_aux_channels, 32, 32), jnp.float32)  # NCHW

    result = jax.jit(forward)(params, x, y)
    jax.block_until_ready(result)
    assert result['out'].shape == (2, 16, 2, 2)
    assert result['fine_grained'].shape == (2, 16, 8, 8)
    print("KERNEL_OK")
</pallas_src>

<mosaic_0001>
module attributes {stable_mosaic.version = 11 : i64} {
  func.func @_mm_kernel(%arg0: i32, %arg1: i32, %arg2: i32, %arg3: memref<256x256xbf16, #tpu.memory_space<vmem>>, %arg4: memref<256x128xbf16, #tpu.memory_space<vmem>>, %arg5: memref<1x256xf32, #tpu.memory_space<vmem>>, %arg6: memref<1x256xf32, #tpu.memory_space<vmem>>, %arg7: memref<1x128xf32, #tpu.memory_space<vmem>>, %arg8: memref<1x128xf32, #tpu.memory_space<vmem>>, %arg9: memref<256x128xbf16, #tpu.memory_space<vmem>>, %arg10: memref<256x128xf32, #tpu.memory_space<vmem>>) attributes {dimension_semantics = [#tpu.dimension_semantics<parallel>, #tpu.dimension_semantics<parallel>, #tpu.dimension_semantics<arbitrary>], iteration_bounds = array<i64: 2, 1, 1>, scalar_prefetch = 0 : i64, scratch_operands = 1 : i64, tpu.core_type = #tpu.core_type<tc>, window_params = [{transform_indices = @transform_0, window_bounds = array<i64: 256, 256>}, {transform_indices = @transform_1, window_bounds = array<i64: 256, 128>}, {transform_indices = @transform_2, window_bounds = array<i64: 1, 256>}, {transform_indices = @transform_3, window_bounds = array<i64: 1, 256>}, {transform_indices = @transform_4, window_bounds = array<i64: 1, 128>}, {transform_indices = @transform_5, window_bounds = array<i64: 1, 128>}, {transform_indices = @transform_6, window_bounds = array<i64: 256, 128>}]} {
    %c0_i32 = arith.constant 0 : i32
    %0 = arith.cmpi eq, %arg2, %c0_i32 : i32
    %1 = arith.extui %0 : i1 to i32
    %c0_i32_0 = arith.constant 0 : i32
    %2 = arith.cmpi ne, %1, %c0_i32_0 : i32
    scf.if %2 {
      %cst_10 = arith.constant 0.000000e+00 : f32
      %12 = vector.broadcast %cst_10 : f32 to vector<256x128xf32>
      %c0_11 = arith.constant 0 : index
      %c0_12 = arith.constant 0 : index
      %13 = vector.load %arg10[%c0_11, %c0_12] : memref<256x128xf32, #tpu.memory_space<vmem>>, vector<256x128xf32>
      tpu.vector_store %arg10[%c0_11, %c0_12], %12 {strides = array<i32>} : memref<256x128xf32, #tpu.memory_space<vmem>>, vector<256x128xf32>,
    } else {
    }
    %c0 = arith.constant 0 : index
    %c0_1 = arith.constant 0 : index
    %3 = vector.load %arg3[%c0, %c0_1] : memref<256x256xbf16, #tpu.memory_space<vmem>>, vector<256x256xbf16>
    %c0_2 = arith.constant 0 : index
    %c0_3 = arith.constant 0 : index
    %4 = vector.load %arg10[%c0_2, %c0_3] : memref<256x128xf32, #tpu.memory_space<vmem>>, vector<256x128xf32>
    %c0_4 = arith.constant 0 : index
    %c0_5 = arith.constant 0 : index
    %5 = vector.load %arg4[%c0_4, %c0_5] : memref<256x128xbf16, #tpu.memory_space<vmem>>, vector<256x128xbf16>
    %cst = arith.constant dense<0.000000e+00> : vector<256x128xf32>
    %6 = tpu.matmul %3, %5, %cst {dimension_numbers = #tpu.dot_dimension_numbers<[1], [0], [0], [1], [0, 0, 1, 1], [], []>} : vector<256x256xbf16>, vector<256x128xbf16>, vector<256x128xf32> -> vector<256x128xf32>
    %7 = arith.addf %4, %6 : vector<256x128xf32>
    %c0_6 = arith.constant 0 : index
    %c0_7 = arith.constant 0 : index
    %8 = vector.load %arg10[%c0_6, %c0_7] : memref<256x128xf32, #tpu.memory_space<vmem>>, vector<256x128xf32>
    tpu.vector_store %arg10[%c0_6, %c0_7], %7 {strides = array<i32>} : memref<256x128xf32, #tpu.memory_space<vmem>>, vector<256x128xf32>,
    %c0_i32_8 = arith.constant 0 : i32
    %9 = arith.cmpi eq, %arg2, %c0_i32_8 : i32
    %10 = arith.extui %9 : i1 to i32
    %c0_i32_9 = arith.constant 0 : i32
    %11 = arith.cmpi ne, %10, %c0_i32_9 : i32
    scf.if %11 {
      %c0_10 = arith.constant 0 : index
      %c0_11 = arith.constant 0 : index
      %12 = vector.load %arg10[%c0_10, %c0_11] : memref<256x128xf32, #tpu.memory_space<vmem>>, vector<256x128xf32>
      %c0_12 = arith.constant 0 : index
      %c0_13 = arith.constant 0 : index
      %13 = vector.load %arg7[%c0_12, %c0_13] : memref<1x128xf32, #tpu.memory_space<vmem>>, vector<1x128xf32>
      %14 = vector.broadcast %13 : vector<1x128xf32> to vector<256x128xf32>
      %15 = arith.mulf %12, %14 : vector<256x128xf32>
      %c0_14 = arith.constant 0 : index
      %c0_15 = arith.constant 0 : index
      %16 = vector.load %arg8[%c0_14, %c0_15] : memref<1x128xf32, #tpu.memory_space<vmem>>, vector<1x128xf32>
      %17 = vector.broadcast %16 : vector<1x128xf32> to vector<256x128xf32>
      %18 = arith.addf %15, %17 : vector<256x128xf32>
      %cst_16 = arith.constant 0.000000e+00 : f32
      %19 = vector.broadcast %cst_16 : f32 to vector<256x128xf32>
      %20 = arith.maximumf %18, %19 : vector<256x128xf32>
      %21 = arith.truncf %20 : vector<256x128xf32> to vector<256x128xbf16>
      %c0_17 = arith.constant 0 : index
      %c0_18 = arith.constant 0 : index
      %22 = vector.load %arg9[%c0_17, %c0_18] : memref<256x128xbf16, #tpu.memory_space<vmem>>, vector<256x128xbf16>
      tpu.vector_store %arg9[%c0_17, %c0_18], %21 {strides = array<i32>} : memref<256x128xbf16, #tpu.memory_space<vmem>>, vector<256x128xbf16>,
    } else {
    }
    return
  }
  func.func @transform_0(%arg0: i32, %arg1: i32, %arg2: i32) -> (i32, i32) {
    %c0_i32 = arith.constant 0 : i32
    return %arg0, %arg2 : i32, i32
  }
  func.func @transform_1(%arg0: i32, %arg1: i32, %arg2: i32) -> (i32, i32) {
    %c0_i32 = arith.constant 0 : i32
    return %arg2, %arg1 : i32, i32
  }
  func.func @transform_2(%arg0: i32, %arg1: i32, %arg2: i32) -> (i32, i32) {
    %c0_i32 = arith.constant 0 : i32
    %c0_i32_0 = arith.constant 0 : i32
    return %c0_i32, %arg2 : i32, i32
  }
  func.func @transform_3(%arg0: i32, %arg1: i32, %arg2: i32) -> (i32, i32) {
    %c0_i32 = arith.constant 0 : i32
    %c0_i32_0 = arith.constant 0 : i32
    return %c0_i32, %arg2 : i32, i32
  }
  func.func @transform_4(%arg0: i32, %arg1: i32, %arg2: i32) -> (i32, i32) {
    %c0_i32 = arith.constant 0 : i32
    %c0_i32_0 = arith.constant 0 : i32
    return %c0_i32, %arg1 : i32, i32
  }
  func.func @transform_5(%arg0: i32, %arg1: i32, %arg2: i32) -> (i32, i32) {
    %c0_i32 = arith.constant 0 : i32
    %c0_i32_0 = arith.constant 0 : i32
    return %c0_i32, %arg1 : i32, i32
  }
  func.func @transform_6(%arg0: i32, %arg1: i32, %arg2: i32) -> (i32, i32) {
    %c0_i32 = arith.constant 0 : i32
    return %arg0, %arg1 : i32, i32
  }
}

module attributes {stable_mosaic.version = 11 : i64} {
  func.func @_mm_kernel(%arg0: i32, %arg1: i32, %arg2: i32, %arg3: memref<256x128xbf16, #tpu.memory_space<vmem>>, %arg4: memref<128x128xbf16, #tpu.memory_space<vmem>>, %arg5: memref<1x128xf32, #tpu.memory_space<vmem>>, %arg6: memref<1x128xf32, #tpu.memory_space<vmem>>, %arg7: memref<1x128xf32, #tpu.memory_space<vmem>>, %arg8: memref<1x128xf32, #tpu.memory_space<vmem>>, %arg9: memref<256x128xbf16, #tpu.memory_space<vmem>>, %arg10: memref<256x128xf32, #tpu.memory_space<vmem>>) attributes {dimension_semantics = [#tpu.dimension_semantics<parallel>, #tpu.dimension_semantics<parallel>, #tpu.dimension_semantics<arbitrary>], iteration_bounds = array<i64: 2, 1, 1>, scalar_prefetch = 0 : i64, scratch_operands = 1 : i64, tpu.core_type = #tpu.core_type<tc>, window_params = [{transform_indices = @transform_0, window_bounds = array<i64: 256, 128>}, {transform_indices = @transform_1, window_bounds = array<i64: 128, 128>}, {transform_indices = @transform_2, window_bounds = array<i64: 1, 128>}, {transform_indices = @transform_3, window_bounds = array<i64: 1, 128>}, {transform_indices = @transform_4, window_bounds = array<i64: 1, 128>}, {transform_indices = @transform_5, window_bounds = array<i64: 1, 128>}, {transform_indices = @transform_6, window_bounds = array<i64: 256, 128>}]} {
    %c0_i32 = arith.constant 0 : i32
    %0 = arith.cmpi eq, %arg2, %c0_i32 : i32
    %1 = arith.extui %0 : i1 to i32
    %c0_i32_0 = arith.constant 0 : i32
    %2 = arith.cmpi ne, %1, %c0_i32_0 : i32
    scf.if %2 {
      %cst_10 = arith.constant 0.000000e+00 : f32
      %12 = vector.broadcast %cst_10 : f32 to vector<256x128xf32>
      %c0_11 = arith.constant 0 : index
      %c0_12 = arith.constant 0 : index
      %13 = vector.load %arg10[%c0_11, %c0_12] : memref<256x128xf32, #tpu.memory_space<vmem>>, vector<256x128xf32>
      tpu.vector_store %arg10[%c0_11, %c0_12], %12 {strides = array<i32>} : memref<256x128xf32, #tpu.memory_space<vmem>>, vector<256x128xf32>,
    } else {
    }
    %c0 = arith.constant 0 : index
    %c0_1 = arith.constant 0 : index
    %3 = vector.load %arg3[%c0, %c0_1] : memref<256x128xbf16, #tpu.memory_space<vmem>>, vector<256x128xbf16>
    %c0_2 = arith.constant 0 : index
    %c0_3 = arith.constant 0 : index
    %4 = vector.load %arg10[%c0_2, %c0_3] : memref<256x128xf32, #tpu.memory_space<vmem>>, vector<256x128xf32>
    %c0_4 = arith.constant 0 : index
    %c0_5 = arith.constant 0 : index
    %5 = vector.load %arg4[%c0_4, %c0_5] : memref<128x128xbf16, #tpu.memory_space<vmem>>, vector<128x128xbf16>
    %cst = arith.constant dense<0.000000e+00> : vector<256x128xf32>
    %6 = tpu.matmul %3, %5, %cst {dimension_numbers = #tpu.dot_dimension_numbers<[1], [0], [0], [1], [0, 0, 1, 1], [], []>} : vector<256x128xbf16>, vector<128x128xbf16>, vector<256x128xf32> -> vector<256x128xf32>
    %7 = arith.addf %4, %6 : vector<256x128xf32>
    %c0_6 = arith.constant 0 : index
    %c0_7 = arith.constant 0 : index
    %8 = vector.load %arg10[%c0_6, %c0_7] : memref<256x128xf32, #tpu.memory_space<vmem>>, vector<256x128xf32>
    tpu.vector_store %arg10[%c0_6, %c0_7], %7 {strides = array<i32>} : memref<256x128xf32, #tpu.memory_space<vmem>>, vector<256x128xf32>,
    %c0_i32_8 = arith.constant 0 : i32
    %9 = arith.cmpi eq, %arg2, %c0_i32_8 : i32
    %10 = arith.extui %9 : i1 to i32
    %c0_i32_9 = arith.constant 0 : i32
    %11 = arith.cmpi ne, %10, %c0_i32_9 : i32
    scf.if %11 {
      %c0_10 = arith.constant 0 : index
      %c0_11 = arith.constant 0 : index
      %12 = vector.load %arg10[%c0_10, %c0_11] : memref<256x128xf32, #tpu.memory_space<vmem>>, vector<256x128xf32>
      %c0_12 = arith.constant 0 : index
      %c0_13 = arith.constant 0 : index
      %13 = vector.load %arg7[%c0_12, %c0_13] : memref<1x128xf32, #tpu.memory_space<vmem>>, vector<1x128xf32>
      %14 = vector.broadcast %13 : vector<1x128xf32> to vector<256x128xf32>
      %15 = arith.mulf %12, %14 : vector<256x128xf32>
      %c0_14 = arith.constant 0 : index
      %c0_15 = arith.constant 0 : index
      %16 = vector.load %arg8[%c0_14, %c0_15] : memref<1x128xf32, #tpu.memory_space<vmem>>, vector<1x128xf32>
      %17 = vector.broadcast %16 : vector<1x128xf32> to vector<256x128xf32>
      %18 = arith.addf %15, %17 : vector<256x128xf32>
      %cst_16 = arith.constant 0.000000e+00 : f32
      %19 = vector.broadcast %cst_16 : f32 to vector<256x128xf32>
      %20 = arith.maximumf %18, %19 : vector<256x128xf32>
      %21 = arith.truncf %20 : vector<256x128xf32> to vector<256x128xbf16>
      %c0_17 = arith.constant 0 : index
      %c0_18 = arith.constant 0 : index
      %22 = vector.load %arg9[%c0_17, %c0_18] : memref<256x128xbf16, #tpu.memory_space<vmem>>, vector<256x128xbf16>
      tpu.vector_store %arg9[%c0_17, %c0_18], %21 {strides = array<i32>} : memref<256x128xbf16, #tpu.memory_space<vmem>>, vector<256x128xbf16>,
    } else {
    }
    return
  }
  func.func @transform_0(%arg0: i32, %arg1: i32, %arg2: i32) -> (i32, i32) {
    %c0_i32 = arith.constant 0 : i32
    return %arg0, %arg2 : i32, i32
  }
  func.func @transform_1(%arg0: i32, %arg1: i32, %arg2: i32) -> (i32, i32) {
    %c0_i32 = arith.constant 0 : i32
    return %arg2, %arg1 : i32, i32
  }
  func.func @transform_2(%arg0: i32, %arg1: i32, %arg2: i32) -> (i32, i32) {
    %c0_i32 = arith.constant 0 : i32
    %c0_i32_0 = arith.constant 0 : i32
    return %c0_i32, %arg2 : i32, i32
  }
  func.func @transform_3(%arg0: i32, %arg1: i32, %arg2: i32) -> (i32, i32) {
    %c0_i32 = arith.constant 0 : i32
    %c0_i32_0 = arith.constant 0 : i32
    return %c0_i32, %arg2 : i32, i32
  }
  func.func @transform_4(%arg0: i32, %arg1: i32, %arg2: i32) -> (i32, i32) {
    %c0_i32 = arith.constant 0 : i32
    %c0_i32_0 = arith.constant 0 : i32
    return %c0_i32, %arg1 : i32, i32
  }
  func.func @transform_5(%arg0: i32, %arg1: i32, %arg2: i32) -> (i32, i32) {
    %c0_i32 = arith.constant 0 : i32
    %c0_i32_0 = arith.constant 0 : i32
    return %c0_i32, %arg1 : i32, i32
  }
  func.func @transform_6(%arg0: i32, %arg1: i32, %arg2: i32) -> (i32, i32) {
    %c0_i32 = arith.constant 0 : i32
    return %arg0, %arg1 : i32, i32
  }
}

module attributes {stable_mosaic.version = 11 : i64} {
  func.func @_mm_kernel(%arg0: i32, %arg1: i32, %arg2: i32, %arg3: memref<256x128xbf16, #tpu.memory_space<vmem>>, %arg4: memref<128x128xbf16, #tpu.memory_space<vmem>>, %arg5: memref<1x128xf32, #tpu.memory_space<vmem>>, %arg6: memref<1x128xf32, #tpu.memory_space<vmem>>, %arg7: memref<1x128xf32, #tpu.memory_space<vmem>>, %arg8: memref<1x128xf32, #tpu.memory_space<vmem>>, %arg9: memref<256x128xbf16, #tpu.memory_space<vmem>>, %arg10: memref<256x128xf32, #tpu.memory_space<vmem>>) attributes {dimension_semantics = [#tpu.dimension_semantics<parallel>, #tpu.dimension_semantics<parallel>, #tpu.dimension_semantics<arbitrary>], iteration_bounds = array<i64: 2, 1, 1>, scalar_prefetch = 0 : i64, scratch_operands = 1 : i64, tpu.core_type = #tpu.core_type<tc>, window_params = [{transform_indices = @transform_0, window_bounds = array<i64: 256, 128>}, {transform_indices = @transform_1, window_bounds = array<i64: 128, 128>}, {transform_indices = @transform_2, window_bounds = array<i64: 1, 128>}, {transform_indices = @transform_3, window_bounds = array<i64: 1, 128>}, {transform_indices = @transform_4, window_bounds = array<i64: 1, 128>}, {transform_indices = @transform_5, window_bounds = array<i64: 1, 128>}, {transform_indices = @transform_6, window_bounds = array<i64: 256, 128>}]} {
    %c0_i32 = arith.constant 0 : i32
    %0 = arith.cmpi eq, %arg2, %c0_i32 : i32
    %1 = arith.extui %0 : i1 to i32
    %c0_i32_0 = arith.constant 0 : i32
    %2 = arith.cmpi ne, %1, %c0_i32_0 : i32
    scf.if %2 {
      %cst_15 = arith.constant 0.000000e+00 : f32
      %22 = vector.broadcast %cst_15 : f32 to vector<256x128xf32>
      %c0_16 = arith.constant 0 : index
      %c0_17 = arith.constant 0 : index
      %23 = vector.load %arg10[%c0_16, %c0_17] : memref<256x128xf32, #tpu.memory_space<vmem>>, vector<256x128xf32>
      tpu.vector_store %arg10[%c0_16, %c0_17], %22 {strides = array<i32>} : memref<256x128xf32, #tpu.memory_space<vmem>>, vector<256x128xf32>,
    } else {
    }
    %c0 = arith.constant 0 : index
    %c0_1 = arith.constant 0 : index
    %3 = vector.load %arg3[%c0, %c0_1] : memref<256x128xbf16, #tpu.memory_space<vmem>>, vector<256x128xbf16>
    %4 = arith.extf %3 : vector<256x128xbf16> to vector<256x128xf32>
    %c0_2 = arith.constant 0 : index
    %c0_3 = arith.constant 0 : index
    %5 = vector.load %arg5[%c0_2, %c0_3] : memref<1x128xf32, #tpu.memory_space<vmem>>, vector<1x128xf32>
    %6 = vector.broadcast %5 : vector<1x128xf32> to vector<256x128xf32>
    %7 = arith.mulf %4, %6 : vector<256x128xf32>
    %c0_4 = arith.constant 0 : index
    %c0_5 = arith.constant 0 : index
    %8 = vector.load %arg6[%c0_4, %c0_5] : memref<1x128xf32, #tpu.memory_space<vmem>>, vector<1x128xf32>
    %9 = vector.broadcast %8 : vector<1x128xf32> to vector<256x128xf32>
    %10 = arith.addf %7, %9 : vector<256x128xf32>
    %cst = arith.constant 0.000000e+00 : f32
    %11 = vector.broadcast %cst : f32 to vector<256x128xf32>
    %12 = arith.maximumf %10, %11 : vector<256x128xf32>
    %13 = arith.truncf %12 : vector<256x128xf32> to vector<256x128xbf16>
    %c0_6 = arith.constant 0 : index
    %c0_7 = arith.constant 0 : index
    %14 = vector.load %arg10[%c0_6, %c0_7] : memref<256x128xf32, #tpu.memory_space<vmem>>, vector<256x128xf32>
    %c0_8 = arith.constant 0 : index
    %c0_9 = arith.constant 0 : index
    %15 = vector.load %arg4[%c0_8, %c0_9] : memref<128x128xbf16, #tpu.memory_space<vmem>>, vector<128x128xbf16>
    %cst_10 = arith.constant dense<0.000000e+00> : vector<256x128xf32>
    %16 = tpu.matmul %13, %15, %cst_10 {dimension_numbers = #tpu.dot_dimension_numbers<[1], [0], [0], [1], [0, 0, 1, 1], [], []>} : vector<256x128xbf16>, vector<128x128xbf16>, vector<256x128xf32> -> vector<256x128xf32>
    %17 = arith.addf %14, %16 : vector<256x128xf32>
    %c0_11 = arith.constant 0 : index
    %c0_12 = arith.constant 0 : index
    %18 = vector.load %arg10[%c0_11, %c0_12] : memref<256x128xf32, #tpu.memory_space<vmem>>, vector<256x128xf32>
    tpu.vector_store %arg10[%c0_11, %c0_12], %17 {strides = array<i32>} : memref<256x128xf32, #tpu.memory_space<vmem>>, vector<256x128xf32>,
    %c0_i32_13 = arith.constant 0 : i32
    %19 = arith.cmpi eq, %arg2, %c0_i32_13 : i32
    %20 = arith.extui %19 : i1 to i32
    %c0_i32_14 = arith.constant 0 : i32
    %21 = arith.cmpi ne, %20, %c0_i32_14 : i32
    scf.if %21 {
      %c0_15 = arith.constant 0 : index
      %c0_16 = arith.constant 0 : index
      %22 = vector.load %arg10[%c0_15, %c0_16] : memref<256x128xf32, #tpu.memory_space<vmem>>, vector<256x128xf32>
      %c0_17 = arith.constant 0 : index
      %c0_18 = arith.constant 0 : index
      %23 = vector.load %arg7[%c0_17, %c0_18] : memref<1x128xf32, #tpu.memory_space<vmem>>, vector<1x128xf32>
      %24 = vector.broadcast %23 : vector<1x128xf32> to vector<256x128xf32>
      %25 = arith.mulf %22, %24 : vector<256x128xf32>
      %c0_19 = arith.constant 0 : index
      %c0_20 = arith.constant 0 : index
      %26 = vector.load %arg8[%c0_19, %c0_20] : memref<1x128xf32, #tpu.memory_space<vmem>>, vector<1x128xf32>
      %27 = vector.broadcast %26 : vector<1x128xf32> to vector<256x128xf32>
      %28 = arith.addf %25, %27 : vector<256x128xf32>
      %cst_21 = arith.constant 0.000000e+00 : f32
      %29 = vector.broadcast %cst_21 : f32 to vector<256x128xf32>
      %30 = arith.maximumf %28, %29 : vector<256x128xf32>
      %31 = arith.truncf %30 : vector<256x128xf32> to vector<256x128xbf16>
      %c0_22 = arith.constant 0 : index
      %c0_23 = arith.constant 0 : index
      %32 = vector.load %arg9[%c0_22, %c0_23] : memref<256x128xbf16, #tpu.memory_space<vmem>>, vector<256x128xbf16>
      tpu.vector_store %arg9[%c0_22, %c0_23], %31 {strides = array<i32>} : memref<256x128xbf16, #tpu.memory_space<vmem>>, vector<256x128xbf16>,
    } else {
    }
    return
  }
  func.func @transform_0(%arg0: i32, %arg1: i32, %arg2: i32) -> (i32, i32) {
    %c0_i32 = arith.constant 0 : i32
    return %arg0, %arg2 : i32, i32
  }
  func.func @transform_1(%arg0: i32, %arg1: i32, %arg2: i32) -> (i32, i32) {
    %c0_i32 = arith.constant 0 : i32
    return %arg2, %arg1 : i32, i32
  }
  func.func @transform_2(%arg0: i32, %arg1: i32, %arg2: i32) -> (i32, i32) {
    %c0_i32 = arith.constant 0 : i32
    %c0_i32_0 = arith.constant 0 : i32
    return %c0_i32, %arg2 : i32, i32
  }
  func.func @transform_3(%arg0: i32, %arg1: i32, %arg2: i32) -> (i32, i32) {
    %c0_i32 = arith.constant 0 : i32
    %c0_i32_0 = arith.constant 0 : i32
    return %c0_i32, %arg2 : i32, i32
  }
  func.func @transform_4(%arg0: i32, %arg1: i32, %arg2: i32) -> (i32, i32) {
    %c0_i32 = arith.constant 0 : i32
    %c0_i32_0 = arith.constant 0 : i32
    return %c0_i32, %arg1 : i32, i32
  }
  func.func @transform_5(%arg0: i32, %arg1: i32, %arg2: i32) -> (i32, i32) {
    %c0_i32 = arith.constant 0 : i32
    %c0_i32_0 = arith.constant 0 : i32
    return %c0_i32, %arg1 : i32, i32
  }
  func.func @transform_6(%arg0: i32, %arg1: i32, %arg2: i32) -> (i32, i32) {
    %c0_i32 = arith.constant 0 : i32
    return %arg0, %arg1 : i32, i32
  }
}

module attributes {stable_mosaic.version = 11 : i64} {
  func.func @_mm_kernel(%arg0: i32, %arg1: i32, %arg2: i32, %arg3: memref<256x128xbf16, #tpu.memory_space<vmem>>, %arg4: memref<128x128xbf16, #tpu.memory_space<vmem>>, %arg5: memref<1x128xf32, #tpu.memory_space<vmem>>, %arg6: memref<1x128xf32, #tpu.memory_space<vmem>>, %arg7: memref<1x128xf32, #tpu.memory_space<vmem>>, %arg8: memref<1x128xf32, #tpu.memory_space<vmem>>, %arg9: memref<256x128xbf16, #tpu.memory_space<vmem>>, %arg10: memref<256x128xf32, #tpu.memory_space<vmem>>) attributes {dimension_semantics = [#tpu.dimension_semantics<parallel>, #tpu.dimension_semantics<parallel>, #tpu.dimension_semantics<arbitrary>], iteration_bounds = array<i64: 2, 1, 1>, scalar_prefetch = 0 : i64, scratch_operands = 1 : i64, tpu.core_type = #tpu.core_type<tc>, window_params = [{transform_indices = @transform_0, window_bounds = array<i64: 256, 128>}, {transform_indices = @transform_1, window_bounds = array<i64: 128, 128>}, {transform_indices = @transform_2, window_bounds = array<i64: 1, 128>}, {transform_indices = @transform_3, window_bounds = array<i64: 1, 128>}, {transform_indices = @transform_4, window_bounds = array<i64: 1, 128>}, {transform_indices = @transform_5, window_bounds = array<i64: 1, 128>}, {transform_indices = @transform_6, window_bounds = array<i64: 256, 128>}]} {
    %c0_i32 = arith.constant 0 : i32
    %0 = arith.cmpi eq, %arg2, %c0_i32 : i32
    %1 = arith.extui %0 : i1 to i32
    %c0_i32_0 = arith.constant 0 : i32
    %2 = arith.cmpi ne, %1, %c0_i32_0 : i32
    scf.if %2 {
      %cst_10 = arith.constant 0.000000e+00 : f32
      %12 = vector.broadcast %cst_10 : f32 to vector<256x128xf32>
      %c0_11 = arith.constant 0 : index
      %c0_12 = arith.constant 0 : index
      %13 = vector.load %arg10[%c0_11, %c0_12] : memref<256x128xf32, #tpu.memory_space<vmem>>, vector<256x128xf32>
      tpu.vector_store %arg10[%c0_11, %c0_12], %12 {strides = array<i32>} : memref<256x128xf32, #tpu.memory_space<vmem>>, vector<256x128xf32>,
    } else {
    }
    %c0 = arith.constant 0 : index
    %c0_1 = arith.constant 0 : index
    %3 = vector.load %arg3[%c0, %c0_1] : memref<256x128xbf16, #tpu.memory_space<vmem>>, vector<256x128xbf16>
    %c0_2 = arith.constant 0 : index
    %c0_3 = arith.constant 0 : index
    %4 = vector.load %arg10[%c0_2, %c0_3] : memref<256x128xf32, #tpu.memory_space<vmem>>, vector<256x128xf32>
    %c0_4 = arith.constant 0 : index
    %c0_5 = arith.constant 0 : index
    %5 = vector.load %arg4[%c0_4, %c0_5] : memref<128x128xbf16, #tpu.memory_space<vmem>>, vector<128x128xbf16>
    %cst = arith.constant dense<0.000000e+00> : vector<256x128xf32>
    %6 = tpu.matmul %3, %5, %cst {dimension_numbers = #tpu.dot_dimension_numbers<[1], [0], [0], [1], [0, 0, 1, 1], [], []>} : vector<256x128xbf16>, vector<128x128xbf16>, vector<256x128xf32> -> vector<256x128xf32>
    %7 = arith.addf %4, %6 : vector<256x128xf32>
    %c0_6 = arith.constant 0 : index
    %c0_7 = arith.constant 0 : index
    %8 = vector.load %arg10[%c0_6, %c0_7] : memref<256x128xf32, #tpu.memory_space<vmem>>, vector<256x128xf32>
    tpu.vector_store %arg10[%c0_6, %c0_7], %7 {strides = array<i32>} : memref<256x128xf32, #tpu.memory_space<vmem>>, vector<256x128xf32>,
    %c0_i32_8 = arith.constant 0 : i32
    %9 = arith.cmpi eq, %arg2, %c0_i32_8 : i32
    %10 = arith.extui %9 : i1 to i32
    %c0_i32_9 = arith.constant 0 : i32
    %11 = arith.cmpi ne, %10, %c0_i32_9 : i32
    scf.if %11 {
      %c0_10 = arith.constant 0 : index
      %c0_11 = arith.constant 0 : index
      %12 = vector.load %arg10[%c0_10, %c0_11] : memref<256x128xf32, #tpu.memory_space<vmem>>, vector<256x128xf32>
      %13 = arith.truncf %12 : vector<256x128xf32> to vector<256x128xbf16>
      %c0_12 = arith.constant 0 : index
      %c0_13 = arith.constant 0 : index
      %14 = vector.load %arg9[%c0_12, %c0_13] : memref<256x128xbf16, #tpu.memory_space<vmem>>, vector<256x128xbf16>
      tpu.vector_store %arg9[%c0_12, %c0_13], %13 {strides = array<i32>} : memref<256x128xbf16, #tpu.memory_space<vmem>>, vector<256x128xbf16>,
    } else {
    }
    return
  }
  func.func @transform_0(%arg0: i32, %arg1: i32, %arg2: i32) -> (i32, i32) {
    %c0_i32 = arith.constant 0 : i32
    return %arg0, %arg2 : i32, i32
  }
  func.func @transform_1(%arg0: i32, %arg1: i32, %arg2: i32) -> (i32, i32) {
    %c0_i32 = arith.constant 0 : i32
    return %arg2, %arg1 : i32, i32
  }
  func.func @transform_2(%arg0: i32, %arg1: i32, %arg2: i32) -> (i32, i32) {
    %c0_i32 = arith.constant 0 : i32
    %c0_i32_0 = arith.constant 0 : i32
    return %c0_i32, %arg2 : i32, i32
  }
  func.func @transform_3(%arg0: i32, %arg1: i32, %arg2: i32) -> (i32, i32) {
    %c0_i32 = arith.constant 0 : i32
    %c0_i32_0 = arith.constant 0 : i32
    return %c0_i32, %arg2 : i32, i32
  }
  func.func @transform_4(%arg0: i32, %arg1: i32, %arg2: i32) -> (i32, i32) {
    %c0_i32 = arith.constant 0 : i32
    %c0_i32_0 = arith.constant 0 : i32
    return %c0_i32, %arg1 : i32, i32
  }
  func.func @transform_5(%arg0: i32, %arg1: i32, %arg2: i32) -> (i32, i32) {
    %c0_i32 = arith.constant 0 : i32
    %c0_i32_0 = arith.constant 0 : i32
    return %c0_i32, %arg1 : i32, i32
  }
  func.func @transform_6(%arg0: i32, %arg1: i32, %arg2: i32) -> (i32, i32) {
    %c0_i32 = arith.constant 0 : i32
    return %arg0, %arg1 : i32, i32
  }
}

module attributes {stable_mosaic.version = 11 : i64} {
  func.func @_pool_bn_relu_kernel(%arg0: i32, %arg1: memref<16x2x8x32xbf16, #tpu.memory_space<vmem>>, %arg2: memref<1x16xf32, #tpu.memory_space<vmem>>, %arg3: memref<1x16xf32, #tpu.memory_space<vmem>>, %arg4: memref<16x8x16xbf16, #tpu.memory_space<vmem>>) attributes {dimension_semantics = [#tpu.dimension_semantics<parallel>], iteration_bounds = array<i64: 1>, scalar_prefetch = 0 : i64, scratch_operands = 0 : i64, tpu.core_type = #tpu.core_type<tc>, window_params = [{transform_indices = @transform_0, window_bounds = array<i64: 16, 2, 8, 32>}, {pipeline_mode = #tpu.pipeline_mode<synchronous>, transform_indices = @transform_1, window_bounds = array<i64: 1, 16>}, {pipeline_mode = #tpu.pipeline_mode<synchronous>, transform_indices = @transform_2, window_bounds = array<i64: 1, 16>}, {transform_indices = @transform_3, window_bounds = array<i64: 16, 8, 16>}]} {
    %c0 = arith.constant 0 : index
    %c0_0 = arith.constant 0 : index
    %0 = vector.load %arg2[%c0, %c0_0] : memref<1x16xf32, #tpu.memory_space<vmem>>, vector<1x16xf32>
    %c0_1 = arith.constant 0 : index
    %c0_2 = arith.constant 0 : index
    %1 = vector.load %arg3[%c0_1, %c0_2] : memref<1x16xf32, #tpu.memory_space<vmem>>, vector<1x16xf32>
    %c0_3 = arith.constant 0 : index
    %c0_4 = arith.constant 0 : index
    %c0_5 = arith.constant 0 : index
    %c0_6 = arith.constant 0 : index
    %2 = vector.load %arg1[%c0_3, %c0_4, %c0_5, %c0_6] : memref<16x2x8x32xbf16, #tpu.memory_space<vmem>>, vector<16x1x8x32xbf16>
    %3 = vector.shape_cast %2 : vector<16x1x8x32xbf16> to vector<16x8x32xbf16>
    %c0_7 = arith.constant 0 : index
    %c1 = arith.constant 1 : index
    %c0_8 = arith.constant 0 : index
    %c0_9 = arith.constant 0 : index
    %4 = vector.load %arg1[%c0_7, %c1, %c0_8, %c0_9] : memref<16x2x8x32xbf16, #tpu.memory_space<vmem>>, vector<16x1x8x32xbf16>
    %5 = vector.shape_cast %4 : vector<16x1x8x32xbf16> to vector<16x8x32xbf16>
    %6 = vector.extract_strided_slice %3 {offsets = [0, 0, 0], sizes = [16, 8, 16], strides = [1, 1, 1]} : vector<16x8x32xbf16> to vector<16x8x16xbf16>
    %7 = arith.extf %6 : vector<16x8x16xbf16> to vector<16x8x16xf32>
    %8 = vector.shape_cast %0 : vector<1x16xf32> to vector<1x1x16xf32>
    %9 = vector.broadcast %8 : vector<1x1x16xf32> to vector<16x8x16xf32>
    %10 = arith.mulf %7, %9 : vector<16x8x16xf32>
    %11 = vector.shape_cast %1 : vector<1x16xf32> to vector<1x1x16xf32>
    %12 = vector.broadcast %11 : vector<1x1x16xf32> to vector<16x8x16xf32>
    %13 = arith.addf %10, %12 : vector<16x8x16xf32>
    %cst = arith.constant 0.000000e+00 : f32
    %14 = vector.broadcast %cst : f32 to vector<16x8x16xf32>
    %15 = arith.maximumf %13, %14 : vector<16x8x16xf32>
    %16 = vector.extract_strided_slice %3 {offsets = [0, 0, 16], sizes = [16, 8, 16], strides = [1, 1, 1]} : vector<16x8x32xbf16> to vector<16x8x16xbf16>
    %17 = arith.extf %16 : vector<16x8x16xbf16> to vector<16x8x16xf32>
    %18 = vector.shape_cast %0 : vector<1x16xf32> to vector<1x1x16xf32>
    %19 = vector.broadcast %18 : vector<1x1x16xf32> to vector<16x8x16xf32>
    %20 = arith.mulf %17, %19 : vector<16x8x16xf32>
    %21 = vector.shape_cast %1 : vector<1x16xf32> to vector<1x1x16xf32>
    %22 = vector.broadcast %21 : vector<1x1x16xf32> to vector<16x8x16xf32>
    %23 = arith.addf %20, %22 : vector<16x8x16xf32>
    %cst_10 = arith.constant 0.000000e+00 : f32
    %24 = vector.broadcast %cst_10 : f32 to vector<16x8x16xf32>
    %25 = arith.maximumf %23, %24 : vector<16x8x16xf32>
    %26 = arith.addf %15, %25 : vector<16x8x16xf32>
    %27 = vector.extract_strided_slice %5 {offsets = [0, 0, 0], sizes = [16, 8, 16], strides = [1, 1, 1]} : vector<16x8x32xbf16> to vector<16x8x16xbf16>
    %28 = arith.extf %27 : vector<16x8x16xbf16> to vector<16x8x16xf32>
    %29 = vector.shape_cast %0 : vector<1x16xf32> to vector<1x1x16xf32>
    %30 = vector.broadcast %29 : vector<1x1x16xf32> to vector<16x8x16xf32>
    %31 = arith.mulf %28, %30 : vector<16x8x16xf32>
    %32 = vector.shape_cast %1 : vector<1x16xf32> to vector<1x1x16xf32>
    %33 = vector.broadcast %32 : vector<1x1x16xf32> to vector<16x8x16xf32>
    %34 = arith.addf %31, %33 : vector<16x8x16xf32>
    %cst_11 = arith.constant 0.000000e+00 : f32
    %35 = vector.broadcast %cst_11 : f32 to vector<16x8x16xf32>
    %36 = arith.maximumf %34, %35 : vector<16x8x16xf32>
    %37 = arith.addf %26, %36 : vector<16x8x16xf32>
    %38 = vector.extract_strided_slice %5 {offsets = [0, 0, 16], sizes = [16, 8, 16], strides = [1, 1, 1]} : vector<16x8x32xbf16> to vector<16x8x16xbf16>
    %39 = arith.extf %38 : vector<16x8x16xbf16> to vector<16x8x16xf32>
    %40 = vector.shape_cast %0 : vector<1x16xf32> to vector<1x1x16xf32>
    %41 = vector.broadcast %40 : vector<1x1x16xf32> to vector<16x8x16xf32>
    %42 = arith.mulf %39, %41 : vector<16x8x16xf32>
    %43 = vector.shape_cast %1 : vector<1x16xf32> to vector<1x1x16xf32>
    %44 = vector.broadcast %43 : vector<1x1x16xf32> to vector<16x8x16xf32>
    %45 = arith.addf %42, %44 : vector<16x8x16xf32>
    %cst_12 = arith.constant 0.000000e+00 : f32
    %46 = vector.broadcast %cst_12 : f32 to vector<16x8x16xf32>
    %47 = arith.maximumf %45, %46 : vector<16x8x16xf32>
    %48 = arith.addf %37, %47 : vector<16x8x16xf32>
    %cst_13 = arith.constant 2.500000e-01 : f32
    %49 = vector.broadcast %cst_13 : f32 to vector<16x8x16xf32>
    %50 = arith.mulf %48, %49 : vector<16x8x16xf32>
    %51 = arith.truncf %50 : vector<16x8x16xf32> to vector<16x8x16xbf16>
    %c0_14 = arith.constant 0 : index
    %c0_15 = arith.constant 0 : index
    %c0_16 = arith.constant 0 : index
    %52 = vector.load %arg4[%c0_14, %c0_15, %c0_16] : memref<16x8x16xbf16, #tpu.memory_space<vmem>>, vector<16x8x16xbf16>
    tpu.vector_store %arg4[%c0_14, %c0_15, %c0_16], %51 {strides = array<i32>} : memref<16x8x16xbf16, #tpu.memory_space<vmem>>, vector<16x8x16xbf16>,
    return
  }
  func.func @transform_0(%arg0: i32) -> (i32, i32, i32, i32) {
    %c0_i32 = arith.constant 0 : i32
    %c0_i32_0 = arith.constant 0 : i32
    %c0_i32_1 = arith.constant 0 : i32
    %c0_i32_2 = arith.constant 0 : i32
    return %arg0, %c0_i32, %c0_i32_0, %c0_i32_1 : i32, i32, i32, i32
  }
  func.func @transform_1(%arg0: i32) -> (i32, i32) {
    %c0_i32 = arith.constant 0 : i32
    %c0_i32_0 = arith.constant 0 : i32
    %c0_i32_1 = arith.constant 0 : i32
    return %c0_i32, %c0_i32_0 : i32, i32
  }
  func.func @transform_2(%arg0: i32) -> (i32, i32) {
    %c0_i32 = arith.constant 0 : i32
    %c0_i32_0 = arith.constant 0 : i32
    %c0_i32_1 = arith.constant 0 : i32
    return %c0_i32, %c0_i32_0 : i32, i32
  }
  func.func @transform_3(%arg0: i32) -> (i32, i32, i32) {
    %c0_i32 = arith.constant 0 : i32
    %c0_i32_0 = arith.constant 0 : i32
    %c0_i32_1 = arith.constant 0 : i32
    return %arg0, %c0_i32, %c0_i32_0 : i32, i32, i32
  }
}

module attributes {stable_mosaic.version = 11 : i64} {
  func.func @_mm_kernel(%arg0: i32, %arg1: i32, %arg2: i32, %arg3: memref<128x128xbf16, #tpu.memory_space<vmem>>, %arg4: memref<128x128xbf16, #tpu.memory_space<vmem>>, %arg5: memref<1x128xf32, #tpu.memory_space<vmem>>, %arg6: memref<1x128xf32, #tpu.memory_space<vmem>>, %arg7: memref<1x128xf32, #tpu.memory_space<vmem>>, %arg8: memref<1x128xf32, #tpu.memory_space<vmem>>, %arg9: memref<128x128xbf16, #tpu.memory_space<vmem>>, %arg10: memref<128x128xf32, #tpu.memory_space<vmem>>) attributes {dimension_semantics = [#tpu.dimension_semantics<parallel>, #tpu.dimension_semantics<parallel>, #tpu.dimension_semantics<arbitrary>], iteration_bounds = array<i64: 1, 1, 1>, scalar_prefetch = 0 : i64, scratch_operands = 1 : i64, tpu.core_type = #tpu.core_type<tc>, window_params = [{transform_indices = @transform_0, window_bounds = array<i64: 128, 128>}, {transform_indices = @transform_1, window_bounds = array<i64: 128, 128>}, {transform_indices = @transform_2, window_bounds = array<i64: 1, 128>}, {transform_indices = @transform_3, window_bounds = array<i64: 1, 128>}, {transform_indices = @transform_4, window_bounds = array<i64: 1, 128>}, {transform_indices = @transform_5, window_bounds = array<i64: 1, 128>}, {transform_indices = @transform_6, window_bounds = array<i64: 128, 128>}]} {
    %c0_i32 = arith.constant 0 : i32
    %0 = arith.cmpi eq, %arg2, %c0_i32 : i32
    %1 = arith.extui %0 : i1 to i32
    %c0_i32_0 = arith.constant 0 : i32
    %2 = arith.cmpi ne, %1, %c0_i32_0 : i32
    scf.if %2 {
      %cst_10 = arith.constant 0.000000e+00 : f32
      %12 = vector.broadcast %cst_10 : f32 to vector<128x128xf32>
      %c0_11 = arith.constant 0 : index
      %c0_12 = arith.constant 0 : index
      %13 = vector.load %arg10[%c0_11, %c0_12] : memref<128x128xf32, #tpu.memory_space<vmem>>, vector<128x128xf32>
      tpu.vector_store %arg10[%c0_11, %c0_12], %12 {strides = array<i32>} : memref<128x128xf32, #tpu.memory_space<vmem>>, vector<128x128xf32>,
    } else {
    }
    %c0 = arith.constant 0 : index
    %c0_1 = arith.constant 0 : index
    %3 = vector.load %arg3[%c0, %c0_1] : memref<128x128xbf16, #tpu.memory_space<vmem>>, vector<128x128xbf16>
    %c0_2 = arith.constant 0 : index
    %c0_3 = arith.constant 0 : index
    %4 = vector.load %arg10[%c0_2, %c0_3] : memref<128x128xf32, #tpu.memory_space<vmem>>, vector<128x128xf32>
    %c0_4 = arith.constant 0 : index
    %c0_5 = arith.constant 0 : index
    %5 = vector.load %arg4[%c0_4, %c0_5] : memref<128x128xbf16, #tpu.memory_space<vmem>>, vector<128x128xbf16>
    %cst = arith.constant dense<0.000000e+00> : vector<128x128xf32>
    %6 = tpu.matmul %3, %5, %cst {dimension_numbers = #tpu.dot_dimension_numbers<[1], [0], [0], [1], [0, 0, 1, 1], [], []>} : vector<128x128xbf16>, vector<128x128xbf16>, vector<128x128xf32> -> vector<128x128xf32>
    %7 = arith.addf %4, %6 : vector<128x128xf32>
    %c0_6 = arith.constant 0 : index
    %c0_7 = arith.constant 0 : index
    %8 = vector.load %arg10[%c0_6, %c0_7] : memref<128x128xf32, #tpu.memory_space<vmem>>, vector<128x128xf32>
    tpu.vector_store %arg10[%c0_6, %c0_7], %7 {strides = array<i32>} : memref<128x128xf32, #tpu.memory_space<vmem>>, vector<128x128xf32>,
    %c0_i32_8 = arith.constant 0 : i32
    %9 = arith.cmpi eq, %arg2, %c0_i32_8 : i32
    %10 = arith.extui %9 : i1 to i32
    %c0_i32_9 = arith.constant 0 : i32
    %11 = arith.cmpi ne, %10, %c0_i32_9 : i32
    scf.if %11 {
      %c0_10 = arith.constant 0 : index
      %c0_11 = arith.constant 0 : index
      %12 = vector.load %arg10[%c0_10, %c0_11] : memref<128x128xf32, #tpu.memory_space<vmem>>, vector<128x128xf32>
      %13 = arith.truncf %12 : vector<128x128xf32> to vector<128x128xbf16>
      %c0_12 = arith.constant 0 : index
      %c0_13 = arith.constant 0 : index
      %14 = vector.load %arg9[%c0_12, %c0_13] : memref<128x128xbf16, #tpu.memory_space<vmem>>, vector<128x128xbf16>
      tpu.vector_store %arg9[%c0_12, %c0_13], %13 {strides = array<i32>} : memref<128x128xbf16, #tpu.memory_space<vmem>>, vector<128x128xbf16>,
    } else {
    }
    return
  }
  func.func @transform_0(%arg0: i32, %arg1: i32, %arg2: i32) -> (i32, i32) {
    %c0_i32 = arith.constant 0 : i32
    return %arg0, %arg2 : i32, i32
  }
  func.func @transform_1(%arg0: i32, %arg1: i32, %arg2: i32) -> (i32, i32) {
    %c0_i32 = arith.constant 0 : i32
    return %arg2, %arg1 : i32, i32
  }
  func.func @transform_2(%arg0: i32, %arg1: i32, %arg2: i32) -> (i32, i32) {
    %c0_i32 = arith.constant 0 : i32
    %c0_i32_0 = arith.constant 0 : i32
    return %c0_i32, %arg2 : i32, i32
  }
  func.func @transform_3(%arg0: i32, %arg1: i32, %arg2: i32) -> (i32, i32) {
    %c0_i32 = arith.constant 0 : i32
    %c0_i32_0 = arith.constant 0 : i32
    return %c0_i32, %arg2 : i32, i32
  }
  func.func @transform_4(%arg0: i32, %arg1: i32, %arg2: i32) -> (i32, i32) {
    %c0_i32 = arith.constant 0 : i32
    %c0_i32_0 = arith.constant 0 : i32
    return %c0_i32, %arg1 : i32, i32
  }
  func.func @transform_5(%arg0: i32, %arg1: i32, %arg2: i32) -> (i32, i32) {
    %c0_i32 = arith.constant 0 : i32
    %c0_i32_0 = arith.constant 0 : i32
    return %c0_i32, %arg1 : i32, i32
  }
  func.func @transform_6(%arg0: i32, %arg1: i32, %arg2: i32) -> (i32, i32) {
    %c0_i32 = arith.constant 0 : i32
    return %arg0, %arg1 : i32, i32
  }
}

module attributes {stable_mosaic.version = 11 : i64} {
  func.func @_mm_kernel(%arg0: i32, %arg1: i32, %arg2: i32, %arg3: memref<128x128xbf16, #tpu.memory_space<vmem>>, %arg4: memref<128x128xbf16, #tpu.memory_space<vmem>>, %arg5: memref<1x128xf32, #tpu.memory_space<vmem>>, %arg6: memref<1x128xf32, #tpu.memory_space<vmem>>, %arg7: memref<1x128xf32, #tpu.memory_space<vmem>>, %arg8: memref<1x128xf32, #tpu.memory_space<vmem>>, %arg9: memref<128x128xbf16, #tpu.memory_space<vmem>>, %arg10: memref<128x128xf32, #tpu.memory_space<vmem>>) attributes {dimension_semantics = [#tpu.dimension_semantics<parallel>, #tpu.dimension_semantics<parallel>, #tpu.dimension_semantics<arbitrary>], iteration_bounds = array<i64: 1, 1, 1>, scalar_prefetch = 0 : i64, scratch_operands = 1 : i64, tpu.core_type = #tpu.core_type<tc>, window_params = [{transform_indices = @transform_0, window_bounds = array<i64: 128, 128>}, {transform_indices = @transform_1, window_bounds = array<i64: 128, 128>}, {transform_indices = @transform_2, window_bounds = array<i64: 1, 128>}, {transform_indices = @transform_3, window_bounds = array<i64: 1, 128>}, {transform_indices = @transform_4, window_bounds = array<i64: 1, 128>}, {transform_indices = @transform_5, window_bounds = array<i64: 1, 128>}, {transform_indices = @transform_6, window_bounds = array<i64: 128, 128>}]} {
    %c0_i32 = arith.constant 0 : i32
    %0 = arith.cmpi eq, %arg2, %c0_i32 : i32
    %1 = arith.extui %0 : i1 to i32
    %c0_i32_0 = arith.constant 0 : i32
    %2 = arith.cmpi ne, %1, %c0_i32_0 : i32
    scf.if %2 {
      %cst_10 = arith.constant 0.000000e+00 : f32
      %12 = vector.broadcast %cst_10 : f32 to vector<128x128xf32>
      %c0_11 = arith.constant 0 : index
      %c0_12 = arith.constant 0 : index
      %13 = vector.load %arg10[%c0_11, %c0_12] : memref<128x128xf32, #tpu.memory_space<vmem>>, vector<128x128xf32>
      tpu.vector_store %arg10[%c0_11, %c0_12], %12 {strides = array<i32>} : memref<128x128xf32, #tpu.memory_space<vmem>>, vector<128x128xf32>,
    } else {
    }
    %c0 = arith.constant 0 : index
    %c0_1 = arith.constant 0 : index
    %3 = vector.load %arg3[%c0, %c0_1] : memref<128x128xbf16, #tpu.memory_space<vmem>>, vector<128x128xbf16>
    %c0_2 = arith.constant 0 : index
    %c0_3 = arith.constant 0 : index
    %4 = vector.load %arg10[%c0_2, %c0_3] : memref<128x128xf32, #tpu.memory_space<vmem>>, vector<128x128xf32>
    %c0_4 = arith.constant 0 : index
    %c0_5 = arith.constant 0 : index
    %5 = vector.load %arg4[%c0_4, %c0_5] : memref<128x128xbf16, #tpu.memory_space<vmem>>, vector<128x128xbf16>
    %cst = arith.constant dense<0.000000e+00> : vector<128x128xf32>
    %6 = tpu.matmul %3, %5, %cst {dimension_numbers = #tpu.dot_dimension_numbers<[1], [0], [0], [1], [0, 0, 1, 1], [], []>} : vector<128x128xbf16>, vector<128x128xbf16>, vector<128x128xf32> -> vector<128x128xf32>
    %7 = arith.addf %4, %6 : vector<128x128xf32>
    %c0_6 = arith.constant 0 : index
    %c0_7 = arith.constant 0 : index
    %8 = vector.load %arg10[%c0_6, %c0_7] : memref<128x128xf32, #tpu.memory_space<vmem>>, vector<128x128xf32>
    tpu.vector_store %arg10[%c0_6, %c0_7], %7 {strides = array<i32>} : memref<128x128xf32, #tpu.memory_space<vmem>>, vector<128x128xf32>,
    %c0_i32_8 = arith.constant 0 : i32
    %9 = arith.cmpi eq, %arg2, %c0_i32_8 : i32
    %10 = arith.extui %9 : i1 to i32
    %c0_i32_9 = arith.constant 0 : i32
    %11 = arith.cmpi ne, %10, %c0_i32_9 : i32
    scf.if %11 {
      %c0_10 = arith.constant 0 : index
      %c0_11 = arith.constant 0 : index
      %12 = vector.load %arg10[%c0_10, %c0_11] : memref<128x128xf32, #tpu.memory_space<vmem>>, vector<128x128xf32>
      %c0_12 = arith.constant 0 : index
      %c0_13 = arith.constant 0 : index
      %13 = vector.load %arg7[%c0_12, %c0_13] : memref<1x128xf32, #tpu.memory_space<vmem>>, vector<1x128xf32>
      %14 = vector.broadcast %13 : vector<1x128xf32> to vector<128x128xf32>
      %15 = arith.mulf %12, %14 : vector<128x128xf32>
      %c0_14 = arith.constant 0 : index
      %c0_15 = arith.constant 0 : index
      %16 = vector.load %arg8[%c0_14, %c0_15] : memref<1x128xf32, #tpu.memory_space<vmem>>, vector<1x128xf32>
      %17 = vector.broadcast %16 : vector<1x128xf32> to vector<128x128xf32>
      %18 = arith.addf %15, %17 : vector<128x128xf32>
      %cst_16 = arith.constant 0.000000e+00 : f32
      %19 = vector.broadcast %cst_16 : f32 to vector<128x128xf32>
      %20 = arith.maximumf %18, %19 : vector<128x128xf32>
      %21 = arith.truncf %20 : vector<128x128xf32> to vector<128x128xbf16>
      %c0_17 = arith.constant 0 : index
      %c0_18 = arith.constant 0 : index
      %22 = vector.load %arg9[%c0_17, %c0_18] : memref<128x128xbf16, #tpu.memory_space<vmem>>, vector<128x128xbf16>
      tpu.vector_store %arg9[%c0_17, %c0_18], %21 {strides = array<i32>} : memref<128x128xbf16, #tpu.memory_space<vmem>>, vector<128x128xbf16>,
    } else {
    }
    return
  }
  func.func @transform_0(%arg0: i32, %arg1: i32, %arg2: i32) -> (i32, i32) {
    %c0_i32 = arith.constant 0 : i32
    return %arg0, %arg2 : i32, i32
  }
  func.func @transform_1(%arg0: i32, %arg1: i32, %arg2: i32) -> (i32, i32) {
    %c0_i32 = arith.constant 0 : i32
    return %arg2, %arg1 : i32, i32
  }
  func.func @transform_2(%arg0: i32, %arg1: i32, %arg2: i32) -> (i32, i32) {
    %c0_i32 = arith.constant 0 : i32
    %c0_i32_0 = arith.constant 0 : i32
    return %c0_i32, %arg2 : i32, i32
  }
  func.func @transform_3(%arg0: i32, %arg1: i32, %arg2: i32) -> (i32, i32) {
    %c0_i32 = arith.constant 0 : i32
    %c0_i32_0 = arith.constant 0 : i32
    return %c0_i32, %arg2 : i32, i32
  }
  func.func @transform_4(%arg0: i32, %arg1: i32, %arg2: i32) -> (i32, i32) {
    %c0_i32 = arith.constant 0 : i32
    %c0_i32_0 = arith.constant 0 : i32
    return %c0_i32, %arg1 : i32, i32
  }
  func.func @transform_5(%arg0: i32, %arg1: i32, %arg2: i32) -> (i32, i32) {
    %c0_i32 = arith.constant 0 : i32
    %c0_i32_0 = arith.constant 0 : i32
    return %c0_i32, %arg1 : i32, i32
  }
  func.func @transform_6(%arg0: i32, %arg1: i32, %arg2: i32) -> (i32, i32) {
    %c0_i32 = arith.constant 0 : i32
    return %arg0, %arg1 : i32, i32
  }
}

module attributes {stable_mosaic.version = 11 : i64} {
  func.func @_mm_kernel(%arg0: i32, %arg1: i32, %arg2: i32, %arg3: memref<128x128xbf16, #tpu.memory_space<vmem>>, %arg4: memref<128x128xbf16, #tpu.memory_space<vmem>>, %arg5: memref<1x128xf32, #tpu.memory_space<vmem>>, %arg6: memref<1x128xf32, #tpu.memory_space<vmem>>, %arg7: memref<1x128xf32, #tpu.memory_space<vmem>>, %arg8: memref<1x128xf32, #tpu.memory_space<vmem>>, %arg9: memref<128x128xbf16, #tpu.memory_space<vmem>>, %arg10: memref<128x128xf32, #tpu.memory_space<vmem>>) attributes {dimension_semantics = [#tpu.dimension_semantics<parallel>, #tpu.dimension_semantics<parallel>, #tpu.dimension_semantics<arbitrary>], iteration_bounds = array<i64: 1, 1, 1>, scalar_prefetch = 0 : i64, scratch_operands = 1 : i64, tpu.core_type = #tpu.core_type<tc>, window_params = [{transform_indices = @transform_0, window_bounds = array<i64: 128, 128>}, {transform_indices = @transform_1, window_bounds = array<i64: 128, 128>}, {transform_indices = @transform_2, window_bounds = array<i64: 1, 128>}, {transform_indices = @transform_3, window_bounds = array<i64: 1, 128>}, {transform_indices = @transform_4, window_bounds = array<i64: 1, 128>}, {transform_indices = @transform_5, window_bounds = array<i64: 1, 128>}, {transform_indices = @transform_6, window_bounds = array<i64: 128, 128>}]} {
    %c0_i32 = arith.constant 0 : i32
    %0 = arith.cmpi eq, %arg2, %c0_i32 : i32
    %1 = arith.extui %0 : i1 to i32
    %c0_i32_0 = arith.constant 0 : i32
    %2 = arith.cmpi ne, %1, %c0_i32_0 : i32
    scf.if %2 {
      %cst_15 = arith.constant 0.000000e+00 : f32
      %22 = vector.broadcast %cst_15 : f32 to vector<128x128xf32>
      %c0_16 = arith.constant 0 : index
      %c0_17 = arith.constant 0 : index
      %23 = vector.load %arg10[%c0_16, %c0_17] : memref<128x128xf32, #tpu.memory_space<vmem>>, vector<128x128xf32>
      tpu.vector_store %arg10[%c0_16, %c0_17], %22 {strides = array<i32>} : memref<128x128xf32, #tpu.memory_space<vmem>>, vector<128x128xf32>,
    } else {
    }
    %c0 = arith.constant 0 : index
    %c0_1 = arith.constant 0 : index
    %3 = vector.load %arg3[%c0, %c0_1] : memref<128x128xbf16, #tpu.memory_space<vmem>>, vector<128x128xbf16>
    %4 = arith.extf %3 : vector<128x128xbf16> to vector<128x128xf32>
    %c0_2 = arith.constant 0 : index
    %c0_3 = arith.constant 0 : index
    %5 = vector.load %arg5[%c0_2, %c0_3] : memref<1x128xf32, #tpu.memory_space<vmem>>, vector<1x128xf32>
    %6 = vector.broadcast %5 : vector<1x128xf32> to vector<128x128xf32>
    %7 = arith.mulf %4, %6 : vector<128x128xf32>
    %c0_4 = arith.constant 0 : index
    %c0_5 = arith.constant 0 : index
    %8 = vector.load %arg6[%c0_4, %c0_5] : memref<1x128xf32, #tpu.memory_space<vmem>>, vector<1x128xf32>
    %9 = vector.broadcast %8 : vector<1x128xf32> to vector<128x128xf32>
    %10 = arith.addf %7, %9 : vector<128x128xf32>
    %cst = arith.constant 0.000000e+00 : f32
    %11 = vector.broadcast %cst : f32 to vector<128x128xf32>
    %12 = arith.maximumf %10, %11 : vector<128x128xf32>
    %13 = arith.truncf %12 : vector<128x128xf32> to vector<128x128xbf16>
    %c0_6 = arith.constant 0 : index
    %c0_7 = arith.constant 0 : index
    %14 = vector.load %arg10[%c0_6, %c0_7] : memref<128x128xf32, #tpu.memory_space<vmem>>, vector<128x128xf32>
    %c0_8 = arith.constant 0 : index
    %c0_9 = arith.constant 0 : index
    %15 = vector.load %arg4[%c0_8, %c0_9] : memref<128x128xbf16, #tpu.memory_space<vmem>>, vector<128x128xbf16>
    %cst_10 = arith.constant dense<0.000000e+00> : vector<128x128xf32>
    %16 = tpu.matmul %13, %15, %cst_10 {dimension_numbers = #tpu.dot_dimension_numbers<[1], [0], [0], [1], [0, 0, 1, 1], [], []>} : vector<128x128xbf16>, vector<128x128xbf16>, vector<128x128xf32> -> vector<128x128xf32>
    %17 = arith.addf %14, %16 : vector<128x128xf32>
    %c0_11 = arith.constant 0 : index
    %c0_12 = arith.constant 0 : index
    %18 = vector.load %arg10[%c0_11, %c0_12] : memref<128x128xf32, #tpu.memory_space<vmem>>, vector<128x128xf32>
    tpu.vector_store %arg10[%c0_11, %c0_12], %17 {strides = array<i32>} : memref<128x128xf32, #tpu.memory_space<vmem>>, vector<128x128xf32>,
    %c0_i32_13 = arith.constant 0 : i32
    %19 = arith.cmpi eq, %arg2, %c0_i32_13 : i32
    %20 = arith.extui %19 : i1 to i32
    %c0_i32_14 = arith.constant 0 : i32
    %21 = arith.cmpi ne, %20, %c0_i32_14 : i32
    scf.if %21 {
      %c0_15 = arith.constant 0 : index
      %c0_16 = arith.constant 0 : index
      %22 = vector.load %arg10[%c0_15, %c0_16] : memref<128x128xf32, #tpu.memory_space<vmem>>, vector<128x128xf32>
      %c0_17 = arith.constant 0 : index
      %c0_18 = arith.constant 0 : index
      %23 = vector.load %arg7[%c0_17, %c0_18] : memref<1x128xf32, #tpu.memory_space<vmem>>, vector<1x128xf32>
      %24 = vector.broadcast %23 : vector<1x128xf32> to vector<128x128xf32>
      %25 = arith.mulf %22, %24 : vector<128x128xf32>
      %c0_19 = arith.constant 0 : index
      %c0_20 = arith.constant 0 : index
      %26 = vector.load %arg8[%c0_19, %c0_20] : memref<1x128xf32, #tpu.memory_space<vmem>>, vector<1x128xf32>
      %27 = vector.broadcast %26 : vector<1x128xf32> to vector<128x128xf32>
      %28 = arith.addf %25, %27 : vector<128x128xf32>
      %cst_21 = arith.constant 0.000000e+00 : f32
      %29 = vector.broadcast %cst_21 : f32 to vector<128x128xf32>
      %30 = arith.maximumf %28, %29 : vector<128x128xf32>
      %31 = arith.truncf %30 : vector<128x128xf32> to vector<128x128xbf16>
      %c0_22 = arith.constant 0 : index
      %c0_23 = arith.constant 0 : index
      %32 = vector.load %arg9[%c0_22, %c0_23] : memref<128x128xbf16, #tpu.memory_space<vmem>>, vector<128x128xbf16>
      tpu.vector_store %arg9[%c0_22, %c0_23], %31 {strides = array<i32>} : memref<128x128xbf16, #tpu.memory_space<vmem>>, vector<128x128xbf16>,
    } else {
    }
    return
  }
  func.func @transform_0(%arg0: i32, %arg1: i32, %arg2: i32) -> (i32, i32) {
    %c0_i32 = arith.constant 0 : i32
    return %arg0, %arg2 : i32, i32
  }
  func.func @transform_1(%arg0: i32, %arg1: i32, %arg2: i32) -> (i32, i32) {
    %c0_i32 = arith.constant 0 : i32
    return %arg2, %arg1 : i32, i32
  }
  func.func @transform_2(%arg0: i32, %arg1: i32, %arg2: i32) -> (i32, i32) {
    %c0_i32 = arith.constant 0 : i32
    %c0_i32_0 = arith.constant 0 : i32
    return %c0_i32, %arg2 : i32, i32
  }
  func.func @transform_3(%arg0: i32, %arg1: i32, %arg2: i32) -> (i32, i32) {
    %c0_i32 = arith.constant 0 : i32
    %c0_i32_0 = arith.constant 0 : i32
    return %c0_i32, %arg2 : i32, i32
  }
  func.func @transform_4(%arg0: i32, %arg1: i32, %arg2: i32) -> (i32, i32) {
    %c0_i32 = arith.constant 0 : i32
    %c0_i32_0 = arith.constant 0 : i32
    return %c0_i32, %arg1 : i32, i32
  }
  func.func @transform_5(%arg0: i32, %arg1: i32, %arg2: i32) -> (i32, i32) {
    %c0_i32 = arith.constant 0 : i32
    %c0_i32_0 = arith.constant 0 : i32
    return %c0_i32, %arg1 : i32, i32
  }
  func.func @transform_6(%arg0: i32, %arg1: i32, %arg2: i32) -> (i32, i32) {
    %c0_i32 = arith.constant 0 : i32
    return %arg0, %arg1 : i32, i32
  }
}

module attributes {stable_mosaic.version = 11 : i64} {
  func.func @_mm_kernel(%arg0: i32, %arg1: i32, %arg2: i32, %arg3: memref<32x128xbf16, #tpu.memory_space<vmem>>, %arg4: memref<128x128xbf16, #tpu.memory_space<vmem>>, %arg5: memref<1x128xf32, #tpu.memory_space<vmem>>, %arg6: memref<1x128xf32, #tpu.memory_space<vmem>>, %arg7: memref<1x128xf32, #tpu.memory_space<vmem>>, %arg8: memref<1x128xf32, #tpu.memory_space<vmem>>, %arg9: memref<32x128xbf16, #tpu.memory_space<vmem>>, %arg10: memref<32x128xf32, #tpu.memory_space<vmem>>) attributes {dimension_semantics = [#tpu.dimension_semantics<parallel>, #tpu.dimension_semantics<parallel>, #tpu.dimension_semantics<arbitrary>], iteration_bounds = array<i64: 1, 1, 1>, scalar_prefetch = 0 : i64, scratch_operands = 1 : i64, tpu.core_type = #tpu.core_type<tc>, window_params = [{transform_indices = @transform_0, window_bounds = array<i64: 32, 128>}, {transform_indices = @transform_1, window_bounds = array<i64: 128, 128>}, {transform_indices = @transform_2, window_bounds = array<i64: 1, 128>}, {transform_indices = @transform_3, window_bounds = array<i64: 1, 128>}, {transform_indices = @transform_4, window_bounds = array<i64: 1, 128>}, {transform_indices = @transform_5, window_bounds = array<i64: 1, 128>}, {transform_indices = @transform_6, window_bounds = array<i64: 32, 128>}]} {
    %c0_i32 = arith.constant 0 : i32
    %0 = arith.cmpi eq, %arg2, %c0_i32 : i32
    %1 = arith.extui %0 : i1 to i32
    %c0_i32_0 = arith.constant 0 : i32
    %2 = arith.cmpi ne, %1, %c0_i32_0 : i32
    scf.if %2 {
      %cst_10 = arith.constant 0.000000e+00 : f32
      %12 = vector.broadcast %cst_10 : f32 to vector<32x128xf32>
      %c0_11 = arith.constant 0 : index
      %c0_12 = arith.constant 0 : index
      %13 = vector.load %arg10[%c0_11, %c0_12] : memref<32x128xf32, #tpu.memory_space<vmem>>, vector<32x128xf32>
      tpu.vector_store %arg10[%c0_11, %c0_12], %12 {strides = array<i32>} : memref<32x128xf32, #tpu.memory_space<vmem>>, vector<32x128xf32>,
    } else {
    }
    %c0 = arith.constant 0 : index
    %c0_1 = arith.constant 0 : index
    %3 = vector.load %arg3[%c0, %c0_1] : memref<32x128xbf16, #tpu.memory_space<vmem>>, vector<32x128xbf16>
    %c0_2 = arith.constant 0 : index
    %c0_3 = arith.constant 0 : index
    %4 = vector.load %arg10[%c0_2, %c0_3] : memref<32x128xf32, #tpu.memory_space<vmem>>, vector<32x128xf32>
    %c0_4 = arith.constant 0 : index
    %c0_5 = arith.constant 0 : index
    %5 = vector.load %arg4[%c0_4, %c0_5] : memref<128x128xbf16, #tpu.memory_space<vmem>>, vector<128x128xbf16>
    %cst = arith.constant dense<0.000000e+00> : vector<32x128xf32>
    %6 = tpu.matmul %3, %5, %cst {dimension_numbers = #tpu.dot_dimension_numbers<[1], [0], [0], [1], [0, 0, 1, 1], [], []>} : vector<32x128xbf16>, vector<128x128xbf16>, vector<32x128xf32> -> vector<32x128xf32>
    %7 = arith.addf %4, %6 : vector<32x128xf32>
    %c0_6 = arith.constant 0 : index
    %c0_7 = arith.constant 0 : index
    %8 = vector.load %arg10[%c0_6, %c0_7] : memref<32x128xf32, #tpu.memory_space<vmem>>, vector<32x128xf32>
    tpu.vector_store %arg10[%c0_6, %c0_7], %7 {strides = array<i32>} : memref<32x128xf32, #tpu.memory_space<vmem>>, vector<32x128xf32>,
    %c0_i32_8 = arith.constant 0 : i32
    %9 = arith.cmpi eq, %arg2, %c0_i32_8 : i32
    %10 = arith.extui %9 : i1 to i32
    %c0_i32_9 = arith.constant 0 : i32
    %11 = arith.cmpi ne, %10, %c0_i32_9 : i32
    scf.if %11 {
      %c0_10 = arith.constant 0 : index
      %c0_11 = arith.constant 0 : index
      %12 = vector.load %arg10[%c0_10, %c0_11] : memref<32x128xf32, #tpu.memory_space<vmem>>, vector<32x128xf32>
      %13 = arith.truncf %12 : vector<32x128xf32> to vector<32x128xbf16>
      %c0_12 = arith.constant 0 : index
      %c0_13 = arith.constant 0 : index
      %14 = vector.load %arg9[%c0_12, %c0_13] : memref<32x128xbf16, #tpu.memory_space<vmem>>, vector<32x128xbf16>
      tpu.vector_store %arg9[%c0_12, %c0_13], %13 {strides = array<i32>} : memref<32x128xbf16, #tpu.memory_space<vmem>>, vector<32x128xbf16>,
    } else {
    }
    return
  }
  func.func @transform_0(%arg0: i32, %arg1: i32, %arg2: i32) -> (i32, i32) {
    %c0_i32 = arith.constant 0 : i32
    return %arg0, %arg2 : i32, i32
  }
  func.func @transform_1(%arg0: i32, %arg1: i32, %arg2: i32) -> (i32, i32) {
    %c0_i32 = arith.constant 0 : i32
    return %arg2, %arg1 : i32, i32
  }
  func.func @transform_2(%arg0: i32, %arg1: i32, %arg2: i32) -> (i32, i32) {
    %c0_i32 = arith.constant 0 : i32
    %c0_i32_0 = arith.constant 0 : i32
    return %c0_i32, %arg2 : i32, i32
  }
  func.func @transform_3(%arg0: i32, %arg1: i32, %arg2: i32) -> (i32, i32) {
    %c0_i32 = arith.constant 0 : i32
    %c0_i32_0 = arith.constant 0 : i32
    return %c0_i32, %arg2 : i32, i32
  }
  func.func @transform_4(%arg0: i32, %arg1: i32, %arg2: i32) -> (i32, i32) {
    %c0_i32 = arith.constant 0 : i32
    %c0_i32_0 = arith.constant 0 : i32
    return %c0_i32, %arg1 : i32, i32
  }
  func.func @transform_5(%arg0: i32, %arg1: i32, %arg2: i32) -> (i32, i32) {
    %c0_i32 = arith.constant 0 : i32
    %c0_i32_0 = arith.constant 0 : i32
    return %c0_i32, %arg1 : i32, i32
  }
  func.func @transform_6(%arg0: i32, %arg1: i32, %arg2: i32) -> (i32, i32) {
    %c0_i32 = arith.constant 0 : i32
    return %arg0, %arg1 : i32, i32
  }
}

module attributes {stable_mosaic.version = 11 : i64} {
  func.func @_pool_bn_relu_kernel(%arg0: i32, %arg1: memref<8x2x4x32xbf16, #tpu.memory_space<vmem>>, %arg2: memref<1x16xf32, #tpu.memory_space<vmem>>, %arg3: memref<1x16xf32, #tpu.memory_space<vmem>>, %arg4: memref<8x4x16xbf16, #tpu.memory_space<vmem>>) attributes {dimension_semantics = [#tpu.dimension_semantics<parallel>], iteration_bounds = array<i64: 1>, scalar_prefetch = 0 : i64, scratch_operands = 0 : i64, tpu.core_type = #tpu.core_type<tc>, window_params = [{transform_indices = @transform_0, window_bounds = array<i64: 8, 2, 4, 32>}, {pipeline_mode = #tpu.pipeline_mode<synchronous>, transform_indices = @transform_1, window_bounds = array<i64: 1, 16>}, {pipeline_mode = #tpu.pipeline_mode<synchronous>, transform_indices = @transform_2, window_bounds = array<i64: 1, 16>}, {transform_indices = @transform_3, window_bounds = array<i64: 8, 4, 16>}]} {
    %c0 = arith.constant 0 : index
    %c0_0 = arith.constant 0 : index
    %0 = vector.load %arg2[%c0, %c0_0] : memref<1x16xf32, #tpu.memory_space<vmem>>, vector<1x16xf32>
    %c0_1 = arith.constant 0 : index
    %c0_2 = arith.constant 0 : index
    %1 = vector.load %arg3[%c0_1, %c0_2] : memref<1x16xf32, #tpu.memory_space<vmem>>, vector<1x16xf32>
    %c0_3 = arith.constant 0 : index
    %c0_4 = arith.constant 0 : index
    %c0_5 = arith.constant 0 : index
    %c0_6 = arith.constant 0 : index
    %2 = vector.load %arg1[%c0_3, %c0_4, %c0_5, %c0_6] : memref<8x2x4x32xbf16, #tpu.memory_space<vmem>>, vector<8x1x4x32xbf16>
    %3 = vector.shape_cast %2 : vector<8x1x4x32xbf16> to vector<8x4x32xbf16>
    %c0_7 = arith.constant 0 : index
    %c1 = arith.constant 1 : index
    %c0_8 = arith.constant 0 : index
    %c0_9 = arith.constant 0 : index
    %4 = vector.load %arg1[%c0_7, %c1, %c0_8, %c0_9] : memref<8x2x4x32xbf16, #tpu.memory_space<vmem>>, vector<8x1x4x32xbf16>
    %5 = vector.shape_cast %4 : vector<8x1x4x32xbf16> to vector<8x4x32xbf16>
    %6 = vector.extract_strided_slice %3 {offsets = [0, 0, 0], sizes = [8, 4, 16], strides = [1, 1, 1]} : vector<8x4x32xbf16> to vector<8x4x16xbf16>
    %7 = arith.extf %6 : vector<8x4x16xbf16> to vector<8x4x16xf32>
    %8 = vector.shape_cast %0 : vector<1x16xf32> to vector<1x1x16xf32>
    %9 = vector.broadcast %8 : vector<1x1x16xf32> to vector<8x4x16xf32>
    %10 = arith.mulf %7, %9 : vector<8x4x16xf32>
    %11 = vector.shape_cast %1 : vector<1x16xf32> to vector<1x1x16xf32>
    %12 = vector.broadcast %11 : vector<1x1x16xf32> to vector<8x4x16xf32>
    %13 = arith.addf %10, %12 : vector<8x4x16xf32>
    %cst = arith.constant 0.000000e+00 : f32
    %14 = vector.broadcast %cst : f32 to vector<8x4x16xf32>
    %15 = arith.maximumf %13, %14 : vector<8x4x16xf32>
    %16 = vector.extract_strided_slice %3 {offsets = [0, 0, 16], sizes = [8, 4, 16], strides = [1, 1, 1]} : vector<8x4x32xbf16> to vector<8x4x16xbf16>
    %17 = arith.extf %16 : vector<8x4x16xbf16> to vector<8x4x16xf32>
    %18 = vector.shape_cast %0 : vector<1x16xf32> to vector<1x1x16xf32>
    %19 = vector.broadcast %18 : vector<1x1x16xf32> to vector<8x4x16xf32>
    %20 = arith.mulf %17, %19 : vector<8x4x16xf32>
    %21 = vector.shape_cast %1 : vector<1x16xf32> to vector<1x1x16xf32>
    %22 = vector.broadcast %21 : vector<1x1x16xf32> to vector<8x4x16xf32>
    %23 = arith.addf %20, %22 : vector<8x4x16xf32>
    %cst_10 = arith.constant 0.000000e+00 : f32
    %24 = vector.broadcast %cst_10 : f32 to vector<8x4x16xf32>
    %25 = arith.maximumf %23, %24 : vector<8x4x16xf32>
    %26 = arith.addf %15, %25 : vector<8x4x16xf32>
    %27 = vector.extract_strided_slice %5 {offsets = [0, 0, 0], sizes = [8, 4, 16], strides = [1, 1, 1]} : vector<8x4x32xbf16> to vector<8x4x16xbf16>
    %28 = arith.extf %27 : vector<8x4x16xbf16> to vector<8x4x16xf32>
    %29 = vector.shape_cast %0 : vector<1x16xf32> to vector<1x1x16xf32>
    %30 = vector.broadcast %29 : vector<1x1x16xf32> to vector<8x4x16xf32>
    %31 = arith.mulf %28, %30 : vector<8x4x16xf32>
    %32 = vector.shape_cast %1 : vector<1x16xf32> to vector<1x1x16xf32>
    %33 = vector.broadcast %32 : vector<1x1x16xf32> to vector<8x4x16xf32>
    %34 = arith.addf %31, %33 : vector<8x4x16xf32>
    %cst_11 = arith.constant 0.000000e+00 : f32
    %35 = vector.broadcast %cst_11 : f32 to vector<8x4x16xf32>
    %36 = arith.maximumf %34, %35 : vector<8x4x16xf32>
    %37 = arith.addf %26, %36 : vector<8x4x16xf32>
    %38 = vector.extract_strided_slice %5 {offsets = [0, 0, 16], sizes = [8, 4, 16], strides = [1, 1, 1]} : vector<8x4x32xbf16> to vector<8x4x16xbf16>
    %39 = arith.extf %38 : vector<8x4x16xbf16> to vector<8x4x16xf32>
    %40 = vector.shape_cast %0 : vector<1x16xf32> to vector<1x1x16xf32>
    %41 = vector.broadcast %40 : vector<1x1x16xf32> to vector<8x4x16xf32>
    %42 = arith.mulf %39, %41 : vector<8x4x16xf32>
    %43 = vector.shape_cast %1 : vector<1x16xf32> to vector<1x1x16xf32>
    %44 = vector.broadcast %43 : vector<1x1x16xf32> to vector<8x4x16xf32>
    %45 = arith.addf %42, %44 : vector<8x4x16xf32>
    %cst_12 = arith.constant 0.000000e+00 : f32
    %46 = vector.broadcast %cst_12 : f32 to vector<8x4x16xf32>
    %47 = arith.maximumf %45, %46 : vector<8x4x16xf32>
    %48 = arith.addf %37, %47 : vector<8x4x16xf32>
    %cst_13 = arith.constant 2.500000e-01 : f32
    %49 = vector.broadcast %cst_13 : f32 to vector<8x4x16xf32>
    %50 = arith.mulf %48, %49 : vector<8x4x16xf32>
    %51 = arith.truncf %50 : vector<8x4x16xf32> to vector<8x4x16xbf16>
    %c0_14 = arith.constant 0 : index
    %c0_15 = arith.constant 0 : index
    %c0_16 = arith.constant 0 : index
    %52 = vector.load %arg4[%c0_14, %c0_15, %c0_16] : memref<8x4x16xbf16, #tpu.memory_space<vmem>>, vector<8x4x16xbf16>
    tpu.vector_store %arg4[%c0_14, %c0_15, %c0_16], %51 {strides = array<i32>} : memref<8x4x16xbf16, #tpu.memory_space<vmem>>, vector<8x4x16xbf16>,
    return
  }
  func.func @transform_0(%arg0: i32) -> (i32, i32, i32, i32) {
    %c0_i32 = arith.constant 0 : i32
    %c0_i32_0 = arith.constant 0 : i32
    %c0_i32_1 = arith.constant 0 : i32
    %c0_i32_2 = arith.constant 0 : i32
    return %arg0, %c0_i32, %c0_i32_0, %c0_i32_1 : i32, i32, i32, i32
  }
  func.func @transform_1(%arg0: i32) -> (i32, i32) {
    %c0_i32 = arith.constant 0 : i32
    %c0_i32_0 = arith.constant 0 : i32
    %c0_i32_1 = arith.constant 0 : i32
    return %c0_i32, %c0_i32_0 : i32, i32
  }
  func.func @transform_2(%arg0: i32) -> (i32, i32) {
    %c0_i32 = arith.constant 0 : i32
    %c0_i32_0 = arith.constant 0 : i32
    %c0_i32_1 = arith.constant 0 : i32
    return %c0_i32, %c0_i32_0 : i32, i32
  }
  func.func @transform_3(%arg0: i32) -> (i32, i32, i32) {
    %c0_i32 = arith.constant 0 : i32
    %c0_i32_0 = arith.constant 0 : i32
    %c0_i32_1 = arith.constant 0 : i32
    return %arg0, %c0_i32, %c0_i32_0 : i32, i32, i32
  }
}

module attributes {stable_mosaic.version = 11 : i64} {
  func.func @_mm_kernel(%arg0: i32, %arg1: i32, %arg2: i32, %arg3: memref<32x128xbf16, #tpu.memory_space<vmem>>, %arg4: memref<128x128xbf16, #tpu.memory_space<vmem>>, %arg5: memref<1x128xf32, #tpu.memory_space<vmem>>, %arg6: memref<1x128xf32, #tpu.memory_space<vmem>>, %arg7: memref<1x128xf32, #tpu.memory_space<vmem>>, %arg8: memref<1x128xf32, #tpu.memory_space<vmem>>, %arg9: memref<32x128xbf16, #tpu.memory_space<vmem>>, %arg10: memref<32x128xf32, #tpu.memory_space<vmem>>) attributes {dimension_semantics = [#tpu.dimension_semantics<parallel>, #tpu.dimension_semantics<parallel>, #tpu.dimension_semantics<arbitrary>], iteration_bounds = array<i64: 1, 1, 1>, scalar_prefetch = 0 : i64, scratch_operands = 1 : i64, tpu.core_type = #tpu.core_type<tc>, window_params = [{transform_indices = @transform_0, window_bounds = array<i64: 32, 128>}, {transform_indices = @transform_1, window_bounds = array<i64: 128, 128>}, {transform_indices = @transform_2, window_bounds = array<i64: 1, 128>}, {transform_indices = @transform_3, window_bounds = array<i64: 1, 128>}, {transform_indices = @transform_4, window_bounds = array<i64: 1, 128>}, {transform_indices = @transform_5, window_bounds = array<i64: 1, 128>}, {transform_indices = @transform_6, window_bounds = array<i64: 32, 128>}]} {
    %c0_i32 = arith.constant 0 : i32
    %0 = arith.cmpi eq, %arg2, %c0_i32 : i32
    %1 = arith.extui %0 : i1 to i32
    %c0_i32_0 = arith.constant 0 : i32
    %2 = arith.cmpi ne, %1, %c0_i32_0 : i32
    scf.if %2 {
      %cst_10 = arith.constant 0.000000e+00 : f32
      %12 = vector.broadcast %cst_10 : f32 to vector<32x128xf32>
      %c0_11 = arith.constant 0 : index
      %c0_12 = arith.constant 0 : index
      %13 = vector.load %arg10[%c0_11, %c0_12] : memref<32x128xf32, #tpu.memory_space<vmem>>, vector<32x128xf32>
      tpu.vector_store %arg10[%c0_11, %c0_12], %12 {strides = array<i32>} : memref<32x128xf32, #tpu.memory_space<vmem>>, vector<32x128xf32>,
    } else {
    }
    %c0 = arith.constant 0 : index
    %c0_1 = arith.constant 0 : index
    %3 = vector.load %arg3[%c0, %c0_1] : memref<32x128xbf16, #tpu.memory_space<vmem>>, vector<32x128xbf16>
    %c0_2 = arith.constant 0 : index
    %c0_3 = arith.constant 0 : index
    %4 = vector.load %arg10[%c0_2, %c0_3] : memref<32x128xf32, #tpu.memory_space<vmem>>, vector<32x128xf32>
    %c0_4 = arith.constant 0 : index
    %c0_5 = arith.constant 0 : index
    %5 = vector.load %arg4[%c0_4, %c0_5] : memref<128x128xbf16, #tpu.memory_space<vmem>>, vector<128x128xbf16>
    %cst = arith.constant dense<0.000000e+00> : vector<32x128xf32>
    %6 = tpu.matmul %3, %5, %cst {dimension_numbers = #tpu.dot_dimension_numbers<[1], [0], [0], [1], [0, 0, 1, 1], [], []>} : vector<32x128xbf16>, vector<128x128xbf16>, vector<32x128xf32> -> vector<32x128xf32>
    %7 = arith.addf %4, %6 : vector<32x128xf32>
    %c0_6 = arith.constant 0 : index
    %c0_7 = arith.constant 0 : index
    %8 = vector.load %arg10[%c0_6, %c0_7] : memref<32x128xf32, #tpu.memory_space<vmem>>, vector<32x128xf32>
    tpu.vector_store %arg10[%c0_6, %c0_7], %7 {strides = array<i32>} : memref<32x128xf32, #tpu.memory_space<vmem>>, vector<32x128xf32>,
    %c0_i32_8 = arith.constant 0 : i32
    %9 = arith.cmpi eq, %arg2, %c0_i32_8 : i32
    %10 = arith.extui %9 : i1 to i32
    %c0_i32_9 = arith.constant 0 : i32
    %11 = arith.cmpi ne, %10, %c0_i32_9 : i32
    scf.if %11 {
      %c0_10 = arith.constant 0 : index
      %c0_11 = arith.constant 0 : index
      %12 = vector.load %arg10[%c0_10, %c0_11] : memref<32x128xf32, #tpu.memory_space<vmem>>, vector<32x128xf32>
      %c0_12 = arith.constant 0 : index
      %c0_13 = arith.constant 0 : index
      %13 = vector.load %arg7[%c0_12, %c0_13] : memref<1x128xf32, #tpu.memory_space<vmem>>, vector<1x128xf32>
      %14 = vector.broadcast %13 : vector<1x128xf32> to vector<32x128xf32>
      %15 = arith.mulf %12, %14 : vector<32x128xf32>
      %c0_14 = arith.constant 0 : index
      %c0_15 = arith.constant 0 : index
      %16 = vector.load %arg8[%c0_14, %c0_15] : memref<1x128xf32, #tpu.memory_space<vmem>>, vector<1x128xf32>
      %17 = vector.broadcast %16 : vector<1x128xf32> to vector<32x128xf32>
      %18 = arith.addf %15, %17 : vector<32x128xf32>
      %cst_16 = arith.constant 0.000000e+00 : f32
      %19 = vector.broadcast %cst_16 : f32 to vector<32x128xf32>
      %20 = arith.maximumf %18, %19 : vector<32x128xf32>
      %21 = arith.truncf %20 : vector<32x128xf32> to vector<32x128xbf16>
      %c0_17 = arith.constant 0 : index
      %c0_18 = arith.constant 0 : index
      %22 = vector.load %arg9[%c0_17, %c0_18] : memref<32x128xbf16, #tpu.memory_space<vmem>>, vector<32x128xbf16>
      tpu.vector_store %arg9[%c0_17, %c0_18], %21 {strides = array<i32>} : memref<32x128xbf16, #tpu.memory_space<vmem>>, vector<32x128xbf16>,
    } else {
    }
    return
  }
  func.func @transform_0(%arg0: i32, %arg1: i32, %arg2: i32) -> (i32, i32) {
    %c0_i32 = arith.constant 0 : i32
    return %arg0, %arg2 : i32, i32
  }
  func.func @transform_1(%arg0: i32, %arg1: i32, %arg2: i32) -> (i32, i32) {
    %c0_i32 = arith.constant 0 : i32
    return %arg2, %arg1 : i32, i32
  }
  func.func @transform_2(%arg0: i32, %arg1: i32, %arg2: i32) -> (i32, i32) {
    %c0_i32 = arith.constant 0 : i32
    %c0_i32_0 = arith.constant 0 : i32
    return %c0_i32, %arg2 : i32, i32
  }
  func.func @transform_3(%arg0: i32, %arg1: i32, %arg2: i32) -> (i32, i32) {
    %c0_i32 = arith.constant 0 : i32
    %c0_i32_0 = arith.constant 0 : i32
    return %c0_i32, %arg2 : i32, i32
  }
  func.func @transform_4(%arg0: i32, %arg1: i32, %arg2: i32) -> (i32, i32) {
    %c0_i32 = arith.constant 0 : i32
    %c0_i32_0 = arith.constant 0 : i32
    return %c0_i32, %arg1 : i32, i32
  }
  func.func @transform_5(%arg0: i32, %arg1: i32, %arg2: i32) -> (i32, i32) {
    %c0_i32 = arith.constant 0 : i32
    %c0_i32_0 = arith.constant 0 : i32
    return %c0_i32, %arg1 : i32, i32
  }
  func.func @transform_6(%arg0: i32, %arg1: i32, %arg2: i32) -> (i32, i32) {
    %c0_i32 = arith.constant 0 : i32
    return %arg0, %arg1 : i32, i32
  }
}

module attributes {stable_mosaic.version = 11 : i64} {
  func.func @_mm_kernel(%arg0: i32, %arg1: i32, %arg2: i32, %arg3: memref<32x128xbf16, #tpu.memory_space<vmem>>, %arg4: memref<128x128xbf16, #tpu.memory_space<vmem>>, %arg5: memref<1x128xf32, #tpu.memory_space<vmem>>, %arg6: memref<1x128xf32, #tpu.memory_space<vmem>>, %arg7: memref<1x128xf32, #tpu.memory_space<vmem>>, %arg8: memref<1x128xf32, #tpu.memory_space<vmem>>, %arg9: memref<32x128xbf16, #tpu.memory_space<vmem>>, %arg10: memref<32x128xf32, #tpu.memory_space<vmem>>) attributes {dimension_semantics = [#tpu.dimension_semantics<parallel>, #tpu.dimension_semantics<parallel>, #tpu.dimension_semantics<arbitrary>], iteration_bounds = array<i64: 1, 1, 1>, scalar_prefetch = 0 : i64, scratch_operands = 1 : i64, tpu.core_type = #tpu.core_type<tc>, window_params = [{transform_indices = @transform_0, window_bounds = array<i64: 32, 128>}, {transform_indices = @transform_1, window_bounds = array<i64: 128, 128>}, {transform_indices = @transform_2, window_bounds = array<i64: 1, 128>}, {transform_indices = @transform_3, window_bounds = array<i64: 1, 128>}, {transform_indices = @transform_4, window_bounds = array<i64: 1, 128>}, {transform_indices = @transform_5, window_bounds = array<i64: 1, 128>}, {transform_indices = @transform_6, window_bounds = array<i64: 32, 128>}]} {
    %c0_i32 = arith.constant 0 : i32
    %0 = arith.cmpi eq, %arg2, %c0_i32 : i32
    %1 = arith.extui %0 : i1 to i32
    %c0_i32_0 = arith.constant 0 : i32
    %2 = arith.cmpi ne, %1, %c0_i32_0 : i32
    scf.if %2 {
      %cst_15 = arith.constant 0.000000e+00 : f32
      %22 = vector.broadcast %cst_15 : f32 to vector<32x128xf32>
      %c0_16 = arith.constant 0 : index
      %c0_17 = arith.constant 0 : index
      %23 = vector.load %arg10[%c0_16, %c0_17] : memref<32x128xf32, #tpu.memory_space<vmem>>, vector<32x128xf32>
      tpu.vector_store %arg10[%c0_16, %c0_17], %22 {strides = array<i32>} : memref<32x128xf32, #tpu.memory_space<vmem>>, vector<32x128xf32>,
    } else {
    }
    %c0 = arith.constant 0 : index
    %c0_1 = arith.constant 0 : index
    %3 = vector.load %arg3[%c0, %c0_1] : memref<32x128xbf16, #tpu.memory_space<vmem>>, vector<32x128xbf16>
    %4 = arith.extf %3 : vector<32x128xbf16> to vector<32x128xf32>
    %c0_2 = arith.constant 0 : index
    %c0_3 = arith.constant 0 : index
    %5 = vector.load %arg5[%c0_2, %c0_3] : memref<1x128xf32, #tpu.memory_space<vmem>>, vector<1x128xf32>
    %6 = vector.broadcast %5 : vector<1x128xf32> to vector<32x128xf32>
    %7 = arith.mulf %4, %6 : vector<32x128xf32>
    %c0_4 = arith.constant 0 : index
    %c0_5 = arith.constant 0 : index
    %8 = vector.load %arg6[%c0_4, %c0_5] : memref<1x128xf32, #tpu.memory_space<vmem>>, vector<1x128xf32>
    %9 = vector.broadcast %8 : vector<1x128xf32> to vector<32x128xf32>
    %10 = arith.addf %7, %9 : vector<32x128xf32>
    %cst = arith.constant 0.000000e+00 : f32
    %11 = vector.broadcast %cst : f32 to vector<32x128xf32>
    %12 = arith.maximumf %10, %11 : vector<32x128xf32>
    %13 = arith.truncf %12 : vector<32x128xf32> to vector<32x128xbf16>
    %c0_6 = arith.constant 0 : index
    %c0_7 = arith.constant 0 : index
    %14 = vector.load %arg10[%c0_6, %c0_7] : memref<32x128xf32, #tpu.memory_space<vmem>>, vector<32x128xf32>
    %c0_8 = arith.constant 0 : index
    %c0_9 = arith.constant 0 : index
    %15 = vector.load %arg4[%c0_8, %c0_9] : memref<128x128xbf16, #tpu.memory_space<vmem>>, vector<128x128xbf16>
    %cst_10 = arith.constant dense<0.000000e+00> : vector<32x128xf32>
    %16 = tpu.matmul %13, %15, %cst_10 {dimension_numbers = #tpu.dot_dimension_numbers<[1], [0], [0], [1], [0, 0, 1, 1], [], []>} : vector<32x128xbf16>, vector<128x128xbf16>, vector<32x128xf32> -> vector<32x128xf32>
    %17 = arith.addf %14, %16 : vector<32x128xf32>
    %c0_11 = arith.constant 0 : index
    %c0_12 = arith.constant 0 : index
    %18 = vector.load %arg10[%c0_11, %c0_12] : memref<32x128xf32, #tpu.memory_space<vmem>>, vector<32x128xf32>
    tpu.vector_store %arg10[%c0_11, %c0_12], %17 {strides = array<i32>} : memref<32x128xf32, #tpu.memory_space<vmem>>, vector<32x128xf32>,
    %c0_i32_13 = arith.constant 0 : i32
    %19 = arith.cmpi eq, %arg2, %c0_i32_13 : i32
    %20 = arith.extui %19 : i1 to i32
    %c0_i32_14 = arith.constant 0 : i32
    %21 = arith.cmpi ne, %20, %c0_i32_14 : i32
    scf.if %21 {
      %c0_15 = arith.constant 0 : index
      %c0_16 = arith.constant 0 : index
      %22 = vector.load %arg10[%c0_15, %c0_16] : memref<32x128xf32, #tpu.memory_space<vmem>>, vector<32x128xf32>
      %c0_17 = arith.constant 0 : index
      %c0_18 = arith.constant 0 : index
      %23 = vector.load %arg7[%c0_17, %c0_18] : memref<1x128xf32, #tpu.memory_space<vmem>>, vector<1x128xf32>
      %24 = vector.broadcast %23 : vector<1x128xf32> to vector<32x128xf32>
      %25 = arith.mulf %22, %24 : vector<32x128xf32>
      %c0_19 = arith.constant 0 : index
      %c0_20 = arith.constant 0 : index
      %26 = vector.load %arg8[%c0_19, %c0_20] : memref<1x128xf32, #tpu.memory_space<vmem>>, vector<1x128xf32>
      %27 = vector.broadcast %26 : vector<1x128xf32> to vector<32x128xf32>
      %28 = arith.addf %25, %27 : vector<32x128xf32>
      %cst_21 = arith.constant 0.000000e+00 : f32
      %29 = vector.broadcast %cst_21 : f32 to vector<32x128xf32>
      %30 = arith.maximumf %28, %29 : vector<32x128xf32>
      %31 = arith.truncf %30 : vector<32x128xf32> to vector<32x128xbf16>
      %c0_22 = arith.constant 0 : index
      %c0_23 = arith.constant 0 : index
      %32 = vector.load %arg9[%c0_22, %c0_23] : memref<32x128xbf16, #tpu.memory_space<vmem>>, vector<32x128xbf16>
      tpu.vector_store %arg9[%c0_22, %c0_23], %31 {strides = array<i32>} : memref<32x128xbf16, #tpu.memory_space<vmem>>, vector<32x128xbf16>,
    } else {
    }
    return
  }
  func.func @transform_0(%arg0: i32, %arg1: i32, %arg2: i32) -> (i32, i32) {
    %c0_i32 = arith.constant 0 : i32
    return %arg0, %arg2 : i32, i32
  }
  func.func @transform_1(%arg0: i32, %arg1: i32, %arg2: i32) -> (i32, i32) {
    %c0_i32 = arith.constant 0 : i32
    return %arg2, %arg1 : i32, i32
  }
  func.func @transform_2(%arg0: i32, %arg1: i32, %arg2: i32) -> (i32, i32) {
    %c0_i32 = arith.constant 0 : i32
    %c0_i32_0 = arith.constant 0 : i32
    return %c0_i32, %arg2 : i32, i32
  }
  func.func @transform_3(%arg0: i32, %arg1: i32, %arg2: i32) -> (i32, i32) {
    %c0_i32 = arith.constant 0 : i32
    %c0_i32_0 = arith.constant 0 : i32
    return %c0_i32, %arg2 : i32, i32
  }
  func.func @transform_4(%arg0: i32, %arg1: i32, %arg2: i32) -> (i32, i32) {
    %c0_i32 = arith.constant 0 : i32
    %c0_i32_0 = arith.constant 0 : i32
    return %c0_i32, %arg1 : i32, i32
  }
  func.func @transform_5(%arg0: i32, %arg1: i32, %arg2: i32) -> (i32, i32) {
    %c0_i32 = arith.constant 0 : i32
    %c0_i32_0 = arith.constant 0 : i32
    return %c0_i32, %arg1 : i32, i32
  }
  func.func @transform_6(%arg0: i32, %arg1: i32, %arg2: i32) -> (i32, i32) {
    %c0_i32 = arith.constant 0 : i32
    return %arg0, %arg1 : i32, i32
  }
}

module attributes {stable_mosaic.version = 11 : i64} {
  func.func @_pool_bn_relu_kernel(%arg0: i32, %arg1: memref<4x2x2x32xbf16, #tpu.memory_space<vmem>>, %arg2: memref<1x16xf32, #tpu.memory_space<vmem>>, %arg3: memref<1x16xf32, #tpu.memory_space<vmem>>, %arg4: memref<4x2x16xbf16, #tpu.memory_space<vmem>>) attributes {dimension_semantics = [#tpu.dimension_semantics<parallel>], iteration_bounds = array<i64: 1>, scalar_prefetch = 0 : i64, scratch_operands = 0 : i64, tpu.core_type = #tpu.core_type<tc>, window_params = [{transform_indices = @transform_0, window_bounds = array<i64: 4, 2, 2, 32>}, {pipeline_mode = #tpu.pipeline_mode<synchronous>, transform_indices = @transform_1, window_bounds = array<i64: 1, 16>}, {pipeline_mode = #tpu.pipeline_mode<synchronous>, transform_indices = @transform_2, window_bounds = array<i64: 1, 16>}, {transform_indices = @transform_3, window_bounds = array<i64: 4, 2, 16>}]} {
    %c0 = arith.constant 0 : index
    %c0_0 = arith.constant 0 : index
    %0 = vector.load %arg2[%c0, %c0_0] : memref<1x16xf32, #tpu.memory_space<vmem>>, vector<1x16xf32>
    %c0_1 = arith.constant 0 : index
    %c0_2 = arith.constant 0 : index
    %1 = vector.load %arg3[%c0_1, %c0_2] : memref<1x16xf32, #tpu.memory_space<vmem>>, vector<1x16xf32>
    %c0_3 = arith.constant 0 : index
    %c0_4 = arith.constant 0 : index
    %c0_5 = arith.constant 0 : index
    %c0_6 = arith.constant 0 : index
    %2 = vector.load %arg1[%c0_3, %c0_4, %c0_5, %c0_6] : memref<4x2x2x32xbf16, #tpu.memory_space<vmem>>, vector<4x1x2x32xbf16>
    %3 = vector.shape_cast %2 : vector<4x1x2x32xbf16> to vector<4x2x32xbf16>
    %c0_7 = arith.constant 0 : index
    %c1 = arith.constant 1 : index
    %c0_8 = arith.constant 0 : index
    %c0_9 = arith.constant 0 : index
    %4 = vector.load %arg1[%c0_7, %c1, %c0_8, %c0_9] : memref<4x2x2x32xbf16, #tpu.memory_space<vmem>>, vector<4x1x2x32xbf16>
    %5 = vector.shape_cast %4 : vector<4x1x2x32xbf16> to vector<4x2x32xbf16>
    %6 = vector.extract_strided_slice %3 {offsets = [0, 0, 0], sizes = [4, 2, 16], strides = [1, 1, 1]} : vector<4x2x32xbf16> to vector<4x2x16xbf16>
    %7 = arith.extf %6 : vector<4x2x16xbf16> to vector<4x2x16xf32>
    %8 = vector.shape_cast %0 : vector<1x16xf32> to vector<1x1x16xf32>
    %9 = vector.broadcast %8 : vector<1x1x16xf32> to vector<4x2x16xf32>
    %10 = arith.mulf %7, %9 : vector<4x2x16xf32>
    %11 = vector.shape_cast %1 : vector<1x16xf32> to vector<1x1x16xf32>
    %12 = vector.broadcast %11 : vector<1x1x16xf32> to vector<4x2x16xf32>
    %13 = arith.addf %10, %12 : vector<4x2x16xf32>
    %cst = arith.constant 0.000000e+00 : f32
    %14 = vector.broadcast %cst : f32 to vector<4x2x16xf32>
    %15 = arith.maximumf %13, %14 : vector<4x2x16xf32>
    %16 = vector.extract_strided_slice %3 {offsets = [0, 0, 16], sizes = [4, 2, 16], strides = [1, 1, 1]} : vector<4x2x32xbf16> to vector<4x2x16xbf16>
    %17 = arith.extf %16 : vector<4x2x16xbf16> to vector<4x2x16xf32>
    %18 = vector.shape_cast %0 : vector<1x16xf32> to vector<1x1x16xf32>
    %19 = vector.broadcast %18 : vector<1x1x16xf32> to vector<4x2x16xf32>
    %20 = arith.mulf %17, %19 : vector<4x2x16xf32>
    %21 = vector.shape_cast %1 : vector<1x16xf32> to vector<1x1x16xf32>
    %22 = vector.broadcast %21 : vector<1x1x16xf32> to vector<4x2x16xf32>
    %23 = arith.addf %20, %22 : vector<4x2x16xf32>
    %cst_10 = arith.constant 0.000000e+00 : f32
    %24 = vector.broadcast %cst_10 : f32 to vector<4x2x16xf32>
    %25 = arith.maximumf %23, %24 : vector<4x2x16xf32>
    %26 = arith.addf %15, %25 : vector<4x2x16xf32>
    %27 = vector.extract_strided_slice %5 {offsets = [0, 0, 0], sizes = [4, 2, 16], strides = [1, 1, 1]} : vector<4x2x32xbf16> to vector<4x2x16xbf16>
    %28 = arith.extf %27 : vector<4x2x16xbf16> to vector<4x2x16xf32>
    %29 = vector.shape_cast %0 : vector<1x16xf32> to vector<1x1x16xf32>
    %30 = vector.broadcast %29 : vector<1x1x16xf32> to vector<4x2x16xf32>
    %31 = arith.mulf %28, %30 : vector<4x2x16xf32>
    %32 = vector.shape_cast %1 : vector<1x16xf32> to vector<1x1x16xf32>
    %33 = vector.broadcast %32 : vector<1x1x16xf32> to vector<4x2x16xf32>
    %34 = arith.addf %31, %33 : vector<4x2x16xf32>
    %cst_11 = arith.constant 0.000000e+00 : f32
    %35 = vector.broadcast %cst_11 : f32 to vector<4x2x16xf32>
    %36 = arith.maximumf %34, %35 : vector<4x2x16xf32>
    %37 = arith.addf %26, %36 : vector<4x2x16xf32>
    %38 = vector.extract_strided_slice %5 {offsets = [0, 0, 16], sizes = [4, 2, 16], strides = [1, 1, 1]} : vector<4x2x32xbf16> to vector<4x2x16xbf16>
    %39 = arith.extf %38 : vector<4x2x16xbf16> to vector<4x2x16xf32>
    %40 = vector.shape_cast %0 : vector<1x16xf32> to vector<1x1x16xf32>
    %41 = vector.broadcast %40 : vector<1x1x16xf32> to vector<4x2x16xf32>
    %42 = arith.mulf %39, %41 : vector<4x2x16xf32>
    %43 = vector.shape_cast %1 : vector<1x16xf32> to vector<1x1x16xf32>
    %44 = vector.broadcast %43 : vector<1x1x16xf32> to vector<4x2x16xf32>
    %45 = arith.addf %42, %44 : vector<4x2x16xf32>
    %cst_12 = arith.constant 0.000000e+00 : f32
    %46 = vector.broadcast %cst_12 : f32 to vector<4x2x16xf32>
    %47 = arith.maximumf %45, %46 : vector<4x2x16xf32>
    %48 = arith.addf %37, %47 : vector<4x2x16xf32>
    %cst_13 = arith.constant 2.500000e-01 : f32
    %49 = vector.broadcast %cst_13 : f32 to vector<4x2x16xf32>
    %50 = arith.mulf %48, %49 : vector<4x2x16xf32>
    %51 = arith.truncf %50 : vector<4x2x16xf32> to vector<4x2x16xbf16>
    %c0_14 = arith.constant 0 : index
    %c0_15 = arith.constant 0 : index
    %c0_16 = arith.constant 0 : index
    %52 = vector.load %arg4[%c0_14, %c0_15, %c0_16] : memref<4x2x16xbf16, #tpu.memory_space<vmem>>, vector<4x2x16xbf16>
    tpu.vector_store %arg4[%c0_14, %c0_15, %c0_16], %51 {strides = array<i32>} : memref<4x2x16xbf16, #tpu.memory_space<vmem>>, vector<4x2x16xbf16>,
    return
  }
  func.func @transform_0(%arg0: i32) -> (i32, i32, i32, i32) {
    %c0_i32 = arith.constant 0 : i32
    %c0_i32_0 = arith.constant 0 : i32
    %c0_i32_1 = arith.constant 0 : i32
    %c0_i32_2 = arith.constant 0 : i32
    return %arg0, %c0_i32, %c0_i32_0, %c0_i32_1 : i32, i32, i32, i32
  }
  func.func @transform_1(%arg0: i32) -> (i32, i32) {
    %c0_i32 = arith.constant 0 : i32
    %c0_i32_0 = arith.constant 0 : i32
    %c0_i32_1 = arith.constant 0 : i32
    return %c0_i32, %c0_i32_0 : i32, i32
  }
  func.func @transform_2(%arg0: i32) -> (i32, i32) {
    %c0_i32 = arith.constant 0 : i32
    %c0_i32_0 = arith.constant 0 : i32
    %c0_i32_1 = arith.constant 0 : i32
    return %c0_i32, %c0_i32_0 : i32, i32
  }
  func.func @transform_3(%arg0: i32) -> (i32, i32, i32) {
    %c0_i32 = arith.constant 0 : i32
    %c0_i32_0 = arith.constant 0 : i32
    %c0_i32_1 = arith.constant 0 : i32
    return %arg0, %c0_i32, %c0_i32_0 : i32, i32, i32
  }
}

module attributes {stable_mosaic.version = 11 : i64} {
  func.func @_mm_kernel(%arg0: i32, %arg1: i32, %arg2: i32, %arg3: memref<8x128xbf16, #tpu.memory_space<vmem>>, %arg4: memref<128x128xbf16, #tpu.memory_space<vmem>>, %arg5: memref<1x128xf32, #tpu.memory_space<vmem>>, %arg6: memref<1x128xf32, #tpu.memory_space<vmem>>, %arg7: memref<1x128xf32, #tpu.memory_space<vmem>>, %arg8: memref<1x128xf32, #tpu.memory_space<vmem>>, %arg9: memref<8x128xbf16, #tpu.memory_space<vmem>>, %arg10: memref<8x128xf32, #tpu.memory_space<vmem>>) attributes {dimension_semantics = [#tpu.dimension_semantics<parallel>, #tpu.dimension_semantics<parallel>, #tpu.dimension_semantics<arbitrary>], iteration_bounds = array<i64: 1, 1, 1>, scalar_prefetch = 0 : i64, scratch_operands = 1 : i64, tpu.core_type = #tpu.core_type<tc>, window_params = [{transform_indices = @transform_0, window_bounds = array<i64: 8, 128>}, {transform_indices = @transform_1, window_bounds = array<i64: 128, 128>}, {transform_indices = @transform_2, window_bounds = array<i64: 1, 128>}, {transform_indices = @transform_3, window_bounds = array<i64: 1, 128>}, {transform_indices = @transform_4, window_bounds = array<i64: 1, 128>}, {transform_indices = @transform_5, window_bounds = array<i64: 1, 128>}, {transform_indices = @transform_6, window_bounds = array<i64: 8, 128>}]} {
    %c0_i32 = arith.constant 0 : i32
    %0 = arith.cmpi eq, %arg2, %c0_i32 : i32
    %1 = arith.extui %0 : i1 to i32
    %c0_i32_0 = arith.constant 0 : i32
    %2 = arith.cmpi ne, %1, %c0_i32_0 : i32
    scf.if %2 {
      %cst_10 = arith.constant 0.000000e+00 : f32
      %12 = vector.broadcast %cst_10 : f32 to vector<8x128xf32>
      %c0_11 = arith.constant 0 : index
      %c0_12 = arith.constant 0 : index
      %13 = vector.load %arg10[%c0_11, %c0_12] : memref<8x128xf32, #tpu.memory_space<vmem>>, vector<8x128xf32>
      tpu.vector_store %arg10[%c0_11, %c0_12], %12 {strides = array<i32>} : memref<8x128xf32, #tpu.memory_space<vmem>>, vector<8x128xf32>,
    } else {
    }
    %c0 = arith.constant 0 : index
    %c0_1 = arith.constant 0 : index
    %3 = vector.load %arg3[%c0, %c0_1] : memref<8x128xbf16, #tpu.memory_space<vmem>>, vector<8x128xbf16>
    %c0_2 = arith.constant 0 : index
    %c0_3 = arith.constant 0 : index
    %4 = vector.load %arg10[%c0_2, %c0_3] : memref<8x128xf32, #tpu.memory_space<vmem>>, vector<8x128xf32>
    %c0_4 = arith.constant 0 : index
    %c0_5 = arith.constant 0 : index
    %5 = vector.load %arg4[%c0_4, %c0_5] : memref<128x128xbf16, #tpu.memory_space<vmem>>, vector<128x128xbf16>
    %cst = arith.constant dense<0.000000e+00> : vector<8x128xf32>
    %6 = tpu.matmul %3, %5, %cst {dimension_numbers = #tpu.dot_dimension_numbers<[1], [0], [0], [1], [0, 0, 1, 1], [], []>} : vector<8x128xbf16>, vector<128x128xbf16>, vector<8x128xf32> -> vector<8x128xf32>
    %7 = arith.addf %4, %6 : vector<8x128xf32>
    %c0_6 = arith.constant 0 : index
    %c0_7 = arith.constant 0 : index
    %8 = vector.load %arg10[%c0_6, %c0_7] : memref<8x128xf32, #tpu.memory_space<vmem>>, vector<8x128xf32>
    tpu.vector_store %arg10[%c0_6, %c0_7], %7 {strides = array<i32>} : memref<8x128xf32, #tpu.memory_space<vmem>>, vector<8x128xf32>,
    %c0_i32_8 = arith.constant 0 : i32
    %9 = arith.cmpi eq, %arg2, %c0_i32_8 : i32
    %10 = arith.extui %9 : i1 to i32
    %c0_i32_9 = arith.constant 0 : i32
    %11 = arith.cmpi ne, %10, %c0_i32_9 : i32
    scf.if %11 {
      %c0_10 = arith.constant 0 : index
      %c0_11 = arith.constant 0 : index
      %12 = vector.load %arg10[%c0_10, %c0_11] : memref<8x128xf32, #tpu.memory_space<vmem>>, vector<8x128xf32>
      %13 = arith.truncf %12 : vector<8x128xf32> to vector<8x128xbf16>
      %c0_12 = arith.constant 0 : index
      %c0_13 = arith.constant 0 : index
      %14 = vector.load %arg9[%c0_12, %c0_13] : memref<8x128xbf16, #tpu.memory_space<vmem>>, vector<8x128xbf16>
      tpu.vector_store %arg9[%c0_12, %c0_13], %13 {strides = array<i32>} : memref<8x128xbf16, #tpu.memory_space<vmem>>, vector<8x128xbf16>,
    } else {
    }
    return
  }
  func.func @transform_0(%arg0: i32, %arg1: i32, %arg2: i32) -> (i32, i32) {
    %c0_i32 = arith.constant 0 : i32
    return %arg0, %arg2 : i32, i32
  }
  func.func @transform_1(%arg0: i32, %arg1: i32, %arg2: i32) -> (i32, i32) {
    %c0_i32 = arith.constant 0 : i32
    return %arg2, %arg1 : i32, i32
  }
  func.func @transform_2(%arg0: i32, %arg1: i32, %arg2: i32) -> (i32, i32) {
    %c0_i32 = arith.constant 0 : i32
    %c0_i32_0 = arith.constant 0 : i32
    return %c0_i32, %arg2 : i32, i32
  }
  func.func @transform_3(%arg0: i32, %arg1: i32, %arg2: i32) -> (i32, i32) {
    %c0_i32 = arith.constant 0 : i32
    %c0_i32_0 = arith.constant 0 : i32
    return %c0_i32, %arg2 : i32, i32
  }
  func.func @transform_4(%arg0: i32, %arg1: i32, %arg2: i32) -> (i32, i32) {
    %c0_i32 = arith.constant 0 : i32
    %c0_i32_0 = arith.constant 0 : i32
    return %c0_i32, %arg1 : i32, i32
  }
  func.func @transform_5(%arg0: i32, %arg1: i32, %arg2: i32) -> (i32, i32) {
    %c0_i32 = arith.constant 0 : i32
    %c0_i32_0 = arith.constant 0 : i32
    return %c0_i32, %arg1 : i32, i32
  }
  func.func @transform_6(%arg0: i32, %arg1: i32, %arg2: i32) -> (i32, i32) {
    %c0_i32 = arith.constant 0 : i32
    return %arg0, %arg1 : i32, i32
  }
}

module attributes {stable_mosaic.version = 11 : i64} {
  func.func @_mm_kernel(%arg0: i32, %arg1: i32, %arg2: i32, %arg3: memref<8x128xbf16, #tpu.memory_space<vmem>>, %arg4: memref<128x128xbf16, #tpu.memory_space<vmem>>, %arg5: memref<1x128xf32, #tpu.memory_space<vmem>>, %arg6: memref<1x128xf32, #tpu.memory_space<vmem>>, %arg7: memref<1x128xf32, #tpu.memory_space<vmem>>, %arg8: memref<1x128xf32, #tpu.memory_space<vmem>>, %arg9: memref<8x128xbf16, #tpu.memory_space<vmem>>, %arg10: memref<8x128xf32, #tpu.memory_space<vmem>>) attributes {dimension_semantics = [#tpu.dimension_semantics<parallel>, #tpu.dimension_semantics<parallel>, #tpu.dimension_semantics<arbitrary>], iteration_bounds = array<i64: 1, 1, 1>, scalar_prefetch = 0 : i64, scratch_operands = 1 : i64, tpu.core_type = #tpu.core_type<tc>, window_params = [{transform_indices = @transform_0, window_bounds = array<i64: 8, 128>}, {transform_indices = @transform_1, window_bounds = array<i64: 128, 128>}, {transform_indices = @transform_2, window_bounds = array<i64: 1, 128>}, {transform_indices = @transform_3, window_bounds = array<i64: 1, 128>}, {transform_indices = @transform_4, window_bounds = array<i64: 1, 128>}, {transform_indices = @transform_5, window_bounds = array<i64: 1, 128>}, {transform_indices = @transform_6, window_bounds = array<i64: 8, 128>}]} {
    %c0_i32 = arith.constant 0 : i32
    %0 = arith.cmpi eq, %arg2, %c0_i32 : i32
    %1 = arith.extui %0 : i1 to i32
    %c0_i32_0 = arith.constant 0 : i32
    %2 = arith.cmpi ne, %1, %c0_i32_0 : i32
    scf.if %2 {
      %cst_10 = arith.constant 0.000000e+00 : f32
      %12 = vector.broadcast %cst_10 : f32 to vector<8x128xf32>
      %c0_11 = arith.constant 0 : index
      %c0_12 = arith.constant 0 : index
      %13 = vector.load %arg10[%c0_11, %c0_12] : memref<8x128xf32, #tpu.memory_space<vmem>>, vector<8x128xf32>
      tpu.vector_store %arg10[%c0_11, %c0_12], %12 {strides = array<i32>} : memref<8x128xf32, #tpu.memory_space<vmem>>, vector<8x128xf32>,
    } else {
    }
    %c0 = arith.constant 0 : index
    %c0_1 = arith.constant 0 : index
    %3 = vector.load %arg3[%c0, %c0_1] : memref<8x128xbf16, #tpu.memory_space<vmem>>, vector<8x128xbf16>
    %c0_2 = arith.constant 0 : index
    %c0_3 = arith.constant 0 : index
    %4 = vector.load %arg10[%c0_2, %c0_3] : memref<8x128xf32, #tpu.memory_space<vmem>>, vector<8x128xf32>
    %c0_4 = arith.constant 0 : index
    %c0_5 = arith.constant 0 : index
    %5 = vector.load %arg4[%c0_4, %c0_5] : memref<128x128xbf16, #tpu.memory_space<vmem>>, vector<128x128xbf16>
    %cst = arith.constant dense<0.000000e+00> : vector<8x128xf32>
    %6 = tpu.matmul %3, %5, %cst {dimension_numbers = #tpu.dot_dimension_numbers<[1], [0], [0], [1], [0, 0, 1, 1], [], []>} : vector<8x128xbf16>, vector<128x128xbf16>, vector<8x128xf32> -> vector<8x128xf32>
    %7 = arith.addf %4, %6 : vector<8x128xf32>
    %c0_6 = arith.constant 0 : index
    %c0_7 = arith.constant 0 : index
    %8 = vector.load %arg10[%c0_6, %c0_7] : memref<8x128xf32, #tpu.memory_space<vmem>>, vector<8x128xf32>
    tpu.vector_store %arg10[%c0_6, %c0_7], %7 {strides = array<i32>} : memref<8x128xf32, #tpu.memory_space<vmem>>, vector<8x128xf32>,
    %c0_i32_8 = arith.constant 0 : i32
    %9 = arith.cmpi eq, %arg2, %c0_i32_8 : i32
    %10 = arith.extui %9 : i1 to i32
    %c0_i32_9 = arith.constant 0 : i32
    %11 = arith.cmpi ne, %10, %c0_i32_9 : i32
    scf.if %11 {
      %c0_10 = arith.constant 0 : index
      %c0_11 = arith.constant 0 : index
      %12 = vector.load %arg10[%c0_10, %c0_11] : memref<8x128xf32, #tpu.memory_space<vmem>>, vector<8x128xf32>
      %c0_12 = arith.constant 0 : index
      %c0_13 = arith.constant 0 : index
      %13 = vector.load %arg7[%c0_12, %c0_13] : memref<1x128xf32, #tpu.memory_space<vmem>>, vector<1x128xf32>
      %14 = vector.broadcast %13 : vector<1x128xf32> to vector<8x128xf32>
      %15 = arith.mulf %12, %14 : vector<8x128xf32>
      %c0_14 = arith.constant 0 : index
      %c0_15 = arith.constant 0 : index
      %16 = vector.load %arg8[%c0_14, %c0_15] : memref<1x128xf32, #tpu.memory_space<vmem>>, vector<1x128xf32>
      %17 = vector.broadcast %16 : vector<1x128xf32> to vector<8x128xf32>
      %18 = arith.addf %15, %17 : vector<8x128xf32>
      %cst_16 = arith.constant 0.000000e+00 : f32
      %19 = vector.broadcast %cst_16 : f32 to vector<8x128xf32>
      %20 = arith.maximumf %18, %19 : vector<8x128xf32>
      %21 = arith.truncf %20 : vector<8x128xf32> to vector<8x128xbf16>
      %c0_17 = arith.constant 0 : index
      %c0_18 = arith.constant 0 : index
      %22 = vector.load %arg9[%c0_17, %c0_18] : memref<8x128xbf16, #tpu.memory_space<vmem>>, vector<8x128xbf16>
      tpu.vector_store %arg9[%c0_17, %c0_18], %21 {strides = array<i32>} : memref<8x128xbf16, #tpu.memory_space<vmem>>, vector<8x128xbf16>,
    } else {
    }
    return
  }
  func.func @transform_0(%arg0: i32, %arg1: i32, %arg2: i32) -> (i32, i32) {
    %c0_i32 = arith.constant 0 : i32
    return %arg0, %arg2 : i32, i32
  }
  func.func @transform_1(%arg0: i32, %arg1: i32, %arg2: i32) -> (i32, i32) {
    %c0_i32 = arith.constant 0 : i32
    return %arg2, %arg1 : i32, i32
  }
  func.func @transform_2(%arg0: i32, %arg1: i32, %arg2: i32) -> (i32, i32) {
    %c0_i32 = arith.constant 0 : i32
    %c0_i32_0 = arith.constant 0 : i32
    return %c0_i32, %arg2 : i32, i32
  }
  func.func @transform_3(%arg0: i32, %arg1: i32, %arg2: i32) -> (i32, i32) {
    %c0_i32 = arith.constant 0 : i32
    %c0_i32_0 = arith.constant 0 : i32
    return %c0_i32, %arg2 : i32, i32
  }
  func.func @transform_4(%arg0: i32, %arg1: i32, %arg2: i32) -> (i32, i32) {
    %c0_i32 = arith.constant 0 : i32
    %c0_i32_0 = arith.constant 0 : i32
    return %c0_i32, %arg1 : i32, i32
  }
  func.func @transform_5(%arg0: i32, %arg1: i32, %arg2: i32) -> (i32, i32) {
    %c0_i32 = arith.constant 0 : i32
    %c0_i32_0 = arith.constant 0 : i32
    return %c0_i32, %arg1 : i32, i32
  }
  func.func @transform_6(%arg0: i32, %arg1: i32, %arg2: i32) -> (i32, i32) {
    %c0_i32 = arith.constant 0 : i32
    return %arg0, %arg1 : i32, i32
  }
}

module attributes {stable_mosaic.version = 11 : i64} {
  func.func @_mm_kernel(%arg0: i32, %arg1: i32, %arg2: i32, %arg3: memref<8x128xbf16, #tpu.memory_space<vmem>>, %arg4: memref<128x128xbf16, #tpu.memory_space<vmem>>, %arg5: memref<1x128xf32, #tpu.memory_space<vmem>>, %arg6: memref<1x128xf32, #tpu.memory_space<vmem>>, %arg7: memref<1x128xf32, #tpu.memory_space<vmem>>, %arg8: memref<1x128xf32, #tpu.memory_space<vmem>>, %arg9: memref<8x128xbf16, #tpu.memory_space<vmem>>, %arg10: memref<8x128xf32, #tpu.memory_space<vmem>>) attributes {dimension_semantics = [#tpu.dimension_semantics<parallel>, #tpu.dimension_semantics<parallel>, #tpu.dimension_semantics<arbitrary>], iteration_bounds = array<i64: 1, 1, 1>, scalar_prefetch = 0 : i64, scratch_operands = 1 : i64, tpu.core_type = #tpu.core_type<tc>, window_params = [{transform_indices = @transform_0, window_bounds = array<i64: 8, 128>}, {transform_indices = @transform_1, window_bounds = array<i64: 128, 128>}, {transform_indices = @transform_2, window_bounds = array<i64: 1, 128>}, {transform_indices = @transform_3, window_bounds = array<i64: 1, 128>}, {transform_indices = @transform_4, window_bounds = array<i64: 1, 128>}, {transform_indices = @transform_5, window_bounds = array<i64: 1, 128>}, {transform_indices = @transform_6, window_bounds = array<i64: 8, 128>}]} {
    %c0_i32 = arith.constant 0 : i32
    %0 = arith.cmpi eq, %arg2, %c0_i32 : i32
    %1 = arith.extui %0 : i1 to i32
    %c0_i32_0 = arith.constant 0 : i32
    %2 = arith.cmpi ne, %1, %c0_i32_0 : i32
    scf.if %2 {
      %cst_15 = arith.constant 0.000000e+00 : f32
      %22 = vector.broadcast %cst_15 : f32 to vector<8x128xf32>
      %c0_16 = arith.constant 0 : index
      %c0_17 = arith.constant 0 : index
      %23 = vector.load %arg10[%c0_16, %c0_17] : memref<8x128xf32, #tpu.memory_space<vmem>>, vector<8x128xf32>
      tpu.vector_store %arg10[%c0_16, %c0_17], %22 {strides = array<i32>} : memref<8x128xf32, #tpu.memory_space<vmem>>, vector<8x128xf32>,
    } else {
    }
    %c0 = arith.constant 0 : index
    %c0_1 = arith.constant 0 : index
    %3 = vector.load %arg3[%c0, %c0_1] : memref<8x128xbf16, #tpu.memory_space<vmem>>, vector<8x128xbf16>
    %4 = arith.extf %3 : vector<8x128xbf16> to vector<8x128xf32>
    %c0_2 = arith.constant 0 : index
    %c0_3 = arith.constant 0 : index
    %5 = vector.load %arg5[%c0_2, %c0_3] : memref<1x128xf32, #tpu.memory_space<vmem>>, vector<1x128xf32>
    %6 = vector.broadcast %5 : vector<1x128xf32> to vector<8x128xf32>
    %7 = arith.mulf %4, %6 : vector<8x128xf32>
    %c0_4 = arith.constant 0 : index
    %c0_5 = arith.constant 0 : index
    %8 = vector.load %arg6[%c0_4, %c0_5] : memref<1x128xf32, #tpu.memory_space<vmem>>, vector<1x128xf32>
    %9 = vector.broadcast %8 : vector<1x128xf32> to vector<8x128xf32>
    %10 = arith.addf %7, %9 : vector<8x128xf32>
    %cst = arith.constant 0.000000e+00 : f32
    %11 = vector.broadcast %cst : f32 to vector<8x128xf32>
    %12 = arith.maximumf %10, %11 : vector<8x128xf32>
    %13 = arith.truncf %12 : vector<8x128xf32> to vector<8x128xbf16>
    %c0_6 = arith.constant 0 : index
    %c0_7 = arith.constant 0 : index
    %14 = vector.load %arg10[%c0_6, %c0_7] : memref<8x128xf32, #tpu.memory_space<vmem>>, vector<8x128xf32>
    %c0_8 = arith.constant 0 : index
    %c0_9 = arith.constant 0 : index
    %15 = vector.load %arg4[%c0_8, %c0_9] : memref<128x128xbf16, #tpu.memory_space<vmem>>, vector<128x128xbf16>
    %cst_10 = arith.constant dense<0.000000e+00> : vector<8x128xf32>
    %16 = tpu.matmul %13, %15, %cst_10 {dimension_numbers = #tpu.dot_dimension_numbers<[1], [0], [0], [1], [0, 0, 1, 1], [], []>} : vector<8x128xbf16>, vector<128x128xbf16>, vector<8x128xf32> -> vector<8x128xf32>
    %17 = arith.addf %14, %16 : vector<8x128xf32>
    %c0_11 = arith.constant 0 : index
    %c0_12 = arith.constant 0 : index
    %18 = vector.load %arg10[%c0_11, %c0_12] : memref<8x128xf32, #tpu.memory_space<vmem>>, vector<8x128xf32>
    tpu.vector_store %arg10[%c0_11, %c0_12], %17 {strides = array<i32>} : memref<8x128xf32, #tpu.memory_space<vmem>>, vector<8x128xf32>,
    %c0_i32_13 = arith.constant 0 : i32
    %19 = arith.cmpi eq, %arg2, %c0_i32_13 : i32
    %20 = arith.extui %19 : i1 to i32
    %c0_i32_14 = arith.constant 0 : i32
    %21 = arith.cmpi ne, %20, %c0_i32_14 : i32
    scf.if %21 {
      %c0_15 = arith.constant 0 : index
      %c0_16 = arith.constant 0 : index
      %22 = vector.load %arg10[%c0_15, %c0_16] : memref<8x128xf32, #tpu.memory_space<vmem>>, vector<8x128xf32>
      %c0_17 = arith.constant 0 : index
      %c0_18 = arith.constant 0 : index
      %23 = vector.load %arg7[%c0_17, %c0_18] : memref<1x128xf32, #tpu.memory_space<vmem>>, vector<1x128xf32>
      %24 = vector.broadcast %23 : vector<1x128xf32> to vector<8x128xf32>
      %25 = arith.mulf %22, %24 : vector<8x128xf32>
      %c0_19 = arith.constant 0 : index
      %c0_20 = arith.constant 0 : index
      %26 = vector.load %arg8[%c0_19, %c0_20] : memref<1x128xf32, #tpu.memory_space<vmem>>, vector<1x128xf32>
      %27 = vector.broadcast %26 : vector<1x128xf32> to vector<8x128xf32>
      %28 = arith.addf %25, %27 : vector<8x128xf32>
      %cst_21 = arith.constant 0.000000e+00 : f32
      %29 = vector.broadcast %cst_21 : f32 to vector<8x128xf32>
      %30 = arith.maximumf %28, %29 : vector<8x128xf32>
      %31 = arith.truncf %30 : vector<8x128xf32> to vector<8x128xbf16>
      %c0_22 = arith.constant 0 : index
      %c0_23 = arith.constant 0 : index
      %32 = vector.load %arg9[%c0_22, %c0_23] : memref<8x128xbf16, #tpu.memory_space<vmem>>, vector<8x128xbf16>
      tpu.vector_store %arg9[%c0_22, %c0_23], %31 {strides = array<i32>} : memref<8x128xbf16, #tpu.memory_space<vmem>>, vector<8x128xbf16>,
    } else {
    }
    return
  }
  func.func @transform_0(%arg0: i32, %arg1: i32, %arg2: i32) -> (i32, i32) {
    %c0_i32 = arith.constant 0 : i32
    return %arg0, %arg2 : i32, i32
  }
  func.func @transform_1(%arg0: i32, %arg1: i32, %arg2: i32) -> (i32, i32) {
    %c0_i32 = arith.constant 0 : i32
    return %arg2, %arg1 : i32, i32
  }
  func.func @transform_2(%arg0: i32, %arg1: i32, %arg2: i32) -> (i32, i32) {
    %c0_i32 = arith.constant 0 : i32
    %c0_i32_0 = arith.constant 0 : i32
    return %c0_i32, %arg2 : i32, i32
  }
  func.func @transform_3(%arg0: i32, %arg1: i32, %arg2: i32) -> (i32, i32) {
    %c0_i32 = arith.constant 0 : i32
    %c0_i32_0 = arith.constant 0 : i32
    return %c0_i32, %arg2 : i32, i32
  }
  func.func @transform_4(%arg0: i32, %arg1: i32, %arg2: i32) -> (i32, i32) {
    %c0_i32 = arith.constant 0 : i32
    %c0_i32_0 = arith.constant 0 : i32
    return %c0_i32, %arg1 : i32, i32
  }
  func.func @transform_5(%arg0: i32, %arg1: i32, %arg2: i32) -> (i32, i32) {
    %c0_i32 = arith.constant 0 : i32
    %c0_i32_0 = arith.constant 0 : i32
    return %c0_i32, %arg1 : i32, i32
  }
  func.func @transform_6(%arg0: i32, %arg1: i32, %arg2: i32) -> (i32, i32) {
    %c0_i32 = arith.constant 0 : i32
    return %arg0, %arg1 : i32, i32
  }
}

module attributes {stable_mosaic.version = 11 : i64} {
  func.func @_mm_mix_kernel(%arg0: i32, %arg1: i32, %arg2: i32, %arg3: memref<8x128xbf16, #tpu.memory_space<vmem>>, %arg4: memref<128x128xbf16, #tpu.memory_space<vmem>>, %arg5: memref<128x128xbf16, #tpu.memory_space<vmem>>, %arg6: memref<1x128xf32, #tpu.memory_space<vmem>>, %arg7: memref<1x128xf32, #tpu.memory_space<vmem>>, %arg8: memref<1x128xf32, #tpu.memory_space<vmem>>, %arg9: memref<1x128xf32, #tpu.memory_space<vmem>>, %arg10: memref<1x128xf32, #tpu.memory_space<vmem>>, %arg11: memref<1x128xf32, #tpu.memory_space<vmem>>, %arg12: memref<1x128xf32, #tpu.memory_space<vmem>>, %arg13: memref<1x128xf32, #tpu.memory_space<vmem>>, %arg14: memref<8x128xf32, #tpu.memory_space<vmem>>, %arg15: memref<8x128xf32, #tpu.memory_space<vmem>>, %arg16: memref<8x128xf32, #tpu.memory_space<vmem>>) attributes {dimension_semantics = [#tpu.dimension_semantics<parallel>, #tpu.dimension_semantics<parallel>, #tpu.dimension_semantics<arbitrary>], iteration_bounds = array<i64: 1, 1, 1>, scalar_prefetch = 0 : i64, scratch_operands = 2 : i64, tpu.core_type = #tpu.core_type<tc>, window_params = [{transform_indices = @transform_0, window_bounds = array<i64: 8, 128>}, {transform_indices = @transform_1, window_bounds = array<i64: 128, 128>}, {transform_indices = @transform_2, window_bounds = array<i64: 128, 128>}, {transform_indices = @transform_3, window_bounds = array<i64: 1, 128>}, {transform_indices = @transform_4, window_bounds = array<i64: 1, 128>}, {transform_indices = @transform_5, window_bounds = array<i64: 1, 128>}, {transform_indices = @transform_6, window_bounds = array<i64: 1, 128>}, {transform_indices = @transform_7, window_bounds = array<i64: 1, 128>}, {transform_indices = @transform_8, window_bounds = array<i64: 1, 128>}, {transform_indices = @transform_9, window_bounds = array<i64: 1, 128>}, {transform_indices = @transform_10, window_bounds = array<i64: 1, 128>}, {transform_indices = @transform_11, window_bounds = array<i64: 8, 128>}]} {
    %c0_i32 = arith.constant 0 : i32
    %0 = arith.cmpi eq, %arg2, %c0_i32 : i32
    %1 = arith.extui %0 : i1 to i32
    %c0_i32_0 = arith.constant 0 : i32
    %2 = arith.cmpi ne, %1, %c0_i32_0 : i32
    scf.if %2 {
      %cst_21 = arith.constant 0.000000e+00 : f32
      %25 = vector.broadcast %cst_21 : f32 to vector<8x128xf32>
      %c0_22 = arith.constant 0 : index
      %c0_23 = arith.constant 0 : index
      %26 = vector.load %arg15[%c0_22, %c0_23] : memref<8x128xf32, #tpu.memory_space<vmem>>, vector<8x128xf32>
      tpu.vector_store %arg15[%c0_22, %c0_23], %25 {strides = array<i32>} : memref<8x128xf32, #tpu.memory_space<vmem>>, vector<8x128xf32>,
      %cst_24 = arith.constant 0.000000e+00 : f32
      %27 = vector.broadcast %cst_24 : f32 to vector<8x128xf32>
      %c0_25 = arith.constant 0 : index
      %c0_26 = arith.constant 0 : index
      %28 = vector.load %arg16[%c0_25, %c0_26] : memref<8x128xf32, #tpu.memory_space<vmem>>, vector<8x128xf32>
      tpu.vector_store %arg16[%c0_25, %c0_26], %27 {strides = array<i32>} : memref<8x128xf32, #tpu.memory_space<vmem>>, vector<8x128xf32>,
    } else {
    }
    %c0 = arith.constant 0 : index
    %c0_1 = arith.constant 0 : index
    %3 = vector.load %arg3[%c0, %c0_1] : memref<8x128xbf16, #tpu.memory_space<vmem>>, vector<8x128xbf16>
    %4 = arith.extf %3 : vector<8x128xbf16> to vector<8x128xf32>
    %c0_2 = arith.constant 0 : index
    %c0_3 = arith.constant 0 : index
    %5 = vector.load %arg6[%c0_2, %c0_3] : memref<1x128xf32, #tpu.memory_space<vmem>>, vector<1x128xf32>
    %6 = vector.broadcast %5 : vector<1x128xf32> to vector<8x128xf32>
    %7 = arith.mulf %4, %6 : vector<8x128xf32>
    %c0_4 = arith.constant 0 : index
    %c0_5 = arith.constant 0 : index
    %8 = vector.load %arg7[%c0_4, %c0_5] : memref<1x128xf32, #tpu.memory_space<vmem>>, vector<1x128xf32>
    %9 = vector.broadcast %8 : vector<1x128xf32> to vector<8x128xf32>
    %10 = arith.addf %7, %9 : vector<8x128xf32>
    %11 = arith.truncf %10 : vector<8x128xf32> to vector<8x128xbf16>
    %c0_6 = arith.constant 0 : index
    %c0_7 = arith.constant 0 : index
    %12 = vector.load %arg15[%c0_6, %c0_7] : memref<8x128xf32, #tpu.memory_space<vmem>>, vector<8x128xf32>
    %c0_8 = arith.constant 0 : index
    %c0_9 = arith.constant 0 : index
    %13 = vector.load %arg4[%c0_8, %c0_9] : memref<128x128xbf16, #tpu.memory_space<vmem>>, vector<128x128xbf16>
    %cst = arith.constant dense<0.000000e+00> : vector<8x128xf32>
    %14 = tpu.matmul %11, %13, %cst {dimension_numbers = #tpu.dot_dimension_numbers<[1], [0], [0], [1], [0, 0, 1, 1], [], []>} : vector<8x128xbf16>, vector<128x128xbf16>, vector<8x128xf32> -> vector<8x128xf32>
    %15 = arith.addf %12, %14 : vector<8x128xf32>
    %c0_10 = arith.constant 0 : index
    %c0_11 = arith.constant 0 : index
    %16 = vector.load %arg15[%c0_10, %c0_11] : memref<8x128xf32, #tpu.memory_space<vmem>>, vector<8x128xf32>
    tpu.vector_store %arg15[%c0_10, %c0_11], %15 {strides = array<i32>} : memref<8x128xf32, #tpu.memory_space<vmem>>, vector<8x128xf32>,
    %c0_12 = arith.constant 0 : index
    %c0_13 = arith.constant 0 : index
    %17 = vector.load %arg16[%c0_12, %c0_13] : memref<8x128xf32, #tpu.memory_space<vmem>>, vector<8x128xf32>
    %c0_14 = arith.constant 0 : index
    %c0_15 = arith.constant 0 : index
    %18 = vector.load %arg5[%c0_14, %c0_15] : memref<128x128xbf16, #tpu.memory_space<vmem>>, vector<128x128xbf16>
    %cst_16 = arith.constant dense<0.000000e+00> : vector<8x128xf32>
    %19 = tpu.matmul %11, %18, %cst_16 {dimension_numbers = #tpu.dot_dimension_numbers<[1], [0], [0], [1], [0, 0, 1, 1], [], []>} : vector<8x128xbf16>, vector<128x128xbf16>, vector<8x128xf32> -> vector<8x128xf32>
    %20 = arith.addf %17, %19 : vector<8x128xf32>
    %c0_17 = arith.constant 0 : index
    %c0_18 = arith.constant 0 : index
    %21 = vector.load %arg16[%c0_17, %c0_18] : memref<8x128xf32, #tpu.memory_space<vmem>>, vector<8x128xf32>
    tpu.vector_store %arg16[%c0_17, %c0_18], %20 {strides = array<i32>} : memref<8x128xf32, #tpu.memory_space<vmem>>, vector<8x128xf32>,
    %c0_i32_19 = arith.constant 0 : i32
    %22 = arith.cmpi eq, %arg2, %c0_i32_19 : i32
    %23 = arith.extui %22 : i1 to i32
    %c0_i32_20 = arith.constant 0 : i32
    %24 = arith.cmpi ne, %23, %c0_i32_20 : i32
    scf.if %24 {
      %c0_21 = arith.constant 0 : index
      %c0_22 = arith.constant 0 : index
      %25 = vector.load %arg15[%c0_21, %c0_22] : memref<8x128xf32, #tpu.memory_space<vmem>>, vector<8x128xf32>
      %c0_23 = arith.constant 0 : index
      %c0_24 = arith.constant 0 : index
      %26 = vector.load %arg8[%c0_23, %c0_24] : memref<1x128xf32, #tpu.memory_space<vmem>>, vector<1x128xf32>
      %27 = vector.broadcast %26 : vector<1x128xf32> to vector<8x128xf32>
      %28 = arith.mulf %25, %27 : vector<8x128xf32>
      %c0_25 = arith.constant 0 : index
      %c0_26 = arith.constant 0 : index
      %29 = vector.load %arg9[%c0_25, %c0_26] : memref<1x128xf32, #tpu.memory_space<vmem>>, vector<1x128xf32>
      %30 = vector.broadcast %29 : vector<1x128xf32> to vector<8x128xf32>
      %31 = arith.addf %28, %30 : vector<8x128xf32>
      %cst_27 = arith.constant 0.000000e+00 : f32
      %32 = vector.broadcast %cst_27 : f32 to vector<8x128xf32>
      %33 = arith.maximumf %31, %32 : vector<8x128xf32>
      %c0_28 = arith.constant 0 : index
      %c0_29 = arith.constant 0 : index
      %34 = vector.load %arg16[%c0_28, %c0_29] : memref<8x128xf32, #tpu.memory_space<vmem>>, vector<8x128xf32>
      %c0_30 = arith.constant 0 : index
      %c0_31 = arith.constant 0 : index
      %35 = vector.load %arg10[%c0_30, %c0_31] : memref<1x128xf32, #tpu.memory_space<vmem>>, vector<1x128xf32>
      %36 = vector.broadcast %35 : vector<1x128xf32> to vector<8x128xf32>
      %37 = arith.mulf %34, %36 : vector<8x128xf32>
      %c0_32 = arith.constant 0 : index
      %c0_33 = arith.constant 0 : index
      %38 = vector.load %arg11[%c0_32, %c0_33] : memref<1x128xf32, #tpu.memory_space<vmem>>, vector<1x128xf32>
      %39 = vector.broadcast %38 : vector<1x128xf32> to vector<8x128xf32>
      %40 = arith.addf %37, %39 : vector<8x128xf32>
      %cst_34 = arith.constant 0.000000e+00 : f32
      %41 = vector.broadcast %cst_34 : f32 to vector<8x128xf32>
      %42 = arith.maximumf %40, %41 : vector<8x128xf32>
      %c0_35 = arith.constant 0 : index
      %c0_36 = arith.constant 0 : index
      %43 = vector.load %arg12[%c0_35, %c0_36] : memref<1x128xf32, #tpu.memory_space<vmem>>, vector<1x128xf32>
      %44 = vector.broadcast %43 : vector<1x128xf32> to vector<8x128xf32>
      %45 = arith.mulf %33, %44 : vector<8x128xf32>
      %c0_37 = arith.constant 0 : index
      %c0_38 = arith.constant 0 : index
      %46 = vector.load %arg13[%c0_37, %c0_38] : memref<1x128xf32, #tpu.memory_space<vmem>>, vector<1x128xf32>
      %47 = vector.broadcast %46 : vector<1x128xf32> to vector<8x128xf32>
      %48 = arith.mulf %42, %47 : vector<8x128xf32>
      %49 = arith.addf %45, %48 : vector<8x128xf32>
      %c0_39 = arith.constant 0 : index
      %c0_40 = arith.constant 0 : index
      %50 = vector.load %arg14[%c0_39, %c0_40] : memref<8x128xf32, #tpu.memory_space<vmem>>, vector<8x128xf32>
      tpu.vector_store %arg14[%c0_39, %c0_40], %49 {strides = array<i32>} : memref<8x128xf32, #tpu.memory_space<vmem>>, vector<8x128xf32>,
    } else {
    }
    return
  }
  func.func @transform_0(%arg0: i32, %arg1: i32, %arg2: i32) -> (i32, i32) {
    %c0_i32 = arith.constant 0 : i32
    return %arg0, %arg2 : i32, i32
  }
  func.func @transform_1(%arg0: i32, %arg1: i32, %arg2: i32) -> (i32, i32) {
    %c0_i32 = arith.constant 0 : i32
    return %arg2, %arg1 : i32, i32
  }
  func.func @transform_2(%arg0: i32, %arg1: i32, %arg2: i32) -> (i32, i32) {
    %c0_i32 = arith.constant 0 : i32
    return %arg2, %arg1 : i32, i32
  }
  func.func @transform_3(%arg0: i32, %arg1: i32, %arg2: i32) -> (i32, i32) {
    %c0_i32 = arith.constant 0 : i32
    %c0_i32_0 = arith.constant 0 : i32
    return %c0_i32, %arg2 : i32, i32
  }
  func.func @transform_4(%arg0: i32, %arg1: i32, %arg2: i32) -> (i32, i32) {
    %c0_i32 = arith.constant 0 : i32
    %c0_i32_0 = arith.constant 0 : i32
    return %c0_i32, %arg2 : i32, i32
  }
  func.func @transform_5(%arg0: i32, %arg1: i32, %arg2: i32) -> (i32, i32) {
    %c0_i32 = arith.constant 0 : i32
    %c0_i32_0 = arith.constant 0 : i32
    return %c0_i32, %arg1 : i32, i32
  }
  func.func @transform_6(%arg0: i32, %arg1: i32, %arg2: i32) -> (i32, i32) {
    %c0_i32 = arith.constant 0 : i32
    %c0_i32_0 = arith.constant 0 : i32
    return %c0_i32, %arg1 : i32, i32
  }
  func.func @transform_7(%arg0: i32, %arg1: i32, %arg2: i32) -> (i32, i32) {
    %c0_i32 = arith.constant 0 : i32
    %c0_i32_0 = arith.constant 0 : i32
    return %c0_i32, %arg1 : i32, i32
  }
  func.func @transform_8(%arg0: i32, %arg1: i32, %arg2: i32) -> (i32, i32) {
    %c0_i32 = arith.constant 0 : i32
    %c0_i32_0 = arith.constant 0 : i32
    return %c0_i32, %arg1 : i32, i32
  }
  func.func @transform_9(%arg0: i32, %arg1: i32, %arg2: i32) -> (i32, i32) {
    %c0_i32 = arith.constant 0 : i32
    %c0_i32_0 = arith.constant 0 : i32
    return %c0_i32, %arg1 : i32, i32
  }
  func.func @transform_10(%arg0: i32, %arg1: i32, %arg2: i32) -> (i32, i32) {
    %c0_i32 = arith.constant 0 : i32
    %c0_i32_0 = arith.constant 0 : i32
    return %c0_i32, %arg1 : i32, i32
  }
  func.func @transform_11(%arg0: i32, %arg1: i32, %arg2: i32) -> (i32, i32) {
    %c0_i32 = arith.constant 0 : i32
    return %arg0, %arg1 : i32, i32
  }
}

</mosaic_0001>

<llo_original>
// kernel: forward.54
$region0: #{forward.54}
  #allocation0 [shape = 'u32[]', space=smem, size = 0x4, offset = 0x4, fixed_abs, tag = 'smem constant byte address 0x4 - core index']
  #allocation1 [shape = 'u32[72,128]{1,0:T(1,128)}', space=vmem, size = 0x9000, scoped, tag = 'internal scratch']
  #allocation2 [shape = 'f32[256,128]{1,0:T(8,128)}', space=vmem, size = 0x20000, scoped, tag = 'scratch operand']
  %s0 = inlined_call_operand.vmem [shape: bf16[512,128], index: 0, kind: input, shape index: {}]
  %s1 = inlined_call_operand.vmem [shape: bf16[128,128], index: 1, kind: input, shape index: {}]
  %s2 = inlined_call_operand.vmem [shape: f32[1,128], index: 2, kind: input, shape index: {}]
  %s3 = inlined_call_operand.vmem [shape: f32[1,128], index: 3, kind: input, shape index: {}]
  %s4 = inlined_call_operand.vmem [shape: f32[1,128], index: 4, kind: input, shape index: {}]
  %s5 = inlined_call_operand.vmem [shape: f32[1,128], index: 5, kind: input, shape index: {}]
  %s6 = inlined_call_operand.vmem [shape: bf16[512,128], index: 6, kind: output, shape index: {}]
  %s7 = sld [smem:[#allocation0]]
  $region65: #{forward.54} parent=0
    _
  %s9 = ssub.s32 1, %s7
  %s10 = scalar_select 0, %s9, %s7
  loop: start=0, step=1, limit=4
  $region2: #{forward.54} parent=0 // loop_pre_header
    _
  $region3: #{forward.54} parent=0 // loop_header
    %s12 = sphi 0, %s16
    %p13 = scmp.ge.s32.totalorder %s12, 4
    %s19 = sphi 0, %s38
    %s20 = sphi 0, %s34
    %s21 = sphi 0, %s30
    %s22 = sphi 0, %s19
    %s23 = sphi 0, %s20
    %s24 = sphi 0, %s21
    %s25 = sphi 0, %s22
    %s26 = sphi 0, %s23
    %s27 = sphi 0, %s24
    %s43 = sphi 0, %s45
    %s46 = sphi 0, %s43
    %s47 = sphi 0, %s46
    %s63 = sphi 0, %s47
    %s71 = sphi 0, %s73
    %s74 = sphi 0, %s71
    %s75 = sphi 0, %s74
    %s91 = sphi 0, %s75
    %s97 = sphi 0, %s99
    %s100 = sphi 0, %s97
    %s101 = sphi 0, %s100
    %s117 = sphi 0, %s101
    %s123 = sphi 0, %s125
    %s126 = sphi 0, %s123
    %s127 = sphi 0, %s126
    %s143 = sphi 0, %s127
    %s149 = sphi 0, %s151
    %s152 = sphi 0, %s149
    %s153 = sphi 0, %s152
    %s169 = sphi 0, %s153
    %s175 = sphi 0, %s177
    %s178 = sphi 0, %s175
    %s179 = sphi 0, %s178
    %s195 = sphi 0, %s179
    %s203 = sphi 0, %s205
    %s206 = sphi 0, %s203
    %s207 = sphi 0, %s206
    %s223 = sphi 0, %s207
  $region4: #{forward.54} parent=0 // loop_header_branch
    %15 = sbr.rel (%p13) target = $region8
  $region5: #{forward.54} parent=0 // loop_body
    %s17 = ssub.s32 %s12, 1
    %s18 = ssub.s32 %s12, 2
    %s28 = sadd.s32 1, %s21
    %p29 = scmp.ge.s32.totalorder %s28, 1
    %s30 = scalar_select %p29, 0, %s28
    %s31 = sadd.s32 1, %s20
    %s32 = scalar_select %p29, %s31, %s20
    %p33 = scmp.ge.s32.totalorder %s32, 1
    %s34 = scalar_select %p33, 0, %s32
    %s35 = sadd.s32 1, %s19
    %s36 = scalar_select %p33, %s35, %s19
    %p37 = scmp.ge.s32.totalorder %s36, 2
    %s38 = scalar_select %p37, 0, %s36
    %s39 = ssub.s32 %s19, %s38
    %s40 = ssub.s32 %s21, %s30
    %s41 = sor.u32 %s39, %s40
    %p42 = scmp.eq.s32.totalorder %s41, 0
    %s44 = sadd.s32 %s43, 1
    %s45 = scalar_select %p42, %s43, %s44
    %p48 = pneg %p42
    %p49 = scmp.eq.s32.totalorder %s12, 1
    %p50 = por %p48, %p49
    %p51 = scmp.ne.s32.totalorder %s43, %s46
    %p52 = scmp.eq.s32.totalorder %s12, 0
    %p53 = por %p51, %p52
    %p54 = scmp.ne.s32.totalorder %s43, %s46
    %p55 = scmp.eq.s32.totalorder %s17, 1
    %p56 = por %p54, %p55
    %p57 = scmp.ne.s32.totalorder %s46, %s47
    %p58 = scmp.eq.s32.totalorder %s17, 0
    %p59 = por %p57, %p58
    %p60 = scmp.ne.s32.totalorder %s46, %s47
    %p61 = scmp.eq.s32.totalorder %s18, 1
    %p62 = por %p60, %p61
    %p64 = scmp.ne.s32.totalorder %s47, %s63
    %p65 = scmp.eq.s32.totalorder %s18, 0
    %p66 = por %p64, %p65
    %s67 = ssub.s32 %s21, %s30
    %s68 = ssub.s32 %s20, %s34
    %s69 = sor.u32 %s67, %s68
    %p70 = scmp.eq.s32.totalorder %s69, 0
    %s72 = sadd.s32 %s71, 1
    %s73 = scalar_select %p70, %s71, %s72
    %p76 = pneg %p70
    %p77 = scmp.eq.s32.totalorder %s12, 1
    %p78 = por %p76, %p77
    %p79 = scmp.ne.s32.totalorder %s71, %s74
    %p80 = scmp.eq.s32.totalorder %s12, 0
    %p81 = por %p79, %p80
    %p82 = scmp.ne.s32.totalorder %s71, %s74
    %p83 = scmp.eq.s32.totalorder %s17, 1
    %p84 = por %p82, %p83
    %p85 = scmp.ne.s32.totalorder %s74, %s75
    %p86 = scmp.eq.s32.totalorder %s17, 0
    %p87 = por %p85, %p86
    %p88 = scmp.ne.s32.totalorder %s74, %s75
    %p89 = scmp.eq.s32.totalorder %s18, 1
    %p90 = por %p88, %p89
    %p92 = scmp.ne.s32.totalorder %s75, %s91
    %p93 = scmp.eq.s32.totalorder %s18, 0
    %p94 = por %p92, %p93
    %s95 = ssub.s32 %s21, %s30
    %p96 = scmp.eq.s32.totalorder %s95, 0
    %s98 = sadd.s32 %s97, 1
    %s99 = scalar_select %p96, %s97, %s98
    %p102 = pneg %p96
    %p103 = scmp.eq.s32.totalorder %s12, 1
    %p104 = por %p102, %p103
    %p105 = scmp.ne.s32.totalorder %s97, %s100
    %p106 = scmp.eq.s32.totalorder %s12, 0
    %p107 = por %p105, %p106
    %p108 = scmp.ne.s32.totalorder %s97, %s100
    %p109 = scmp.eq.s32.totalorder %s17, 1
    %p110 = por %p108, %p109
    %p111 = scmp.ne.s32.totalorder %s100, %s101
    %p112 = scmp.eq.s32.totalorder %s17, 0
    %p113 = por %p111, %p112
    %p114 = scmp.ne.s32.totalorder %s100, %s101
    %p115 = scmp.eq.s32.totalorder %s18, 1
    %p116 = por %p114, %p115
    %p118 = scmp.ne.s32.totalorder %s101, %s117
    %p119 = scmp.eq.s32.totalorder %s18, 0
    %p120 = por %p118, %p119
    %s121 = ssub.s32 %s21, %s30
    %p122 = scmp.eq.s32.totalorder %s121, 0
    %s124 = sadd.s32 %s123, 1
    %s125 = scalar_select %p122, %s123, %s124
    %p128 = pneg %p122
    %p129 = scmp.eq.s32.totalorder %s12, 1
    %p130 = por %p128, %p129
    %p131 = scmp.ne.s32.totalorder %s123, %s126
    %p132 = scmp.eq.s32.totalorder %s12, 0
    %p133 = por %p131, %p132
    %p134 = scmp.ne.s32.totalorder %s123, %s126
    %p135 = scmp.eq.s32.totalorder %s17, 1
    %p136 = por %p134, %p135
    %p137 = scmp.ne.s32.totalorder %s126, %s127
    %p138 = scmp.eq.s32.totalorder %s17, 0
    %p139 = por %p137, %p138
    %p140 = scmp.ne.s32.totalorder %s126, %s127
    %p141 = scmp.eq.s32.totalorder %s18, 1
    %p142 = por %p140, %p141
    %p144 = scmp.ne.s32.totalorder %s127, %s143
    %p145 = scmp.eq.s32.totalorder %s18, 0
    %p146 = por %p144, %p145
    %s147 = ssub.s32 %s20, %s34
    %p148 = scmp.eq.s32.totalorder %s147, 0
    %s150 = sadd.s32 %s149, 1
    %s151 = scalar_select %p148, %s149, %s150
    %p154 = pneg %p148
    %p155 = scmp.eq.s32.totalorder %s12, 1
    %p156 = por %p154, %p155
    %p157 = scmp.ne.s32.totalorder %s149, %s152
    %p158 = scmp.eq.s32.totalorder %s12, 0
    %p159 = por %p157, %p158
    %p160 = scmp.ne.s32.totalorder %s149, %s152
    %p161 = scmp.eq.s32.totalorder %s17, 1
    %p162 = por %p160, %p161
    %p163 = scmp.ne.s32.totalorder %s152, %s153
    %p164 = scmp.eq.s32.totalorder %s17, 0
    %p165 = por %p163, %p164
    %p166 = scmp.ne.s32.totalorder %s152, %s153
    %p167 = scmp.eq.s32.totalorder %s18, 1
    %p168 = por %p166, %p167
    %p170 = scmp.ne.s32.totalorder %s153, %s169
    %p171 = scmp.eq.s32.totalorder %s18, 0
    %p172 = por %p170, %p171
    %s173 = ssub.s32 %s20, %s34
    %p174 = scmp.eq.s32.totalorder %s173, 0
    %s176 = sadd.s32 %s175, 1
    %s177 = scalar_select %p174, %s175, %s176
    %p180 = pneg %p174
    %p181 = scmp.eq.s32.totalorder %s12, 1
    %p182 = por %p180, %p181
    %p183 = scmp.ne.s32.totalorder %s175, %s178
    %p184 = scmp.eq.s32.totalorder %s12, 0
    %p185 = por %p183, %p184
    %p186 = scmp.ne.s32.totalorder %s175, %s178
    %p187 = scmp.eq.s32.totalorder %s17, 1
    %p188 = por %p186, %p187
    %p189 = scmp.ne.s32.totalorder %s178, %s179
    %p190 = scmp.eq.s32.totalorder %s17, 0
    %p191 = por %p189, %p190
    %p192 = scmp.ne.s32.totalorder %s178, %s179
    %p193 = scmp.eq.s32.totalorder %s18, 1
    %p194 = por %p192, %p193
    %p196 = scmp.ne.s32.totalorder %s179, %s195
    %p197 = scmp.eq.s32.totalorder %s18, 0
    %p198 = por %p196, %p197
    %s199 = ssub.s32 %s19, %s38
    %s200 = ssub.s32 %s20, %s34
    %s201 = sor.u32 %s199, %s200
    %p202 = scmp.eq.s32.totalorder %s201, 0
    %s204 = sadd.s32 %s203, 1
    %s205 = scalar_select %p202, %s203, %s204
    %p208 = pneg %p202
    %p209 = scmp.eq.s32.totalorder %s12, 1
    %p210 = por %p208, %p209
    %p211 = scmp.ne.s32.totalorder %s203, %s206
    %p212 = scmp.eq.s32.totalorder %s12, 0
    %p213 = por %p211, %p212
    %p214 = scmp.ne.s32.totalorder %s203, %s206
    %p215 = scmp.eq.s32.totalorder %s17, 1
    %p216 = por %p214, %p215
    %p217 = scmp.ne.s32.totalorder %s206, %s207
    %p218 = scmp.eq.s32.totalorder %s17, 0
    %p219 = por %p217, %p218
    %p220 = scmp.ne.s32.totalorder %s206, %s207
    %p221 = scmp.eq.s32.totalorder %s18, 1
    %p222 = por %p220, %p221
    %p224 = scmp.ne.s32.totalorder %s207, %s223
    %p225 = scmp.eq.s32.totalorder %s18, 0
    %p226 = por %p224, %p225
    %p227 = scmp.le.s32.totalorder 1, %s12
    %p228 = scmp.lt.s32.totalorder %s12, 3
    %p229 = pnand %p227, %p228
    %p230 = pneg %p229
    // Predicated region
    $region9: #{forward.54} parent=5 // pred_check
      _
    $region10: #{forward.54} parent=5 // pred_check_branch
      %232 = sbr.rel (%p229) target = $region12
    $region11: #{forward.54} parent=5 // pred_region
      %s233 = ssub.s32 %s12, 1
      // Predicated region
      $region13: #{forward.54} parent=11 // pred_check
        %p234 = pneg %p87
      $region14: #{forward.54} parent=11 // pred_check_branch
        %236 = sbr.rel (%p234) target = $region16
      $region15: #{forward.54} parent=11 // pred_region
        %s237 = smul.u32 16, %s24
        %p238 = scmp.lt.s32.totalorder %s237, 15
        %s239 = scalar_select %p238, %s237, 15
        %p240 = scmp.lt.s32.totalorder %s23, 0
        %s241 = scalar_select %p240, %s23, 0
        %s242 = sadd.s32 %s241, %s239
        %s243 = smul.addr %s242, 4
        %s244 = scalar_lea.vmem %s1, %s243
        %s245 = smul.u32 16, %s24
      $region16: #{forward.54} parent=11 // pred_fallthru
        _
      // Predicated region
      $region17: #{forward.54} parent=11 // pred_check
        %p246 = pneg %p113
      $region18: #{forward.54} parent=11 // pred_check_branch
        %248 = sbr.rel (%p246) target = $region20
      $region19: #{forward.54} parent=11 // pred_region
        %p249 = scmp.lt.s32.totalorder %s24, 0
        %s250 = scalar_select %p249, %s24, 0
        %s251 = scalar_lea.vmem %s2, %s250
      $region20: #{forward.54} parent=11 // pred_fallthru
        _
      // Predicated region
      $region21: #{forward.54} parent=11 // pred_check
        %p252 = pneg %p139
      $region22: #{forward.54} parent=11 // pred_check_branch
        %254 = sbr.rel (%p252) target = $region24
      $region23: #{forward.54} parent=11 // pred_region
        %p255 = scmp.lt.s32.totalorder %s24, 0
        %s256 = scalar_select %p255, %s24, 0
        %s257 = scalar_lea.vmem %s3, %s256
      $region24: #{forward.54} parent=11 // pred_fallthru
        _
      // Predicated region
      $region25: #{forward.54} parent=11 // pred_check
        %p258 = pneg %p165
      $region26: #{forward.54} parent=11 // pred_check_branch
        %260 = sbr.rel (%p258) target = $region28
      $region27: #{forward.54} parent=11 // pred_region
        %p261 = scmp.lt.s32.totalorder %s23, 0
        %s262 = scalar_select %p261, %s23, 0
        %s263 = scalar_lea.vmem %s4, %s262
      $region28: #{forward.54} parent=11 // pred_fallthru
        _
      // Predicated region
      $region29: #{forward.54} parent=11 // pred_check
        %p264 = pneg %p191
      $region30: #{forward.54} parent=11 // pred_check_branch
        %266 = sbr.rel (%p264) target = $region32
      $region31: #{forward.54} parent=11 // pred_region
        %p267 = scmp.lt.s32.totalorder %s23, 0
        %s268 = scalar_select %p267, %s23, 0
        %s269 = scalar_lea.vmem %s5, %s268
      $region32: #{forward.54} parent=11 // pred_fallthru
        _
    $region12: #{forward.54} parent=5 // pred_fallthru
      _
    %p270 = scmp.lt.s32.totalorder %s12, 2
    // Predicated region
    $region33: #{forward.54} parent=5 // pred_check
      %p271 = pneg %p270
    $region34: #{forward.54} parent=5 // pred_check_branch
      %273 = sbr.rel (%p271) target = $region36
    $region35: #{forward.54} parent=5 // pred_region
      // Predicated region
      $region37: #{forward.54} parent=35 // pred_check
        %p274 = pneg %p53
      $region38: #{forward.54} parent=35 // pred_check_branch
        %276 = sbr.rel (%p274) target = $region40
      $region39: #{forward.54} parent=35 // pred_region
        %s277 = smul.u32 32, %s19
        %p278 = scmp.lt.s32.totalorder %s277, 63
        %s279 = scalar_select %p278, %s277, 63
        %p280 = scmp.lt.s32.totalorder %s21, 0
        %s281 = scalar_select %p280, %s21, 0
        %s282 = sadd.s32 %s281, %s279
        %s283 = smul.addr %s282, 4
        %s284 = scalar_lea.vmem %s0, %s283
        %s285 = smul.u32 32, %s19
      $region40: #{forward.54} parent=35 // pred_fallthru
        _
    $region36: #{forward.54} parent=5 // pred_fallthru
      _
    %p286 = scmp.le.s32.totalorder 1, %s12
    %p287 = scmp.lt.s32.totalorder %s12, 3
    %p288 = pnand %p286, %p287
    %p289 = pneg %p288
    // Predicated region
    $region41: #{forward.54} parent=5 // pred_check
      _
    $region42: #{forward.54} parent=5 // pred_check_branch
      %291 = sbr.rel (%p288) target = $region44
    $region43: #{forward.54} parent=5 // pred_region
      %s292 = ssub.s32 %s12, 1
      %s293 = smul.u32 32, %s22
      %p294 = scmp.lt.s32.totalorder %s293, 63
      %s295 = scalar_select %p294, %s293, 63
      %p296 = scmp.lt.s32.totalorder %s24, 0
      %s297 = scalar_select %p296, %s24, 0
      %s298 = sadd.s32 %s297, %s295
      %s299 = smul.addr %s298, 4
      %s300 = scalar_lea.vmem %s0, %s299
      %p301 = pneg %p59
      %p302 = pneg %p56
      %s303 = smul.u32 16, %s24
      %p304 = scmp.lt.s32.totalorder %s303, 15
      %s305 = scalar_select %p304, %s303, 15
      %p306 = scmp.lt.s32.totalorder %s23, 0
      %s307 = scalar_select %p306, %s23, 0
      %s308 = sadd.s32 %s307, %s305
      %s309 = smul.addr %s308, 4
      %s310 = scalar_lea.vmem %s1, %s309
      %p311 = pneg %p87
      %p312 = pneg %p84
      %p313 = scmp.lt.s32.totalorder %s24, 0
      %s314 = scalar_select %p313, %s24, 0
      %s315 = scalar_lea.vmem %s2, %s314
      %p316 = pneg %p113
      %p317 = pneg %p110
      %p318 = scmp.lt.s32.totalorder %s24, 0
      %s319 = scalar_select %p318, %s24, 0
      %s320 = scalar_lea.vmem %s3, %s319
      %p321 = pneg %p139
      %p322 = pneg %p136
      %p323 = scmp.lt.s32.totalorder %s23, 0
      %s324 = scalar_select %p323, %s23, 0
      %s325 = scalar_lea.vmem %s4, %s324
      %p326 = pneg %p165
      %p327 = pneg %p162
      %p328 = scmp.lt.s32.totalorder %s23, 0
      %s329 = scalar_select %p328, %s23, 0
      %s330 = scalar_lea.vmem %s5, %s329
      %p331 = pneg %p191
      %p332 = pneg %p188
      %p333 = pneg %p219
      %p334 = pneg %p216
      %s335 = smul.u32 32, %s22
      %p336 = scmp.lt.s32.totalorder %s335, 63
      %s337 = scalar_select %p336, %s335, 63
      %p338 = scmp.lt.s32.totalorder %s23, 0
      %s339 = scalar_select %p338, %s23, 0
      %s340 = sadd.s32 %s339, %s337
      %s341 = smul.addr %s340, 4
      %s342 = scalar_lea.vmem %s6, %s341
      %s343 = smul.u32 32, %s22
      %p344 = scmp.lt.s32.totalorder %s343, 63
      %s345 = scalar_select %p344, %s343, 63
      %p346 = scmp.lt.s32.totalorder %s24, 0
      %s347 = scalar_select %p346, %s24, 0
      %s348 = sadd.s32 %s347, %s345
      %s349 = smul.addr %s348, 4
      %s350 = scalar_lea.vmem %s0, %s349
      %s351 = smul.u32 32, %s22
      %s352 = smul.u32 16, %s24
      %p353 = scmp.lt.s32.totalorder %s352, 15
      %s354 = scalar_select %p353, %s352, 15
      %p355 = scmp.lt.s32.totalorder %s23, 0
      %s356 = scalar_select %p355, %s23, 0
      %s357 = sadd.s32 %s356, %s354
      %s358 = smul.addr %s357, 4
      %s359 = scalar_lea.vmem %s1, %s358
      %s360 = smul.u32 16, %s24
      %p361 = scmp.lt.s32.totalorder %s24, 0
      %s362 = scalar_select %p361, %s24, 0
      %s363 = scalar_lea.vmem %s2, %s362
      %p364 = scmp.lt.s32.totalorder %s24, 0
      %s365 = scalar_select %p364, %s24, 0
      %s366 = scalar_lea.vmem %s3, %s365
      %p367 = scmp.lt.s32.totalorder %s23, 0
      %s368 = scalar_select %p367, %s23, 0
      %s369 = scalar_lea.vmem %s4, %s368
      %p370 = scmp.lt.s32.totalorder %s23, 0
      %s371 = scalar_select %p370, %s23, 0
      %s372 = scalar_lea.vmem %s5, %s371
      %s373 = smul.u32 32, %s22
      %p374 = scmp.lt.s32.totalorder %s373, 63
      %s375 = scalar_select %p374, %s373, 63
      %p376 = scmp.lt.s32.totalorder %s23, 0
      %s377 = scalar_select %p376, %s23, 0
      %s378 = sadd.s32 %s377, %s375
      %s379 = smul.addr %s378, 4
      %s380 = scalar_lea.vmem %s6, %s379
      %s381 = smul.u32 32, %s22
      %p382 = scmp.eq.s32.totalorder %s24, 0
      // Predicated region
      $region45: #{forward.54} parent=43 // pred_check
        %p383 = pneg %p382
      $region46: #{forward.54} parent=43 // pred_check_branch
        %385 = sbr.rel (%p383) target = $region48
      $region47: #{forward.54} parent=43 // pred_region
        %386 = vst [vmem:[#allocation2] sm:$0xff] 0.0
        %387 = vst [vmem:[#allocation2 + $0x8] sm:$0xff] 0.0
        %388 = vst [vmem:[#allocation2 + $0x10] sm:$0xff] 0.0
        %389 = vst [vmem:[#allocation2 + $0x18] sm:$0xff] 0.0
        %390 = vst [vmem:[#allocation2 + $0x20] sm:$0xff] 0.0
        %391 = vst [vmem:[#allocation2 + $0x28] sm:$0xff] 0.0
        %392 = vst [vmem:[#allocation2 + $0x30] sm:$0xff] 0.0
        %393 = vst [vmem:[#allocation2 + $0x38] sm:$0xff] 0.0
        %394 = vst [vmem:[#allocation2 + $0x40] sm:$0xff] 0.0
        %395 = vst [vmem:[#allocation2 + $0x48] sm:$0xff] 0.0
        %396 = vst [vmem:[#allocation2 + $0x50] sm:$0xff] 0.0
        %397 = vst [vmem:[#allocation2 + $0x58] sm:$0xff] 0.0
        %398 = vst [vmem:[#allocation2 + $0x60] sm:$0xff] 0.0
        %399 = vst [vmem:[#allocation2 + $0x68] sm:$0xff] 0.0
        %400 = vst [vmem:[#allocation2 + $0x70] sm:$0xff] 0.0
        %401 = vst [vmem:[#allocation2 + $0x78] sm:$0xff] 0.0
        %402 = vst [vmem:[#allocation2 + $0x80] sm:$0xff] 0.0
        %403 = vst [vmem:[#allocation2 + $0x88] sm:$0xff] 0.0
        %404 = vst [vmem:[#allocation2 + $0x90] sm:$0xff] 0.0
        %405 = vst [vmem:[#allocation2 + $0x98] sm:$0xff] 0.0
        %406 = vst [vmem:[#allocation2 + $0xa0] sm:$0xff] 0.0
        %407 = vst [vmem:[#allocation2 + $0xa8] sm:$0xff] 0.0
        %408 = vst [vmem:[#allocation2 + $0xb0] sm:$0xff] 0.0
        %409 = vst [vmem:[#allocation2 + $0xb8] sm:$0xff] 0.0
        %410 = vst [vmem:[#allocation2 + $0xc0] sm:$0xff] 0.0
        %411 = vst [vmem:[#allocation2 + $0xc8] sm:$0xff] 0.0
        %412 = vst [vmem:[#allocation2 + $0xd0] sm:$0xff] 0.0
        %413 = vst [vmem:[#allocation2 + $0xd8] sm:$0xff] 0.0
        %414 = vst [vmem:[#allocation2 + $0xe0] sm:$0xff] 0.0
        %415 = vst [vmem:[#allocation2 + $0xe8] sm:$0xff] 0.0
        %416 = vst [vmem:[#allocation2 + $0xf0] sm:$0xff] 0.0
        %417 = vst [vmem:[#allocation2 + $0xf8] sm:$0xff] 0.0
      $region48: #{forward.54} parent=43 // pred_fallthru
        _
      %v418 = vld [vmem:[%s350] sm:$0xf]
      %v419 = vld [vmem:[%s350 + $0x4] sm:$0xf]
      %v420 = vld [vmem:[%s350 + $0x8] sm:$0xf]
      %v421 = vld [vmem:[%s350 + $0xc] sm:$0xf]
      %v422 = vld [vmem:[%s350 + $0x10] sm:$0xf]
      %v423 = vld [vmem:[%s350 + $0x14] sm:$0xf]
      %v424 = vld [vmem:[%s350 + $0x18] sm:$0xf]
      %v425 = vld [vmem:[%s350 + $0x1c] sm:$0xf]
      %v426 = vld [vmem:[%s350 + $0x20] sm:$0xf]
      %v427 = vld [vmem:[%s350 + $0x24] sm:$0xf]
      %v428 = vld [vmem:[%s350 + $0x28] sm:$0xf]
      %v429 = vld [vmem:[%s350 + $0x2c] sm:$0xf]
      %v430 = vld [vmem:[%s350 + $0x30] sm:$0xf]
      %v431 = vld [vmem:[%s350 + $0x34] sm:$0xf]
      %v432 = vld [vmem:[%s350 + $0x38] sm:$0xf]
      %v433 = vld [vmem:[%s350 + $0x3c] sm:$0xf]
      %v434 = vld [vmem:[%s350 + $0x40] sm:$0xf]
      %v435 = vld [vmem:[%s350 + $0x44] sm:$0xf]
      %v436 = vld [vmem:[%s350 + $0x48] sm:$0xf]
      %v437 = vld [vmem:[%s350 + $0x4c] sm:$0xf]
      %v438 = vld [vmem:[%s350 + $0x50] sm:$0xf]
      %v439 = vld [vmem:[%s350 + $0x54] sm:$0xf]
      %v440 = vld [vmem:[%s350 + $0x58] sm:$0xf]
      %v441 = vld [vmem:[%s350 + $0x5c] sm:$0xf]
      %v442 = vld [vmem:[%s350 + $0x60] sm:$0xf]
      %v443 = vld [vmem:[%s350 + $0x64] sm:$0xf]
      %v444 = vld [vmem:[%s350 + $0x68] sm:$0xf]
      %v445 = vld [vmem:[%s350 + $0x6c] sm:$0xf]
      %v446 = vld [vmem:[%s350 + $0x70] sm:$0xf]
      %v447 = vld [vmem:[%s350 + $0x74] sm:$0xf]
      %v448 = vld [vmem:[%s350 + $0x78] sm:$0xf]
      %v449 = vld [vmem:[%s350 + $0x7c] sm:$0xf]
      %v450 = vunpack.c.l.bf16 %v418
      %v451 = vunpack.c.l.bf16 %v419
      %v452 = vunpack.c.l.bf16 %v420
      %v453 = vunpack.c.l.bf16 %v421
      %v454 = vunpack.c.l.bf16 %v422
      %v455 = vunpack.c.l.bf16 %v423
      %v456 = vunpack.c.l.bf16 %v424
      %v457 = vunpack.c.l.bf16 %v425
      %v458 = vunpack.c.l.bf16 %v426
      %v459 = vunpack.c.l.bf16 %v427
      %v460 = vunpack.c.l.bf16 %v428
      %v461 = vunpack.c.l.bf16 %v429
      %v462 = vunpack.c.l.bf16 %v430
      %v463 = vunpack.c.l.bf16 %v431
      %v464 = vunpack.c.l.bf16 %v432
      %v465 = vunpack.c.l.bf16 %v433
      %v466 = vunpack.c.l.bf16 %v434
      %v467 = vunpack.c.l.bf16 %v435
      %v468 = vunpack.c.l.bf16 %v436
      %v469 = vunpack.c.l.bf16 %v437
      %v470 = vunpack.c.l.bf16 %v438
      %v471 = vunpack.c.l.bf16 %v439
      %v472 = vunpack.c.l.bf16 %v440
      %v473 = vunpack.c.l.bf16 %v441
      %v474 = vunpack.c.l.bf16 %v442
      %v475 = vunpack.c.l.bf16 %v443
      %v476 = vunpack.c.l.bf16 %v444
      %v477 = vunpack.c.l.bf16 %v445
      %v478 = vunpack.c.l.bf16 %v446
      %v479 = vunpack.c.l.bf16 %v447
      %v480 = vunpack.c.l.bf16 %v448
      %v481 = vunpack.c.l.bf16 %v449
      %v482 = vld [vmem:[%s363] sm:$0x1]
      %v484 = vperm.slane %v482, 0
      %v486 = vmul.f32 %v450, %v484
      %v487 = vmul.f32 %v451, %v484
      %v488 = vmul.f32 %v452, %v484
      %v489 = vmul.f32 %v453, %v484
      %v490 = vmul.f32 %v454, %v484
      %v491 = vmul.f32 %v455, %v484
      %v492 = vmul.f32 %v456, %v484
      %v493 = vmul.f32 %v457, %v484
      %v494 = vmul.f32 %v458, %v484
      %v495 = vmul.f32 %v459, %v484
      %v496 = vmul.f32 %v460, %v484
      %v497 = vmul.f32 %v461, %v484
      %v498 = vmul.f32 %v462, %v484
      %v499 = vmul.f32 %v463, %v484
      %v500 = vmul.f32 %v464, %v484
      %v501 = vmul.f32 %v465, %v484
      %v502 = vmul.f32 %v466, %v484
      %v503 = vmul.f32 %v467, %v484
      %v504 = vmul.f32 %v468, %v484
      %v505 = vmul.f32 %v469, %v484
      %v506 = vmul.f32 %v470, %v484
      %v507 = vmul.f32 %v471, %v484
      %v508 = vmul.f32 %v472, %v484
      %v509 = vmul.f32 %v473, %v484
      %v510 = vmul.f32 %v474, %v484
      %v511 = vmul.f32 %v475, %v484
      %v512 = vmul.f32 %v476, %v484
      %v513 = vmul.f32 %v477, %v484
      %v514 = vmul.f32 %v478, %v484
      %v515 = vmul.f32 %v479, %v484
      %v516 = vmul.f32 %v480, %v484
      %v517 = vmul.f32 %v481, %v484
      %v518 = vld [vmem:[%s366] sm:$0x1]
      %v520 = vperm.slane %v518, 0
      %v522 = vadd.f32 %v486, %v520
      %v523 = vadd.f32 %v487, %v520
      %v524 = vadd.f32 %v488, %v520
      %v525 = vadd.f32 %v489, %v520
      %v526 = vadd.f32 %v490, %v520
      %v527 = vadd.f32 %v491, %v520
      %v528 = vadd.f32 %v492, %v520
      %v529 = vadd.f32 %v493, %v520
      %v530 = vadd.f32 %v494, %v520
      %v531 = vadd.f32 %v495, %v520
      %v532 = vadd.f32 %v496, %v520
      %v533 = vadd.f32 %v497, %v520
      %v534 = vadd.f32 %v498, %v520
      %v535 = vadd.f32 %v499, %v520
      %v536 = vadd.f32 %v500, %v520
      %v537 = vadd.f32 %v501, %v520
      %v538 = vadd.f32 %v502, %v520
      %v539 = vadd.f32 %v503, %v520
      %v540 = vadd.f32 %v504, %v520
      %v541 = vadd.f32 %v505, %v520
      %v542 = vadd.f32 %v506, %v520
      %v543 = vadd.f32 %v507, %v520
      %v544 = vadd.f32 %v508, %v520
      %v545 = vadd.f32 %v509, %v520
      %v546 = vadd.f32 %v510, %v520
      %v547 = vadd.f32 %v511, %v520
      %v548 = vadd.f32 %v512, %v520
      %v549 = vadd.f32 %v513, %v520
      %v550 = vadd.f32 %v514, %v520
      %v551 = vadd.f32 %v515, %v520
      %v552 = vadd.f32 %v516, %v520
      %v553 = vadd.f32 %v517, %v520
      %v554 = vmax.f32 %v522, 0.0
      %v555 = vmax.f32 %v523, 0.0
      %v556 = vmax.f32 %v524, 0.0
      %v557 = vmax.f32 %v525, 0.0
      %v558 = vmax.f32 %v526, 0.0
      %v559 = vmax.f32 %v527, 0.0
      %v560 = vmax.f32 %v528, 0.0
      %v561 = vmax.f32 %v529, 0.0
      %v562 = vmax.f32 %v530, 0.0
      %v563 = vmax.f32 %v531, 0.0
      %v564 = vmax.f32 %v532, 0.0
      %v565 = vmax.f32 %v533, 0.0
      %v566 = vmax.f32 %v534, 0.0
      %v567 = vmax.f32 %v535, 0.0
      %v568 = vmax.f32 %v536, 0.0
      %v569 = vmax.f32 %v537, 0.0
      %v570 = vmax.f32 %v538, 0.0
      %v571 = vmax.f32 %v539, 0.0
      %v572 = vmax.f32 %v540, 0.0
      %v573 = vmax.f32 %v541, 0.0
      %v574 = vmax.f32 %v542, 0.0
      %v575 = vmax.f32 %v543, 0.0
      %v576 = vmax.f32 %v544, 0.0
      %v577 = vmax.f32 %v545, 0.0
      %v578 = vmax.f32 %v546, 0.0
      %v579 = vmax.f32 %v547, 0.0
      %v580 = vmax.f32 %v548, 0.0
      %v581 = vmax.f32 %v549, 0.0
      %v582 = vmax.f32 %v550, 0.0
      %v583 = vmax.f32 %v551, 0.0
      %v584 = vmax.f32 %v552, 0.0
      %v585 = vmax.f32 %v553, 0.0
      %v586 = vpack.c.bf16 %v555, %v554
      %v587 = vpack.c.bf16 %v557, %v556
      %v588 = vpack.c.bf16 %v559, %v558
      %v589 = vpack.c.bf16 %v561, %v560
      %v590 = vpack.c.bf16 %v563, %v562
      %v591 = vpack.c.bf16 %v565, %v564
      %v592 = vpack.c.bf16 %v567, %v566
      %v593 = vpack.c.bf16 %v569, %v568
      %v594 = vpack.c.bf16 %v571, %v570
      %v595 = vpack.c.bf16 %v573, %v572
      %v596 = vpack.c.bf16 %v575, %v574
      %v597 = vpack.c.bf16 %v577, %v576
      %v598 = vpack.c.bf16 %v579, %v578
      %v599 = vpack.c.bf16 %v581, %v580
      %v600 = vpack.c.bf16 %v583, %v582
      %v601 = vpack.c.bf16 %v585, %v584
      %v602 = vld [vmem:[#allocation2] sm:$0xff]
      %v603 = vld [vmem:[#allocation2 + $0x8] sm:$0xff]
      %v604 = vld [vmem:[#allocation2 + $0x10] sm:$0xff]
      %v605 = vld [vmem:[#allocation2 + $0x18] sm:$0xff]
      %v606 = vld [vmem:[#allocation2 + $0x20] sm:$0xff]
      %v607 = vld [vmem:[#allocation2 + $0x28] sm:$0xff]
      %v608 = vld [vmem:[#allocation2 + $0x30] sm:$0xff]
      %v609 = vld [vmem:[#allocation2 + $0x38] sm:$0xff]
      %v610 = vld [vmem:[#allocation2 + $0x40] sm:$0xff]
      %v611 = vld [vmem:[#allocation2 + $0x48] sm:$0xff]
      %v612 = vld [vmem:[#allocation2 + $0x50] sm:$0xff]
      %v613 = vld [vmem:[#allocation2 + $0x58] sm:$0xff]
      %v614 = vld [vmem:[#allocation2 + $0x60] sm:$0xff]
      %v615 = vld [vmem:[#allocation2 + $0x68] sm:$0xff]
      %v616 = vld [vmem:[#allocation2 + $0x70] sm:$0xff]
      %v617 = vld [vmem:[#allocation2 + $0x78] sm:$0xff]
      %v618 = vld [vmem:[#allocation2 + $0x80] sm:$0xff]
      %v619 = vld [vmem:[#allocation2 + $0x88] sm:$0xff]
      %v620 = vld [vmem:[#allocation2 + $0x90] sm:$0xff]
      %v621 = vld [vmem:[#allocation2 + $0x98] sm:$0xff]
      %v622 = vld [vmem:[#allocation2 + $0xa0] sm:$0xff]
      %v623 = vld [vmem:[#allocation2 + $0xa8] sm:$0xff]
      %v624 = vld [vmem:[#allocation2 + $0xb0] sm:$0xff]
      %v625 = vld [vmem:[#allocation2 + $0xb8] sm:$0xff]
      %v626 = vld [vmem:[#allocation2 + $0xc0] sm:$0xff]
      %v627 = vld [vmem:[#allocation2 + $0xc8] sm:$0xff]
      %v628 = vld [vmem:[#allocation2 + $0xd0] sm:$0xff]
      %v629 = vld [vmem:[#allocation2 + $0xd8] sm:$0xff]
      %v630 = vld [vmem:[#allocation2 + $0xe0] sm:$0xff]
      %v631 = vld [vmem:[#allocation2 + $0xe8] sm:$0xff]
      %v632 = vld [vmem:[#allocation2 + $0xf0] sm:$0xff]
      %v633 = vld [vmem:[#allocation2 + $0xf8] sm:$0xff]
      %v634 = vld [vmem:[%s359] sm:$0xf]
      %v635 = vld [vmem:[%s359 + $0x4] sm:$0xf]
      %v636 = vld [vmem:[%s359 + $0x8] sm:$0xf]
      %v637 = vld [vmem:[%s359 + $0xc] sm:$0xf]
      %v638 = vld [vmem:[%s359 + $0x10] sm:$0xf]
      %v639 = vld [vmem:[%s359 + $0x14] sm:$0xf]
      %v640 = vld [vmem:[%s359 + $0x18] sm:$0xf]
      %v641 = vld [vmem:[%s359 + $0x1c] sm:$0xf]
      %v642 = vld [vmem:[%s359 + $0x20] sm:$0xf]
      %v643 = vld [vmem:[%s359 + $0x24] sm:$0xf]
      %v644 = vld [vmem:[%s359 + $0x28] sm:$0xf]
      %v645 = vld [vmem:[%s359 + $0x2c] sm:$0xf]
      %v646 = vld [vmem:[%s359 + $0x30] sm:$0xf]
      %v647 = vld [vmem:[%s359 + $0x34] sm:$0xf]
      %v648 = vld [vmem:[%s359 + $0x38] sm:$0xf]
      %v649 = vld [vmem:[%s359 + $0x3c] sm:$0xf]
      %v666 = vunpack.c.l.b16 %v634
      %v667 = vunpack.c.l.b16 %v635
      %v668 = vunpack.c.l.b16 %v636
      %v669 = vunpack.c.l.b16 %v637
      %v670 = vunpack.c.l.b16 %v638
      %v671 = vunpack.c.l.b16 %v639
      %v672 = vunpack.c.l.b16 %v640
      %v673 = vunpack.c.l.b16 %v641
      %v674 = vunpack.c.l.b16 %v642
      %v675 = vunpack.c.l.b16 %v643
      %v676 = vunpack.c.l.b16 %v644
      %v677 = vunpack.c.l.b16 %v645
      %v678 = vunpack.c.l.b16 %v646
      %v679 = vunpack.c.l.b16 %v647
      %v680 = vunpack.c.l.b16 %v648
      %v681 = vunpack.c.l.b16 %v649
      %v682 = vpack.c.b16 %v667, %v666
      %v683 = vpack.c.b16 %v669, %v668
      %v684 = vpack.c.b16 %v671, %v670
      %v685 = vpack.c.b16 %v673, %v672
      %v686 = vpack.c.b16 %v675, %v674
      %v687 = vpack.c.b16 %v677, %v676
      %v688 = vpack.c.b16 %v679, %v678
      %v689 = vpack.c.b16 %v681, %v680
      %698 = vmatpush.bf16.msra.mxu0 %v689
      %699 = vmatpush.bf16.msra.mxu0 %v688
      %700 = vmatpush.bf16.msra.mxu0 %v687
      %701 = vmatpush.bf16.msra.mxu0 %v686
      %702 = vmatpush.bf16.msra.mxu0 %v685
      %703 = vmatpush.bf16.msra.mxu0 %v684
      %704 = vmatpush.bf16.msra.mxu0 %v683
      %705 = vmatpush.bf16.msra.mxu0 %v682
      %706 = vmatmul.bf16.gmra.mxu0 %v586
      %v707 = vpop.f32.mrf.mxu0
      %v708 = vadd.f32 0.0, %v707
      %v709 = vpop.f32.mrf.mxu0
      %v710 = vadd.f32 0.0, %v709
      %711 = vmatmul.bf16.gmra.mxu0 %v587
      %v712 = vpop.f32.mrf.mxu0
      %v713 = vadd.f32 0.0, %v712
      %v714 = vpop.f32.mrf.mxu0
      %v715 = vadd.f32 0.0, %v714
      %716 = vmatmul.bf16.gmra.mxu0 %v588
      %v717 = vpop.f32.mrf.mxu0
      %v718 = vadd.f32 0.0, %v717
      %v719 = vpop.f32.mrf.mxu0
      %v720 = vadd.f32 0.0, %v719
      %721 = vmatmul.bf16.gmra.mxu0 %v589
      %v722 = vpop.f32.mrf.mxu0
      %v723 = vadd.f32 0.0, %v722
      %v724 = vpop.f32.mrf.mxu0
      %v725 = vadd.f32 0.0, %v724
      %726 = vmatmul.bf16.gmra.mxu0 %v590
      %v727 = vpop.f32.mrf.mxu0
      %v728 = vadd.f32 0.0, %v727
      %v729 = vpop.f32.mrf.mxu0
      %v730 = vadd.f32 0.0, %v729
      %731 = vmatmul.bf16.gmra.mxu0 %v591
      %v732 = vpop.f32.mrf.mxu0
      %v733 = vadd.f32 0.0, %v732
      %v734 = vpop.f32.mrf.mxu0
      %v735 = vadd.f32 0.0, %v734
      %736 = vmatmul.bf16.gmra.mxu0 %v592
      %v737 = vpop.f32.mrf.mxu0
      %v738 = vadd.f32 0.0, %v737
      %v739 = vpop.f32.mrf.mxu0
      %v740 = vadd.f32 0.0, %v739
      %741 = vmatmul.bf16.gmra.mxu0 %v593
      %v742 = vpop.f32.mrf.mxu0
      %v743 = vadd.f32 0.0, %v742
      %v744 = vpop.f32.mrf.mxu0
      %v745 = vadd.f32 0.0, %v744
      %746 = vmatmul.bf16.gmra.mxu0 %v594
      %v747 = vpop.f32.mrf.mxu0
      %v748 = vadd.f32 0.0, %v747
      %v749 = vpop.f32.mrf.mxu0
      %v750 = vadd.f32 0.0, %v749
      %751 = vmatmul.bf16.gmra.mxu0 %v595
      %v752 = vpop.f32.mrf.mxu0
      %v753 = vadd.f32 0.0, %v752
      %v754 = vpop.f32.mrf.mxu0
      %v755 = vadd.f32 0.0, %v754
      %756 = vmatmul.bf16.gmra.mxu0 %v596
      %v757 = vpop.f32.mrf.mxu0
      %v758 = vadd.f32 0.0, %v757
      %v759 = vpop.f32.mrf.mxu0
      %v760 = vadd.f32 0.0, %v759
      %761 = vmatmul.bf16.gmra.mxu0 %v597
      %v762 = vpop.f32.mrf.mxu0
      %v763 = vadd.f32 0.0, %v762
      %v764 = vpop.f32.mrf.mxu0
      %v765 = vadd.f32 0.0, %v764
      %766 = vmatmul.bf16.gmra.mxu0 %v598
      %v767 = vpop.f32.mrf.mxu0
      %v768 = vadd.f32 0.0, %v767
      %v769 = vpop.f32.mrf.mxu0
      %v770 = vadd.f32 0.0, %v769
      %771 = vmatmul.bf16.gmra.mxu0 %v599
      %v772 = vpop.f32.mrf.mxu0
      %v773 = vadd.f32 0.0, %v772
      %v774 = vpop.f32.mrf.mxu0
      %v775 = vadd.f32 0.0, %v774
      %776 = vmatmul.bf16.gmra.mxu0 %v600
      %v777 = vpop.f32.mrf.mxu0
      %v778 = vadd.f32 0.0, %v777
      %v779 = vpop.f32.mrf.mxu0
      %v780 = vadd.f32 0.0, %v779
      %781 = vmatmul.bf16.gmra.mxu0 %v601
      %v782 = vpop.f32.mrf.mxu0
      %v783 = vadd.f32 0.0, %v782
      %v784 = vpop.f32.mrf.mxu0
      %v785 = vadd.f32 0.0, %v784
      %786 = vdwg.mxu0
      %v787 = vadd.f32 %v602, %v708
      %v788 = vadd.f32 %v603, %v710
      %v789 = vadd.f32 %v604, %v713
      %v790 = vadd.f32 %v605, %v715
      %v791 = vadd.f32 %v606, %v718
      %v792 = vadd.f32 %v607, %v720
      %v793 = vadd.f32 %v608, %v723
      %v794 = vadd.f32 %v609, %v725
      %v795 = vadd.f32 %v610, %v728
      %v796 = vadd.f32 %v611, %v730
      %v797 = vadd.f32 %v612, %v733
      %v798 = vadd.f32 %v613, %v735
      %v799 = vadd.f32 %v614, %v738
      %v800 = vadd.f32 %v615, %v740
      %v801 = vadd.f32 %v616, %v743
      %v802 = vadd.f32 %v617, %v745
      %v803 = vadd.f32 %v618, %v748
      %v804 = vadd.f32 %v619, %v750
      %v805 = vadd.f32 %v620, %v753
      %v806 = vadd.f32 %v621, %v755
      %v807 = vadd.f32 %v622, %v758
      %v808 = vadd.f32 %v623, %v760
      %v809 = vadd.f32 %v624, %v763
      %v810 = vadd.f32 %v625, %v765
      %v811 = vadd.f32 %v626, %v768
      %v812 = vadd.f32 %v627, %v770
      %v813 = vadd.f32 %v628, %v773
      %v814 = vadd.f32 %v629, %v775
      %v815 = vadd.f32 %v630, %v778
      %v816 = vadd.f32 %v631, %v780
      %v817 = vadd.f32 %v632, %v783
      %v818 = vadd.f32 %v633, %v785
      %819 = vst [vmem:[#allocation2] sm:$0xff] %v787
      %820 = vst [vmem:[#allocation2 + $0x8] sm:$0xff] %v788
      %821 = vst [vmem:[#allocation2 + $0x10] sm:$0xff] %v789
      %822 = vst [vmem:[#allocation2 + $0x18] sm:$0xff] %v790
      %823 = vst [vmem:[#allocation2 + $0x20] sm:$0xff] %v791
      %824 = vst [vmem:[#allocation2 + $0x28] sm:$0xff] %v792
      %825 = vst [vmem:[#allocation2 + $0x30] sm:$0xff] %v793
      %826 = vst [vmem:[#allocation2 + $0x38] sm:$0xff] %v794
      %827 = vst [vmem:[#allocation2 + $0x40] sm:$0xff] %v795
      %828 = vst [vmem:[#allocation2 + $0x48] sm:$0xff] %v796
      %829 = vst [vmem:[#allocation2 + $0x50] sm:$0xff] %v797
      %830 = vst [vmem:[#allocation2 + $0x58] sm:$0xff] %v798
      %831 = vst [vmem:[#allocation2 + $0x60] sm:$0xff] %v799
      %832 = vst [vmem:[#allocation2 + $0x68] sm:$0xff] %v800
      %833 = vst [vmem:[#allocation2 + $0x70] sm:$0xff] %v801
      %834 = vst [vmem:[#allocation2 + $0x78] sm:$0xff] %v802
      %835 = vst [vmem:[#allocation2 + $0x80] sm:$0xff] %v803
      %836 = vst [vmem:[#allocation2 + $0x88] sm:$0xff] %v804
      %837 = vst [vmem:[#allocation2 + $0x90] sm:$0xff] %v805
      %838 = vst [vmem:[#allocation2 + $0x98] sm:$0xff] %v806
      %839 = vst [vmem:[#allocation2 + $0xa0] sm:$0xff] %v807
      %840 = vst [vmem:[#allocation2 + $0xa8] sm:$0xff] %v808
      %841 = vst [vmem:[#allocation2 + $0xb0] sm:$0xff] %v809
      %842 = vst [vmem:[#allocation2 + $0xb8] sm:$0xff] %v810
      %843 = vst [vmem:[#allocation2 + $0xc0] sm:$0xff] %v811
      %844 = vst [vmem:[#allocation2 + $0xc8] sm:$0xff] %v812
      %845 = vst [vmem:[#allocation2 + $0xd0] sm:$0xff] %v813
      %846 = vst [vmem:[#allocation2 + $0xd8] sm:$0xff] %v814
      %847 = vst [vmem:[#allocation2 + $0xe0] sm:$0xff] %v815
      %848 = vst [vmem:[#allocation2 + $0xe8] sm:$0xff] %v816
      %849 = vst [vmem:[#allocation2 + $0xf0] sm:$0xff] %v817
      %850 = vst [vmem:[#allocation2 + $0xf8] sm:$0xff] %v818
      // Predicated region
      $region49: #{forward.54} parent=43 // pred_check
        %p851 = pneg %p382
      $region50: #{forward.54} parent=43 // pred_check_branch
        %853 = sbr.rel (%p851) target = $region52
      $region51: #{forward.54} parent=43 // pred_region
        %v854 = vld [vmem:[#allocation2] sm:$0xff]
        %v855 = vld [vmem:[#allocation2 + $0x8] sm:$0xff]
        %v856 = vld [vmem:[#allocation2 + $0x10] sm:$0xff]
        %v857 = vld [vmem:[#allocation2 + $0x18] sm:$0xff]
        %v858 = vld [vmem:[#allocation2 + $0x20] sm:$0xff]
        %v859 = vld [vmem:[#allocation2 + $0x28] sm:$0xff]
        %v860 = vld [vmem:[#allocation2 + $0x30] sm:$0xff]
        %v861 = vld [vmem:[#allocation2 + $0x38] sm:$0xff]
        %v862 = vld [vmem:[#allocation2 + $0x40] sm:$0xff]
        %v863 = vld [vmem:[#allocation2 + $0x48] sm:$0xff]
        %v864 = vld [vmem:[#allocation2 + $0x50] sm:$0xff]
        %v865 = vld [vmem:[#allocation2 + $0x58] sm:$0xff]
        %v866 = vld [vmem:[#allocation2 + $0x60] sm:$0xff]
        %v867 = vld [vmem:[#allocation2 + $0x68] sm:$0xff]
        %v868 = vld [vmem:[#allocation2 + $0x70] sm:$0xff]
        %v869 = vld [vmem:[#allocation2 + $0x78] sm:$0xff]
        %v870 = vld [vmem:[#allocation2 + $0x80] sm:$0xff]
        %v871 = vld [vmem:[#allocation2 + $0x88] sm:$0xff]
        %v872 = vld [vmem:[#allocation2 + $0x90] sm:$0xff]
        %v873 = vld [vmem:[#allocation2 + $0x98] sm:$0xff]
        %v874 = vld [vmem:[#allocation2 + $0xa0] sm:$0xff]
        %v875 = vld [vmem:[#allocation2 + $0xa8] sm:$0xff]
        %v876 = vld [vmem:[#allocation2 + $0xb0] sm:$0xff]
        %v877 = vld [vmem:[#allocation2 + $0xb8] sm:$0xff]
        %v878 = vld [vmem:[#allocation2 + $0xc0] sm:$0xff]
        %v879 = vld [vmem:[#allocation2 + $0xc8] sm:$0xff]
        %v880 = vld [vmem:[#allocation2 + $0xd0] sm:$0xff]
        %v881 = vld [vmem:[#allocation2 + $0xd8] sm:$0xff]
        %v882 = vld [vmem:[#allocation2 + $0xe0] sm:$0xff]
        %v883 = vld [vmem:[#allocation2 + $0xe8] sm:$0xff]
        %v884 = vld [vmem:[#allocation2 + $0xf0] sm:$0xff]
        %v885 = vld [vmem:[#allocation2 + $0xf8] sm:$0xff]
        %v886 = vld [vmem:[%s369] sm:$0x1]
        %v888 = vperm.slane %v886, 0
        %v890 = vmul.f32 %v854, %v888
        %v891 = vmul.f32 %v855, %v888
        %v892 = vmul.f32 %v856, %v888
        %v893 = vmul.f32 %v857, %v888
        %v894 = vmul.f32 %v858, %v888
        %v895 = vmul.f32 %v859, %v888
        %v896 = vmul.f32 %v860, %v888
        %v897 = vmul.f32 %v861, %v888
        %v898 = vmul.f32 %v862, %v888
        %v899 = vmul.f32 %v863, %v888
        %v900 = vmul.f32 %v864, %v888
        %v901 = vmul.f32 %v865, %v888
        %v902 = vmul.f32 %v866, %v888
        %v903 = vmul.f32 %v867, %v888
        %v904 = vmul.f32 %v868, %v888
        %v905 = vmul.f32 %v869, %v888
        %v906 = vmul.f32 %v870, %v888
        %v907 = vmul.f32 %v871, %v888
        %v908 = vmul.f32 %v872, %v888
        %v909 = vmul.f32 %v873, %v888
        %v910 = vmul.f32 %v874, %v888
        %v911 = vmul.f32 %v875, %v888
        %v912 = vmul.f32 %v876, %v888
        %v913 = vmul.f32 %v877, %v888
        %v914 = vmul.f32 %v878, %v888
        %v915 = vmul.f32 %v879, %v888
        %v916 = vmul.f32 %v880, %v888
        %v917 = vmul.f32 %v881, %v888
        %v918 = vmul.f32 %v882, %v888
        %v919 = vmul.f32 %v883, %v888
        %v920 = vmul.f32 %v884, %v888
        %v921 = vmul.f32 %v885, %v888
        %v922 = vld [vmem:[%s372] sm:$0x1]
        %v924 = vperm.slane %v922, 0
        %v926 = vadd.f32 %v890, %v924
        %v927 = vadd.f32 %v891, %v924
        %v928 = vadd.f32 %v892, %v924
        %v929 = vadd.f32 %v893, %v924
        %v930 = vadd.f32 %v894, %v924
        %v931 = vadd.f32 %v895, %v924
        %v932 = vadd.f32 %v896, %v924
        %v933 = vadd.f32 %v897, %v924
        %v934 = vadd.f32 %v898, %v924
        %v935 = vadd.f32 %v899, %v924
        %v936 = vadd.f32 %v900, %v924
        %v937 = vadd.f32 %v901, %v924
        %v938 = vadd.f32 %v902, %v924
        %v939 = vadd.f32 %v903, %v924
        %v940 = vadd.f32 %v904, %v924
        %v941 = vadd.f32 %v905, %v924
        %v942 = vadd.f32 %v906, %v924
        %v943 = vadd.f32 %v907, %v924
        %v944 = vadd.f32 %v908, %v924
        %v945 = vadd.f32 %v909, %v924
        %v946 = vadd.f32 %v910, %v924
        %v947 = vadd.f32 %v911, %v924
        %v948 = vadd.f32 %v912, %v924
        %v949 = vadd.f32 %v913, %v924
        %v950 = vadd.f32 %v914, %v924
        %v951 = vadd.f32 %v915, %v924
        %v952 = vadd.f32 %v916, %v924
        %v953 = vadd.f32 %v917, %v924
        %v954 = vadd.f32 %v918, %v924
        %v955 = vadd.f32 %v919, %v924
        %v956 = vadd.f32 %v920, %v924
        %v957 = vadd.f32 %v921, %v924
        %v958 = vmax.f32 %v926, 0.0
        %v959 = vmax.f32 %v927, 0.0
        %v960 = vmax.f32 %v928, 0.0
        %v961 = vmax.f32 %v929, 0.0
        %v962 = vmax.f32 %v930, 0.0
        %v963 = vmax.f32 %v931, 0.0
        %v964 = vmax.f32 %v932, 0.0
        %v965 = vmax.f32 %v933, 0.0
        %v966 = vmax.f32 %v934, 0.0
        %v967 = vmax.f32 %v935, 0.0
        %v968 = vmax.f32 %v936, 0.0
        %v969 = vmax.f32 %v937, 0.0
        %v970 = vmax.f32 %v938, 0.0
        %v971 = vmax.f32 %v939, 0.0
        %v972 = vmax.f32 %v940, 0.0
        %v973 = vmax.f32 %v941, 0.0
        %v974 = vmax.f32 %v942, 0.0
        %v975 = vmax.f32 %v943, 0.0
        %v976 = vmax.f32 %v944, 0.0
        %v977 = vmax.f32 %v945, 0.0
        %v978 = vmax.f32 %v946, 0.0
        %v979 = vmax.f32 %v947, 0.0
        %v980 = vmax.f32 %v948, 0.0
        %v981 = vmax.f32 %v949, 0.0
        %v982 = vmax.f32 %v950, 0.0
        %v983 = vmax.f32 %v951, 0.0
        %v984 = vmax.f32 %v952, 0.0
        %v985 = vmax.f32 %v953, 0.0
        %v986 = vmax.f32 %v954, 0.0
        %v987 = vmax.f32 %v955, 0.0
        %v988 = vmax.f32 %v956, 0.0
        %v989 = vmax.f32 %v957, 0.0
        %v990 = vpack.c.bf16 %v958, %v958
        %v991 = vpack.c.bf16 %v959, %v959
        %v992 = vpack.c.bf16 %v960, %v960
        %v993 = vpack.c.bf16 %v961, %v961
        %v994 = vpack.c.bf16 %v962, %v962
        %v995 = vpack.c.bf16 %v963, %v963
        %v996 = vpack.c.bf16 %v964, %v964
        %v997 = vpack.c.bf16 %v965, %v965
        %v998 = vpack.c.bf16 %v966, %v966
        %v999 = vpack.c.bf16 %v967, %v967
        %v1000 = vpack.c.bf16 %v968, %v968
        %v1001 = vpack.c.bf16 %v969, %v969
        %v1002 = vpack.c.bf16 %v970, %v970
        %v1003 = vpack.c.bf16 %v971, %v971
        %v1004 = vpack.c.bf16 %v972, %v972
        %v1005 = vpack.c.bf16 %v973, %v973
        %v1006 = vpack.c.bf16 %v974, %v974
        %v1007 = vpack.c.bf16 %v975, %v975
        %v1008 = vpack.c.bf16 %v976, %v976
        %v1009 = vpack.c.bf16 %v977, %v977
        %v1010 = vpack.c.bf16 %v978, %v978
        %v1011 = vpack.c.bf16 %v979, %v979
        %v1012 = vpack.c.bf16 %v980, %v980
        %v1013 = vpack.c.bf16 %v981, %v981
        %v1014 = vpack.c.bf16 %v982, %v982
        %v1015 = vpack.c.bf16 %v983, %v983
        %v1016 = vpack.c.bf16 %v984, %v984
        %v1017 = vpack.c.bf16 %v985, %v985
        %v1018 = vpack.c.bf16 %v986, %v986
        %v1019 = vpack.c.bf16 %v987, %v987
        %v1020 = vpack.c.bf16 %v988, %v988
        %v1021 = vpack.c.bf16 %v989, %v989
        %1022 = vst [vmem:[%s380] sm:$0xf] %v990
        %1023 = vst [vmem:[%s380 + $0x4] sm:$0xf] %v991
        %1024 = vst [vmem:[%s380 + $0x8] sm:$0xf] %v992
        %1025 = vst [vmem:[%s380 + $0xc] sm:$0xf] %v993
        %1026 = vst [vmem:[%s380 + $0x10] sm:$0xf] %v994
        %1027 = vst [vmem:[%s380 + $0x14] sm:$0xf] %v995
        %1028 = vst [vmem:[%s380 + $0x18] sm:$0xf] %v996
        %1029 = vst [vmem:[%s380 + $0x1c] sm:$0xf] %v997
        %1030 = vst [vmem:[%s380 + $0x20] sm:$0xf] %v998
        %1031 = vst [vmem:[%s380 + $0x24] sm:$0xf] %v999
        %1032 = vst [vmem:[%s380 + $0x28] sm:$0xf] %v1000
        %1033 = vst [vmem:[%s380 + $0x2c] sm:$0xf] %v1001
        %1034 = vst [vmem:[%s380 + $0x30] sm:$0xf] %v1002
        %1035 = vst [vmem:[%s380 + $0x34] sm:$0xf] %v1003
        %1036 = vst [vmem:[%s380 + $0x38] sm:$0xf] %v1004
        %1037 = vst [vmem:[%s380 + $0x3c] sm:$0xf] %v1005
        %1038 = vst [vmem:[%s380 + $0x40] sm:$0xf] %v1006
        %1039 = vst [vmem:[%s380 + $0x44] sm:$0xf] %v1007
        %1040 = vst [vmem:[%s380 + $0x48] sm:$0xf] %v1008
        %1041 = vst [vmem:[%s380 + $0x4c] sm:$0xf] %v1009
        %1042 = vst [vmem:[%s380 + $0x50] sm:$0xf] %v1010
        %1043 = vst [vmem:[%s380 + $0x54] sm:$0xf] %v1011
        %1044 = vst [vmem:[%s380 + $0x58] sm:$0xf] %v1012
        %1045 = vst [vmem:[%s380 + $0x5c] sm:$0xf] %v1013
        %1046 = vst [vmem:[%s380 + $0x60] sm:$0xf] %v1014
        %1047 = vst [vmem:[%s380 + $0x64] sm:$0xf] %v1015
        %1048 = vst [vmem:[%s380 + $0x68] sm:$0xf] %v1016
        %1049 = vst [vmem:[%s380 + $0x6c] sm:$0xf] %v1017
        %1050 = vst [vmem:[%s380 + $0x70] sm:$0xf] %v1018
        %1051 = vst [vmem:[%s380 + $0x74] sm:$0xf] %v1019
        %1052 = vst [vmem:[%s380 + $0x78] sm:$0xf] %v1020
        %1053 = vst [vmem:[%s380 + $0x7c] sm:$0xf] %v1021
      $region52: #{forward.54} parent=43 // pred_fallthru
        _
      %s1054 = smul.u32 32, %s22
      %p1055 = scmp.lt.s32.totalorder %s1054, 63
      %s1056 = scalar_select %p1055, %s1054, 63
      %p1057 = scmp.lt.s32.totalorder %s23, 0
      %s1058 = scalar_select %p1057, %s23, 0
      %s1059 = sadd.s32 %s1058, %s1056
      %s1060 = smul.addr %s1059, 4
      %s1061 = scalar_lea.vmem %s6, %s1060
      // Predicated region
      $region53: #{forward.54} parent=43 // pred_check
        %p1062 = pneg %p216
      $region54: #{forward.54} parent=43 // pred_check_branch
        %1064 = sbr.rel (%p1062) target = $region56
      $region55: #{forward.54} parent=43 // pred_region
        %s1065 = smul.u32 32, %s22
      $region56: #{forward.54} parent=43 // pred_fallthru
        _
    $region44: #{forward.54} parent=5 // pred_fallthru
      _
    %p1066 = scmp.le.s32.totalorder 2, %s12
    // Predicated region
    $region57: #{forward.54} parent=5 // pred_check
      %p1067 = pneg %p1066
    $region58: #{forward.54} parent=5 // pred_check_branch
      %1069 = sbr.rel (%p1067) target = $region60
    $region59: #{forward.54} parent=5 // pred_region
      %s1070 = ssub.s32 %s12, 2
      // Predicated region
      $region61: #{forward.54} parent=59 // pred_check
        %p1071 = pneg %p222
      $region62: #{forward.54} parent=59 // pred_check_branch
        %1073 = sbr.rel (%p1071) target = $region64
      $region63: #{forward.54} parent=59 // pred_region
        %s1074 = smul.u32 32, %s25
        %p1075 = scmp.lt.s32.totalorder %s1074, 63
        %s1076 = scalar_select %p1075, %s1074, 63
        %p1077 = scmp.lt.s32.totalorder %s26, 0
        %s1078 = scalar_select %p1077, %s26, 0
        %s1079 = sadd.s32 %s1078, %s1076
        %s1080 = smul.addr %s1079, 4
        %s1081 = scalar_lea.vmem %s6, %s1080
      $region64: #{forward.54} parent=59 // pred_fallthru
        _
    $region60: #{forward.54} parent=5 // pred_fallthru
      _
  $region6: #{forward.54} parent=0 // loop_footer
    %s16 = sadd.s32 1, %s12
  $region7: #{forward.54} parent=0 // loop_footer_branch
    %11 = sbr.rel target = $region3
  $region8: #{forward.54} parent=0 // loop_exit
    _

// kernel: forward.53
$region0: #{forward.53}
  #allocation0 [shape = 'u32[]', space=smem, size = 0x4, offset = 0x4, fixed_abs, tag = 'smem constant byte address 0x4 - core index']
  #allocation1 [shape = 'u32[72,128]{1,0:T(1,128)}', space=vmem, size = 0x9000, scoped, tag = 'internal scratch']
  #allocation2 [shape = 'f32[256,128]{1,0:T(8,128)}', space=vmem, size = 0x20000, scoped, tag = 'scratch operand']
  %s0 = inlined_call_operand.vmem [shape: bf16[512,128], index: 0, kind: input, shape index: {}]
  %s1 = inlined_call_operand.vmem [shape: bf16[128,128], index: 1, kind: input, shape index: {}]
  %s2 = inlined_call_operand.vmem [shape: f32[1,128], index: 2, kind: input, shape index: {}]
  %s3 = inlined_call_operand.vmem [shape: f32[1,128], index: 3, kind: input, shape index: {}]
  %s4 = inlined_call_operand.vmem [shape: f32[1,128], index: 4, kind: input, shape index: {}]
  %s5 = inlined_call_operand.vmem [shape: f32[1,128], index: 5, kind: input, shape index: {}]
  %s6 = inlined_call_operand.vmem [shape: bf16[512,128], index: 6, kind: output, shape index: {}]
  %s7 = sld [smem:[#allocation0]]
  $region65: #{forward.53} parent=0
    _
  %s9 = ssub.s32 1, %s7
  %s10 = scalar_select 0, %s9, %s7
  loop: start=0, step=1, limit=4
  $region2: #{forward.53} parent=0 // loop_pre_header
    _
  $region3: #{forward.53} parent=0 // loop_header
    %s12 = sphi 0, %s16
    %p13 = scmp.ge.s32.totalorder %s12, 4
    %s19 = sphi 0, %s38
    %s20 = sphi 0, %s34
    %s21 = sphi 0, %s30
    %s22 = sphi 0, %s19
    %s23 = sphi 0, %s20
    %s24 = sphi 0, %s21
    %s25 = sphi 0, %s22
    %s26 = sphi 0, %s23
    %s27 = sphi 0, %s24
    %s43 = sphi 0, %s45
    %s46 = sphi 0, %s43
    %s47 = sphi 0, %s46
    %s63 = sphi 0, %s47
    %s71 = sphi 0, %s73
    %s74 = sphi 0, %s71
    %s75 = sphi 0, %s74
    %s91 = sphi 0, %s75
    %s97 = sphi 0, %s99
    %s100 = sphi 0, %s97
    %s101 = sphi 0, %s100
    %s117 = sphi 0, %s101
    %s123 = sphi 0, %s125
    %s126 = sphi 0, %s123
    %s127 = sphi 0, %s126
    %s143 = sphi 0, %s127
    %s149 = sphi 0, %s151
    %s152 = sphi 0, %s149
    %s153 = sphi 0, %s152
    %s169 = sphi 0, %s153
    %s175 = sphi 0, %s177
    %s178 = sphi 0, %s175
    %s179 = sphi 0, %s178
    %s195 = sphi 0, %s179
    %s203 = sphi 0, %s205
    %s206 = sphi 0, %s203
    %s207 = sphi 0, %s206
    %s223 = sphi 0, %s207
  $region4: #{forward.53} parent=0 // loop_header_branch
    %15 = sbr.rel (%p13) target = $region8
  $region5: #{forward.53} parent=0 // loop_body
    %s17 = ssub.s32 %s12, 1
    %s18 = ssub.s32 %s12, 2
    %s28 = sadd.s32 1, %s21
    %p29 = scmp.ge.s32.totalorder %s28, 1
    %s30 = scalar_select %p29, 0, %s28
    %s31 = sadd.s32 1, %s20
    %s32 = scalar_select %p29, %s31, %s20
    %p33 = scmp.ge.s32.totalorder %s32, 1
    %s34 = scalar_select %p33, 0, %s32
    %s35 = sadd.s32 1, %s19
    %s36 = scalar_select %p33, %s35, %s19
    %p37 = scmp.ge.s32.totalorder %s36, 2
    %s38 = scalar_select %p37, 0, %s36
    %s39 = ssub.s32 %s19, %s38
    %s40 = ssub.s32 %s21, %s30
    %s41 = sor.u32 %s39, %s40
    %p42 = scmp.eq.s32.totalorder %s41, 0
    %s44 = sadd.s32 %s43, 1
    %s45 = scalar_select %p42, %s43, %s44
    %p48 = pneg %p42
    %p49 = scmp.eq.s32.totalorder %s12, 1
    %p50 = por %p48, %p49
    %p51 = scmp.ne.s32.totalorder %s43, %s46
    %p52 = scmp.eq.s32.totalorder %s12, 0
    %p53 = por %p51, %p52
    %p54 = scmp.ne.s32.totalorder %s43, %s46
    %p55 = scmp.eq.s32.totalorder %s17, 1
    %p56 = por %p54, %p55
    %p57 = scmp.ne.s32.totalorder %s46, %s47
    %p58 = scmp.eq.s32.totalorder %s17, 0
    %p59 = por %p57, %p58
    %p60 = scmp.ne.s32.totalorder %s46, %s47
    %p61 = scmp.eq.s32.totalorder %s18, 1
    %p62 = por %p60, %p61
    %p64 = scmp.ne.s32.totalorder %s47, %s63
    %p65 = scmp.eq.s32.totalorder %s18, 0
    %p66 = por %p64, %p65
    %s67 = ssub.s32 %s21, %s30
    %s68 = ssub.s32 %s20, %s34
    %s69 = sor.u32 %s67, %s68
    %p70 = scmp.eq.s32.totalorder %s69, 0
    %s72 = sadd.s32 %s71, 1
    %s73 = scalar_select %p70, %s71, %s72
    %p76 = pneg %p70
    %p77 = scmp.eq.s32.totalorder %s12, 1
    %p78 = por %p76, %p77
    %p79 = scmp.ne.s32.totalorder %s71, %s74
    %p80 = scmp.eq.s32.totalorder %s12, 0
    %p81 = por %p79, %p80
    %p82 = scmp.ne.s32.totalorder %s71, %s74
    %p83 = scmp.eq.s32.totalorder %s17, 1
    %p84 = por %p82, %p83
    %p85 = scmp.ne.s32.totalorder %s74, %s75
    %p86 = scmp.eq.s32.totalorder %s17, 0
    %p87 = por %p85, %p86
    %p88 = scmp.ne.s32.totalorder %s74, %s75
    %p89 = scmp.eq.s32.totalorder %s18, 1
    %p90 = por %p88, %p89
    %p92 = scmp.ne.s32.totalorder %s75, %s91
    %p93 = scmp.eq.s32.totalorder %s18, 0
    %p94 = por %p92, %p93
    %s95 = ssub.s32 %s21, %s30
    %p96 = scmp.eq.s32.totalorder %s95, 0
    %s98 = sadd.s32 %s97, 1
    %s99 = scalar_select %p96, %s97, %s98
    %p102 = pneg %p96
    %p103 = scmp.eq.s32.totalorder %s12, 1
    %p104 = por %p102, %p103
    %p105 = scmp.ne.s32.totalorder %s97, %s100
    %p106 = scmp.eq.s32.totalorder %s12, 0
    %p107 = por %p105, %p106
    %p108 = scmp.ne.s32.totalorder %s97, %s100
    %p109 = scmp.eq.s32.totalorder %s17, 1
    %p110 = por %p108, %p109
    %p111 = scmp.ne.s32.totalorder %s100, %s101
    %p112 = scmp.eq.s32.totalorder %s17, 0
    %p113 = por %p111, %p112
    %p114 = scmp.ne.s32.totalorder %s100, %s101
    %p115 = scmp.eq.s32.totalorder %s18, 1
    %p116 = por %p114, %p115
    %p118 = scmp.ne.s32.totalorder %s101, %s117
    %p119 = scmp.eq.s32.totalorder %s18, 0
    %p120 = por %p118, %p119
    %s121 = ssub.s32 %s21, %s30
    %p122 = scmp.eq.s32.totalorder %s121, 0
    %s124 = sadd.s32 %s123, 1
    %s125 = scalar_select %p122, %s123, %s124
    %p128 = pneg %p122
    %p129 = scmp.eq.s32.totalorder %s12, 1
    %p130 = por %p128, %p129
    %p131 = scmp.ne.s32.totalorder %s123, %s126
    %p132 = scmp.eq.s32.totalorder %s12, 0
    %p133 = por %p131, %p132
    %p134 = scmp.ne.s32.totalorder %s123, %s126
    %p135 = scmp.eq.s32.totalorder %s17, 1
    %p136 = por %p134, %p135
    %p137 = scmp.ne.s32.totalorder %s126, %s127
    %p138 = scmp.eq.s32.totalorder %s17, 0
    %p139 = por %p137, %p138
    %p140 = scmp.ne.s32.totalorder %s126, %s127
    %p141 = scmp.eq.s32.totalorder %s18, 1
    %p142 = por %p140, %p141
    %p144 = scmp.ne.s32.totalorder %s127, %s143
    %p145 = scmp.eq.s32.totalorder %s18, 0
    %p146 = por %p144, %p145
    %s147 = ssub.s32 %s20, %s34
    %p148 = scmp.eq.s32.totalorder %s147, 0
    %s150 = sadd.s32 %s149, 1
    %s151 = scalar_select %p148, %s149, %s150
    %p154 = pneg %p148
    %p155 = scmp.eq.s32.totalorder %s12, 1
    %p156 = por %p154, %p155
    %p157 = scmp.ne.s32.totalorder %s149, %s152
    %p158 = scmp.eq.s32.totalorder %s12, 0
    %p159 = por %p157, %p158
    %p160 = scmp.ne.s32.totalorder %s149, %s152
    %p161 = scmp.eq.s32.totalorder %s17, 1
    %p162 = por %p160, %p161
    %p163 = scmp.ne.s32.totalorder %s152, %s153
    %p164 = scmp.eq.s32.totalorder %s17, 0
    %p165 = por %p163, %p164
    %p166 = scmp.ne.s32.totalorder %s152, %s153
    %p167 = scmp.eq.s32.totalorder %s18, 1
    %p168 = por %p166, %p167
    %p170 = scmp.ne.s32.totalorder %s153, %s169
    %p171 = scmp.eq.s32.totalorder %s18, 0
    %p172 = por %p170, %p171
    %s173 = ssub.s32 %s20, %s34
    %p174 = scmp.eq.s32.totalorder %s173, 0
    %s176 = sadd.s32 %s175, 1
    %s177 = scalar_select %p174, %s175, %s176
    %p180 = pneg %p174
    %p181 = scmp.eq.s32.totalorder %s12, 1
    %p182 = por %p180, %p181
    %p183 = scmp.ne.s32.totalorder %s175, %s178
    %p184 = scmp.eq.s32.totalorder %s12, 0
    %p185 = por %p183, %p184
    %p186 = scmp.ne.s32.totalorder %s175, %s178
    %p187 = scmp.eq.s32.totalorder %s17, 1
    %p188 = por %p186, %p187
    %p189 = scmp.ne.s32.totalorder %s178, %s179
    %p190 = scmp.eq.s32.totalorder %s17, 0
    %p191 = por %p189, %p190
    %p192 = scmp.ne.s32.totalorder %s178, %s179
    %p193 = scmp.eq.s32.totalorder %s18, 1
    %p194 = por %p192, %p193
    %p196 = scmp.ne.s32.totalorder %s179, %s195
    %p197 = scmp.eq.s32.totalorder %s18, 0
    %p198 = por %p196, %p197
    %s199 = ssub.s32 %s19, %s38
    %s200 = ssub.s32 %s20, %s34
    %s201 = sor.u32 %s199, %s200
    %p202 = scmp.eq.s32.totalorder %s201, 0
    %s204 = sadd.s32 %s203, 1
    %s205 = scalar_select %p202, %s203, %s204
    %p208 = pneg %p202
    %p209 = scmp.eq.s32.totalorder %s12, 1
    %p210 = por %p208, %p209
    %p211 = scmp.ne.s32.totalorder %s203, %s206
    %p212 = scmp.eq.s32.totalorder %s12, 0
    %p213 = por %p211, %p212
    %p214 = scmp.ne.s32.totalorder %s203, %s206
    %p215 = scmp.eq.s32.totalorder %s17, 1
    %p216 = por %p214, %p215
    %p217 = scmp.ne.s32.totalorder %s206, %s207
    %p218 = scmp.eq.s32.totalorder %s17, 0
    %p219 = por %p217, %p218
    %p220 = scmp.ne.s32.totalorder %s206, %s207
    %p221 = scmp.eq.s32.totalorder %s18, 1
    %p222 = por %p220, %p221
    %p224 = scmp.ne.s32.totalorder %s207, %s223
    %p225 = scmp.eq.s32.totalorder %s18, 0
    %p226 = por %p224, %p225
    %p227 = scmp.le.s32.totalorder 1, %s12
    %p228 = scmp.lt.s32.totalorder %s12, 3
    %p229 = pnand %p227, %p228
    %p230 = pneg %p229
    // Predicated region
    $region9: #{forward.53} parent=5 // pred_check
      _
    $region10: #{forward.53} parent=5 // pred_check_branch
      %232 = sbr.rel (%p229) target = $region12
    $region11: #{forward.53} parent=5 // pred_region
      %s233 = ssub.s32 %s12, 1
      // Predicated region
      $region13: #{forward.53} parent=11 // pred_check
        %p234 = pneg %p87
      $region14: #{forward.53} parent=11 // pred_check_branch
        %236 = sbr.rel (%p234) target = $region16
      $region15: #{forward.53} parent=11 // pred_region
        %s237 = smul.u32 16, %s24
        %p238 = scmp.lt.s32.totalorder %s237, 15
        %s239 = scalar_select %p238, %s237, 15
        %p240 = scmp.lt.s32.totalorder %s23, 0
        %s241 = scalar_select %p240, %s23, 0
        %s242 = sadd.s32 %s241, %s239
        %s243 = smul.addr %s242, 4
        %s244 = scalar_lea.vmem %s1, %s243
        %s245 = smul.u32 16, %s24
      $region16: #{forward.53} parent=11 // pred_fallthru
        _
      // Predicated region
      $region17: #{forward.53} parent=11 // pred_check
        %p246 = pneg %p113
      $region18: #{forward.53} parent=11 // pred_check_branch
        %248 = sbr.rel (%p246) target = $region20
      $region19: #{forward.53} parent=11 // pred_region
        %p249 = scmp.lt.s32.totalorder %s24, 0
        %s250 = scalar_select %p249, %s24, 0
        %s251 = scalar_lea.vmem %s2, %s250
      $region20: #{forward.53} parent=11 // pred_fallthru
        _
      // Predicated region
      $region21: #{forward.53} parent=11 // pred_check
        %p252 = pneg %p139
      $region22: #{forward.53} parent=11 // pred_check_branch
        %254 = sbr.rel (%p252) target = $region24
      $region23: #{forward.53} parent=11 // pred_region
        %p255 = scmp.lt.s32.totalorder %s24, 0
        %s256 = scalar_select %p255, %s24, 0
        %s257 = scalar_lea.vmem %s3, %s256
      $region24: #{forward.53} parent=11 // pred_fallthru
        _
      // Predicated region
      $region25: #{forward.53} parent=11 // pred_check
        %p258 = pneg %p165
      $region26: #{forward.53} parent=11 // pred_check_branch
        %260 = sbr.rel (%p258) target = $region28
      $region27: #{forward.53} parent=11 // pred_region
        %p261 = scmp.lt.s32.totalorder %s23, 0
        %s262 = scalar_select %p261, %s23, 0
        %s263 = scalar_lea.vmem %s4, %s262
      $region28: #{forward.53} parent=11 // pred_fallthru
        _
      // Predicated region
      $region29: #{forward.53} parent=11 // pred_check
        %p264 = pneg %p191
      $region30: #{forward.53} parent=11 // pred_check_branch
        %266 = sbr.rel (%p264) target = $region32
      $region31: #{forward.53} parent=11 // pred_region
        %p267 = scmp.lt.s32.totalorder %s23, 0
        %s268 = scalar_select %p267, %s23, 0
        %s269 = scalar_lea.vmem %s5, %s268
      $region32: #{forward.53} parent=11 // pred_fallthru
        _
    $region12: #{forward.53} parent=5 // pred_fallthru
      _
    %p270 = scmp.lt.s32.totalorder %s12, 2
    // Predicated region
    $region33: #{forward.53} parent=5 // pred_check
      %p271 = pneg %p270
    $region34: #{forward.53} parent=5 // pred_check_branch
      %273 = sbr.rel (%p271) target = $region36
    $region35: #{forward.53} parent=5 // pred_region
      // Predicated region
      $region37: #{forward.53} parent=35 // pred_check
        %p274 = pneg %p53
      $region38: #{forward.53} parent=35 // pred_check_branch
        %276 = sbr.rel (%p274) target = $region40
      $region39: #{forward.53} parent=35 // pred_region
        %s277 = smul.u32 32, %s19
        %p278 = scmp.lt.s32.totalorder %s277, 63
        %s279 = scalar_select %p278, %s277, 63
        %p280 = scmp.lt.s32.totalorder %s21, 0
        %s281 = scalar_select %p280, %s21, 0
        %s282 = sadd.s32 %s281, %s279
        %s283 = smul.addr %s282, 4
        %s284 = scalar_lea.vmem %s0, %s283
        %s285 = smul.u32 32, %s19
      $region40: #{forward.53} parent=35 // pred_fallthru
        _
    $region36: #{forward.53} parent=5 // pred_fallthru
      _
    %p286 = scmp.le.s32.totalorder 1, %s12
    %p287 = scmp.lt.s32.totalorder %s12, 3
    %p288 = pnand %p286, %p287
    %p289 = pneg %p288
    // Predicated region
    $region41: #{forward.53} parent=5 // pred_check
      _
    $region42: #{forward.53} parent=5 // pred_check_branch
      %291 = sbr.rel (%p288) target = $region44
    $region43: #{forward.53} parent=5 // pred_region
      %s292 = ssub.s32 %s12, 1
      %s293 = smul.u32 32, %s22
      %p294 = scmp.lt.s32.totalorder %s293, 63
      %s295 = scalar_select %p294, %s293, 63
      %p296 = scmp.lt.s32.totalorder %s24, 0
      %s297 = scalar_select %p296, %s24, 0
      %s298 = sadd.s32 %s297, %s295
      %s299 = smul.addr %s298, 4
      %s300 = scalar_lea.vmem %s0, %s299
      %p301 = pneg %p59
      %p302 = pneg %p56
      %s303 = smul.u32 16, %s24
      %p304 = scmp.lt.s32.totalorder %s303, 15
      %s305 = scalar_select %p304, %s303, 15
      %p306 = scmp.lt.s32.totalorder %s23, 0
      %s307 = scalar_select %p306, %s23, 0
      %s308 = sadd.s32 %s307, %s305
      %s309 = smul.addr %s308, 4
      %s310 = scalar_lea.vmem %s1, %s309
      %p311 = pneg %p87
      %p312 = pneg %p84
      %p313 = scmp.lt.s32.totalorder %s24, 0
      %s314 = scalar_select %p313, %s24, 0
      %s315 = scalar_lea.vmem %s2, %s314
      %p316 = pneg %p113
      %p317 = pneg %p110
      %p318 = scmp.lt.s32.totalorder %s24, 0
      %s319 = scalar_select %p318, %s24, 0
      %s320 = scalar_lea.vmem %s3, %s319
      %p321 = pneg %p139
      %p322 = pneg %p136
      %p323 = scmp.lt.s32.totalorder %s23, 0
      %s324 = scalar_select %p323, %s23, 0
      %s325 = scalar_lea.vmem %s4, %s324
      %p326 = pneg %p165
      %p327 = pneg %p162
      %p328 = scmp.lt.s32.totalorder %s23, 0
      %s329 = scalar_select %p328, %s23, 0
      %s330 = scalar_lea.vmem %s5, %s329
      %p331 = pneg %p191
      %p332 = pneg %p188
      %p333 = pneg %p219
      %p334 = pneg %p216
      %s335 = smul.u32 32, %s22
      %p336 = scmp.lt.s32.totalorder %s335, 63
      %s337 = scalar_select %p336, %s335, 63
      %p338 = scmp.lt.s32.totalorder %s23, 0
      %s339 = scalar_select %p338, %s23, 0
      %s340 = sadd.s32 %s339, %s337
      %s341 = smul.addr %s340, 4
      %s342 = scalar_lea.vmem %s6, %s341
      %s343 = smul.u32 32, %s22
      %p344 = scmp.lt.s32.totalorder %s343, 63
      %s345 = scalar_select %p344, %s343, 63
      %p346 = scmp.lt.s32.totalorder %s24, 0
      %s347 = scalar_select %p346, %s24, 0
      %s348 = sadd.s32 %s347, %s345
      %s349 = smul.addr %s348, 4
      %s350 = scalar_lea.vmem %s0, %s349
      %s351 = smul.u32 32, %s22
      %s352 = smul.u32 16, %s24
      %p353 = scmp.lt.s32.totalorder %s352, 15
      %s354 = scalar_select %p353, %s352, 15
      %p355 = scmp.lt.s32.totalorder %s23, 0
      %s356 = scalar_select %p355, %s23, 0
      %s357 = sadd.s32 %s356, %s354
      %s358 = smul.addr %s357, 4
      %s359 = scalar_lea.vmem %s1, %s358
      %s360 = smul.u32 16, %s24
      %p361 = scmp.lt.s32.totalorder %s24, 0
      %s362 = scalar_select %p361, %s24, 0
      %s363 = scalar_lea.vmem %s2, %s362
      %p364 = scmp.lt.s32.totalorder %s24, 0
      %s365 = scalar_select %p364, %s24, 0
      %s366 = scalar_lea.vmem %s3, %s365
      %p367 = scmp.lt.s32.totalorder %s23, 0
      %s368 = scalar_select %p367, %s23, 0
      %s369 = scalar_lea.vmem %s4, %s368
      %p370 = scmp.lt.s32.totalorder %s23, 0
      %s371 = scalar_select %p370, %s23, 0
      %s372 = scalar_lea.vmem %s5, %s371
      %s373 = smul.u32 32, %s22
      %p374 = scmp.lt.s32.totalorder %s373, 63
      %s375 = scalar_select %p374, %s373, 63
      %p376 = scmp.lt.s32.totalorder %s23, 0
      %s377 = scalar_select %p376, %s23, 0
      %s378 = sadd.s32 %s377, %s375
      %s379 = smul.addr %s378, 4
      %s380 = scalar_lea.vmem %s6, %s379
      %s381 = smul.u32 32, %s22
      %p382 = scmp.eq.s32.totalorder %s24, 0
      // Predicated region
      $region45: #{forward.53} parent=43 // pred_check
        %p383 = pneg %p382
      $region46: #{forward.53} parent=43 // pred_check_branch
        %385 = sbr.rel (%p383) target = $region48
      $region47: #{forward.53} parent=43 // pred_region
        %386 = vst [vmem:[#allocation2] sm:$0xff] 0.0
        %387 = vst [vmem:[#allocation2 + $0x8] sm:$0xff] 0.0
        %388 = vst [vmem:[#allocation2 + $0x10] sm:$0xff] 0.0
        %389 = vst [vmem:[#allocation2 + $0x18] sm:$0xff] 0.0
        %390 = vst [vmem:[#allocation2 + $0x20] sm:$0xff] 0.0
        %391 = vst [vmem:[#allocation2 + $0x28] sm:$0xff] 0.0
        %392 = vst [vmem:[#allocation2 + $0x30] sm:$0xff] 0.0
        %393 = vst [vmem:[#allocation2 + $0x38] sm:$0xff] 0.0
        %394 = vst [vmem:[#allocation2 + $0x40] sm:$0xff] 0.0
        %395 = vst [vmem:[#allocation2 + $0x48] sm:$0xff] 0.0
        %396 = vst [vmem:[#allocation2 + $0x50] sm:$0xff] 0.0
        %397 = vst [vmem:[#allocation2 + $0x58] sm:$0xff] 0.0
        %398 = vst [vmem:[#allocation2 + $0x60] sm:$0xff] 0.0
        %399 = vst [vmem:[#allocation2 + $0x68] sm:$0xff] 0.0
        %400 = vst [vmem:[#allocation2 + $0x70] sm:$0xff] 0.0
        %401 = vst [vmem:[#allocation2 + $0x78] sm:$0xff] 0.0
        %402 = vst [vmem:[#allocation2 + $0x80] sm:$0xff] 0.0
        %403 = vst [vmem:[#allocation2 + $0x88] sm:$0xff] 0.0
        %404 = vst [vmem:[#allocation2 + $0x90] sm:$0xff] 0.0
        %405 = vst [vmem:[#allocation2 + $0x98] sm:$0xff] 0.0
        %406 = vst [vmem:[#allocation2 + $0xa0] sm:$0xff] 0.0
        %407 = vst [vmem:[#allocation2 + $0xa8] sm:$0xff] 0.0
        %408 = vst [vmem:[#allocation2 + $0xb0] sm:$0xff] 0.0
        %409 = vst [vmem:[#allocation2 + $0xb8] sm:$0xff] 0.0
        %410 = vst [vmem:[#allocation2 + $0xc0] sm:$0xff] 0.0
        %411 = vst [vmem:[#allocation2 + $0xc8] sm:$0xff] 0.0
        %412 = vst [vmem:[#allocation2 + $0xd0] sm:$0xff] 0.0
        %413 = vst [vmem:[#allocation2 + $0xd8] sm:$0xff] 0.0
        %414 = vst [vmem:[#allocation2 + $0xe0] sm:$0xff] 0.0
        %415 = vst [vmem:[#allocation2 + $0xe8] sm:$0xff] 0.0
        %416 = vst [vmem:[#allocation2 + $0xf0] sm:$0xff] 0.0
        %417 = vst [vmem:[#allocation2 + $0xf8] sm:$0xff] 0.0
      $region48: #{forward.53} parent=43 // pred_fallthru
        _
      %v418 = vld [vmem:[%s350] sm:$0xf]
      %v419 = vld [vmem:[%s350 + $0x4] sm:$0xf]
      %v420 = vld [vmem:[%s350 + $0x8] sm:$0xf]
      %v421 = vld [vmem:[%s350 + $0xc] sm:$0xf]
      %v422 = vld [vmem:[%s350 + $0x10] sm:$0xf]
      %v423 = vld [vmem:[%s350 + $0x14] sm:$0xf]
      %v424 = vld [vmem:[%s350 + $0x18] sm:$0xf]
      %v425 = vld [vmem:[%s350 + $0x1c] sm:$0xf]
      %v426 = vld [vmem:[%s350 + $0x20] sm:$0xf]
      %v427 = vld [vmem:[%s350 + $0x24] sm:$0xf]
      %v428 = vld [vmem:[%s350 + $0x28] sm:$0xf]
      %v429 = vld [vmem:[%s350 + $0x2c] sm:$0xf]
      %v430 = vld [vmem:[%s350 + $0x30] sm:$0xf]
      %v431 = vld [vmem:[%s350 + $0x34] sm:$0xf]
      %v432 = vld [vmem:[%s350 + $0x38] sm:$0xf]
      %v433 = vld [vmem:[%s350 + $0x3c] sm:$0xf]
      %v434 = vld [vmem:[%s350 + $0x40] sm:$0xf]
      %v435 = vld [vmem:[%s350 + $0x44] sm:$0xf]
      %v436 = vld [vmem:[%s350 + $0x48] sm:$0xf]
      %v437 = vld [vmem:[%s350 + $0x4c] sm:$0xf]
      %v438 = vld [vmem:[%s350 + $0x50] sm:$0xf]
      %v439 = vld [vmem:[%s350 + $0x54] sm:$0xf]
      %v440 = vld [vmem:[%s350 + $0x58] sm:$0xf]
      %v441 = vld [vmem:[%s350 + $0x5c] sm:$0xf]
      %v442 = vld [vmem:[%s350 + $0x60] sm:$0xf]
      %v443 = vld [vmem:[%s350 + $0x64] sm:$0xf]
      %v444 = vld [vmem:[%s350 + $0x68] sm:$0xf]
      %v445 = vld [vmem:[%s350 + $0x6c] sm:$0xf]
      %v446 = vld [vmem:[%s350 + $0x70] sm:$0xf]
      %v447 = vld [vmem:[%s350 + $0x74] sm:$0xf]
      %v448 = vld [vmem:[%s350 + $0x78] sm:$0xf]
      %v449 = vld [vmem:[%s350 + $0x7c] sm:$0xf]
      %v450 = vld [vmem:[#allocation2] sm:$0xff]
      %v451 = vld [vmem:[#allocation2 + $0x8] sm:$0xff]
      %v452 = vld [vmem:[#allocation2 + $0x10] sm:$0xff]
      %v453 = vld [vmem:[#allocation2 + $0x18] sm:$0xff]
      %v454 = vld [vmem:[#allocation2 + $0x20] sm:$0xff]
      %v455 = vld [vmem:[#allocation2 + $0x28] sm:$0xff]
      %v456 = vld [vmem:[#allocation2 + $0x30] sm:$0xff]
      %v457 = vld [vmem:[#allocation2 + $0x38] sm:$0xff]
      %v458 = vld [vmem:[#allocation2 + $0x40] sm:$0xff]
      %v459 = vld [vmem:[#allocation2 + $0x48] sm:$0xff]
      %v460 = vld [vmem:[#allocation2 + $0x50] sm:$0xff]
      %v461 = vld [vmem:[#allocation2 + $0x58] sm:$0xff]
      %v462 = vld [vmem:[#allocation2 + $0x60] sm:$0xff]
      %v463 = vld [vmem:[#allocation2 + $0x68] sm:$0xff]
      %v464 = vld [vmem:[#allocation2 + $0x70] sm:$0xff]
      %v465 = vld [vmem:[#allocation2 + $0x78] sm:$0xff]
      %v466 = vld [vmem:[#allocation2 + $0x80] sm:$0xff]
      %v467 = vld [vmem:[#allocation2 + $0x88] sm:$0xff]
      %v468 = vld [vmem:[#allocation2 + $0x90] sm:$0xff]
      %v469 = vld [vmem:[#allocation2 + $0x98] sm:$0xff]
      %v470 = vld [vmem:[#allocation2 + $0xa0] sm:$0xff]
      %v471 = vld [vmem:[#allocation2 + $0xa8] sm:$0xff]
      %v472 = vld [vmem:[#allocation2 + $0xb0] sm:$0xff]
      %v473 = vld [vmem:[#allocation2 + $0xb8] sm:$0xff]
      %v474 = vld [vmem:[#allocation2 + $0xc0] sm:$0xff]
      %v475 = vld [vmem:[#allocation2 + $0xc8] sm:$0xff]
      %v476 = vld [vmem:[#allocation2 + $0xd0] sm:$0xff]
      %v477 = vld [vmem:[#allocation2 + $0xd8] sm:$0xff]
      %v478 = vld [vmem:[#allocation2 + $0xe0] sm:$0xff]
      %v479 = vld [vmem:[#allocation2 + $0xe8] sm:$0xff]
      %v480 = vld [vmem:[#allocation2 + $0xf0] sm:$0xff]
      %v481 = vld [vmem:[#allocation2 + $0xf8] sm:$0xff]
      %v482 = vld [vmem:[%s359] sm:$0xf]
      %v483 = vld [vmem:[%s359 + $0x4] sm:$0xf]
      %v484 = vld [vmem:[%s359 + $0x8] sm:$0xf]
      %v485 = vld [vmem:[%s359 + $0xc] sm:$0xf]
      %v486 = vld [vmem:[%s359 + $0x10] sm:$0xf]
      %v487 = vld [vmem:[%s359 + $0x14] sm:$0xf]
      %v488 = vld [vmem:[%s359 + $0x18] sm:$0xf]
      %v489 = vld [vmem:[%s359 + $0x1c] sm:$0xf]
      %v490 = vld [vmem:[%s359 + $0x20] sm:$0xf]
      %v491 = vld [vmem:[%s359 + $0x24] sm:$0xf]
      %v492 = vld [vmem:[%s359 + $0x28] sm:$0xf]
      %v493 = vld [vmem:[%s359 + $0x2c] sm:$0xf]
      %v494 = vld [vmem:[%s359 + $0x30] sm:$0xf]
      %v495 = vld [vmem:[%s359 + $0x34] sm:$0xf]
      %v496 = vld [vmem:[%s359 + $0x38] sm:$0xf]
      %v497 = vld [vmem:[%s359 + $0x3c] sm:$0xf]
      %v530 = vunpack.c.l.b16 %v418
      %v531 = vunpack.c.l.b16 %v419
      %v532 = vunpack.c.l.b16 %v420
      %v533 = vunpack.c.l.b16 %v421
      %v534 = vunpack.c.l.b16 %v422
      %v535 = vunpack.c.l.b16 %v423
      %v536 = vunpack.c.l.b16 %v424
      %v537 = vunpack.c.l.b16 %v425
      %v538 = vunpack.c.l.b16 %v426
      %v539 = vunpack.c.l.b16 %v427
      %v540 = vunpack.c.l.b16 %v428
      %v541 = vunpack.c.l.b16 %v429
      %v542 = vunpack.c.l.b16 %v430
      %v543 = vunpack.c.l.b16 %v431
      %v544 = vunpack.c.l.b16 %v432
      %v545 = vunpack.c.l.b16 %v433
      %v546 = vunpack.c.l.b16 %v434
      %v547 = vunpack.c.l.b16 %v435
      %v548 = vunpack.c.l.b16 %v436
      %v549 = vunpack.c.l.b16 %v437
      %v550 = vunpack.c.l.b16 %v438
      %v551 = vunpack.c.l.b16 %v439
      %v552 = vunpack.c.l.b16 %v440
      %v553 = vunpack.c.l.b16 %v441
      %v554 = vunpack.c.l.b16 %v442
      %v555 = vunpack.c.l.b16 %v443
      %v556 = vunpack.c.l.b16 %v444
      %v557 = vunpack.c.l.b16 %v445
      %v558 = vunpack.c.l.b16 %v446
      %v559 = vunpack.c.l.b16 %v447
      %v560 = vunpack.c.l.b16 %v448
      %v561 = vunpack.c.l.b16 %v449
      %v562 = vpack.c.b16 %v531, %v530
      %v563 = vpack.c.b16 %v533, %v532
      %v564 = vpack.c.b16 %v535, %v534
      %v565 = vpack.c.b16 %v537, %v536
      %v566 = vpack.c.b16 %v539, %v538
      %v567 = vpack.c.b16 %v541, %v540
      %v568 = vpack.c.b16 %v543, %v542
      %v569 = vpack.c.b16 %v545, %v544
      %v570 = vpack.c.b16 %v547, %v546
      %v571 = vpack.c.b16 %v549, %v548
      %v572 = vpack.c.b16 %v551, %v550
      %v573 = vpack.c.b16 %v553, %v552
      %v574 = vpack.c.b16 %v555, %v554
      %v575 = vpack.c.b16 %v557, %v556
      %v576 = vpack.c.b16 %v559, %v558
      %v577 = vpack.c.b16 %v561, %v560
      %v610 = vunpack.c.l.b16 %v482
      %v611 = vunpack.c.l.b16 %v483
      %v612 = vunpack.c.l.b16 %v484
      %v613 = vunpack.c.l.b16 %v485
      %v614 = vunpack.c.l.b16 %v486
      %v615 = vunpack.c.l.b16 %v487
      %v616 = vunpack.c.l.b16 %v488
      %v617 = vunpack.c.l.b16 %v489
      %v618 = vunpack.c.l.b16 %v490
      %v619 = vunpack.c.l.b16 %v491
      %v620 = vunpack.c.l.b16 %v492
      %v621 = vunpack.c.l.b16 %v493
      %v622 = vunpack.c.l.b16 %v494
      %v623 = vunpack.c.l.b16 %v495
      %v624 = vunpack.c.l.b16 %v496
      %v625 = vunpack.c.l.b16 %v497
      %v626 = vpack.c.b16 %v611, %v610
      %v627 = vpack.c.b16 %v613, %v612
      %v628 = vpack.c.b16 %v615, %v614
      %v629 = vpack.c.b16 %v617, %v616
      %v630 = vpack.c.b16 %v619, %v618
      %v631 = vpack.c.b16 %v621, %v620
      %v632 = vpack.c.b16 %v623, %v622
      %v633 = vpack.c.b16 %v625, %v624
      %642 = vmatpush.bf16.msra.mxu0 %v633
      %643 = vmatpush.bf16.msra.mxu0 %v632
      %644 = vmatpush.bf16.msra.mxu0 %v631
      %645 = vmatpush.bf16.msra.mxu0 %v630
      %646 = vmatpush.bf16.msra.mxu0 %v629
      %647 = vmatpush.bf16.msra.mxu0 %v628
      %648 = vmatpush.bf16.msra.mxu0 %v627
      %649 = vmatpush.bf16.msra.mxu0 %v626
      %650 = vmatmul.bf16.gmra.mxu0 %v562
      %v651 = vpop.f32.mrf.mxu0
      %v652 = vadd.f32 0.0, %v651
      %v653 = vpop.f32.mrf.mxu0
      %v654 = vadd.f32 0.0, %v653
      %655 = vmatmul.bf16.gmra.mxu0 %v563
      %v656 = vpop.f32.mrf.mxu0
      %v657 = vadd.f32 0.0, %v656
      %v658 = vpop.f32.mrf.mxu0
      %v659 = vadd.f32 0.0, %v658
      %660 = vmatmul.bf16.gmra.mxu0 %v564
      %v661 = vpop.f32.mrf.mxu0
      %v662 = vadd.f32 0.0, %v661
      %v663 = vpop.f32.mrf.mxu0
      %v664 = vadd.f32 0.0, %v663
      %665 = vmatmul.bf16.gmra.mxu0 %v565
      %v666 = vpop.f32.mrf.mxu0
      %v667 = vadd.f32 0.0, %v666
      %v668 = vpop.f32.mrf.mxu0
      %v669 = vadd.f32 0.0, %v668
      %670 = vmatmul.bf16.gmra.mxu0 %v566
      %v671 = vpop.f32.mrf.mxu0
      %v672 = vadd.f32 0.0, %v671
      %v673 = vpop.f32.mrf.mxu0
      %v674 = vadd.f32 0.0, %v673
      %675 = vmatmul.bf16.gmra.mxu0 %v567
      %v676 = vpop.f32.mrf.mxu0
      %v677 = vadd.f32 0.0, %v676
      %v678 = vpop.f32.mrf.mxu0
      %v679 = vadd.f32 0.0, %v678
      %680 = vmatmul.bf16.gmra.mxu0 %v568
      %v681 = vpop.f32.mrf.mxu0
      %v682 = vadd.f32 0.0, %v681
      %v683 = vpop.f32.mrf.mxu0
      %v684 = vadd.f32 0.0, %v683
      %685 = vmatmul.bf16.gmra.mxu0 %v569
      %v686 = vpop.f32.mrf.mxu0
      %v687 = vadd.f32 0.0, %v686
      %v688 = vpop.f32.mrf.mxu0
      %v689 = vadd.f32 0.0, %v688
      %690 = vmatmul.bf16.gmra.mxu0 %v570
      %v691 = vpop.f32.mrf.mxu0
      %v692 = vadd.f32 0.0, %v691
      %v693 = vpop.f32.mrf.mxu0
      %v694 = vadd.f32 0.0, %v693
      %695 = vmatmul.bf16.gmra.mxu0 %v571
      %v696 = vpop.f32.mrf.mxu0
      %v697 = vadd.f32 0.0, %v696
      %v698 = vpop.f32.mrf.mxu0
      %v699 = vadd.f32 0.0, %v698
      %700 = vmatmul.bf16.gmra.mxu0 %v572
      %v701 = vpop.f32.mrf.mxu0
      %v702 = vadd.f32 0.0, %v701
      %v703 = vpop.f32.mrf.mxu0
      %v704 = vadd.f32 0.0, %v703
      %705 = vmatmul.bf16.gmra.mxu0 %v573
      %v706 = vpop.f32.mrf.mxu0
      %v707 = vadd.f32 0.0, %v706
      %v708 = vpop.f32.mrf.mxu0
      %v709 = vadd.f32 0.0, %v708
      %710 = vmatmul.bf16.gmra.mxu0 %v574
      %v711 = vpop.f32.mrf.mxu0
      %v712 = vadd.f32 0.0, %v711
      %v713 = vpop.f32.mrf.mxu0
      %v714 = vadd.f32 0.0, %v713
      %715 = vmatmul.bf16.gmra.mxu0 %v575
      %v716 = vpop.f32.mrf.mxu0
      %v717 = vadd.f32 0.0, %v716
      %v718 = vpop.f32.mrf.mxu0
      %v719 = vadd.f32 0.0, %v718
      %720 = vmatmul.bf16.gmra.mxu0 %v576
      %v721 = vpop.f32.mrf.mxu0
      %v722 = vadd.f32 0.0, %v721
      %v723 = vpop.f32.mrf.mxu0
      %v724 = vadd.f32 0.0, %v723
      %725 = vmatmul.bf16.gmra.mxu0 %v577
      %v726 = vpop.f32.mrf.mxu0
      %v727 = vadd.f32 0.0, %v726
      %v728 = vpop.f32.mrf.mxu0
      %v729 = vadd.f32 0.0, %v728
      %730 = vdwg.mxu0
      %v731 = vadd.f32 %v450, %v652
      %v732 = vadd.f32 %v451, %v654
      %v733 = vadd.f32 %v452, %v657
      %v734 = vadd.f32 %v453, %v659
      %v735 = vadd.f32 %v454, %v662
      %v736 = vadd.f32 %v455, %v664
      %v737 = vadd.f32 %v456, %v667
      %v738 = vadd.f32 %v457, %v669
      %v739 = vadd.f32 %v458, %v672
      %v740 = vadd.f32 %v459, %v674
      %v741 = vadd.f32 %v460, %v677
      %v742 = vadd.f32 %v461, %v679
      %v743 = vadd.f32 %v462, %v682
      %v744 = vadd.f32 %v463, %v684
      %v745 = vadd.f32 %v464, %v687
      %v746 = vadd.f32 %v465, %v689
      %v747 = vadd.f32 %v466, %v692
      %v748 = vadd.f32 %v467, %v694
      %v749 = vadd.f32 %v468, %v697
      %v750 = vadd.f32 %v469, %v699
      %v751 = vadd.f32 %v470, %v702
      %v752 = vadd.f32 %v471, %v704
      %v753 = vadd.f32 %v472, %v707
      %v754 = vadd.f32 %v473, %v709
      %v755 = vadd.f32 %v474, %v712
      %v756 = vadd.f32 %v475, %v714
      %v757 = vadd.f32 %v476, %v717
      %v758 = vadd.f32 %v477, %v719
      %v759 = vadd.f32 %v478, %v722
      %v760 = vadd.f32 %v479, %v724
      %v761 = vadd.f32 %v480, %v727
      %v762 = vadd.f32 %v481, %v729
      %763 = vst [vmem:[#allocation2] sm:$0xff] %v731
      %764 = vst [vmem:[#allocation2 + $0x8] sm:$0xff] %v732
      %765 = vst [vmem:[#allocation2 + $0x10] sm:$0xff] %v733
      %766 = vst [vmem:[#allocation2 + $0x18] sm:$0xff] %v734
      %767 = vst [vmem:[#allocation2 + $0x20] sm:$0xff] %v735
      %768 = vst [vmem:[#allocation2 + $0x28] sm:$0xff] %v736
      %769 = vst [vmem:[#allocation2 + $0x30] sm:$0xff] %v737
      %770 = vst [vmem:[#allocation2 + $0x38] sm:$0xff] %v738
      %771 = vst [vmem:[#allocation2 + $0x40] sm:$0xff] %v739
      %772 = vst [vmem:[#allocation2 + $0x48] sm:$0xff] %v740
      %773 = vst [vmem:[#allocation2 + $0x50] sm:$0xff] %v741
      %774 = vst [vmem:[#allocation2 + $0x58] sm:$0xff] %v742
      %775 = vst [vmem:[#allocation2 + $0x60] sm:$0xff] %v743
      %776 = vst [vmem:[#allocation2 + $0x68] sm:$0xff] %v744
      %777 = vst [vmem:[#allocation2 + $0x70] sm:$0xff] %v745
      %778 = vst [vmem:[#allocation2 + $0x78] sm:$0xff] %v746
      %779 = vst [vmem:[#allocation2 + $0x80] sm:$0xff] %v747
      %780 = vst [vmem:[#allocation2 + $0x88] sm:$0xff] %v748
      %781 = vst [vmem:[#allocation2 + $0x90] sm:$0xff] %v749
      %782 = vst [vmem:[#allocation2 + $0x98] sm:$0xff] %v750
      %783 = vst [vmem:[#allocation2 + $0xa0] sm:$0xff] %v751
      %784 = vst [vmem:[#allocation2 + $0xa8] sm:$0xff] %v752
      %785 = vst [vmem:[#allocation2 + $0xb0] sm:$0xff] %v753
      %786 = vst [vmem:[#allocation2 + $0xb8] sm:$0xff] %v754
      %787 = vst [vmem:[#allocation2 + $0xc0] sm:$0xff] %v755
      %788 = vst [vmem:[#allocation2 + $0xc8] sm:$0xff] %v756
      %789 = vst [vmem:[#allocation2 + $0xd0] sm:$0xff] %v757
      %790 = vst [vmem:[#allocation2 + $0xd8] sm:$0xff] %v758
      %791 = vst [vmem:[#allocation2 + $0xe0] sm:$0xff] %v759
      %792 = vst [vmem:[#allocation2 + $0xe8] sm:$0xff] %v760
      %793 = vst [vmem:[#allocation2 + $0xf0] sm:$0xff] %v761
      %794 = vst [vmem:[#allocation2 + $0xf8] sm:$0xff] %v762
      // Predicated region
      $region49: #{forward.53} parent=43 // pred_check
        %p795 = pneg %p382
      $region50: #{forward.53} parent=43 // pred_check_branch
        %797 = sbr.rel (%p795) target = $region52
      $region51: #{forward.53} parent=43 // pred_region
        %v798 = vld [vmem:[#allocation2] sm:$0xff]
        %v799 = vld [vmem:[#allocation2 + $0x8] sm:$0xff]
        %v800 = vld [vmem:[#allocation2 + $0x10] sm:$0xff]
        %v801 = vld [vmem:[#allocation2 + $0x18] sm:$0xff]
        %v802 = vld [vmem:[#allocation2 + $0x20] sm:$0xff]
        %v803 = vld [vmem:[#allocation2 + $0x28] sm:$0xff]
        %v804 = vld [vmem:[#allocation2 + $0x30] sm:$0xff]
        %v805 = vld [vmem:[#allocation2 + $0x38] sm:$0xff]
        %v806 = vld [vmem:[#allocation2 + $0x40] sm:$0xff]
        %v807 = vld [vmem:[#allocation2 + $0x48] sm:$0xff]
        %v808 = vld [vmem:[#allocation2 + $0x50] sm:$0xff]
        %v809 = vld [vmem:[#allocation2 + $0x58] sm:$0xff]
        %v810 = vld [vmem:[#allocation2 + $0x60] sm:$0xff]
        %v811 = vld [vmem:[#allocation2 + $0x68] sm:$0xff]
        %v812 = vld [vmem:[#allocation2 + $0x70] sm:$0xff]
        %v813 = vld [vmem:[#allocation2 + $0x78] sm:$0xff]
        %v814 = vld [vmem:[#allocation2 + $0x80] sm:$0xff]
        %v815 = vld [vmem:[#allocation2 + $0x88] sm:$0xff]
        %v816 = vld [vmem:[#allocation2 + $0x90] sm:$0xff]
        %v817 = vld [vmem:[#allocation2 + $0x98] sm:$0xff]
        %v818 = vld [vmem:[#allocation2 + $0xa0] sm:$0xff]
        %v819 = vld [vmem:[#allocation2 + $0xa8] sm:$0xff]
        %v820 = vld [vmem:[#allocation2 + $0xb0] sm:$0xff]
        %v821 = vld [vmem:[#allocation2 + $0xb8] sm:$0xff]
        %v822 = vld [vmem:[#allocation2 + $0xc0] sm:$0xff]
        %v823 = vld [vmem:[#allocation2 + $0xc8] sm:$0xff]
        %v824 = vld [vmem:[#allocation2 + $0xd0] sm:$0xff]
        %v825 = vld [vmem:[#allocation2 + $0xd8] sm:$0xff]
        %v826 = vld [vmem:[#allocation2 + $0xe0] sm:$0xff]
        %v827 = vld [vmem:[#allocation2 + $0xe8] sm:$0xff]
        %v828 = vld [vmem:[#allocation2 + $0xf0] sm:$0xff]
        %v829 = vld [vmem:[#allocation2 + $0xf8] sm:$0xff]
        %v830 = vld [vmem:[%s369] sm:$0x1]
        %v832 = vperm.slane %v830, 0
        %v834 = vmul.f32 %v798, %v832
        %v835 = vmul.f32 %v799, %v832
        %v836 = vmul.f32 %v800, %v832
        %v837 = vmul.f32 %v801, %v832
        %v838 = vmul.f32 %v802, %v832
        %v839 = vmul.f32 %v803, %v832
        %v840 = vmul.f32 %v804, %v832
        %v841 = vmul.f32 %v805, %v832
        %v842 = vmul.f32 %v806, %v832
        %v843 = vmul.f32 %v807, %v832
        %v844 = vmul.f32 %v808, %v832
        %v845 = vmul.f32 %v809, %v832
        %v846 = vmul.f32 %v810, %v832
        %v847 = vmul.f32 %v811, %v832
        %v848 = vmul.f32 %v812, %v832
        %v849 = vmul.f32 %v813, %v832
        %v850 = vmul.f32 %v814, %v832
        %v851 = vmul.f32 %v815, %v832
        %v852 = vmul.f32 %v816, %v832
        %v853 = vmul.f32 %v817, %v832
        %v854 = vmul.f32 %v818, %v832
        %v855 = vmul.f32 %v819, %v832
        %v856 = vmul.f32 %v820, %v832
        %v857 = vmul.f32 %v821, %v832
        %v858 = vmul.f32 %v822, %v832
        %v859 = vmul.f32 %v823, %v832
        %v860 = vmul.f32 %v824, %v832
        %v861 = vmul.f32 %v825, %v832
        %v862 = vmul.f32 %v826, %v832
        %v863 = vmul.f32 %v827, %v832
        %v864 = vmul.f32 %v828, %v832
        %v865 = vmul.f32 %v829, %v832
        %v866 = vld [vmem:[%s372] sm:$0x1]
        %v868 = vperm.slane %v866, 0
        %v870 = vadd.f32 %v834, %v868
        %v871 = vadd.f32 %v835, %v868
        %v872 = vadd.f32 %v836, %v868
        %v873 = vadd.f32 %v837, %v868
        %v874 = vadd.f32 %v838, %v868
        %v875 = vadd.f32 %v839, %v868
        %v876 = vadd.f32 %v840, %v868
        %v877 = vadd.f32 %v841, %v868
        %v878 = vadd.f32 %v842, %v868
        %v879 = vadd.f32 %v843, %v868
        %v880 = vadd.f32 %v844, %v868
        %v881 = vadd.f32 %v845, %v868
        %v882 = vadd.f32 %v846, %v868
        %v883 = vadd.f32 %v847, %v868
        %v884 = vadd.f32 %v848, %v868
        %v885 = vadd.f32 %v849, %v868
        %v886 = vadd.f32 %v850, %v868
        %v887 = vadd.f32 %v851, %v868
        %v888 = vadd.f32 %v852, %v868
        %v889 = vadd.f32 %v853, %v868
        %v890 = vadd.f32 %v854, %v868
        %v891 = vadd.f32 %v855, %v868
        %v892 = vadd.f32 %v856, %v868
        %v893 = vadd.f32 %v857, %v868
        %v894 = vadd.f32 %v858, %v868
        %v895 = vadd.f32 %v859, %v868
        %v896 = vadd.f32 %v860, %v868
        %v897 = vadd.f32 %v861, %v868
        %v898 = vadd.f32 %v862, %v868
        %v899 = vadd.f32 %v863, %v868
        %v900 = vadd.f32 %v864, %v868
        %v901 = vadd.f32 %v865, %v868
        %v902 = vmax.f32 %v870, 0.0
        %v903 = vmax.f32 %v871, 0.0
        %v904 = vmax.f32 %v872, 0.0
        %v905 = vmax.f32 %v873, 0.0
        %v906 = vmax.f32 %v874, 0.0
        %v907 = vmax.f32 %v875, 0.0
        %v908 = vmax.f32 %v876, 0.0
        %v909 = vmax.f32 %v877, 0.0
        %v910 = vmax.f32 %v878, 0.0
        %v911 = vmax.f32 %v879, 0.0
        %v912 = vmax.f32 %v880, 0.0
        %v913 = vmax.f32 %v881, 0.0
        %v914 = vmax.f32 %v882, 0.0
        %v915 = vmax.f32 %v883, 0.0
        %v916 = vmax.f32 %v884, 0.0
        %v917 = vmax.f32 %v885, 0.0
        %v918 = vmax.f32 %v886, 0.0
        %v919 = vmax.f32 %v887, 0.0
        %v920 = vmax.f32 %v888, 0.0
        %v921 = vmax.f32 %v889, 0.0
        %v922 = vmax.f32 %v890, 0.0
        %v923 = vmax.f32 %v891, 0.0
        %v924 = vmax.f32 %v892, 0.0
        %v925 = vmax.f32 %v893, 0.0
        %v926 = vmax.f32 %v894, 0.0
        %v927 = vmax.f32 %v895, 0.0
        %v928 = vmax.f32 %v896, 0.0
        %v929 = vmax.f32 %v897, 0.0
        %v930 = vmax.f32 %v898, 0.0
        %v931 = vmax.f32 %v899, 0.0
        %v932 = vmax.f32 %v900, 0.0
        %v933 = vmax.f32 %v901, 0.0
        %v934 = vpack.c.bf16 %v902, %v902
        %v935 = vpack.c.bf16 %v903, %v903
        %v936 = vpack.c.bf16 %v904, %v904
        %v937 = vpack.c.bf16 %v905, %v905
        %v938 = vpack.c.bf16 %v906, %v906
        %v939 = vpack.c.bf16 %v907, %v907
        %v940 = vpack.c.bf16 %v908, %v908
        %v941 = vpack.c.bf16 %v909, %v909
        %v942 = vpack.c.bf16 %v910, %v910
        %v943 = vpack.c.bf16 %v911, %v911
        %v944 = vpack.c.bf16 %v912, %v912
        %v945 = vpack.c.bf16 %v913, %v913
        %v946 = vpack.c.bf16 %v914, %v914
        %v947 = vpack.c.bf16 %v915, %v915
        %v948 = vpack.c.bf16 %v916, %v916
        %v949 = vpack.c.bf16 %v917, %v917
        %v950 = vpack.c.bf16 %v918, %v918
        %v951 = vpack.c.bf16 %v919, %v919
        %v952 = vpack.c.bf16 %v920, %v920
        %v953 = vpack.c.bf16 %v921, %v921
        %v954 = vpack.c.bf16 %v922, %v922
        %v955 = vpack.c.bf16 %v923, %v923
        %v956 = vpack.c.bf16 %v924, %v924
        %v957 = vpack.c.bf16 %v925, %v925
        %v958 = vpack.c.bf16 %v926, %v926
        %v959 = vpack.c.bf16 %v927, %v927
        %v960 = vpack.c.bf16 %v928, %v928
        %v961 = vpack.c.bf16 %v929, %v929
        %v962 = vpack.c.bf16 %v930, %v930
        %v963 = vpack.c.bf16 %v931, %v931
        %v964 = vpack.c.bf16 %v932, %v932
        %v965 = vpack.c.bf16 %v933, %v933
        %966 = vst [vmem:[%s380] sm:$0xf] %v934
        %967 = vst [vmem:[%s380 + $0x4] sm:$0xf] %v935
        %968 = vst [vmem:[%s380 + $0x8] sm:$0xf] %v936
        %969 = vst [vmem:[%s380 + $0xc] sm:$0xf] %v937
        %970 = vst [vmem:[%s380 + $0x10] sm:$0xf] %v938
        %971 = vst [vmem:[%s380 + $0x14] sm:$0xf] %v939
        %972 = vst [vmem:[%s380 + $0x18] sm:$0xf] %v940
        %973 = vst [vmem:[%s380 + $0x1c] sm:$0xf] %v941
        %974 = vst [vmem:[%s380 + $0x20] sm:$0xf] %v942
        %975 = vst [vmem:[%s380 + $0x24] sm:$0xf] %v943
        %976 = vst [vmem:[%s380 + $0x28] sm:$0xf] %v944
        %977 = vst [vmem:[%s380 + $0x2c] sm:$0xf] %v945
        %978 = vst [vmem:[%s380 + $0x30] sm:$0xf] %v946
        %979 = vst [vmem:[%s380 + $0x34] sm:$0xf] %v947
        %980 = vst [vmem:[%s380 + $0x38] sm:$0xf] %v948
        %981 = vst [vmem:[%s380 + $0x3c] sm:$0xf] %v949
        %982 = vst [vmem:[%s380 + $0x40] sm:$0xf] %v950
        %983 = vst [vmem:[%s380 + $0x44] sm:$0xf] %v951
        %984 = vst [vmem:[%s380 + $0x48] sm:$0xf] %v952
        %985 = vst [vmem:[%s380 + $0x4c] sm:$0xf] %v953
        %986 = vst [vmem:[%s380 + $0x50] sm:$0xf] %v954
        %987 = vst [vmem:[%s380 + $0x54] sm:$0xf] %v955
        %988 = vst [vmem:[%s380 + $0x58] sm:$0xf] %v956
        %989 = vst [vmem:[%s380 + $0x5c] sm:$0xf] %v957
        %990 = vst [vmem:[%s380 + $0x60] sm:$0xf] %v958
        %991 = vst [vmem:[%s380 + $0x64] sm:$0xf] %v959
        %992 = vst [vmem:[%s380 + $0x68] sm:$0xf] %v960
        %993 = vst [vmem:[%s380 + $0x6c] sm:$0xf] %v961
        %994 = vst [vmem:[%s380 + $0x70] sm:$0xf] %v962
        %995 = vst [vmem:[%s380 + $0x74] sm:$0xf] %v963
        %996 = vst [vmem:[%s380 + $0x78] sm:$0xf] %v964
        %997 = vst [vmem:[%s380 + $0x7c] sm:$0xf] %v965
      $region52: #{forward.53} parent=43 // pred_fallthru
        _
      %s998 = smul.u32 32, %s22
      %p999 = scmp.lt.s32.totalorder %s998, 63
      %s1000 = scalar_select %p999, %s998, 63
      %p1001 = scmp.lt.s32.totalorder %s23, 0
      %s1002 = scalar_select %p1001, %s23, 0
      %s1003 = sadd.s32 %s1002, %s1000
      %s1004 = smul.addr %s1003, 4
      %s1005 = scalar_lea.vmem %s6, %s1004
      // Predicated region
      $region53: #{forward.53} parent=43 // pred_check
        %p1006 = pneg %p216
      $region54: #{forward.53} parent=43 // pred_check_branch
        %1008 = sbr.rel (%p1006) target = $region56
      $region55: #{forward.53} parent=43 // pred_region
        %s1009 = smul.u32 32, %s22
      $region56: #{forward.53} parent=43 // pred_fallthru
        _
    $region44: #{forward.53} parent=5 // pred_fallthru
      _
    %p1010 = scmp.le.s32.totalorder 2, %s12
    // Predicated region
    $region57: #{forward.53} parent=5 // pred_check
      %p1011 = pneg %p1010
    $region58: #{forward.53} parent=5 // pred_check_branch
      %1013 = sbr.rel (%p1011) target = $region60
    $region59: #{forward.53} parent=5 // pred_region
      %s1014 = ssub.s32 %s12, 2
      // Predicated region
      $region61: #{forward.53} parent=59 // pred_check
        %p1015 = pneg %p222
      $region62: #{forward.53} parent=59 // pred_check_branch
        %1017 = sbr.rel (%p1015) target = $region64
      $region63: #{forward.53} parent=59 // pred_region
        %s1018 = smul.u32 32, %s25
        %p1019 = scmp.lt.s32.totalorder %s1018, 63
        %s1020 = scalar_select %p1019, %s1018, 63
        %p1021 = scmp.lt.s32.totalorder %s26, 0
        %s1022 = scalar_select %p1021, %s26, 0
        %s1023 = sadd.s32 %s1022, %s1020
        %s1024 = smul.addr %s1023, 4
        %s1025 = scalar_lea.vmem %s6, %s1024
      $region64: #{forward.53} parent=59 // pred_fallthru
        _
    $region60: #{forward.53} parent=5 // pred_fallthru
      _
  $region6: #{forward.53} parent=0 // loop_footer
    %s16 = sadd.s32 1, %s12
  $region7: #{forward.53} parent=0 // loop_footer_branch
    %11 = sbr.rel target = $region3
  $region8: #{forward.53} parent=0 // loop_exit
    _

// kernel: forward.51
$region0: #{forward.51}
  #allocation0 [shape = 'u32[]', space=smem, size = 0x4, offset = 0x4, fixed_abs, tag = 'smem constant byte address 0x4 - core index']
  #allocation1 [shape = 'u32[72,128]{1,0:T(1,128)}', space=vmem, size = 0x9000, scoped, tag = 'internal scratch']
  #allocation2 [shape = 'f32[256,128]{1,0:T(8,128)}', space=vmem, size = 0x20000, scoped, tag = 'scratch operand']
  %s0 = inlined_call_operand.vmem [shape: bf16[512,256], index: 0, kind: input, shape index: {}]
  %s1 = inlined_call_operand.vmem [shape: bf16[256,128], index: 1, kind: input, shape index: {}]
  %s2 = inlined_call_operand.vmem [shape: f32[1,256], index: 2, kind: input, shape index: {}]
  %s3 = inlined_call_operand.vmem [shape: f32[1,256], index: 3, kind: input, shape index: {}]
  %s4 = inlined_call_operand.vmem [shape: f32[1,128], index: 4, kind: input, shape index: {}]
  %s5 = inlined_call_operand.vmem [shape: f32[1,128], index: 5, kind: input, shape index: {}]
  %s6 = inlined_call_operand.vmem [shape: bf16[512,128], index: 6, kind: output, shape index: {}]
  %s7 = sld [smem:[#allocation0]]
  $region65: #{forward.51} parent=0
    _
  %s9 = ssub.s32 1, %s7
  %s10 = scalar_select 0, %s9, %s7
  loop: start=0, step=1, limit=4
  $region2: #{forward.51} parent=0 // loop_pre_header
    _
  $region3: #{forward.51} parent=0 // loop_header
    %s12 = sphi 0, %s16
    %p13 = scmp.ge.s32.totalorder %s12, 4
    %s19 = sphi 0, %s38
    %s20 = sphi 0, %s34
    %s21 = sphi 0, %s30
    %s22 = sphi 0, %s19
    %s23 = sphi 0, %s20
    %s24 = sphi 0, %s21
    %s25 = sphi 0, %s22
    %s26 = sphi 0, %s23
    %s27 = sphi 0, %s24
    %s43 = sphi 0, %s45
    %s46 = sphi 0, %s43
    %s47 = sphi 0, %s46
    %s63 = sphi 0, %s47
    %s71 = sphi 0, %s73
    %s74 = sphi 0, %s71
    %s75 = sphi 0, %s74
    %s91 = sphi 0, %s75
    %s97 = sphi 0, %s99
    %s100 = sphi 0, %s97
    %s101 = sphi 0, %s100
    %s117 = sphi 0, %s101
    %s123 = sphi 0, %s125
    %s126 = sphi 0, %s123
    %s127 = sphi 0, %s126
    %s143 = sphi 0, %s127
    %s149 = sphi 0, %s151
    %s152 = sphi 0, %s149
    %s153 = sphi 0, %s152
    %s169 = sphi 0, %s153
    %s175 = sphi 0, %s177
    %s178 = sphi 0, %s175
    %s179 = sphi 0, %s178
    %s195 = sphi 0, %s179
    %s203 = sphi 0, %s205
    %s206 = sphi 0, %s203
    %s207 = sphi 0, %s206
    %s223 = sphi 0, %s207
  $region4: #{forward.51} parent=0 // loop_header_branch
    %15 = sbr.rel (%p13) target = $region8
  $region5: #{forward.51} parent=0 // loop_body
    %s17 = ssub.s32 %s12, 1
    %s18 = ssub.s32 %s12, 2
    %s28 = sadd.s32 1, %s21
    %p29 = scmp.ge.s32.totalorder %s28, 1
    %s30 = scalar_select %p29, 0, %s28
    %s31 = sadd.s32 1, %s20
    %s32 = scalar_select %p29, %s31, %s20
    %p33 = scmp.ge.s32.totalorder %s32, 1
    %s34 = scalar_select %p33, 0, %s32
    %s35 = sadd.s32 1, %s19
    %s36 = scalar_select %p33, %s35, %s19
    %p37 = scmp.ge.s32.totalorder %s36, 2
    %s38 = scalar_select %p37, 0, %s36
    %s39 = ssub.s32 %s19, %s38
    %s40 = ssub.s32 %s21, %s30
    %s41 = sor.u32 %s39, %s40
    %p42 = scmp.eq.s32.totalorder %s41, 0
    %s44 = sadd.s32 %s43, 1
    %s45 = scalar_select %p42, %s43, %s44
    %p48 = pneg %p42
    %p49 = scmp.eq.s32.totalorder %s12, 1
    %p50 = por %p48, %p49
    %p51 = scmp.ne.s32.totalorder %s43, %s46
    %p52 = scmp.eq.s32.totalorder %s12, 0
    %p53 = por %p51, %p52
    %p54 = scmp.ne.s32.totalorder %s43, %s46
    %p55 = scmp.eq.s32.totalorder %s17, 1
    %p56 = por %p54, %p55
    %p57 = scmp.ne.s32.totalorder %s46, %s47
    %p58 = scmp.eq.s32.totalorder %s17, 0
    %p59 = por %p57, %p58
    %p60 = scmp.ne.s32.totalorder %s46, %s47
    %p61 = scmp.eq.s32.totalorder %s18, 1
    %p62 = por %p60, %p61
    %p64 = scmp.ne.s32.totalorder %s47, %s63
    %p65 = scmp.eq.s32.totalorder %s18, 0
    %p66 = por %p64, %p65
    %s67 = ssub.s32 %s21, %s30
    %s68 = ssub.s32 %s20, %s34
    %s69 = sor.u32 %s67, %s68
    %p70 = scmp.eq.s32.totalorder %s69, 0
    %s72 = sadd.s32 %s71, 1
    %s73 = scalar_select %p70, %s71, %s72
    %p76 = pneg %p70
    %p77 = scmp.eq.s32.totalorder %s12, 1
    %p78 = por %p76, %p77
    %p79 = scmp.ne.s32.totalorder %s71, %s74
    %p80 = scmp.eq.s32.totalorder %s12, 0
    %p81 = por %p79, %p80
    %p82 = scmp.ne.s32.totalorder %s71, %s74
    %p83 = scmp.eq.s32.totalorder %s17, 1
    %p84 = por %p82, %p83
    %p85 = scmp.ne.s32.totalorder %s74, %s75
    %p86 = scmp.eq.s32.totalorder %s17, 0
    %p87 = por %p85, %p86
    %p88 = scmp.ne.s32.totalorder %s74, %s75
    %p89 = scmp.eq.s32.totalorder %s18, 1
    %p90 = por %p88, %p89
    %p92 = scmp.ne.s32.totalorder %s75, %s91
    %p93 = scmp.eq.s32.totalorder %s18, 0
    %p94 = por %p92, %p93
    %s95 = ssub.s32 %s21, %s30
    %p96 = scmp.eq.s32.totalorder %s95, 0
    %s98 = sadd.s32 %s97, 1
    %s99 = scalar_select %p96, %s97, %s98
    %p102 = pneg %p96
    %p103 = scmp.eq.s32.totalorder %s12, 1
    %p104 = por %p102, %p103
    %p105 = scmp.ne.s32.totalorder %s97, %s100
    %p106 = scmp.eq.s32.totalorder %s12, 0
    %p107 = por %p105, %p106
    %p108 = scmp.ne.s32.totalorder %s97, %s100
    %p109 = scmp.eq.s32.totalorder %s17, 1
    %p110 = por %p108, %p109
    %p111 = scmp.ne.s32.totalorder %s100, %s101
    %p112 = scmp.eq.s32.totalorder %s17, 0
    %p113 = por %p111, %p112
    %p114 = scmp.ne.s32.totalorder %s100, %s101
    %p115 = scmp.eq.s32.totalorder %s18, 1
    %p116 = por %p114, %p115
    %p118 = scmp.ne.s32.totalorder %s101, %s117
    %p119 = scmp.eq.s32.totalorder %s18, 0
    %p120 = por %p118, %p119
    %s121 = ssub.s32 %s21, %s30
    %p122 = scmp.eq.s32.totalorder %s121, 0
    %s124 = sadd.s32 %s123, 1
    %s125 = scalar_select %p122, %s123, %s124
    %p128 = pneg %p122
    %p129 = scmp.eq.s32.totalorder %s12, 1
    %p130 = por %p128, %p129
    %p131 = scmp.ne.s32.totalorder %s123, %s126
    %p132 = scmp.eq.s32.totalorder %s12, 0
    %p133 = por %p131, %p132
    %p134 = scmp.ne.s32.totalorder %s123, %s126
    %p135 = scmp.eq.s32.totalorder %s17, 1
    %p136 = por %p134, %p135
    %p137 = scmp.ne.s32.totalorder %s126, %s127
    %p138 = scmp.eq.s32.totalorder %s17, 0
    %p139 = por %p137, %p138
    %p140 = scmp.ne.s32.totalorder %s126, %s127
    %p141 = scmp.eq.s32.totalorder %s18, 1
    %p142 = por %p140, %p141
    %p144 = scmp.ne.s32.totalorder %s127, %s143
    %p145 = scmp.eq.s32.totalorder %s18, 0
    %p146 = por %p144, %p145
    %s147 = ssub.s32 %s20, %s34
    %p148 = scmp.eq.s32.totalorder %s147, 0
    %s150 = sadd.s32 %s149, 1
    %s151 = scalar_select %p148, %s149, %s150
    %p154 = pneg %p148
    %p155 = scmp.eq.s32.totalorder %s12, 1
    %p156 = por %p154, %p155
    %p157 = scmp.ne.s32.totalorder %s149, %s152
    %p158 = scmp.eq.s32.totalorder %s12, 0
    %p159 = por %p157, %p158
    %p160 = scmp.ne.s32.totalorder %s149, %s152
    %p161 = scmp.eq.s32.totalorder %s17, 1
    %p162 = por %p160, %p161
    %p163 = scmp.ne.s32.totalorder %s152, %s153
    %p164 = scmp.eq.s32.totalorder %s17, 0
    %p165 = por %p163, %p164
    %p166 = scmp.ne.s32.totalorder %s152, %s153
    %p167 = scmp.eq.s32.totalorder %s18, 1
    %p168 = por %p166, %p167
    %p170 = scmp.ne.s32.totalorder %s153, %s169
    %p171 = scmp.eq.s32.totalorder %s18, 0
    %p172 = por %p170, %p171
    %s173 = ssub.s32 %s20, %s34
    %p174 = scmp.eq.s32.totalorder %s173, 0
    %s176 = sadd.s32 %s175, 1
    %s177 = scalar_select %p174, %s175, %s176
    %p180 = pneg %p174
    %p181 = scmp.eq.s32.totalorder %s12, 1
    %p182 = por %p180, %p181
    %p183 = scmp.ne.s32.totalorder %s175, %s178
    %p184 = scmp.eq.s32.totalorder %s12, 0
    %p185 = por %p183, %p184
    %p186 = scmp.ne.s32.totalorder %s175, %s178
    %p187 = scmp.eq.s32.totalorder %s17, 1
    %p188 = por %p186, %p187
    %p189 = scmp.ne.s32.totalorder %s178, %s179
    %p190 = scmp.eq.s32.totalorder %s17, 0
    %p191 = por %p189, %p190
    %p192 = scmp.ne.s32.totalorder %s178, %s179
    %p193 = scmp.eq.s32.totalorder %s18, 1
    %p194 = por %p192, %p193
    %p196 = scmp.ne.s32.totalorder %s179, %s195
    %p197 = scmp.eq.s32.totalorder %s18, 0
    %p198 = por %p196, %p197
    %s199 = ssub.s32 %s19, %s38
    %s200 = ssub.s32 %s20, %s34
    %s201 = sor.u32 %s199, %s200
    %p202 = scmp.eq.s32.totalorder %s201, 0
    %s204 = sadd.s32 %s203, 1
    %s205 = scalar_select %p202, %s203, %s204
    %p208 = pneg %p202
    %p209 = scmp.eq.s32.totalorder %s12, 1
    %p210 = por %p208, %p209
    %p211 = scmp.ne.s32.totalorder %s203, %s206
    %p212 = scmp.eq.s32.totalorder %s12, 0
    %p213 = por %p211, %p212
    %p214 = scmp.ne.s32.totalorder %s203, %s206
    %p215 = scmp.eq.s32.totalorder %s17, 1
    %p216 = por %p214, %p215
    %p217 = scmp.ne.s32.totalorder %s206, %s207
    %p218 = scmp.eq.s32.totalorder %s17, 0
    %p219 = por %p217, %p218
    %p220 = scmp.ne.s32.totalorder %s206, %s207
    %p221 = scmp.eq.s32.totalorder %s18, 1
    %p222 = por %p220, %p221
    %p224 = scmp.ne.s32.totalorder %s207, %s223
    %p225 = scmp.eq.s32.totalorder %s18, 0
    %p226 = por %p224, %p225
    %p227 = scmp.le.s32.totalorder 1, %s12
    %p228 = scmp.lt.s32.totalorder %s12, 3
    %p229 = pnand %p227, %p228
    %p230 = pneg %p229
    // Predicated region
    $region9: #{forward.51} parent=5 // pred_check
      _
    $region10: #{forward.51} parent=5 // pred_check_branch
      %232 = sbr.rel (%p229) target = $region12
    $region11: #{forward.51} parent=5 // pred_region
      %s233 = ssub.s32 %s12, 1
      // Predicated region
      $region13: #{forward.51} parent=11 // pred_check
        %p234 = pneg %p87
      $region14: #{forward.51} parent=11 // pred_check_branch
        %236 = sbr.rel (%p234) target = $region16
      $region15: #{forward.51} parent=11 // pred_region
        %s237 = smul.u32 32, %s24
        %p238 = scmp.lt.s32.totalorder %s237, 31
        %s239 = scalar_select %p238, %s237, 31
        %p240 = scmp.lt.s32.totalorder %s23, 0
        %s241 = scalar_select %p240, %s23, 0
        %s242 = sadd.s32 %s241, %s239
        %s243 = smul.addr %s242, 4
        %s244 = scalar_lea.vmem %s1, %s243
        %s245 = smul.u32 32, %s24
      $region16: #{forward.51} parent=11 // pred_fallthru
        _
      // Predicated region
      $region17: #{forward.51} parent=11 // pred_check
        %p246 = pneg %p113
      $region18: #{forward.51} parent=11 // pred_check_branch
        %248 = sbr.rel (%p246) target = $region20
      $region19: #{forward.51} parent=11 // pred_region
        %s249 = smul.u32 2, %s24
        %p250 = scmp.lt.s32.totalorder %s249, 1
        %s251 = scalar_select %p250, %s249, 1
        %s252 = scalar_lea.vmem %s2, %s251
        %s253 = smul.u32 2, %s24
      $region20: #{forward.51} parent=11 // pred_fallthru
        _
      // Predicated region
      $region21: #{forward.51} parent=11 // pred_check
        %p254 = pneg %p139
      $region22: #{forward.51} parent=11 // pred_check_branch
        %256 = sbr.rel (%p254) target = $region24
      $region23: #{forward.51} parent=11 // pred_region
        %s257 = smul.u32 2, %s24
        %p258 = scmp.lt.s32.totalorder %s257, 1
        %s259 = scalar_select %p258, %s257, 1
        %s260 = scalar_lea.vmem %s3, %s259
        %s261 = smul.u32 2, %s24
      $region24: #{forward.51} parent=11 // pred_fallthru
        _
      // Predicated region
      $region25: #{forward.51} parent=11 // pred_check
        %p262 = pneg %p165
      $region26: #{forward.51} parent=11 // pred_check_branch
        %264 = sbr.rel (%p262) target = $region28
      $region27: #{forward.51} parent=11 // pred_region
        %p265 = scmp.lt.s32.totalorder %s23, 0
        %s266 = scalar_select %p265, %s23, 0
        %s267 = scalar_lea.vmem %s4, %s266
      $region28: #{forward.51} parent=11 // pred_fallthru
        _
      // Predicated region
      $region29: #{forward.51} parent=11 // pred_check
        %p268 = pneg %p191
      $region30: #{forward.51} parent=11 // pred_check_branch
        %270 = sbr.rel (%p268) target = $region32
      $region31: #{forward.51} parent=11 // pred_region
        %p271 = scmp.lt.s32.totalorder %s23, 0
        %s272 = scalar_select %p271, %s23, 0
        %s273 = scalar_lea.vmem %s5, %s272
      $region32: #{forward.51} parent=11 // pred_fallthru
        _
    $region12: #{forward.51} parent=5 // pred_fallthru
      _
    %p274 = scmp.lt.s32.totalorder %s12, 2
    // Predicated region
    $region33: #{forward.51} parent=5 // pred_check
      %p275 = pneg %p274
    $region34: #{forward.51} parent=5 // pred_check_branch
      %277 = sbr.rel (%p275) target = $region36
    $region35: #{forward.51} parent=5 // pred_region
      // Predicated region
      $region37: #{forward.51} parent=35 // pred_check
        %p278 = pneg %p53
      $region38: #{forward.51} parent=35 // pred_check_branch
        %280 = sbr.rel (%p278) target = $region40
      $region39: #{forward.51} parent=35 // pred_region
        %s281 = smul.u32 32, %s19
        %s282 = smul.u32 2, %s21
        %p283 = scmp.lt.s32.totalorder %s281, 63
        %s284 = scalar_select %p283, %s281, 63
        %p285 = scmp.lt.s32.totalorder %s282, 1
        %s286 = scalar_select %p285, %s282, 1
        %s287 = smul.addr %s284, 2
        %s288 = sadd.s32 %s286, %s287
        %s289 = smul.addr %s288, 4
        %s290 = scalar_lea.vmem %s0, %s289
        %s291 = smul.u32 32, %s19
        %s292 = smul.u32 2, %s21
      $region40: #{forward.51} parent=35 // pred_fallthru
        _
    $region36: #{forward.51} parent=5 // pred_fallthru
      _
    %p293 = scmp.le.s32.totalorder 1, %s12
    %p294 = scmp.lt.s32.totalorder %s12, 3
    %p295 = pnand %p293, %p294
    %p296 = pneg %p295
    // Predicated region
    $region41: #{forward.51} parent=5 // pred_check
      _
    $region42: #{forward.51} parent=5 // pred_check_branch
      %298 = sbr.rel (%p295) target = $region44
    $region43: #{forward.51} parent=5 // pred_region
      %s299 = ssub.s32 %s12, 1
      %s300 = smul.u32 32, %s22
      %s301 = smul.u32 2, %s24
      %p302 = scmp.lt.s32.totalorder %s300, 63
      %s303 = scalar_select %p302, %s300, 63
      %p304 = scmp.lt.s32.totalorder %s301, 1
      %s305 = scalar_select %p304, %s301, 1
      %s306 = smul.addr %s303, 2
      %s307 = sadd.s32 %s305, %s306
      %s308 = smul.addr %s307, 4
      %s309 = scalar_lea.vmem %s0, %s308
      %p310 = pneg %p59
      %p311 = pneg %p56
      %s312 = smul.u32 32, %s24
      %p313 = scmp.lt.s32.totalorder %s312, 31
      %s314 = scalar_select %p313, %s312, 31
      %p315 = scmp.lt.s32.totalorder %s23, 0
      %s316 = scalar_select %p315, %s23, 0
      %s317 = sadd.s32 %s316, %s314
      %s318 = smul.addr %s317, 4
      %s319 = scalar_lea.vmem %s1, %s318
      %p320 = pneg %p87
      %p321 = pneg %p84
      %s322 = smul.u32 2, %s24
      %p323 = scmp.lt.s32.totalorder %s322, 1
      %s324 = scalar_select %p323, %s322, 1
      %s325 = scalar_lea.vmem %s2, %s324
      %p326 = pneg %p113
      %p327 = pneg %p110
      %s328 = smul.u32 2, %s24
      %p329 = scmp.lt.s32.totalorder %s328, 1
      %s330 = scalar_select %p329, %s328, 1
      %s331 = scalar_lea.vmem %s3, %s330
      %p332 = pneg %p139
      %p333 = pneg %p136
      %p334 = scmp.lt.s32.totalorder %s23, 0
      %s335 = scalar_select %p334, %s23, 0
      %s336 = scalar_lea.vmem %s4, %s335
      %p337 = pneg %p165
      %p338 = pneg %p162
      %p339 = scmp.lt.s32.totalorder %s23, 0
      %s340 = scalar_select %p339, %s23, 0
      %s341 = scalar_lea.vmem %s5, %s340
      %p342 = pneg %p191
      %p343 = pneg %p188
      %p344 = pneg %p219
      %p345 = pneg %p216
      %s346 = smul.u32 32, %s22
      %p347 = scmp.lt.s32.totalorder %s346, 63
      %s348 = scalar_select %p347, %s346, 63
      %p349 = scmp.lt.s32.totalorder %s23, 0
      %s350 = scalar_select %p349, %s23, 0
      %s351 = sadd.s32 %s350, %s348
      %s352 = smul.addr %s351, 4
      %s353 = scalar_lea.vmem %s6, %s352
      %s354 = smul.u32 32, %s22
      %s355 = smul.u32 2, %s24
      %p356 = scmp.lt.s32.totalorder %s354, 63
      %s357 = scalar_select %p356, %s354, 63
      %p358 = scmp.lt.s32.totalorder %s355, 1
      %s359 = scalar_select %p358, %s355, 1
      %s360 = smul.addr %s357, 2
      %s361 = sadd.s32 %s359, %s360
      %s362 = smul.addr %s361, 4
      %s363 = scalar_lea.vmem %s0, %s362
      %s364 = smul.u32 32, %s22
      %s365 = smul.u32 2, %s24
      %s366 = smul.u32 32, %s24
      %p367 = scmp.lt.s32.totalorder %s366, 31
      %s368 = scalar_select %p367, %s366, 31
      %p369 = scmp.lt.s32.totalorder %s23, 0
      %s370 = scalar_select %p369, %s23, 0
      %s371 = sadd.s32 %s370, %s368
      %s372 = smul.addr %s371, 4
      %s373 = scalar_lea.vmem %s1, %s372
      %s374 = smul.u32 32, %s24
      %s375 = smul.u32 2, %s24
      %p376 = scmp.lt.s32.totalorder %s375, 1
      %s377 = scalar_select %p376, %s375, 1
      %s378 = scalar_lea.vmem %s2, %s377
      %s379 = smul.u32 2, %s24
      %s380 = smul.u32 2, %s24
      %p381 = scmp.lt.s32.totalorder %s380, 1
      %s382 = scalar_select %p381, %s380, 1
      %s383 = scalar_lea.vmem %s3, %s382
      %s384 = smul.u32 2, %s24
      %p385 = scmp.lt.s32.totalorder %s23, 0
      %s386 = scalar_select %p385, %s23, 0
      %s387 = scalar_lea.vmem %s4, %s386
      %p388 = scmp.lt.s32.totalorder %s23, 0
      %s389 = scalar_select %p388, %s23, 0
      %s390 = scalar_lea.vmem %s5, %s389
      %s391 = smul.u32 32, %s22
      %p392 = scmp.lt.s32.totalorder %s391, 63
      %s393 = scalar_select %p392, %s391, 63
      %p394 = scmp.lt.s32.totalorder %s23, 0
      %s395 = scalar_select %p394, %s23, 0
      %s396 = sadd.s32 %s395, %s393
      %s397 = smul.addr %s396, 4
      %s398 = scalar_lea.vmem %s6, %s397
      %s399 = smul.u32 32, %s22
      %p400 = scmp.eq.s32.totalorder %s24, 0
      // Predicated region
      $region45: #{forward.51} parent=43 // pred_check
        %p401 = pneg %p400
      $region46: #{forward.51} parent=43 // pred_check_branch
        %403 = sbr.rel (%p401) target = $region48
      $region47: #{forward.51} parent=43 // pred_region
        %404 = vst [vmem:[#allocation2] sm:$0xff] 0.0
        %405 = vst [vmem:[#allocation2 + $0x8] sm:$0xff] 0.0
        %406 = vst [vmem:[#allocation2 + $0x10] sm:$0xff] 0.0
        %407 = vst [vmem:[#allocation2 + $0x18] sm:$0xff] 0.0
        %408 = vst [vmem:[#allocation2 + $0x20] sm:$0xff] 0.0
        %409 = vst [vmem:[#allocation2 + $0x28] sm:$0xff] 0.0
        %410 = vst [vmem:[#allocation2 + $0x30] sm:$0xff] 0.0
        %411 = vst [vmem:[#allocation2 + $0x38] sm:$0xff] 0.0
        %412 = vst [vmem:[#allocation2 + $0x40] sm:$0xff] 0.0
        %413 = vst [vmem:[#allocation2 + $0x48] sm:$0xff] 0.0
        %414 = vst [vmem:[#allocation2 + $0x50] sm:$0xff] 0.0
        %415 = vst [vmem:[#allocation2 + $0x58] sm:$0xff] 0.0
        %416 = vst [vmem:[#allocation2 + $0x60] sm:$0xff] 0.0
        %417 = vst [vmem:[#allocation2 + $0x68] sm:$0xff] 0.0
        %418 = vst [vmem:[#allocation2 + $0x70] sm:$0xff] 0.0
        %419 = vst [vmem:[#allocation2 + $0x78] sm:$0xff] 0.0
        %420 = vst [vmem:[#allocation2 + $0x80] sm:$0xff] 0.0
        %421 = vst [vmem:[#allocation2 + $0x88] sm:$0xff] 0.0
        %422 = vst [vmem:[#allocation2 + $0x90] sm:$0xff] 0.0
        %423 = vst [vmem:[#allocation2 + $0x98] sm:$0xff] 0.0
        %424 = vst [vmem:[#allocation2 + $0xa0] sm:$0xff] 0.0
        %425 = vst [vmem:[#allocation2 + $0xa8] sm:$0xff] 0.0
        %426 = vst [vmem:[#allocation2 + $0xb0] sm:$0xff] 0.0
        %427 = vst [vmem:[#allocation2 + $0xb8] sm:$0xff] 0.0
        %428 = vst [vmem:[#allocation2 + $0xc0] sm:$0xff] 0.0
        %429 = vst [vmem:[#allocation2 + $0xc8] sm:$0xff] 0.0
        %430 = vst [vmem:[#allocation2 + $0xd0] sm:$0xff] 0.0
        %431 = vst [vmem:[#allocation2 + $0xd8] sm:$0xff] 0.0
        %432 = vst [vmem:[#allocation2 + $0xe0] sm:$0xff] 0.0
        %433 = vst [vmem:[#allocation2 + $0xe8] sm:$0xff] 0.0
        %434 = vst [vmem:[#allocation2 + $0xf0] sm:$0xff] 0.0
        %435 = vst [vmem:[#allocation2 + $0xf8] sm:$0xff] 0.0
      $region48: #{forward.51} parent=43 // pred_fallthru
        _
      %v436 = vld [vmem:[%s363] sm:$0xff]
      %v437 = vld [vmem:[%s363 + $0x8] sm:$0xff]
      %v438 = vld [vmem:[%s363 + $0x10] sm:$0xff]
      %v439 = vld [vmem:[%s363 + $0x18] sm:$0xff]
      %v440 = vld [vmem:[%s363 + $0x20] sm:$0xff]
      %v441 = vld [vmem:[%s363 + $0x28] sm:$0xff]
      %v442 = vld [vmem:[%s363 + $0x30] sm:$0xff]
      %v443 = vld [vmem:[%s363 + $0x38] sm:$0xff]
      %v444 = vld [vmem:[%s363 + $0x40] sm:$0xff]
      %v445 = vld [vmem:[%s363 + $0x48] sm:$0xff]
      %v446 = vld [vmem:[%s363 + $0x50] sm:$0xff]
      %v447 = vld [vmem:[%s363 + $0x58] sm:$0xff]
      %v448 = vld [vmem:[%s363 + $0x60] sm:$0xff]
      %v449 = vld [vmem:[%s363 + $0x68] sm:$0xff]
      %v450 = vld [vmem:[%s363 + $0x70] sm:$0xff]
      %v451 = vld [vmem:[%s363 + $0x78] sm:$0xff]
      %v452 = vld [vmem:[%s363 + $0x80] sm:$0xff]
      %v453 = vld [vmem:[%s363 + $0x88] sm:$0xff]
      %v454 = vld [vmem:[%s363 + $0x90] sm:$0xff]
      %v455 = vld [vmem:[%s363 + $0x98] sm:$0xff]
      %v456 = vld [vmem:[%s363 + $0xa0] sm:$0xff]
      %v457 = vld [vmem:[%s363 + $0xa8] sm:$0xff]
      %v458 = vld [vmem:[%s363 + $0xb0] sm:$0xff]
      %v459 = vld [vmem:[%s363 + $0xb8] sm:$0xff]
      %v460 = vld [vmem:[%s363 + $0xc0] sm:$0xff]
      %v461 = vld [vmem:[%s363 + $0xc8] sm:$0xff]
      %v462 = vld [vmem:[%s363 + $0xd0] sm:$0xff]
      %v463 = vld [vmem:[%s363 + $0xd8] sm:$0xff]
      %v464 = vld [vmem:[%s363 + $0xe0] sm:$0xff]
      %v465 = vld [vmem:[%s363 + $0xe8] sm:$0xff]
      %v466 = vld [vmem:[%s363 + $0xf0] sm:$0xff]
      %v467 = vld [vmem:[%s363 + $0xf8] sm:$0xff]
      %v468 = vld [vmem:[#allocation2] sm:$0xff]
      %v469 = vld [vmem:[#allocation2 + $0x8] sm:$0xff]
      %v470 = vld [vmem:[#allocation2 + $0x10] sm:$0xff]
      %v471 = vld [vmem:[#allocation2 + $0x18] sm:$0xff]
      %v472 = vld [vmem:[#allocation2 + $0x20] sm:$0xff]
      %v473 = vld [vmem:[#allocation2 + $0x28] sm:$0xff]
      %v474 = vld [vmem:[#allocation2 + $0x30] sm:$0xff]
      %v475 = vld [vmem:[#allocation2 + $0x38] sm:$0xff]
      %v476 = vld [vmem:[#allocation2 + $0x40] sm:$0xff]
      %v477 = vld [vmem:[#allocation2 + $0x48] sm:$0xff]
      %v478 = vld [vmem:[#allocation2 + $0x50] sm:$0xff]
      %v479 = vld [vmem:[#allocation2 + $0x58] sm:$0xff]
      %v480 = vld [vmem:[#allocation2 + $0x60] sm:$0xff]
      %v481 = vld [vmem:[#allocation2 + $0x68] sm:$0xff]
      %v482 = vld [vmem:[#allocation2 + $0x70] sm:$0xff]
      %v483 = vld [vmem:[#allocation2 + $0x78] sm:$0xff]
      %v484 = vld [vmem:[#allocation2 + $0x80] sm:$0xff]
      %v485 = vld [vmem:[#allocation2 + $0x88] sm:$0xff]
      %v486 = vld [vmem:[#allocation2 + $0x90] sm:$0xff]
      %v487 = vld [vmem:[#allocation2 + $0x98] sm:$0xff]
      %v488 = vld [vmem:[#allocation2 + $0xa0] sm:$0xff]
      %v489 = vld [vmem:[#allocation2 + $0xa8] sm:$0xff]
      %v490 = vld [vmem:[#allocation2 + $0xb0] sm:$0xff]
      %v491 = vld [vmem:[#allocation2 + $0xb8] sm:$0xff]
      %v492 = vld [vmem:[#allocation2 + $0xc0] sm:$0xff]
      %v493 = vld [vmem:[#allocation2 + $0xc8] sm:$0xff]
      %v494 = vld [vmem:[#allocation2 + $0xd0] sm:$0xff]
      %v495 = vld [vmem:[#allocation2 + $0xd8] sm:$0xff]
      %v496 = vld [vmem:[#allocation2 + $0xe0] sm:$0xff]
      %v497 = vld [vmem:[#allocation2 + $0xe8] sm:$0xff]
      %v498 = vld [vmem:[#allocation2 + $0xf0] sm:$0xff]
      %v499 = vld [vmem:[#allocation2 + $0xf8] sm:$0xff]
      %v500 = vld [vmem:[%s373] sm:$0xf]
      %v501 = vld [vmem:[%s373 + $0x4] sm:$0xf]
      %v502 = vld [vmem:[%s373 + $0x8] sm:$0xf]
      %v503 = vld [vmem:[%s373 + $0xc] sm:$0xf]
      %v504 = vld [vmem:[%s373 + $0x10] sm:$0xf]
      %v505 = vld [vmem:[%s373 + $0x14] sm:$0xf]
      %v506 = vld [vmem:[%s373 + $0x18] sm:$0xf]
      %v507 = vld [vmem:[%s373 + $0x1c] sm:$0xf]
      %v508 = vld [vmem:[%s373 + $0x20] sm:$0xf]
      %v509 = vld [vmem:[%s373 + $0x24] sm:$0xf]
      %v510 = vld [vmem:[%s373 + $0x28] sm:$0xf]
      %v511 = vld [vmem:[%s373 + $0x2c] sm:$0xf]
      %v512 = vld [vmem:[%s373 + $0x30] sm:$0xf]
      %v513 = vld [vmem:[%s373 + $0x34] sm:$0xf]
      %v514 = vld [vmem:[%s373 + $0x38] sm:$0xf]
      %v515 = vld [vmem:[%s373 + $0x3c] sm:$0xf]
      %v516 = vld [vmem:[%s373 + $0x40] sm:$0xf]
      %v517 = vld [vmem:[%s373 + $0x44] sm:$0xf]
      %v518 = vld [vmem:[%s373 + $0x48] sm:$0xf]
      %v519 = vld [vmem:[%s373 + $0x4c] sm:$0xf]
      %v520 = vld [vmem:[%s373 + $0x50] sm:$0xf]
      %v521 = vld [vmem:[%s373 + $0x54] sm:$0xf]
      %v522 = vld [vmem:[%s373 + $0x58] sm:$0xf]
      %v523 = vld [vmem:[%s373 + $0x5c] sm:$0xf]
      %v524 = vld [vmem:[%s373 + $0x60] sm:$0xf]
      %v525 = vld [vmem:[%s373 + $0x64] sm:$0xf]
      %v526 = vld [vmem:[%s373 + $0x68] sm:$0xf]
      %v527 = vld [vmem:[%s373 + $0x6c] sm:$0xf]
      %v528 = vld [vmem:[%s373 + $0x70] sm:$0xf]
      %v529 = vld [vmem:[%s373 + $0x74] sm:$0xf]
      %v530 = vld [vmem:[%s373 + $0x78] sm:$0xf]
      %v531 = vld [vmem:[%s373 + $0x7c] sm:$0xf]
      %v564 = vunpack.c.l.b16 %v436
      %v565 = vunpack.c.h.b16 %v436
      %v566 = vunpack.c.l.b16 %v437
      %v567 = vunpack.c.h.b16 %v437
      %v568 = vunpack.c.l.b16 %v438
      %v569 = vunpack.c.h.b16 %v438
      %v570 = vunpack.c.l.b16 %v439
      %v571 = vunpack.c.h.b16 %v439
      %v572 = vunpack.c.l.b16 %v440
      %v573 = vunpack.c.h.b16 %v440
      %v574 = vunpack.c.l.b16 %v441
      %v575 = vunpack.c.h.b16 %v441
      %v576 = vunpack.c.l.b16 %v442
      %v577 = vunpack.c.h.b16 %v442
      %v578 = vunpack.c.l.b16 %v443
      %v579 = vunpack.c.h.b16 %v443
      %v580 = vunpack.c.l.b16 %v444
      %v581 = vunpack.c.h.b16 %v444
      %v582 = vunpack.c.l.b16 %v445
      %v583 = vunpack.c.h.b16 %v445
      %v584 = vunpack.c.l.b16 %v446
      %v585 = vunpack.c.h.b16 %v446
      %v586 = vunpack.c.l.b16 %v447
      %v587 = vunpack.c.h.b16 %v447
      %v588 = vunpack.c.l.b16 %v448
      %v589 = vunpack.c.h.b16 %v448
      %v590 = vunpack.c.l.b16 %v449
      %v591 = vunpack.c.h.b16 %v449
      %v592 = vunpack.c.l.b16 %v450
      %v593 = vunpack.c.h.b16 %v450
      %v594 = vunpack.c.l.b16 %v451
      %v595 = vunpack.c.h.b16 %v451
      %v596 = vunpack.c.l.b16 %v452
      %v597 = vunpack.c.h.b16 %v452
      %v598 = vunpack.c.l.b16 %v453
      %v599 = vunpack.c.h.b16 %v453
      %v600 = vunpack.c.l.b16 %v454
      %v601 = vunpack.c.h.b16 %v454
      %v602 = vunpack.c.l.b16 %v455
      %v603 = vunpack.c.h.b16 %v455
      %v604 = vunpack.c.l.b16 %v456
      %v605 = vunpack.c.h.b16 %v456
      %v606 = vunpack.c.l.b16 %v457
      %v607 = vunpack.c.h.b16 %v457
      %v608 = vunpack.c.l.b16 %v458
      %v609 = vunpack.c.h.b16 %v458
      %v610 = vunpack.c.l.b16 %v459
      %v611 = vunpack.c.h.b16 %v459
      %v612 = vunpack.c.l.b16 %v460
      %v613 = vunpack.c.h.b16 %v460
      %v614 = vunpack.c.l.b16 %v461
      %v615 = vunpack.c.h.b16 %v461
      %v616 = vunpack.c.l.b16 %v462
      %v617 = vunpack.c.h.b16 %v462
      %v618 = vunpack.c.l.b16 %v463
      %v619 = vunpack.c.h.b16 %v463
      %v620 = vunpack.c.l.b16 %v464
      %v621 = vunpack.c.h.b16 %v464
      %v622 = vunpack.c.l.b16 %v465
      %v623 = vunpack.c.h.b16 %v465
      %v624 = vunpack.c.l.b16 %v466
      %v625 = vunpack.c.h.b16 %v466
      %v626 = vunpack.c.l.b16 %v467
      %v627 = vunpack.c.h.b16 %v467
      %v628 = vpack.c.b16 %v566, %v564
      %v629 = vpack.c.b16 %v567, %v565
      %v630 = vpack.c.b16 %v570, %v568
      %v631 = vpack.c.b16 %v571, %v569
      %v632 = vpack.c.b16 %v574, %v572
      %v633 = vpack.c.b16 %v575, %v573
      %v634 = vpack.c.b16 %v578, %v576
      %v635 = vpack.c.b16 %v579, %v577
      %v636 = vpack.c.b16 %v582, %v580
      %v637 = vpack.c.b16 %v583, %v581
      %v638 = vpack.c.b16 %v586, %v584
      %v639 = vpack.c.b16 %v587, %v585
      %v640 = vpack.c.b16 %v590, %v588
      %v641 = vpack.c.b16 %v591, %v589
      %v642 = vpack.c.b16 %v594, %v592
      %v643 = vpack.c.b16 %v595, %v593
      %v644 = vpack.c.b16 %v598, %v596
      %v645 = vpack.c.b16 %v599, %v597
      %v646 = vpack.c.b16 %v602, %v600
      %v647 = vpack.c.b16 %v603, %v601
      %v648 = vpack.c.b16 %v606, %v604
      %v649 = vpack.c.b16 %v607, %v605
      %v650 = vpack.c.b16 %v610, %v608
      %v651 = vpack.c.b16 %v611, %v609
      %v652 = vpack.c.b16 %v614, %v612
      %v653 = vpack.c.b16 %v615, %v613
      %v654 = vpack.c.b16 %v618, %v616
      %v655 = vpack.c.b16 %v619, %v617
      %v656 = vpack.c.b16 %v622, %v620
      %v657 = vpack.c.b16 %v623, %v621
      %v658 = vpack.c.b16 %v626, %v624
      %v659 = vpack.c.b16 %v627, %v625
      %v724 = vunpack.c.l.b16 %v500
      %v725 = vunpack.c.l.b16 %v501
      %v726 = vunpack.c.l.b16 %v502
      %v727 = vunpack.c.l.b16 %v503
      %v728 = vunpack.c.l.b16 %v504
      %v729 = vunpack.c.l.b16 %v505
      %v730 = vunpack.c.l.b16 %v506
      %v731 = vunpack.c.l.b16 %v507
      %v732 = vunpack.c.l.b16 %v508
      %v733 = vunpack.c.l.b16 %v509
      %v734 = vunpack.c.l.b16 %v510
      %v735 = vunpack.c.l.b16 %v511
      %v736 = vunpack.c.l.b16 %v512
      %v737 = vunpack.c.l.b16 %v513
      %v738 = vunpack.c.l.b16 %v514
      %v739 = vunpack.c.l.b16 %v515
      %v740 = vunpack.c.l.b16 %v516
      %v741 = vunpack.c.l.b16 %v517
      %v742 = vunpack.c.l.b16 %v518
      %v743 = vunpack.c.l.b16 %v519
      %v744 = vunpack.c.l.b16 %v520
      %v745 = vunpack.c.l.b16 %v521
      %v746 = vunpack.c.l.b16 %v522
      %v747 = vunpack.c.l.b16 %v523
      %v748 = vunpack.c.l.b16 %v524
      %v749 = vunpack.c.l.b16 %v525
      %v750 = vunpack.c.l.b16 %v526
      %v751 = vunpack.c.l.b16 %v527
      %v752 = vunpack.c.l.b16 %v528
      %v753 = vunpack.c.l.b16 %v529
      %v754 = vunpack.c.l.b16 %v530
      %v755 = vunpack.c.l.b16 %v531
      %v756 = vpack.c.b16 %v725, %v724
      %v757 = vpack.c.b16 %v727, %v726
      %v758 = vpack.c.b16 %v729, %v728
      %v759 = vpack.c.b16 %v731, %v730
      %v760 = vpack.c.b16 %v733, %v732
      %v761 = vpack.c.b16 %v735, %v734
      %v762 = vpack.c.b16 %v737, %v736
      %v763 = vpack.c.b16 %v739, %v738
      %v764 = vpack.c.b16 %v741, %v740
      %v765 = vpack.c.b16 %v743, %v742
      %v766 = vpack.c.b16 %v745, %v744
      %v767 = vpack.c.b16 %v747, %v746
      %v768 = vpack.c.b16 %v749, %v748
      %v769 = vpack.c.b16 %v751, %v750
      %v770 = vpack.c.b16 %v753, %v752
      %v771 = vpack.c.b16 %v755, %v754
      %788 = vmatpush.bf16.msra.mxu0 %v763
      %789 = vmatpush.bf16.msra.mxu0 %v762
      %790 = vmatpush.bf16.msra.mxu0 %v761
      %791 = vmatpush.bf16.msra.mxu0 %v760
      %792 = vmatpush.bf16.msra.mxu0 %v759
      %793 = vmatpush.bf16.msra.mxu0 %v758
      %794 = vmatpush.bf16.msra.mxu0 %v757
      %795 = vmatpush.bf16.msra.mxu0 %v756
      %796 = vmatmul.bf16.gmra.mxu0 %v628
      %v797 = vpop.f32.mrf.mxu0
      %v798 = vadd.f32 0.0, %v797
      %v799 = vpop.f32.mrf.mxu0
      %v800 = vadd.f32 0.0, %v799
      %801 = vmatmul.bf16.gmra.mxu0 %v630
      %v802 = vpop.f32.mrf.mxu0
      %v803 = vadd.f32 0.0, %v802
      %v804 = vpop.f32.mrf.mxu0
      %v805 = vadd.f32 0.0, %v804
      %806 = vmatmul.bf16.gmra.mxu0 %v632
      %v807 = vpop.f32.mrf.mxu0
      %v808 = vadd.f32 0.0, %v807
      %v809 = vpop.f32.mrf.mxu0
      %v810 = vadd.f32 0.0, %v809
      %811 = vmatmul.bf16.gmra.mxu0 %v634
      %v812 = vpop.f32.mrf.mxu0
      %v813 = vadd.f32 0.0, %v812
      %v814 = vpop.f32.mrf.mxu0
      %v815 = vadd.f32 0.0, %v814
      %816 = vmatmul.bf16.gmra.mxu0 %v636
      %v817 = vpop.f32.mrf.mxu0
      %v818 = vadd.f32 0.0, %v817
      %v819 = vpop.f32.mrf.mxu0
      %v820 = vadd.f32 0.0, %v819
      %821 = vmatmul.bf16.gmra.mxu0 %v638
      %v822 = vpop.f32.mrf.mxu0
      %v823 = vadd.f32 0.0, %v822
      %v824 = vpop.f32.mrf.mxu0
      %v825 = vadd.f32 0.0, %v824
      %826 = vmatmul.bf16.gmra.mxu0 %v640
      %v827 = vpop.f32.mrf.mxu0
      %v828 = vadd.f32 0.0, %v827
      %v829 = vpop.f32.mrf.mxu0
      %v830 = vadd.f32 0.0, %v829
      %831 = vmatmul.bf16.gmra.mxu0 %v642
      %v832 = vpop.f32.mrf.mxu0
      %v833 = vadd.f32 0.0, %v832
      %v834 = vpop.f32.mrf.mxu0
      %v835 = vadd.f32 0.0, %v834
      %836 = vmatmul.bf16.gmra.mxu0 %v644
      %v837 = vpop.f32.mrf.mxu0
      %v838 = vadd.f32 0.0, %v837
      %v839 = vpop.f32.mrf.mxu0
      %v840 = vadd.f32 0.0, %v839
      %841 = vmatmul.bf16.gmra.mxu0 %v646
      %v842 = vpop.f32.mrf.mxu0
      %v843 = vadd.f32 0.0, %v842
      %v844 = vpop.f32.mrf.mxu0
      %v845 = vadd.f32 0.0, %v844
      %846 = vmatmul.bf16.gmra.mxu0 %v648
      %v847 = vpop.f32.mrf.mxu0
      %v848 = vadd.f32 0.0, %v847
      %v849 = vpop.f32.mrf.mxu0
      %v850 = vadd.f32 0.0, %v849
      %851 = vmatmul.bf16.gmra.mxu0 %v650
      %v852 = vpop.f32.mrf.mxu0
      %v853 = vadd.f32 0.0, %v852
      %v854 = vpop.f32.mrf.mxu0
      %v855 = vadd.f32 0.0, %v854
      %856 = vmatmul.bf16.gmra.mxu0 %v652
      %v857 = vpop.f32.mrf.mxu0
      %v858 = vadd.f32 0.0, %v857
      %v859 = vpop.f32.mrf.mxu0
      %v860 = vadd.f32 0.0, %v859
      %861 = vmatmul.bf16.gmra.mxu0 %v654
      %v862 = vpop.f32.mrf.mxu0
      %v863 = vadd.f32 0.0, %v862
      %v864 = vpop.f32.mrf.mxu0
      %v865 = vadd.f32 0.0, %v864
      %866 = vmatmul.bf16.gmra.mxu0 %v656
      %v867 = vpop.f32.mrf.mxu0
      %v868 = vadd.f32 0.0, %v867
      %v869 = vpop.f32.mrf.mxu0
      %v870 = vadd.f32 0.0, %v869
      %871 = vmatmul.bf16.gmra.mxu0 %v658
      %v872 = vpop.f32.mrf.mxu0
      %v873 = vadd.f32 0.0, %v872
      %v874 = vpop.f32.mrf.mxu0
      %v875 = vadd.f32 0.0, %v874
      %876 = vdwg.mxu0
      %877 = vmatpush.bf16.msra.mxu0 %v771
      %878 = vmatpush.bf16.msra.mxu0 %v770
      %879 = vmatpush.bf16.msra.mxu0 %v769
      %880 = vmatpush.bf16.msra.mxu0 %v768
      %881 = vmatpush.bf16.msra.mxu0 %v767
      %882 = vmatpush.bf16.msra.mxu0 %v766
      %883 = vmatpush.bf16.msra.mxu0 %v765
      %884 = vmatpush.bf16.msra.mxu0 %v764
      %885 = vmatmul.bf16.gmra.mxu0 %v629
      %v886 = vpop.f32.mrf.mxu0
      %v887 = vadd.f32 %v798, %v886
      %v888 = vpop.f32.mrf.mxu0
      %v889 = vadd.f32 %v800, %v888
      %890 = vmatmul.bf16.gmra.mxu0 %v631
      %v891 = vpop.f32.mrf.mxu0
      %v892 = vadd.f32 %v803, %v891
      %v893 = vpop.f32.mrf.mxu0
      %v894 = vadd.f32 %v805, %v893
      %895 = vmatmul.bf16.gmra.mxu0 %v633
      %v896 = vpop.f32.mrf.mxu0
      %v897 = vadd.f32 %v808, %v896
      %v898 = vpop.f32.mrf.mxu0
      %v899 = vadd.f32 %v810, %v898
      %900 = vmatmul.bf16.gmra.mxu0 %v635
      %v901 = vpop.f32.mrf.mxu0
      %v902 = vadd.f32 %v813, %v901
      %v903 = vpop.f32.mrf.mxu0
      %v904 = vadd.f32 %v815, %v903
      %905 = vmatmul.bf16.gmra.mxu0 %v637
      %v906 = vpop.f32.mrf.mxu0
      %v907 = vadd.f32 %v818, %v906
      %v908 = vpop.f32.mrf.mxu0
      %v909 = vadd.f32 %v820, %v908
      %910 = vmatmul.bf16.gmra.mxu0 %v639
      %v911 = vpop.f32.mrf.mxu0
      %v912 = vadd.f32 %v823, %v911
      %v913 = vpop.f32.mrf.mxu0
      %v914 = vadd.f32 %v825, %v913
      %915 = vmatmul.bf16.gmra.mxu0 %v641
      %v916 = vpop.f32.mrf.mxu0
      %v917 = vadd.f32 %v828, %v916
      %v918 = vpop.f32.mrf.mxu0
      %v919 = vadd.f32 %v830, %v918
      %920 = vmatmul.bf16.gmra.mxu0 %v643
      %v921 = vpop.f32.mrf.mxu0
      %v922 = vadd.f32 %v833, %v921
      %v923 = vpop.f32.mrf.mxu0
      %v924 = vadd.f32 %v835, %v923
      %925 = vmatmul.bf16.gmra.mxu0 %v645
      %v926 = vpop.f32.mrf.mxu0
      %v927 = vadd.f32 %v838, %v926
      %v928 = vpop.f32.mrf.mxu0
      %v929 = vadd.f32 %v840, %v928
      %930 = vmatmul.bf16.gmra.mxu0 %v647
      %v931 = vpop.f32.mrf.mxu0
      %v932 = vadd.f32 %v843, %v931
      %v933 = vpop.f32.mrf.mxu0
      %v934 = vadd.f32 %v845, %v933
      %935 = vmatmul.bf16.gmra.mxu0 %v649
      %v936 = vpop.f32.mrf.mxu0
      %v937 = vadd.f32 %v848, %v936
      %v938 = vpop.f32.mrf.mxu0
      %v939 = vadd.f32 %v850, %v938
      %940 = vmatmul.bf16.gmra.mxu0 %v651
      %v941 = vpop.f32.mrf.mxu0
      %v942 = vadd.f32 %v853, %v941
      %v943 = vpop.f32.mrf.mxu0
      %v944 = vadd.f32 %v855, %v943
      %945 = vmatmul.bf16.gmra.mxu0 %v653
      %v946 = vpop.f32.mrf.mxu0
      %v947 = vadd.f32 %v858, %v946
      %v948 = vpop.f32.mrf.mxu0
      %v949 = vadd.f32 %v860, %v948
      %950 = vmatmul.bf16.gmra.mxu0 %v655
      %v951 = vpop.f32.mrf.mxu0
      %v952 = vadd.f32 %v863, %v951
      %v953 = vpop.f32.mrf.mxu0
      %v954 = vadd.f32 %v865, %v953
      %955 = vmatmul.bf16.gmra.mxu0 %v657
      %v956 = vpop.f32.mrf.mxu0
      %v957 = vadd.f32 %v868, %v956
      %v958 = vpop.f32.mrf.mxu0
      %v959 = vadd.f32 %v870, %v958
      %960 = vmatmul.bf16.gmra.mxu0 %v659
      %v961 = vpop.f32.mrf.mxu0
      %v962 = vadd.f32 %v873, %v961
      %v963 = vpop.f32.mrf.mxu0
      %v964 = vadd.f32 %v875, %v963
      %965 = vdwg.mxu0
      %v966 = vadd.f32 %v468, %v887
      %v967 = vadd.f32 %v469, %v889
      %v968 = vadd.f32 %v470, %v892
      %v969 = vadd.f32 %v471, %v894
      %v970 = vadd.f32 %v472, %v897
      %v971 = vadd.f32 %v473, %v899
      %v972 = vadd.f32 %v474, %v902
      %v973 = vadd.f32 %v475, %v904
      %v974 = vadd.f32 %v476, %v907
      %v975 = vadd.f32 %v477, %v909
      %v976 = vadd.f32 %v478, %v912
      %v977 = vadd.f32 %v479, %v914
      %v978 = vadd.f32 %v480, %v917
      %v979 = vadd.f32 %v481, %v919
      %v980 = vadd.f32 %v482, %v922
      %v981 = vadd.f32 %v483, %v924
      %v982 = vadd.f32 %v484, %v927
      %v983 = vadd.f32 %v485, %v929
      %v984 = vadd.f32 %v486, %v932
      %v985 = vadd.f32 %v487, %v934
      %v986 = vadd.f32 %v488, %v937
      %v987 = vadd.f32 %v489, %v939
      %v988 = vadd.f32 %v490, %v942
      %v989 = vadd.f32 %v491, %v944
      %v990 = vadd.f32 %v492, %v947
      %v991 = vadd.f32 %v493, %v949
      %v992 = vadd.f32 %v494, %v952
      %v993 = vadd.f32 %v495, %v954
      %v994 = vadd.f32 %v496, %v957
      %v995 = vadd.f32 %v497, %v959
      %v996 = vadd.f32 %v498, %v962
      %v997 = vadd.f32 %v499, %v964
      %998 = vst [vmem:[#allocation2] sm:$0xff] %v966
      %999 = vst [vmem:[#allocation2 + $0x8] sm:$0xff] %v967
      %1000 = vst [vmem:[#allocation2 + $0x10] sm:$0xff] %v968
      %1001 = vst [vmem:[#allocation2 + $0x18] sm:$0xff] %v969
      %1002 = vst [vmem:[#allocation2 + $0x20] sm:$0xff] %v970
      %1003 = vst [vmem:[#allocation2 + $0x28] sm:$0xff] %v971
      %1004 = vst [vmem:[#allocation2 + $0x30] sm:$0xff] %v972
      %1005 = vst [vmem:[#allocation2 + $0x38] sm:$0xff] %v973
      %1006 = vst [vmem:[#allocation2 + $0x40] sm:$0xff] %v974
      %1007 = vst [vmem:[#allocation2 + $0x48] sm:$0xff] %v975
      %1008 = vst [vmem:[#allocation2 + $0x50] sm:$0xff] %v976
      %1009 = vst [vmem:[#allocation2 + $0x58] sm:$0xff] %v977
      %1010 = vst [vmem:[#allocation2 + $0x60] sm:$0xff] %v978
      %1011 = vst [vmem:[#allocation2 + $0x68] sm:$0xff] %v979
      %1012 = vst [vmem:[#allocation2 + $0x70] sm:$0xff] %v980
      %1013 = vst [vmem:[#allocation2 + $0x78] sm:$0xff] %v981
      %1014 = vst [vmem:[#allocation2 + $0x80] sm:$0xff] %v982
      %1015 = vst [vmem:[#allocation2 + $0x88] sm:$0xff] %v983
      %1016 = vst [vmem:[#allocation2 + $0x90] sm:$0xff] %v984
      %1017 = vst [vmem:[#allocation2 + $0x98] sm:$0xff] %v985
      %1018 = vst [vmem:[#allocation2 + $0xa0] sm:$0xff] %v986
      %1019 = vst [vmem:[#allocation2 + $0xa8] sm:$0xff] %v987
      %1020 = vst [vmem:[#allocation2 + $0xb0] sm:$0xff] %v988
      %1021 = vst [vmem:[#allocation2 + $0xb8] sm:$0xff] %v989
      %1022 = vst [vmem:[#allocation2 + $0xc0] sm:$0xff] %v990
      %1023 = vst [vmem:[#allocation2 + $0xc8] sm:$0xff] %v991
      %1024 = vst [vmem:[#allocation2 + $0xd0] sm:$0xff] %v992
      %1025 = vst [vmem:[#allocation2 + $0xd8] sm:$0xff] %v993
      %1026 = vst [vmem:[#allocation2 + $0xe0] sm:$0xff] %v994
      %1027 = vst [vmem:[#allocation2 + $0xe8] sm:$0xff] %v995
      %1028 = vst [vmem:[#allocation2 + $0xf0] sm:$0xff] %v996
      %1029 = vst [vmem:[#allocation2 + $0xf8] sm:$0xff] %v997
      // Predicated region
      $region49: #{forward.51} parent=43 // pred_check
        %p1030 = pneg %p400
      $region50: #{forward.51} parent=43 // pred_check_branch
        %1032 = sbr.rel (%p1030) target = $region52
      $region51: #{forward.51} parent=43 // pred_region
        %v1033 = vld [vmem:[#allocation2] sm:$0xff]
        %v1034 = vld [vmem:[#allocation2 + $0x8] sm:$0xff]
        %v1035 = vld [vmem:[#allocation2 + $0x10] sm:$0xff]
        %v1036 = vld [vmem:[#allocation2 + $0x18] sm:$0xff]
        %v1037 = vld [vmem:[#allocation2 + $0x20] sm:$0xff]
        %v1038 = vld [vmem:[#allocation2 + $0x28] sm:$0xff]
        %v1039 = vld [vmem:[#allocation2 + $0x30] sm:$0xff]
        %v1040 = vld [vmem:[#allocation2 + $0x38] sm:$0xff]
        %v1041 = vld [vmem:[#allocation2 + $0x40] sm:$0xff]
        %v1042 = vld [vmem:[#allocation2 + $0x48] sm:$0xff]
        %v1043 = vld [vmem:[#allocation2 + $0x50] sm:$0xff]
        %v1044 = vld [vmem:[#allocation2 + $0x58] sm:$0xff]
        %v1045 = vld [vmem:[#allocation2 + $0x60] sm:$0xff]
        %v1046 = vld [vmem:[#allocation2 + $0x68] sm:$0xff]
        %v1047 = vld [vmem:[#allocation2 + $0x70] sm:$0xff]
        %v1048 = vld [vmem:[#allocation2 + $0x78] sm:$0xff]
        %v1049 = vld [vmem:[#allocation2 + $0x80] sm:$0xff]
        %v1050 = vld [vmem:[#allocation2 + $0x88] sm:$0xff]
        %v1051 = vld [vmem:[#allocation2 + $0x90] sm:$0xff]
        %v1052 = vld [vmem:[#allocation2 + $0x98] sm:$0xff]
        %v1053 = vld [vmem:[#allocation2 + $0xa0] sm:$0xff]
        %v1054 = vld [vmem:[#allocation2 + $0xa8] sm:$0xff]
        %v1055 = vld [vmem:[#allocation2 + $0xb0] sm:$0xff]
        %v1056 = vld [vmem:[#allocation2 + $0xb8] sm:$0xff]
        %v1057 = vld [vmem:[#allocation2 + $0xc0] sm:$0xff]
        %v1058 = vld [vmem:[#allocation2 + $0xc8] sm:$0xff]
        %v1059 = vld [vmem:[#allocation2 + $0xd0] sm:$0xff]
        %v1060 = vld [vmem:[#allocation2 + $0xd8] sm:$0xff]
        %v1061 = vld [vmem:[#allocation2 + $0xe0] sm:$0xff]
        %v1062 = vld [vmem:[#allocation2 + $0xe8] sm:$0xff]
        %v1063 = vld [vmem:[#allocation2 + $0xf0] sm:$0xff]
        %v1064 = vld [vmem:[#allocation2 + $0xf8] sm:$0xff]
        %v1065 = vld [vmem:[%s387] sm:$0x1]
        %v1067 = vperm.slane %v1065, 0
        %v1069 = vmul.f32 %v1033, %v1067
        %v1070 = vmul.f32 %v1034, %v1067
        %v1071 = vmul.f32 %v1035, %v1067
        %v1072 = vmul.f32 %v1036, %v1067
        %v1073 = vmul.f32 %v1037, %v1067
        %v1074 = vmul.f32 %v1038, %v1067
        %v1075 = vmul.f32 %v1039, %v1067
        %v1076 = vmul.f32 %v1040, %v1067
        %v1077 = vmul.f32 %v1041, %v1067
        %v1078 = vmul.f32 %v1042, %v1067
        %v1079 = vmul.f32 %v1043, %v1067
        %v1080 = vmul.f32 %v1044, %v1067
        %v1081 = vmul.f32 %v1045, %v1067
        %v1082 = vmul.f32 %v1046, %v1067
        %v1083 = vmul.f32 %v1047, %v1067
        %v1084 = vmul.f32 %v1048, %v1067
        %v1085 = vmul.f32 %v1049, %v1067
        %v1086 = vmul.f32 %v1050, %v1067
        %v1087 = vmul.f32 %v1051, %v1067
        %v1088 = vmul.f32 %v1052, %v1067
        %v1089 = vmul.f32 %v1053, %v1067
        %v1090 = vmul.f32 %v1054, %v1067
        %v1091 = vmul.f32 %v1055, %v1067
        %v1092 = vmul.f32 %v1056, %v1067
        %v1093 = vmul.f32 %v1057, %v1067
        %v1094 = vmul.f32 %v1058, %v1067
        %v1095 = vmul.f32 %v1059, %v1067
        %v1096 = vmul.f32 %v1060, %v1067
        %v1097 = vmul.f32 %v1061, %v1067
        %v1098 = vmul.f32 %v1062, %v1067
        %v1099 = vmul.f32 %v1063, %v1067
        %v1100 = vmul.f32 %v1064, %v1067
        %v1101 = vld [vmem:[%s390] sm:$0x1]
        %v1103 = vperm.slane %v1101, 0
        %v1105 = vadd.f32 %v1069, %v1103
        %v1106 = vadd.f32 %v1070, %v1103
        %v1107 = vadd.f32 %v1071, %v1103
        %v1108 = vadd.f32 %v1072, %v1103
        %v1109 = vadd.f32 %v1073, %v1103
        %v1110 = vadd.f32 %v1074, %v1103
        %v1111 = vadd.f32 %v1075, %v1103
        %v1112 = vadd.f32 %v1076, %v1103
        %v1113 = vadd.f32 %v1077, %v1103
        %v1114 = vadd.f32 %v1078, %v1103
        %v1115 = vadd.f32 %v1079, %v1103
        %v1116 = vadd.f32 %v1080, %v1103
        %v1117 = vadd.f32 %v1081, %v1103
        %v1118 = vadd.f32 %v1082, %v1103
        %v1119 = vadd.f32 %v1083, %v1103
        %v1120 = vadd.f32 %v1084, %v1103
        %v1121 = vadd.f32 %v1085, %v1103
        %v1122 = vadd.f32 %v1086, %v1103
        %v1123 = vadd.f32 %v1087, %v1103
        %v1124 = vadd.f32 %v1088, %v1103
        %v1125 = vadd.f32 %v1089, %v1103
        %v1126 = vadd.f32 %v1090, %v1103
        %v1127 = vadd.f32 %v1091, %v1103
        %v1128 = vadd.f32 %v1092, %v1103
        %v1129 = vadd.f32 %v1093, %v1103
        %v1130 = vadd.f32 %v1094, %v1103
        %v1131 = vadd.f32 %v1095, %v1103
        %v1132 = vadd.f32 %v1096, %v1103
        %v1133 = vadd.f32 %v1097, %v1103
        %v1134 = vadd.f32 %v1098, %v1103
        %v1135 = vadd.f32 %v1099, %v1103
        %v1136 = vadd.f32 %v1100, %v1103
        %v1137 = vmax.f32 %v1105, 0.0
        %v1138 = vmax.f32 %v1106, 0.0
        %v1139 = vmax.f32 %v1107, 0.0
        %v1140 = vmax.f32 %v1108, 0.0
        %v1141 = vmax.f32 %v1109, 0.0
        %v1142 = vmax.f32 %v1110, 0.0
        %v1143 = vmax.f32 %v1111, 0.0
        %v1144 = vmax.f32 %v1112, 0.0
        %v1145 = vmax.f32 %v1113, 0.0
        %v1146 = vmax.f32 %v1114, 0.0
        %v1147 = vmax.f32 %v1115, 0.0
        %v1148 = vmax.f32 %v1116, 0.0
        %v1149 = vmax.f32 %v1117, 0.0
        %v1150 = vmax.f32 %v1118, 0.0
        %v1151 = vmax.f32 %v1119, 0.0
        %v1152 = vmax.f32 %v1120, 0.0
        %v1153 = vmax.f32 %v1121, 0.0
        %v1154 = vmax.f32 %v1122, 0.0
        %v1155 = vmax.f32 %v1123, 0.0
        %v1156 = vmax.f32 %v1124, 0.0
        %v1157 = vmax.f32 %v1125, 0.0
        %v1158 = vmax.f32 %v1126, 0.0
        %v1159 = vmax.f32 %v1127, 0.0
        %v1160 = vmax.f32 %v1128, 0.0
        %v1161 = vmax.f32 %v1129, 0.0
        %v1162 = vmax.f32 %v1130, 0.0
        %v1163 = vmax.f32 %v1131, 0.0
        %v1164 = vmax.f32 %v1132, 0.0
        %v1165 = vmax.f32 %v1133, 0.0
        %v1166 = vmax.f32 %v1134, 0.0
        %v1167 = vmax.f32 %v1135, 0.0
        %v1168 = vmax.f32 %v1136, 0.0
        %v1169 = vpack.c.bf16 %v1137, %v1137
        %v1170 = vpack.c.bf16 %v1138, %v1138
        %v1171 = vpack.c.bf16 %v1139, %v1139
        %v1172 = vpack.c.bf16 %v1140, %v1140
        %v1173 = vpack.c.bf16 %v1141, %v1141
        %v1174 = vpack.c.bf16 %v1142, %v1142
        %v1175 = vpack.c.bf16 %v1143, %v1143
        %v1176 = vpack.c.bf16 %v1144, %v1144
        %v1177 = vpack.c.bf16 %v1145, %v1145
        %v1178 = vpack.c.bf16 %v1146, %v1146
        %v1179 = vpack.c.bf16 %v1147, %v1147
        %v1180 = vpack.c.bf16 %v1148, %v1148
        %v1181 = vpack.c.bf16 %v1149, %v1149
        %v1182 = vpack.c.bf16 %v1150, %v1150
        %v1183 = vpack.c.bf16 %v1151, %v1151
        %v1184 = vpack.c.bf16 %v1152, %v1152
        %v1185 = vpack.c.bf16 %v1153, %v1153
        %v1186 = vpack.c.bf16 %v1154, %v1154
        %v1187 = vpack.c.bf16 %v1155, %v1155
        %v1188 = vpack.c.bf16 %v1156, %v1156
        %v1189 = vpack.c.bf16 %v1157, %v1157
        %v1190 = vpack.c.bf16 %v1158, %v1158
        %v1191 = vpack.c.bf16 %v1159, %v1159
        %v1192 = vpack.c.bf16 %v1160, %v1160
        %v1193 = vpack.c.bf16 %v1161, %v1161
        %v1194 = vpack.c.bf16 %v1162, %v1162
        %v1195 = vpack.c.bf16 %v1163, %v1163
        %v1196 = vpack.c.bf16 %v1164, %v1164
        %v1197 = vpack.c.bf16 %v1165, %v1165
        %v1198 = vpack.c.bf16 %v1166, %v1166
        %v1199 = vpack.c.bf16 %v1167, %v1167
        %v1200 = vpack.c.bf16 %v1168, %v1168
        %1201 = vst [vmem:[%s398] sm:$0xf] %v1169
        %1202 = vst [vmem:[%s398 + $0x4] sm:$0xf] %v1170
        %1203 = vst [vmem:[%s398 + $0x8] sm:$0xf] %v1171
        %1204 = vst [vmem:[%s398 + $0xc] sm:$0xf] %v1172
        %1205 = vst [vmem:[%s398 + $0x10] sm:$0xf] %v1173
        %1206 = vst [vmem:[%s398 + $0x14] sm:$0xf] %v1174
        %1207 = vst [vmem:[%s398 + $0x18] sm:$0xf] %v1175
        %1208 = vst [vmem:[%s398 + $0x1c] sm:$0xf] %v1176
        %1209 = vst [vmem:[%s398 + $0x20] sm:$0xf] %v1177
        %1210 = vst [vmem:[%s398 + $0x24] sm:$0xf] %v1178
        %1211 = vst [vmem:[%s398 + $0x28] sm:$0xf] %v1179
        %1212 = vst [vmem:[%s398 + $0x2c] sm:$0xf] %v1180
        %1213 = vst [vmem:[%s398 + $0x30] sm:$0xf] %v1181
        %1214 = vst [vmem:[%s398 + $0x34] sm:$0xf] %v1182
        %1215 = vst [vmem:[%s398 + $0x38] sm:$0xf] %v1183
        %1216 = vst [vmem:[%s398 + $0x3c] sm:$0xf] %v1184
        %1217 = vst [vmem:[%s398 + $0x40] sm:$0xf] %v1185
        %1218 = vst [vmem:[%s398 + $0x44] sm:$0xf] %v1186
        %1219 = vst [vmem:[%s398 + $0x48] sm:$0xf] %v1187
        %1220 = vst [vmem:[%s398 + $0x4c] sm:$0xf] %v1188
        %1221 = vst [vmem:[%s398 + $0x50] sm:$0xf] %v1189
        %1222 = vst [vmem:[%s398 + $0x54] sm:$0xf] %v1190
        %1223 = vst [vmem:[%s398 + $0x58] sm:$0xf] %v1191
        %1224 = vst [vmem:[%s398 + $0x5c] sm:$0xf] %v1192
        %1225 = vst [vmem:[%s398 + $0x60] sm:$0xf] %v1193
        %1226 = vst [vmem:[%s398 + $0x64] sm:$0xf] %v1194
        %1227 = vst [vmem:[%s398 + $0x68] sm:$0xf] %v1195
        %1228 = vst [vmem:[%s398 + $0x6c] sm:$0xf] %v1196
        %1229 = vst [vmem:[%s398 + $0x70] sm:$0xf] %v1197
        %1230 = vst [vmem:[%s398 + $0x74] sm:$0xf] %v1198
        %1231 = vst [vmem:[%s398 + $0x78] sm:$0xf] %v1199
        %1232 = vst [vmem:[%s398 + $0x7c] sm:$0xf] %v1200
      $region52: #{forward.51} parent=43 // pred_fallthru
        _
      %s1233 = smul.u32 32, %s22
      %p1234 = scmp.lt.s32.totalorder %s1233, 63
      %s1235 = scalar_select %p1234, %s1233, 63
      %p1236 = scmp.lt.s32.totalorder %s23, 0
      %s1237 = scalar_select %p1236, %s23, 0
      %s1238 = sadd.s32 %s1237, %s1235
      %s1239 = smul.addr %s1238, 4
      %s1240 = scalar_lea.vmem %s6, %s1239
      // Predicated region
      $region53: #{forward.51} parent=43 // pred_check
        %p1241 = pneg %p216
      $region54: #{forward.51} parent=43 // pred_check_branch
        %1243 = sbr.rel (%p1241) target = $region56
      $region55: #{forward.51} parent=43 // pred_region
        %s1244 = smul.u32 32, %s22
      $region56: #{forward.51} parent=43 // pred_fallthru
        _
    $region44: #{forward.51} parent=5 // pred_fallthru
      _
    %p1245 = scmp.le.s32.totalorder 2, %s12
    // Predicated region
    $region57: #{forward.51} parent=5 // pred_check
      %p1246 = pneg %p1245
    $region58: #{forward.51} parent=5 // pred_check_branch
      %1248 = sbr.rel (%p1246) target = $region60
    $region59: #{forward.51} parent=5 // pred_region
      %s1249 = ssub.s32 %s12, 2
      // Predicated region
      $region61: #{forward.51} parent=59 // pred_check
        %p1250 = pneg %p222
      $region62: #{forward.51} parent=59 // pred_check_branch
        %1252 = sbr.rel (%p1250) target = $region64
      $region63: #{forward.51} parent=59 // pred_region
        %s1253 = smul.u32 32, %s25
        %p1254 = scmp.lt.s32.totalorder %s1253, 63
        %s1255 = scalar_select %p1254, %s1253, 63
        %p1256 = scmp.lt.s32.totalorder %s26, 0
        %s1257 = scalar_select %p1256, %s26, 0
        %s1258 = sadd.s32 %s1257, %s1255
        %s1259 = smul.addr %s1258, 4
        %s1260 = scalar_lea.vmem %s6, %s1259
      $region64: #{forward.51} parent=59 // pred_fallthru
        _
    $region60: #{forward.51} parent=5 // pred_fallthru
      _
  $region6: #{forward.51} parent=0 // loop_footer
    %s16 = sadd.s32 1, %s12
  $region7: #{forward.51} parent=0 // loop_footer_branch
    %11 = sbr.rel target = $region3
  $region8: #{forward.51} parent=0 // loop_exit
    _

// kernel: forward.55
$region0: #{forward.55}
  #allocation0 [shape = 'u32[]', space=smem, size = 0x4, offset = 0x4, fixed_abs, tag = 'smem constant byte address 0x4 - core index']
  #allocation1 [shape = 'u32[72,128]{1,0:T(1,128)}', space=vmem, size = 0x9000, scoped, tag = 'internal scratch']
  #allocation2 [shape = 'f32[256,128]{1,0:T(8,128)}', space=vmem, size = 0x20000, scoped, tag = 'scratch operand']
  %s0 = inlined_call_operand.vmem [shape: bf16[512,128], index: 0, kind: input, shape index: {}]
  %s1 = inlined_call_operand.vmem [shape: bf16[128,128], index: 1, kind: input, shape index: {}]
  %s2 = inlined_call_operand.vmem [shape: f32[1,128], index: 2, kind: input, shape index: {}]
  %s3 = inlined_call_operand.vmem [shape: f32[1,128], index: 3, kind: input, shape index: {}]
  %s4 = inlined_call_operand.vmem [shape: f32[1,128], index: 4, kind: input, shape index: {}]
  %s5 = inlined_call_operand.vmem [shape: f32[1,128], index: 5, kind: input, shape index: {}]
  %s6 = inlined_call_operand.vmem [shape: bf16[512,128], index: 6, kind: output, shape index: {}]
  %s7 = sld [smem:[#allocation0]]
  $region65: #{forward.55} parent=0
    _
  %s9 = ssub.s32 1, %s7
  %s10 = scalar_select 0, %s9, %s7
  loop: start=0, step=1, limit=4
  $region2: #{forward.55} parent=0 // loop_pre_header
    _
  $region3: #{forward.55} parent=0 // loop_header
    %s12 = sphi 0, %s16
    %p13 = scmp.ge.s32.totalorder %s12, 4
    %s19 = sphi 0, %s38
    %s20 = sphi 0, %s34
    %s21 = sphi 0, %s30
    %s22 = sphi 0, %s19
    %s23 = sphi 0, %s20
    %s24 = sphi 0, %s21
    %s25 = sphi 0, %s22
    %s26 = sphi 0, %s23
    %s27 = sphi 0, %s24
    %s43 = sphi 0, %s45
    %s46 = sphi 0, %s43
    %s47 = sphi 0, %s46
    %s63 = sphi 0, %s47
    %s71 = sphi 0, %s73
    %s74 = sphi 0, %s71
    %s75 = sphi 0, %s74
    %s91 = sphi 0, %s75
    %s97 = sphi 0, %s99
    %s100 = sphi 0, %s97
    %s101 = sphi 0, %s100
    %s117 = sphi 0, %s101
    %s123 = sphi 0, %s125
    %s126 = sphi 0, %s123
    %s127 = sphi 0, %s126
    %s143 = sphi 0, %s127
    %s149 = sphi 0, %s151
    %s152 = sphi 0, %s149
    %s153 = sphi 0, %s152
    %s169 = sphi 0, %s153
    %s175 = sphi 0, %s177
    %s178 = sphi 0, %s175
    %s179 = sphi 0, %s178
    %s195 = sphi 0, %s179
    %s203 = sphi 0, %s205
    %s206 = sphi 0, %s203
    %s207 = sphi 0, %s206
    %s223 = sphi 0, %s207
  $region4: #{forward.55} parent=0 // loop_header_branch
    %15 = sbr.rel (%p13) target = $region8
  $region5: #{forward.55} parent=0 // loop_body
    %s17 = ssub.s32 %s12, 1
    %s18 = ssub.s32 %s12, 2
    %s28 = sadd.s32 1, %s21
    %p29 = scmp.ge.s32.totalorder %s28, 1
    %s30 = scalar_select %p29, 0, %s28
    %s31 = sadd.s32 1, %s20
    %s32 = scalar_select %p29, %s31, %s20
    %p33 = scmp.ge.s32.totalorder %s32, 1
    %s34 = scalar_select %p33, 0, %s32
    %s35 = sadd.s32 1, %s19
    %s36 = scalar_select %p33, %s35, %s19
    %p37 = scmp.ge.s32.totalorder %s36, 2
    %s38 = scalar_select %p37, 0, %s36
    %s39 = ssub.s32 %s19, %s38
    %s40 = ssub.s32 %s21, %s30
    %s41 = sor.u32 %s39, %s40
    %p42 = scmp.eq.s32.totalorder %s41, 0
    %s44 = sadd.s32 %s43, 1
    %s45 = scalar_select %p42, %s43, %s44
    %p48 = pneg %p42
    %p49 = scmp.eq.s32.totalorder %s12, 1
    %p50 = por %p48, %p49
    %p51 = scmp.ne.s32.totalorder %s43, %s46
    %p52 = scmp.eq.s32.totalorder %s12, 0
    %p53 = por %p51, %p52
    %p54 = scmp.ne.s32.totalorder %s43, %s46
    %p55 = scmp.eq.s32.totalorder %s17, 1
    %p56 = por %p54, %p55
    %p57 = scmp.ne.s32.totalorder %s46, %s47
    %p58 = scmp.eq.s32.totalorder %s17, 0
    %p59 = por %p57, %p58
    %p60 = scmp.ne.s32.totalorder %s46, %s47
    %p61 = scmp.eq.s32.totalorder %s18, 1
    %p62 = por %p60, %p61
    %p64 = scmp.ne.s32.totalorder %s47, %s63
    %p65 = scmp.eq.s32.totalorder %s18, 0
    %p66 = por %p64, %p65
    %s67 = ssub.s32 %s21, %s30
    %s68 = ssub.s32 %s20, %s34
    %s69 = sor.u32 %s67, %s68
    %p70 = scmp.eq.s32.totalorder %s69, 0
    %s72 = sadd.s32 %s71, 1
    %s73 = scalar_select %p70, %s71, %s72
    %p76 = pneg %p70
    %p77 = scmp.eq.s32.totalorder %s12, 1
    %p78 = por %p76, %p77
    %p79 = scmp.ne.s32.totalorder %s71, %s74
    %p80 = scmp.eq.s32.totalorder %s12, 0
    %p81 = por %p79, %p80
    %p82 = scmp.ne.s32.totalorder %s71, %s74
    %p83 = scmp.eq.s32.totalorder %s17, 1
    %p84 = por %p82, %p83
    %p85 = scmp.ne.s32.totalorder %s74, %s75
    %p86 = scmp.eq.s32.totalorder %s17, 0
    %p87 = por %p85, %p86
    %p88 = scmp.ne.s32.totalorder %s74, %s75
    %p89 = scmp.eq.s32.totalorder %s18, 1
    %p90 = por %p88, %p89
    %p92 = scmp.ne.s32.totalorder %s75, %s91
    %p93 = scmp.eq.s32.totalorder %s18, 0
    %p94 = por %p92, %p93
    %s95 = ssub.s32 %s21, %s30
    %p96 = scmp.eq.s32.totalorder %s95, 0
    %s98 = sadd.s32 %s97, 1
    %s99 = scalar_select %p96, %s97, %s98
    %p102 = pneg %p96
    %p103 = scmp.eq.s32.totalorder %s12, 1
    %p104 = por %p102, %p103
    %p105 = scmp.ne.s32.totalorder %s97, %s100
    %p106 = scmp.eq.s32.totalorder %s12, 0
    %p107 = por %p105, %p106
    %p108 = scmp.ne.s32.totalorder %s97, %s100
    %p109 = scmp.eq.s32.totalorder %s17, 1
    %p110 = por %p108, %p109
    %p111 = scmp.ne.s32.totalorder %s100, %s101
    %p112 = scmp.eq.s32.totalorder %s17, 0
    %p113 = por %p111, %p112
    %p114 = scmp.ne.s32.totalorder %s100, %s101
    %p115 = scmp.eq.s32.totalorder %s18, 1
    %p116 = por %p114, %p115
    %p118 = scmp.ne.s32.totalorder %s101, %s117
    %p119 = scmp.eq.s32.totalorder %s18, 0
    %p120 = por %p118, %p119
    %s121 = ssub.s32 %s21, %s30
    %p122 = scmp.eq.s32.totalorder %s121, 0
    %s124 = sadd.s32 %s123, 1
    %s125 = scalar_select %p122, %s123, %s124
    %p128 = pneg %p122
    %p129 = scmp.eq.s32.totalorder %s12, 1
    %p130 = por %p128, %p129
    %p131 = scmp.ne.s32.totalorder %s123, %s126
    %p132 = scmp.eq.s32.totalorder %s12, 0
    %p133 = por %p131, %p132
    %p134 = scmp.ne.s32.totalorder %s123, %s126
    %p135 = scmp.eq.s32.totalorder %s17, 1
    %p136 = por %p134, %p135
    %p137 = scmp.ne.s32.totalorder %s126, %s127
    %p138 = scmp.eq.s32.totalorder %s17, 0
    %p139 = por %p137, %p138
    %p140 = scmp.ne.s32.totalorder %s126, %s127
    %p141 = scmp.eq.s32.totalorder %s18, 1
    %p142 = por %p140, %p141
    %p144 = scmp.ne.s32.totalorder %s127, %s143
    %p145 = scmp.eq.s32.totalorder %s18, 0
    %p146 = por %p144, %p145
    %s147 = ssub.s32 %s20, %s34
    %p148 = scmp.eq.s32.totalorder %s147, 0
    %s150 = sadd.s32 %s149, 1
    %s151 = scalar_select %p148, %s149, %s150
    %p154 = pneg %p148
    %p155 = scmp.eq.s32.totalorder %s12, 1
    %p156 = por %p154, %p155
    %p157 = scmp.ne.s32.totalorder %s149, %s152
    %p158 = scmp.eq.s32.totalorder %s12, 0
    %p159 = por %p157, %p158
    %p160 = scmp.ne.s32.totalorder %s149, %s152
    %p161 = scmp.eq.s32.totalorder %s17, 1
    %p162 = por %p160, %p161
    %p163 = scmp.ne.s32.totalorder %s152, %s153
    %p164 = scmp.eq.s32.totalorder %s17, 0
    %p165 = por %p163, %p164
    %p166 = scmp.ne.s32.totalorder %s152, %s153
    %p167 = scmp.eq.s32.totalorder %s18, 1
    %p168 = por %p166, %p167
    %p170 = scmp.ne.s32.totalorder %s153, %s169
    %p171 = scmp.eq.s32.totalorder %s18, 0
    %p172 = por %p170, %p171
    %s173 = ssub.s32 %s20, %s34
    %p174 = scmp.eq.s32.totalorder %s173, 0
    %s176 = sadd.s32 %s175, 1
    %s177 = scalar_select %p174, %s175, %s176
    %p180 = pneg %p174
    %p181 = scmp.eq.s32.totalorder %s12, 1
    %p182 = por %p180, %p181
    %p183 = scmp.ne.s32.totalorder %s175, %s178
    %p184 = scmp.eq.s32.totalorder %s12, 0
    %p185 = por %p183, %p184
    %p186 = scmp.ne.s32.totalorder %s175, %s178
    %p187 = scmp.eq.s32.totalorder %s17, 1
    %p188 = por %p186, %p187
    %p189 = scmp.ne.s32.totalorder %s178, %s179
    %p190 = scmp.eq.s32.totalorder %s17, 0
    %p191 = por %p189, %p190
    %p192 = scmp.ne.s32.totalorder %s178, %s179
    %p193 = scmp.eq.s32.totalorder %s18, 1
    %p194 = por %p192, %p193
    %p196 = scmp.ne.s32.totalorder %s179, %s195
    %p197 = scmp.eq.s32.totalorder %s18, 0
    %p198 = por %p196, %p197
    %s199 = ssub.s32 %s19, %s38
    %s200 = ssub.s32 %s20, %s34
    %s201 = sor.u32 %s199, %s200
    %p202 = scmp.eq.s32.totalorder %s201, 0
    %s204 = sadd.s32 %s203, 1
    %s205 = scalar_select %p202, %s203, %s204
    %p208 = pneg %p202
    %p209 = scmp.eq.s32.totalorder %s12, 1
    %p210 = por %p208, %p209
    %p211 = scmp.ne.s32.totalorder %s203, %s206
    %p212 = scmp.eq.s32.totalorder %s12, 0
    %p213 = por %p211, %p212
    %p214 = scmp.ne.s32.totalorder %s203, %s206
    %p215 = scmp.eq.s32.totalorder %s17, 1
    %p216 = por %p214, %p215
    %p217 = scmp.ne.s32.totalorder %s206, %s207
    %p218 = scmp.eq.s32.totalorder %s17, 0
    %p219 = por %p217, %p218
    %p220 = scmp.ne.s32.totalorder %s206, %s207
    %p221 = scmp.eq.s32.totalorder %s18, 1
    %p222 = por %p220, %p221
    %p224 = scmp.ne.s32.totalorder %s207, %s223
    %p225 = scmp.eq.s32.totalorder %s18, 0
    %p226 = por %p224, %p225
    %p227 = scmp.le.s32.totalorder 1, %s12
    %p228 = scmp.lt.s32.totalorder %s12, 3
    %p229 = pnand %p227, %p228
    %p230 = pneg %p229
    // Predicated region
    $region9: #{forward.55} parent=5 // pred_check
      _
    $region10: #{forward.55} parent=5 // pred_check_branch
      %232 = sbr.rel (%p229) target = $region12
    $region11: #{forward.55} parent=5 // pred_region
      %s233 = ssub.s32 %s12, 1
      // Predicated region
      $region13: #{forward.55} parent=11 // pred_check
        %p234 = pneg %p87
      $region14: #{forward.55} parent=11 // pred_check_branch
        %236 = sbr.rel (%p234) target = $region16
      $region15: #{forward.55} parent=11 // pred_region
        %s237 = smul.u32 16, %s24
        %p238 = scmp.lt.s32.totalorder %s237, 15
        %s239 = scalar_select %p238, %s237, 15
        %p240 = scmp.lt.s32.totalorder %s23, 0
        %s241 = scalar_select %p240, %s23, 0
        %s242 = sadd.s32 %s241, %s239
        %s243 = smul.addr %s242, 4
        %s244 = scalar_lea.vmem %s1, %s243
        %s245 = smul.u32 16, %s24
      $region16: #{forward.55} parent=11 // pred_fallthru
        _
      // Predicated region
      $region17: #{forward.55} parent=11 // pred_check
        %p246 = pneg %p113
      $region18: #{forward.55} parent=11 // pred_check_branch
        %248 = sbr.rel (%p246) target = $region20
      $region19: #{forward.55} parent=11 // pred_region
        %p249 = scmp.lt.s32.totalorder %s24, 0
        %s250 = scalar_select %p249, %s24, 0
        %s251 = scalar_lea.vmem %s2, %s250
      $region20: #{forward.55} parent=11 // pred_fallthru
        _
      // Predicated region
      $region21: #{forward.55} parent=11 // pred_check
        %p252 = pneg %p139
      $region22: #{forward.55} parent=11 // pred_check_branch
        %254 = sbr.rel (%p252) target = $region24
      $region23: #{forward.55} parent=11 // pred_region
        %p255 = scmp.lt.s32.totalorder %s24, 0
        %s256 = scalar_select %p255, %s24, 0
        %s257 = scalar_lea.vmem %s3, %s256
      $region24: #{forward.55} parent=11 // pred_fallthru
        _
      // Predicated region
      $region25: #{forward.55} parent=11 // pred_check
        %p258 = pneg %p165
      $region26: #{forward.55} parent=11 // pred_check_branch
        %260 = sbr.rel (%p258) target = $region28
      $region27: #{forward.55} parent=11 // pred_region
        %p261 = scmp.lt.s32.totalorder %s23, 0
        %s262 = scalar_select %p261, %s23, 0
        %s263 = scalar_lea.vmem %s4, %s262
      $region28: #{forward.55} parent=11 // pred_fallthru
        _
      // Predicated region
      $region29: #{forward.55} parent=11 // pred_check
        %p264 = pneg %p191
      $region30: #{forward.55} parent=11 // pred_check_branch
        %266 = sbr.rel (%p264) target = $region32
      $region31: #{forward.55} parent=11 // pred_region
        %p267 = scmp.lt.s32.totalorder %s23, 0
        %s268 = scalar_select %p267, %s23, 0
        %s269 = scalar_lea.vmem %s5, %s268
      $region32: #{forward.55} parent=11 // pred_fallthru
        _
    $region12: #{forward.55} parent=5 // pred_fallthru
      _
    %p270 = scmp.lt.s32.totalorder %s12, 2
    // Predicated region
    $region33: #{forward.55} parent=5 // pred_check
      %p271 = pneg %p270
    $region34: #{forward.55} parent=5 // pred_check_branch
      %273 = sbr.rel (%p271) target = $region36
    $region35: #{forward.55} parent=5 // pred_region
      // Predicated region
      $region37: #{forward.55} parent=35 // pred_check
        %p274 = pneg %p53
      $region38: #{forward.55} parent=35 // pred_check_branch
        %276 = sbr.rel (%p274) target = $region40
      $region39: #{forward.55} parent=35 // pred_region
        %s277 = smul.u32 32, %s19
        %p278 = scmp.lt.s32.totalorder %s277, 63
        %s279 = scalar_select %p278, %s277, 63
        %p280 = scmp.lt.s32.totalorder %s21, 0
        %s281 = scalar_select %p280, %s21, 0
        %s282 = sadd.s32 %s281, %s279
        %s283 = smul.addr %s282, 4
        %s284 = scalar_lea.vmem %s0, %s283
        %s285 = smul.u32 32, %s19
      $region40: #{forward.55} parent=35 // pred_fallthru
        _
    $region36: #{forward.55} parent=5 // pred_fallthru
      _
    %p286 = scmp.le.s32.totalorder 1, %s12
    %p287 = scmp.lt.s32.totalorder %s12, 3
    %p288 = pnand %p286, %p287
    %p289 = pneg %p288
    // Predicated region
    $region41: #{forward.55} parent=5 // pred_check
      _
    $region42: #{forward.55} parent=5 // pred_check_branch
      %291 = sbr.rel (%p288) target = $region44
    $region43: #{forward.55} parent=5 // pred_region
      %s292 = ssub.s32 %s12, 1
      %s293 = smul.u32 32, %s22
      %p294 = scmp.lt.s32.totalorder %s293, 63
      %s295 = scalar_select %p294, %s293, 63
      %p296 = scmp.lt.s32.totalorder %s24, 0
      %s297 = scalar_select %p296, %s24, 0
      %s298 = sadd.s32 %s297, %s295
      %s299 = smul.addr %s298, 4
      %s300 = scalar_lea.vmem %s0, %s299
      %p301 = pneg %p59
      %p302 = pneg %p56
      %s303 = smul.u32 16, %s24
      %p304 = scmp.lt.s32.totalorder %s303, 15
      %s305 = scalar_select %p304, %s303, 15
      %p306 = scmp.lt.s32.totalorder %s23, 0
      %s307 = scalar_select %p306, %s23, 0
      %s308 = sadd.s32 %s307, %s305
      %s309 = smul.addr %s308, 4
      %s310 = scalar_lea.vmem %s1, %s309
      %p311 = pneg %p87
      %p312 = pneg %p84
      %p313 = scmp.lt.s32.totalorder %s24, 0
      %s314 = scalar_select %p313, %s24, 0
      %s315 = scalar_lea.vmem %s2, %s314
      %p316 = pneg %p113
      %p317 = pneg %p110
      %p318 = scmp.lt.s32.totalorder %s24, 0
      %s319 = scalar_select %p318, %s24, 0
      %s320 = scalar_lea.vmem %s3, %s319
      %p321 = pneg %p139
      %p322 = pneg %p136
      %p323 = scmp.lt.s32.totalorder %s23, 0
      %s324 = scalar_select %p323, %s23, 0
      %s325 = scalar_lea.vmem %s4, %s324
      %p326 = pneg %p165
      %p327 = pneg %p162
      %p328 = scmp.lt.s32.totalorder %s23, 0
      %s329 = scalar_select %p328, %s23, 0
      %s330 = scalar_lea.vmem %s5, %s329
      %p331 = pneg %p191
      %p332 = pneg %p188
      %p333 = pneg %p219
      %p334 = pneg %p216
      %s335 = smul.u32 32, %s22
      %p336 = scmp.lt.s32.totalorder %s335, 63
      %s337 = scalar_select %p336, %s335, 63
      %p338 = scmp.lt.s32.totalorder %s23, 0
      %s339 = scalar_select %p338, %s23, 0
      %s340 = sadd.s32 %s339, %s337
      %s341 = smul.addr %s340, 4
      %s342 = scalar_lea.vmem %s6, %s341
      %s343 = smul.u32 32, %s22
      %p344 = scmp.lt.s32.totalorder %s343, 63
      %s345 = scalar_select %p344, %s343, 63
      %p346 = scmp.lt.s32.totalorder %s24, 0
      %s347 = scalar_select %p346, %s24, 0
      %s348 = sadd.s32 %s347, %s345
      %s349 = smul.addr %s348, 4
      %s350 = scalar_lea.vmem %s0, %s349
      %s351 = smul.u32 32, %s22
      %s352 = smul.u32 16, %s24
      %p353 = scmp.lt.s32.totalorder %s352, 15
      %s354 = scalar_select %p353, %s352, 15
      %p355 = scmp.lt.s32.totalorder %s23, 0
      %s356 = scalar_select %p355, %s23, 0
      %s357 = sadd.s32 %s356, %s354
      %s358 = smul.addr %s357, 4
      %s359 = scalar_lea.vmem %s1, %s358
      %s360 = smul.u32 16, %s24
      %p361 = scmp.lt.s32.totalorder %s24, 0
      %s362 = scalar_select %p361, %s24, 0
      %s363 = scalar_lea.vmem %s2, %s362
      %p364 = scmp.lt.s32.totalorder %s24, 0
      %s365 = scalar_select %p364, %s24, 0
      %s366 = scalar_lea.vmem %s3, %s365
      %p367 = scmp.lt.s32.totalorder %s23, 0
      %s368 = scalar_select %p367, %s23, 0
      %s369 = scalar_lea.vmem %s4, %s368
      %p370 = scmp.lt.s32.totalorder %s23, 0
      %s371 = scalar_select %p370, %s23, 0
      %s372 = scalar_lea.vmem %s5, %s371
      %s373 = smul.u32 32, %s22
      %p374 = scmp.lt.s32.totalorder %s373, 63
      %s375 = scalar_select %p374, %s373, 63
      %p376 = scmp.lt.s32.totalorder %s23, 0
      %s377 = scalar_select %p376, %s23, 0
      %s378 = sadd.s32 %s377, %s375
      %s379 = smul.addr %s378, 4
      %s380 = scalar_lea.vmem %s6, %s379
      %s381 = smul.u32 32, %s22
      %p382 = scmp.eq.s32.totalorder %s24, 0
      // Predicated region
      $region45: #{forward.55} parent=43 // pred_check
        %p383 = pneg %p382
      $region46: #{forward.55} parent=43 // pred_check_branch
        %385 = sbr.rel (%p383) target = $region48
      $region47: #{forward.55} parent=43 // pred_region
        %386 = vst [vmem:[#allocation2] sm:$0xff] 0.0
        %387 = vst [vmem:[#allocation2 + $0x8] sm:$0xff] 0.0
        %388 = vst [vmem:[#allocation2 + $0x10] sm:$0xff] 0.0
        %389 = vst [vmem:[#allocation2 + $0x18] sm:$0xff] 0.0
        %390 = vst [vmem:[#allocation2 + $0x20] sm:$0xff] 0.0
        %391 = vst [vmem:[#allocation2 + $0x28] sm:$0xff] 0.0
        %392 = vst [vmem:[#allocation2 + $0x30] sm:$0xff] 0.0
        %393 = vst [vmem:[#allocation2 + $0x38] sm:$0xff] 0.0
        %394 = vst [vmem:[#allocation2 + $0x40] sm:$0xff] 0.0
        %395 = vst [vmem:[#allocation2 + $0x48] sm:$0xff] 0.0
        %396 = vst [vmem:[#allocation2 + $0x50] sm:$0xff] 0.0
        %397 = vst [vmem:[#allocation2 + $0x58] sm:$0xff] 0.0
        %398 = vst [vmem:[#allocation2 + $0x60] sm:$0xff] 0.0
        %399 = vst [vmem:[#allocation2 + $0x68] sm:$0xff] 0.0
        %400 = vst [vmem:[#allocation2 + $0x70] sm:$0xff] 0.0
        %401 = vst [vmem:[#allocation2 + $0x78] sm:$0xff] 0.0
        %402 = vst [vmem:[#allocation2 + $0x80] sm:$0xff] 0.0
        %403 = vst [vmem:[#allocation2 + $0x88] sm:$0xff] 0.0
        %404 = vst [vmem:[#allocation2 + $0x90] sm:$0xff] 0.0
        %405 = vst [vmem:[#allocation2 + $0x98] sm:$0xff] 0.0
        %406 = vst [vmem:[#allocation2 + $0xa0] sm:$0xff] 0.0
        %407 = vst [vmem:[#allocation2 + $0xa8] sm:$0xff] 0.0
        %408 = vst [vmem:[#allocation2 + $0xb0] sm:$0xff] 0.0
        %409 = vst [vmem:[#allocation2 + $0xb8] sm:$0xff] 0.0
        %410 = vst [vmem:[#allocation2 + $0xc0] sm:$0xff] 0.0
        %411 = vst [vmem:[#allocation2 + $0xc8] sm:$0xff] 0.0
        %412 = vst [vmem:[#allocation2 + $0xd0] sm:$0xff] 0.0
        %413 = vst [vmem:[#allocation2 + $0xd8] sm:$0xff] 0.0
        %414 = vst [vmem:[#allocation2 + $0xe0] sm:$0xff] 0.0
        %415 = vst [vmem:[#allocation2 + $0xe8] sm:$0xff] 0.0
        %416 = vst [vmem:[#allocation2 + $0xf0] sm:$0xff] 0.0
        %417 = vst [vmem:[#allocation2 + $0xf8] sm:$0xff] 0.0
      $region48: #{forward.55} parent=43 // pred_fallthru
        _
      %v418 = vld [vmem:[%s350] sm:$0xf]
      %v419 = vld [vmem:[%s350 + $0x4] sm:$0xf]
      %v420 = vld [vmem:[%s350 + $0x8] sm:$0xf]
      %v421 = vld [vmem:[%s350 + $0xc] sm:$0xf]
      %v422 = vld [vmem:[%s350 + $0x10] sm:$0xf]
      %v423 = vld [vmem:[%s350 + $0x14] sm:$0xf]
      %v424 = vld [vmem:[%s350 + $0x18] sm:$0xf]
      %v425 = vld [vmem:[%s350 + $0x1c] sm:$0xf]
      %v426 = vld [vmem:[%s350 + $0x20] sm:$0xf]
      %v427 = vld [vmem:[%s350 + $0x24] sm:$0xf]
      %v428 = vld [vmem:[%s350 + $0x28] sm:$0xf]
      %v429 = vld [vmem:[%s350 + $0x2c] sm:$0xf]
      %v430 = vld [vmem:[%s350 + $0x30] sm:$0xf]
      %v431 = vld [vmem:[%s350 + $0x34] sm:$0xf]
      %v432 = vld [vmem:[%s350 + $0x38] sm:$0xf]
      %v433 = vld [vmem:[%s350 + $0x3c] sm:$0xf]
      %v434 = vld [vmem:[%s350 + $0x40] sm:$0xf]
      %v435 = vld [vmem:[%s350 + $0x44] sm:$0xf]
      %v436 = vld [vmem:[%s350 + $0x48] sm:$0xf]
      %v437 = vld [vmem:[%s350 + $0x4c] sm:$0xf]
      %v438 = vld [vmem:[%s350 + $0x50] sm:$0xf]
      %v439 = vld [vmem:[%s350 + $0x54] sm:$0xf]
      %v440 = vld [vmem:[%s350 + $0x58] sm:$0xf]
      %v441 = vld [vmem:[%s350 + $0x5c] sm:$0xf]
      %v442 = vld [vmem:[%s350 + $0x60] sm:$0xf]
      %v443 = vld [vmem:[%s350 + $0x64] sm:$0xf]
      %v444 = vld [vmem:[%s350 + $0x68] sm:$0xf]
      %v445 = vld [vmem:[%s350 + $0x6c] sm:$0xf]
      %v446 = vld [vmem:[%s350 + $0x70] sm:$0xf]
      %v447 = vld [vmem:[%s350 + $0x74] sm:$0xf]
      %v448 = vld [vmem:[%s350 + $0x78] sm:$0xf]
      %v449 = vld [vmem:[%s350 + $0x7c] sm:$0xf]
      %v450 = vld [vmem:[#allocation2] sm:$0xff]
      %v451 = vld [vmem:[#allocation2 + $0x8] sm:$0xff]
      %v452 = vld [vmem:[#allocation2 + $0x10] sm:$0xff]
      %v453 = vld [vmem:[#allocation2 + $0x18] sm:$0xff]
      %v454 = vld [vmem:[#allocation2 + $0x20] sm:$0xff]
      %v455 = vld [vmem:[#allocation2 + $0x28] sm:$0xff]
      %v456 = vld [vmem:[#allocation2 + $0x30] sm:$0xff]
      %v457 = vld [vmem:[#allocation2 + $0x38] sm:$0xff]
      %v458 = vld [vmem:[#allocation2 + $0x40] sm:$0xff]
      %v459 = vld [vmem:[#allocation2 + $0x48] sm:$0xff]
      %v460 = vld [vmem:[#allocation2 + $0x50] sm:$0xff]
      %v461 = vld [vmem:[#allocation2 + $0x58] sm:$0xff]
      %v462 = vld [vmem:[#allocation2 + $0x60] sm:$0xff]
      %v463 = vld [vmem:[#allocation2 + $0x68] sm:$0xff]
      %v464 = vld [vmem:[#allocation2 + $0x70] sm:$0xff]
      %v465 = vld [vmem:[#allocation2 + $0x78] sm:$0xff]
      %v466 = vld [vmem:[#allocation2 + $0x80] sm:$0xff]
      %v467 = vld [vmem:[#allocation2 + $0x88] sm:$0xff]
      %v468 = vld [vmem:[#allocation2 + $0x90] sm:$0xff]
      %v469 = vld [vmem:[#allocation2 + $0x98] sm:$0xff]
      %v470 = vld [vmem:[#allocation2 + $0xa0] sm:$0xff]
      %v471 = vld [vmem:[#allocation2 + $0xa8] sm:$0xff]
      %v472 = vld [vmem:[#allocation2 + $0xb0] sm:$0xff]
      %v473 = vld [vmem:[#allocation2 + $0xb8] sm:$0xff]
      %v474 = vld [vmem:[#allocation2 + $0xc0] sm:$0xff]
      %v475 = vld [vmem:[#allocation2 + $0xc8] sm:$0xff]
      %v476 = vld [vmem:[#allocation2 + $0xd0] sm:$0xff]
      %v477 = vld [vmem:[#allocation2 + $0xd8] sm:$0xff]
      %v478 = vld [vmem:[#allocation2 + $0xe0] sm:$0xff]
      %v479 = vld [vmem:[#allocation2 + $0xe8] sm:$0xff]
      %v480 = vld [vmem:[#allocation2 + $0xf0] sm:$0xff]
      %v481 = vld [vmem:[#allocation2 + $0xf8] sm:$0xff]
      %v482 = vld [vmem:[%s359] sm:$0xf]
      %v483 = vld [vmem:[%s359 + $0x4] sm:$0xf]
      %v484 = vld [vmem:[%s359 + $0x8] sm:$0xf]
      %v485 = vld [vmem:[%s359 + $0xc] sm:$0xf]
      %v486 = vld [vmem:[%s359 + $0x10] sm:$0xf]
      %v487 = vld [vmem:[%s359 + $0x14] sm:$0xf]
      %v488 = vld [vmem:[%s359 + $0x18] sm:$0xf]
      %v489 = vld [vmem:[%s359 + $0x1c] sm:$0xf]
      %v490 = vld [vmem:[%s359 + $0x20] sm:$0xf]
      %v491 = vld [vmem:[%s359 + $0x24] sm:$0xf]
      %v492 = vld [vmem:[%s359 + $0x28] sm:$0xf]
      %v493 = vld [vmem:[%s359 + $0x2c] sm:$0xf]
      %v494 = vld [vmem:[%s359 + $0x30] sm:$0xf]
      %v495 = vld [vmem:[%s359 + $0x34] sm:$0xf]
      %v496 = vld [vmem:[%s359 + $0x38] sm:$0xf]
      %v497 = vld [vmem:[%s359 + $0x3c] sm:$0xf]
      %v530 = vunpack.c.l.b16 %v418
      %v531 = vunpack.c.l.b16 %v419
      %v532 = vunpack.c.l.b16 %v420
      %v533 = vunpack.c.l.b16 %v421
      %v534 = vunpack.c.l.b16 %v422
      %v535 = vunpack.c.l.b16 %v423
      %v536 = vunpack.c.l.b16 %v424
      %v537 = vunpack.c.l.b16 %v425
      %v538 = vunpack.c.l.b16 %v426
      %v539 = vunpack.c.l.b16 %v427
      %v540 = vunpack.c.l.b16 %v428
      %v541 = vunpack.c.l.b16 %v429
      %v542 = vunpack.c.l.b16 %v430
      %v543 = vunpack.c.l.b16 %v431
      %v544 = vunpack.c.l.b16 %v432
      %v545 = vunpack.c.l.b16 %v433
      %v546 = vunpack.c.l.b16 %v434
      %v547 = vunpack.c.l.b16 %v435
      %v548 = vunpack.c.l.b16 %v436
      %v549 = vunpack.c.l.b16 %v437
      %v550 = vunpack.c.l.b16 %v438
      %v551 = vunpack.c.l.b16 %v439
      %v552 = vunpack.c.l.b16 %v440
      %v553 = vunpack.c.l.b16 %v441
      %v554 = vunpack.c.l.b16 %v442
      %v555 = vunpack.c.l.b16 %v443
      %v556 = vunpack.c.l.b16 %v444
      %v557 = vunpack.c.l.b16 %v445
      %v558 = vunpack.c.l.b16 %v446
      %v559 = vunpack.c.l.b16 %v447
      %v560 = vunpack.c.l.b16 %v448
      %v561 = vunpack.c.l.b16 %v449
      %v562 = vpack.c.b16 %v531, %v530
      %v563 = vpack.c.b16 %v533, %v532
      %v564 = vpack.c.b16 %v535, %v534
      %v565 = vpack.c.b16 %v537, %v536
      %v566 = vpack.c.b16 %v539, %v538
      %v567 = vpack.c.b16 %v541, %v540
      %v568 = vpack.c.b16 %v543, %v542
      %v569 = vpack.c.b16 %v545, %v544
      %v570 = vpack.c.b16 %v547, %v546
      %v571 = vpack.c.b16 %v549, %v548
      %v572 = vpack.c.b16 %v551, %v550
      %v573 = vpack.c.b16 %v553, %v552
      %v574 = vpack.c.b16 %v555, %v554
      %v575 = vpack.c.b16 %v557, %v556
      %v576 = vpack.c.b16 %v559, %v558
      %v577 = vpack.c.b16 %v561, %v560
      %v610 = vunpack.c.l.b16 %v482
      %v611 = vunpack.c.l.b16 %v483
      %v612 = vunpack.c.l.b16 %v484
      %v613 = vunpack.c.l.b16 %v485
      %v614 = vunpack.c.l.b16 %v486
      %v615 = vunpack.c.l.b16 %v487
      %v616 = vunpack.c.l.b16 %v488
      %v617 = vunpack.c.l.b16 %v489
      %v618 = vunpack.c.l.b16 %v490
      %v619 = vunpack.c.l.b16 %v491
      %v620 = vunpack.c.l.b16 %v492
      %v621 = vunpack.c.l.b16 %v493
      %v622 = vunpack.c.l.b16 %v494
      %v623 = vunpack.c.l.b16 %v495
      %v624 = vunpack.c.l.b16 %v496
      %v625 = vunpack.c.l.b16 %v497
      %v626 = vpack.c.b16 %v611, %v610
      %v627 = vpack.c.b16 %v613, %v612
      %v628 = vpack.c.b16 %v615, %v614
      %v629 = vpack.c.b16 %v617, %v616
      %v630 = vpack.c.b16 %v619, %v618
      %v631 = vpack.c.b16 %v621, %v620
      %v632 = vpack.c.b16 %v623, %v622
      %v633 = vpack.c.b16 %v625, %v624
      %642 = vmatpush.bf16.msra.mxu0 %v633
      %643 = vmatpush.bf16.msra.mxu0 %v632
      %644 = vmatpush.bf16.msra.mxu0 %v631
      %645 = vmatpush.bf16.msra.mxu0 %v630
      %646 = vmatpush.bf16.msra.mxu0 %v629
      %647 = vmatpush.bf16.msra.mxu0 %v628
      %648 = vmatpush.bf16.msra.mxu0 %v627
      %649 = vmatpush.bf16.msra.mxu0 %v626
      %650 = vmatmul.bf16.gmra.mxu0 %v562
      %v651 = vpop.f32.mrf.mxu0
      %v652 = vadd.f32 0.0, %v651
      %v653 = vpop.f32.mrf.mxu0
      %v654 = vadd.f32 0.0, %v653
      %655 = vmatmul.bf16.gmra.mxu0 %v563
      %v656 = vpop.f32.mrf.mxu0
      %v657 = vadd.f32 0.0, %v656
      %v658 = vpop.f32.mrf.mxu0
      %v659 = vadd.f32 0.0, %v658
      %660 = vmatmul.bf16.gmra.mxu0 %v564
      %v661 = vpop.f32.mrf.mxu0
      %v662 = vadd.f32 0.0, %v661
      %v663 = vpop.f32.mrf.mxu0
      %v664 = vadd.f32 0.0, %v663
      %665 = vmatmul.bf16.gmra.mxu0 %v565
      %v666 = vpop.f32.mrf.mxu0
      %v667 = vadd.f32 0.0, %v666
      %v668 = vpop.f32.mrf.mxu0
      %v669 = vadd.f32 0.0, %v668
      %670 = vmatmul.bf16.gmra.mxu0 %v566
      %v671 = vpop.f32.mrf.mxu0
      %v672 = vadd.f32 0.0, %v671
      %v673 = vpop.f32.mrf.mxu0
      %v674 = vadd.f32 0.0, %v673
      %675 = vmatmul.bf16.gmra.mxu0 %v567
      %v676 = vpop.f32.mrf.mxu0
      %v677 = vadd.f32 0.0, %v676
      %v678 = vpop.f32.mrf.mxu0
      %v679 = vadd.f32 0.0, %v678
      %680 = vmatmul.bf16.gmra.mxu0 %v568
      %v681 = vpop.f32.mrf.mxu0
      %v682 = vadd.f32 0.0, %v681
      %v683 = vpop.f32.mrf.mxu0
      %v684 = vadd.f32 0.0, %v683
      %685 = vmatmul.bf16.gmra.mxu0 %v569
      %v686 = vpop.f32.mrf.mxu0
      %v687 = vadd.f32 0.0, %v686
      %v688 = vpop.f32.mrf.mxu0
      %v689 = vadd.f32 0.0, %v688
      %690 = vmatmul.bf16.gmra.mxu0 %v570
      %v691 = vpop.f32.mrf.mxu0
      %v692 = vadd.f32 0.0, %v691
      %v693 = vpop.f32.mrf.mxu0
      %v694 = vadd.f32 0.0, %v693
      %695 = vmatmul.bf16.gmra.mxu0 %v571
      %v696 = vpop.f32.mrf.mxu0
      %v697 = vadd.f32 0.0, %v696
      %v698 = vpop.f32.mrf.mxu0
      %v699 = vadd.f32 0.0, %v698
      %700 = vmatmul.bf16.gmra.mxu0 %v572
      %v701 = vpop.f32.mrf.mxu0
      %v702 = vadd.f32 0.0, %v701
      %v703 = vpop.f32.mrf.mxu0
      %v704 = vadd.f32 0.0, %v703
      %705 = vmatmul.bf16.gmra.mxu0 %v573
      %v706 = vpop.f32.mrf.mxu0
      %v707 = vadd.f32 0.0, %v706
      %v708 = vpop.f32.mrf.mxu0
      %v709 = vadd.f32 0.0, %v708
      %710 = vmatmul.bf16.gmra.mxu0 %v574
      %v711 = vpop.f32.mrf.mxu0
      %v712 = vadd.f32 0.0, %v711
      %v713 = vpop.f32.mrf.mxu0
      %v714 = vadd.f32 0.0, %v713
      %715 = vmatmul.bf16.gmra.mxu0 %v575
      %v716 = vpop.f32.mrf.mxu0
      %v717 = vadd.f32 0.0, %v716
      %v718 = vpop.f32.mrf.mxu0
      %v719 = vadd.f32 0.0, %v718
      %720 = vmatmul.bf16.gmra.mxu0 %v576
      %v721 = vpop.f32.mrf.mxu0
      %v722 = vadd.f32 0.0, %v721
      %v723 = vpop.f32.mrf.mxu0
      %v724 = vadd.f32 0.0, %v723
      %725 = vmatmul.bf16.gmra.mxu0 %v577
      %v726 = vpop.f32.mrf.mxu0
      %v727 = vadd.f32 0.0, %v726
      %v728 = vpop.f32.mrf.mxu0
      %v729 = vadd.f32 0.0, %v728
      %730 = vdwg.mxu0
      %v731 = vadd.f32 %v450, %v652
      %v732 = vadd.f32 %v451, %v654
      %v733 = vadd.f32 %v452, %v657
      %v734 = vadd.f32 %v453, %v659
      %v735 = vadd.f32 %v454, %v662
      %v736 = vadd.f32 %v455, %v664
      %v737 = vadd.f32 %v456, %v667
      %v738 = vadd.f32 %v457, %v669
      %v739 = vadd.f32 %v458, %v672
      %v740 = vadd.f32 %v459, %v674
      %v741 = vadd.f32 %v460, %v677
      %v742 = vadd.f32 %v461, %v679
      %v743 = vadd.f32 %v462, %v682
      %v744 = vadd.f32 %v463, %v684
      %v745 = vadd.f32 %v464, %v687
      %v746 = vadd.f32 %v465, %v689
      %v747 = vadd.f32 %v466, %v692
      %v748 = vadd.f32 %v467, %v694
      %v749 = vadd.f32 %v468, %v697
      %v750 = vadd.f32 %v469, %v699
      %v751 = vadd.f32 %v470, %v702
      %v752 = vadd.f32 %v471, %v704
      %v753 = vadd.f32 %v472, %v707
      %v754 = vadd.f32 %v473, %v709
      %v755 = vadd.f32 %v474, %v712
      %v756 = vadd.f32 %v475, %v714
      %v757 = vadd.f32 %v476, %v717
      %v758 = vadd.f32 %v477, %v719
      %v759 = vadd.f32 %v478, %v722
      %v760 = vadd.f32 %v479, %v724
      %v761 = vadd.f32 %v480, %v727
      %v762 = vadd.f32 %v481, %v729
      %763 = vst [vmem:[#allocation2] sm:$0xff] %v731
      %764 = vst [vmem:[#allocation2 + $0x8] sm:$0xff] %v732
      %765 = vst [vmem:[#allocation2 + $0x10] sm:$0xff] %v733
      %766 = vst [vmem:[#allocation2 + $0x18] sm:$0xff] %v734
      %767 = vst [vmem:[#allocation2 + $0x20] sm:$0xff] %v735
      %768 = vst [vmem:[#allocation2 + $0x28] sm:$0xff] %v736
      %769 = vst [vmem:[#allocation2 + $0x30] sm:$0xff] %v737
      %770 = vst [vmem:[#allocation2 + $0x38] sm:$0xff] %v738
      %771 = vst [vmem:[#allocation2 + $0x40] sm:$0xff] %v739
      %772 = vst [vmem:[#allocation2 + $0x48] sm:$0xff] %v740
      %773 = vst [vmem:[#allocation2 + $0x50] sm:$0xff] %v741
      %774 = vst [vmem:[#allocation2 + $0x58] sm:$0xff] %v742
      %775 = vst [vmem:[#allocation2 + $0x60] sm:$0xff] %v743
      %776 = vst [vmem:[#allocation2 + $0x68] sm:$0xff] %v744
      %777 = vst [vmem:[#allocation2 + $0x70] sm:$0xff] %v745
      %778 = vst [vmem:[#allocation2 + $0x78] sm:$0xff] %v746
      %779 = vst [vmem:[#allocation2 + $0x80] sm:$0xff] %v747
      %780 = vst [vmem:[#allocation2 + $0x88] sm:$0xff] %v748
      %781 = vst [vmem:[#allocation2 + $0x90] sm:$0xff] %v749
      %782 = vst [vmem:[#allocation2 + $0x98] sm:$0xff] %v750
      %783 = vst [vmem:[#allocation2 + $0xa0] sm:$0xff] %v751
      %784 = vst [vmem:[#allocation2 + $0xa8] sm:$0xff] %v752
      %785 = vst [vmem:[#allocation2 + $0xb0] sm:$0xff] %v753
      %786 = vst [vmem:[#allocation2 + $0xb8] sm:$0xff] %v754
      %787 = vst [vmem:[#allocation2 + $0xc0] sm:$0xff] %v755
      %788 = vst [vmem:[#allocation2 + $0xc8] sm:$0xff] %v756
      %789 = vst [vmem:[#allocation2 + $0xd0] sm:$0xff] %v757
      %790 = vst [vmem:[#allocation2 + $0xd8] sm:$0xff] %v758
      %791 = vst [vmem:[#allocation2 + $0xe0] sm:$0xff] %v759
      %792 = vst [vmem:[#allocation2 + $0xe8] sm:$0xff] %v760
      %793 = vst [vmem:[#allocation2 + $0xf0] sm:$0xff] %v761
      %794 = vst [vmem:[#allocation2 + $0xf8] sm:$0xff] %v762
      // Predicated region
      $region49: #{forward.55} parent=43 // pred_check
        %p795 = pneg %p382
      $region50: #{forward.55} parent=43 // pred_check_branch
        %797 = sbr.rel (%p795) target = $region52
      $region51: #{forward.55} parent=43 // pred_region
        %v798 = vld [vmem:[#allocation2] sm:$0xff]
        %v799 = vld [vmem:[#allocation2 + $0x8] sm:$0xff]
        %v800 = vld [vmem:[#allocation2 + $0x10] sm:$0xff]
        %v801 = vld [vmem:[#allocation2 + $0x18] sm:$0xff]
        %v802 = vld [vmem:[#allocation2 + $0x20] sm:$0xff]
        %v803 = vld [vmem:[#allocation2 + $0x28] sm:$0xff]
        %v804 = vld [vmem:[#allocation2 + $0x30] sm:$0xff]
        %v805 = vld [vmem:[#allocation2 + $0x38] sm:$0xff]
        %v806 = vld [vmem:[#allocation2 + $0x40] sm:$0xff]
        %v807 = vld [vmem:[#allocation2 + $0x48] sm:$0xff]
        %v808 = vld [vmem:[#allocation2 + $0x50] sm:$0xff]
        %v809 = vld [vmem:[#allocation2 + $0x58] sm:$0xff]
        %v810 = vld [vmem:[#allocation2 + $0x60] sm:$0xff]
        %v811 = vld [vmem:[#allocation2 + $0x68] sm:$0xff]
        %v812 = vld [vmem:[#allocation2 + $0x70] sm:$0xff]
        %v813 = vld [vmem:[#allocation2 + $0x78] sm:$0xff]
        %v814 = vld [vmem:[#allocation2 + $0x80] sm:$0xff]
        %v815 = vld [vmem:[#allocation2 + $0x88] sm:$0xff]
        %v816 = vld [vmem:[#allocation2 + $0x90] sm:$0xff]
        %v817 = vld [vmem:[#allocation2 + $0x98] sm:$0xff]
        %v818 = vld [vmem:[#allocation2 + $0xa0] sm:$0xff]
        %v819 = vld [vmem:[#allocation2 + $0xa8] sm:$0xff]
        %v820 = vld [vmem:[#allocation2 + $0xb0] sm:$0xff]
        %v821 = vld [vmem:[#allocation2 + $0xb8] sm:$0xff]
        %v822 = vld [vmem:[#allocation2 + $0xc0] sm:$0xff]
        %v823 = vld [vmem:[#allocation2 + $0xc8] sm:$0xff]
        %v824 = vld [vmem:[#allocation2 + $0xd0] sm:$0xff]
        %v825 = vld [vmem:[#allocation2 + $0xd8] sm:$0xff]
        %v826 = vld [vmem:[#allocation2 + $0xe0] sm:$0xff]
        %v827 = vld [vmem:[#allocation2 + $0xe8] sm:$0xff]
        %v828 = vld [vmem:[#allocation2 + $0xf0] sm:$0xff]
        %v829 = vld [vmem:[#allocation2 + $0xf8] sm:$0xff]
        %v830 = vpack.c.bf16 %v798, %v798
        %v831 = vpack.c.bf16 %v799, %v799
        %v832 = vpack.c.bf16 %v800, %v800
        %v833 = vpack.c.bf16 %v801, %v801
        %v834 = vpack.c.bf16 %v802, %v802
        %v835 = vpack.c.bf16 %v803, %v803
        %v836 = vpack.c.bf16 %v804, %v804
        %v837 = vpack.c.bf16 %v805, %v805
        %v838 = vpack.c.bf16 %v806, %v806
        %v839 = vpack.c.bf16 %v807, %v807
        %v840 = vpack.c.bf16 %v808, %v808
        %v841 = vpack.c.bf16 %v809, %v809
        %v842 = vpack.c.bf16 %v810, %v810
        %v843 = vpack.c.bf16 %v811, %v811
        %v844 = vpack.c.bf16 %v812, %v812
        %v845 = vpack.c.bf16 %v813, %v813
        %v846 = vpack.c.bf16 %v814, %v814
        %v847 = vpack.c.bf16 %v815, %v815
        %v848 = vpack.c.bf16 %v816, %v816
        %v849 = vpack.c.bf16 %v817, %v817
        %v850 = vpack.c.bf16 %v818, %v818
        %v851 = vpack.c.bf16 %v819, %v819
        %v852 = vpack.c.bf16 %v820, %v820
        %v853 = vpack.c.bf16 %v821, %v821
        %v854 = vpack.c.bf16 %v822, %v822
        %v855 = vpack.c.bf16 %v823, %v823
        %v856 = vpack.c.bf16 %v824, %v824
        %v857 = vpack.c.bf16 %v825, %v825
        %v858 = vpack.c.bf16 %v826, %v826
        %v859 = vpack.c.bf16 %v827, %v827
        %v860 = vpack.c.bf16 %v828, %v828
        %v861 = vpack.c.bf16 %v829, %v829
        %862 = vst [vmem:[%s380] sm:$0xf] %v830
        %863 = vst [vmem:[%s380 + $0x4] sm:$0xf] %v831
        %864 = vst [vmem:[%s380 + $0x8] sm:$0xf] %v832
        %865 = vst [vmem:[%s380 + $0xc] sm:$0xf] %v833
        %866 = vst [vmem:[%s380 + $0x10] sm:$0xf] %v834
        %867 = vst [vmem:[%s380 + $0x14] sm:$0xf] %v835
        %868 = vst [vmem:[%s380 + $0x18] sm:$0xf] %v836
        %869 = vst [vmem:[%s380 + $0x1c] sm:$0xf] %v837
        %870 = vst [vmem:[%s380 + $0x20] sm:$0xf] %v838
        %871 = vst [vmem:[%s380 + $0x24] sm:$0xf] %v839
        %872 = vst [vmem:[%s380 + $0x28] sm:$0xf] %v840
        %873 = vst [vmem:[%s380 + $0x2c] sm:$0xf] %v841
        %874 = vst [vmem:[%s380 + $0x30] sm:$0xf] %v842
        %875 = vst [vmem:[%s380 + $0x34] sm:$0xf] %v843
        %876 = vst [vmem:[%s380 + $0x38] sm:$0xf] %v844
        %877 = vst [vmem:[%s380 + $0x3c] sm:$0xf] %v845
        %878 = vst [vmem:[%s380 + $0x40] sm:$0xf] %v846
        %879 = vst [vmem:[%s380 + $0x44] sm:$0xf] %v847
        %880 = vst [vmem:[%s380 + $0x48] sm:$0xf] %v848
        %881 = vst [vmem:[%s380 + $0x4c] sm:$0xf] %v849
        %882 = vst [vmem:[%s380 + $0x50] sm:$0xf] %v850
        %883 = vst [vmem:[%s380 + $0x54] sm:$0xf] %v851
        %884 = vst [vmem:[%s380 + $0x58] sm:$0xf] %v852
        %885 = vst [vmem:[%s380 + $0x5c] sm:$0xf] %v853
        %886 = vst [vmem:[%s380 + $0x60] sm:$0xf] %v854
        %887 = vst [vmem:[%s380 + $0x64] sm:$0xf] %v855
        %888 = vst [vmem:[%s380 + $0x68] sm:$0xf] %v856
        %889 = vst [vmem:[%s380 + $0x6c] sm:$0xf] %v857
        %890 = vst [vmem:[%s380 + $0x70] sm:$0xf] %v858
        %891 = vst [vmem:[%s380 + $0x74] sm:$0xf] %v859
        %892 = vst [vmem:[%s380 + $0x78] sm:$0xf] %v860
        %893 = vst [vmem:[%s380 + $0x7c] sm:$0xf] %v861
      $region52: #{forward.55} parent=43 // pred_fallthru
        _
      %s894 = smul.u32 32, %s22
      %p895 = scmp.lt.s32.totalorder %s894, 63
      %s896 = scalar_select %p895, %s894, 63
      %p897 = scmp.lt.s32.totalorder %s23, 0
      %s898 = scalar_select %p897, %s23, 0
      %s899 = sadd.s32 %s898, %s896
      %s900 = smul.addr %s899, 4
      %s901 = scalar_lea.vmem %s6, %s900
      // Predicated region
      $region53: #{forward.55} parent=43 // pred_check
        %p902 = pneg %p216
      $region54: #{forward.55} parent=43 // pred_check_branch
        %904 = sbr.rel (%p902) target = $region56
      $region55: #{forward.55} parent=43 // pred_region
        %s905 = smul.u32 32, %s22
      $region56: #{forward.55} parent=43 // pred_fallthru
        _
    $region44: #{forward.55} parent=5 // pred_fallthru
      _
    %p906 = scmp.le.s32.totalorder 2, %s12
    // Predicated region
    $region57: #{forward.55} parent=5 // pred_check
      %p907 = pneg %p906
    $region58: #{forward.55} parent=5 // pred_check_branch
      %909 = sbr.rel (%p907) target = $region60
    $region59: #{forward.55} parent=5 // pred_region
      %s910 = ssub.s32 %s12, 2
      // Predicated region
      $region61: #{forward.55} parent=59 // pred_check
        %p911 = pneg %p222
      $region62: #{forward.55} parent=59 // pred_check_branch
        %913 = sbr.rel (%p911) target = $region64
      $region63: #{forward.55} parent=59 // pred_region
        %s914 = smul.u32 32, %s25
        %p915 = scmp.lt.s32.totalorder %s914, 63
        %s916 = scalar_select %p915, %s914, 63
        %p917 = scmp.lt.s32.totalorder %s26, 0
        %s918 = scalar_select %p917, %s26, 0
        %s919 = sadd.s32 %s918, %s916
        %s920 = smul.addr %s919, 4
        %s921 = scalar_lea.vmem %s6, %s920
      $region64: #{forward.55} parent=59 // pred_fallthru
        _
    $region60: #{forward.55} parent=5 // pred_fallthru
      _
  $region6: #{forward.55} parent=0 // loop_footer
    %s16 = sadd.s32 1, %s12
  $region7: #{forward.55} parent=0 // loop_footer_branch
    %11 = sbr.rel target = $region3
  $region8: #{forward.55} parent=0 // loop_exit
    _

// kernel: forward.58
$region0: #{forward.58}
  #allocation0 [shape = 'u32[]', space=smem, size = 0x4, offset = 0x4, fixed_abs, tag = 'smem constant byte address 0x4 - core index']
  #allocation1 [shape = 'u32[72,128]{1,0:T(1,128)}', space=vmem, size = 0x9000, scoped, tag = 'internal scratch']
  %s0 = inlined_call_operand.vmem [shape: bf16[16,2,8,32], index: 0, kind: input, shape index: {}]
  %s1 = inlined_call_operand.vmem [shape: f32[1,16], index: 1, kind: input, shape index: {}]
  %s2 = inlined_call_operand.vmem [shape: f32[1,16], index: 2, kind: input, shape index: {}]
  %s3 = inlined_call_operand.vmem [shape: bf16[16,8,16], index: 3, kind: output, shape index: {}]
  %s4 = sld [smem:[#allocation0]]
  $region22: #{forward.58} parent=0
    _
  %s6 = ssub.s32 1, %s4
  %s7 = scalar_select 0, %s6, %s4
  // Predicated region
  $region2: #{forward.58} parent=0 // pred_check
    _
  $region3: #{forward.58} parent=0 // pred_check_branch
    %9 = sbr.rel (0) target = $region5
  $region4: #{forward.58} parent=0 // pred_region
    _
  $region5: #{forward.58} parent=0 // pred_fallthru
    _
  // Predicated region
  $region6: #{forward.58} parent=0 // pred_check
    _
  $region7: #{forward.58} parent=0 // pred_check_branch
    %11 = sbr.rel (0) target = $region9
  $region8: #{forward.58} parent=0 // pred_region
    _
  $region9: #{forward.58} parent=0 // pred_fallthru
    _
  // Predicated region
  $region10: #{forward.58} parent=0 // pred_check
    _
  $region11: #{forward.58} parent=0 // pred_check_branch
    %13 = sbr.rel (0) target = $region13
  $region12: #{forward.58} parent=0 // pred_region
    _
  $region13: #{forward.58} parent=0 // pred_fallthru
    _
  %v14 = vld [vmem:[%s1] sm:$0x1]
  %v15 = vld [vmem:[%s2] sm:$0x1]
  %v16 = vld [vmem:[%s0] sm:$0xf]
  %v17 = vld [vmem:[%s0 + $0x8] sm:$0xf]
  %v18 = vld [vmem:[%s0 + $0x10] sm:$0xf]
  %v19 = vld [vmem:[%s0 + $0x18] sm:$0xf]
  %v20 = vld [vmem:[%s0 + $0x20] sm:$0xf]
  %v21 = vld [vmem:[%s0 + $0x28] sm:$0xf]
  %v22 = vld [vmem:[%s0 + $0x30] sm:$0xf]
  %v23 = vld [vmem:[%s0 + $0x38] sm:$0xf]
  %v24 = vld [vmem:[%s0 + $0x40] sm:$0xf]
  %v25 = vld [vmem:[%s0 + $0x48] sm:$0xf]
  %v26 = vld [vmem:[%s0 + $0x50] sm:$0xf]
  %v27 = vld [vmem:[%s0 + $0x58] sm:$0xf]
  %v28 = vld [vmem:[%s0 + $0x60] sm:$0xf]
  %v29 = vld [vmem:[%s0 + $0x68] sm:$0xf]
  %v30 = vld [vmem:[%s0 + $0x70] sm:$0xf]
  %v31 = vld [vmem:[%s0 + $0x78] sm:$0xf]
  %s32 = scalar_lea.vmem %s0, 4
  %v33 = vld [vmem:[%s32] sm:$0xf]
  %v34 = vld [vmem:[%s32 + $0x8] sm:$0xf]
  %v35 = vld [vmem:[%s32 + $0x10] sm:$0xf]
  %v36 = vld [vmem:[%s32 + $0x18] sm:$0xf]
  %v37 = vld [vmem:[%s32 + $0x20] sm:$0xf]
  %v38 = vld [vmem:[%s32 + $0x28] sm:$0xf]
  %v39 = vld [vmem:[%s32 + $0x30] sm:$0xf]
  %v40 = vld [vmem:[%s32 + $0x38] sm:$0xf]
  %v41 = vld [vmem:[%s32 + $0x40] sm:$0xf]
  %v42 = vld [vmem:[%s32 + $0x48] sm:$0xf]
  %v43 = vld [vmem:[%s32 + $0x50] sm:$0xf]
  %v44 = vld [vmem:[%s32 + $0x58] sm:$0xf]
  %v45 = vld [vmem:[%s32 + $0x60] sm:$0xf]
  %v46 = vld [vmem:[%s32 + $0x68] sm:$0xf]
  %v47 = vld [vmem:[%s32 + $0x70] sm:$0xf]
  %v48 = vld [vmem:[%s32 + $0x78] sm:$0xf]
  %v49 = vunpack.c.l.bf16 %v16
  %v50 = vunpack.c.l.bf16 %v17
  %v51 = vunpack.c.l.bf16 %v18
  %v52 = vunpack.c.l.bf16 %v19
  %v53 = vunpack.c.l.bf16 %v20
  %v54 = vunpack.c.l.bf16 %v21
  %v55 = vunpack.c.l.bf16 %v22
  %v56 = vunpack.c.l.bf16 %v23
  %v57 = vunpack.c.l.bf16 %v24
  %v58 = vunpack.c.l.bf16 %v25
  %v59 = vunpack.c.l.bf16 %v26
  %v60 = vunpack.c.l.bf16 %v27
  %v61 = vunpack.c.l.bf16 %v28
  %v62 = vunpack.c.l.bf16 %v29
  %v63 = vunpack.c.l.bf16 %v30
  %v64 = vunpack.c.l.bf16 %v31
  %v66 = vperm.slane %v14, 0
  %v68 = vmul.f32 %v49, %v66
  %v69 = vmul.f32 %v50, %v66
  %v70 = vmul.f32 %v51, %v66
  %v71 = vmul.f32 %v52, %v66
  %v72 = vmul.f32 %v53, %v66
  %v73 = vmul.f32 %v54, %v66
  %v74 = vmul.f32 %v55, %v66
  %v75 = vmul.f32 %v56, %v66
  %v76 = vmul.f32 %v57, %v66
  %v77 = vmul.f32 %v58, %v66
  %v78 = vmul.f32 %v59, %v66
  %v79 = vmul.f32 %v60, %v66
  %v80 = vmul.f32 %v61, %v66
  %v81 = vmul.f32 %v62, %v66
  %v82 = vmul.f32 %v63, %v66
  %v83 = vmul.f32 %v64, %v66
  %v85 = vperm.slane %v15, 0
  %v87 = vadd.f32 %v68, %v85
  %v88 = vadd.f32 %v69, %v85
  %v89 = vadd.f32 %v70, %v85
  %v90 = vadd.f32 %v71, %v85
  %v91 = vadd.f32 %v72, %v85
  %v92 = vadd.f32 %v73, %v85
  %v93 = vadd.f32 %v74, %v85
  %v94 = vadd.f32 %v75, %v85
  %v95 = vadd.f32 %v76, %v85
  %v96 = vadd.f32 %v77, %v85
  %v97 = vadd.f32 %v78, %v85
  %v98 = vadd.f32 %v79, %v85
  %v99 = vadd.f32 %v80, %v85
  %v100 = vadd.f32 %v81, %v85
  %v101 = vadd.f32 %v82, %v85
  %v102 = vadd.f32 %v83, %v85
  %v103 = vmax.f32 %v87, 0.0
  %v104 = vmax.f32 %v88, 0.0
  %v105 = vmax.f32 %v89, 0.0
  %v106 = vmax.f32 %v90, 0.0
  %v107 = vmax.f32 %v91, 0.0
  %v108 = vmax.f32 %v92, 0.0
  %v109 = vmax.f32 %v93, 0.0
  %v110 = vmax.f32 %v94, 0.0
  %v111 = vmax.f32 %v95, 0.0
  %v112 = vmax.f32 %v96, 0.0
  %v113 = vmax.f32 %v97, 0.0
  %v114 = vmax.f32 %v98, 0.0
  %v115 = vmax.f32 %v99, 0.0
  %v116 = vmax.f32 %v100, 0.0
  %v117 = vmax.f32 %v101, 0.0
  %v118 = vmax.f32 %v102, 0.0
  %119 = vrot.lane.b32.xlu0 %v66, 16
  %v120 = vpop.permute.xlu0 %119
  %v122 = vmul.f32 %v49, %v120
  %v123 = vmul.f32 %v50, %v120
  %v124 = vmul.f32 %v51, %v120
  %v125 = vmul.f32 %v52, %v120
  %v126 = vmul.f32 %v53, %v120
  %v127 = vmul.f32 %v54, %v120
  %v128 = vmul.f32 %v55, %v120
  %v129 = vmul.f32 %v56, %v120
  %v130 = vmul.f32 %v57, %v120
  %v131 = vmul.f32 %v58, %v120
  %v132 = vmul.f32 %v59, %v120
  %v133 = vmul.f32 %v60, %v120
  %v134 = vmul.f32 %v61, %v120
  %v135 = vmul.f32 %v62, %v120
  %v136 = vmul.f32 %v63, %v120
  %v137 = vmul.f32 %v64, %v120
  %138 = vrot.lane.b32.xlu0 %v85, 16
  %v139 = vpop.permute.xlu0 %138
  %v141 = vadd.f32 %v122, %v139
  %v142 = vadd.f32 %v123, %v139
  %v143 = vadd.f32 %v124, %v139
  %v144 = vadd.f32 %v125, %v139
  %v145 = vadd.f32 %v126, %v139
  %v146 = vadd.f32 %v127, %v139
  %v147 = vadd.f32 %v128, %v139
  %v148 = vadd.f32 %v129, %v139
  %v149 = vadd.f32 %v130, %v139
  %v150 = vadd.f32 %v131, %v139
  %v151 = vadd.f32 %v132, %v139
  %v152 = vadd.f32 %v133, %v139
  %v153 = vadd.f32 %v134, %v139
  %v154 = vadd.f32 %v135, %v139
  %v155 = vadd.f32 %v136, %v139
  %v156 = vadd.f32 %v137, %v139
  %v157 = vmax.f32 %v141, 0.0
  %v158 = vmax.f32 %v142, 0.0
  %v159 = vmax.f32 %v143, 0.0
  %v160 = vmax.f32 %v144, 0.0
  %v161 = vmax.f32 %v145, 0.0
  %v162 = vmax.f32 %v146, 0.0
  %v163 = vmax.f32 %v147, 0.0
  %v164 = vmax.f32 %v148, 0.0
  %v165 = vmax.f32 %v149, 0.0
  %v166 = vmax.f32 %v150, 0.0
  %v167 = vmax.f32 %v151, 0.0
  %v168 = vmax.f32 %v152, 0.0
  %v169 = vmax.f32 %v153, 0.0
  %v170 = vmax.f32 %v154, 0.0
  %v171 = vmax.f32 %v155, 0.0
  %v172 = vmax.f32 %v156, 0.0
  %189 = vrot.lane.b32.xlu0 %v157, 112
  %v190 = vpop.permute.xlu0 %189
  %191 = vrot.lane.b32.xlu0 %v158, 112
  %v192 = vpop.permute.xlu0 %191
  %193 = vrot.lane.b32.xlu0 %v159, 112
  %v194 = vpop.permute.xlu0 %193
  %195 = vrot.lane.b32.xlu0 %v160, 112
  %v196 = vpop.permute.xlu0 %195
  %197 = vrot.lane.b32.xlu0 %v161, 112
  %v198 = vpop.permute.xlu0 %197
  %199 = vrot.lane.b32.xlu0 %v162, 112
  %v200 = vpop.permute.xlu0 %199
  %201 = vrot.lane.b32.xlu0 %v163, 112
  %v202 = vpop.permute.xlu0 %201
  %203 = vrot.lane.b32.xlu0 %v164, 112
  %v204 = vpop.permute.xlu0 %203
  %205 = vrot.lane.b32.xlu0 %v165, 112
  %v206 = vpop.permute.xlu0 %205
  %207 = vrot.lane.b32.xlu0 %v166, 112
  %v208 = vpop.permute.xlu0 %207
  %209 = vrot.lane.b32.xlu0 %v167, 112
  %v210 = vpop.permute.xlu0 %209
  %211 = vrot.lane.b32.xlu0 %v168, 112
  %v212 = vpop.permute.xlu0 %211
  %213 = vrot.lane.b32.xlu0 %v169, 112
  %v214 = vpop.permute.xlu0 %213
  %215 = vrot.lane.b32.xlu0 %v170, 112
  %v216 = vpop.permute.xlu0 %215
  %217 = vrot.lane.b32.xlu0 %v171, 112
  %v218 = vpop.permute.xlu0 %217
  %219 = vrot.lane.b32.xlu0 %v172, 112
  %v220 = vpop.permute.xlu0 %219
  %v237 = vadd.f32 %v103, %v190
  %v238 = vadd.f32 %v104, %v192
  %v239 = vadd.f32 %v105, %v194
  %v240 = vadd.f32 %v106, %v196
  %v241 = vadd.f32 %v107, %v198
  %v242 = vadd.f32 %v108, %v200
  %v243 = vadd.f32 %v109, %v202
  %v244 = vadd.f32 %v110, %v204
  %v245 = vadd.f32 %v111, %v206
  %v246 = vadd.f32 %v112, %v208
  %v247 = vadd.f32 %v113, %v210
  %v248 = vadd.f32 %v114, %v212
  %v249 = vadd.f32 %v115, %v214
  %v250 = vadd.f32 %v116, %v216
  %v251 = vadd.f32 %v117, %v218
  %v252 = vadd.f32 %v118, %v220
  %v253 = vunpack.c.l.bf16 %v33
  %v254 = vunpack.c.l.bf16 %v34
  %v255 = vunpack.c.l.bf16 %v35
  %v256 = vunpack.c.l.bf16 %v36
  %v257 = vunpack.c.l.bf16 %v37
  %v258 = vunpack.c.l.bf16 %v38
  %v259 = vunpack.c.l.bf16 %v39
  %v260 = vunpack.c.l.bf16 %v40
  %v261 = vunpack.c.l.bf16 %v41
  %v262 = vunpack.c.l.bf16 %v42
  %v263 = vunpack.c.l.bf16 %v43
  %v264 = vunpack.c.l.bf16 %v44
  %v265 = vunpack.c.l.bf16 %v45
  %v266 = vunpack.c.l.bf16 %v46
  %v267 = vunpack.c.l.bf16 %v47
  %v268 = vunpack.c.l.bf16 %v48
  %v269 = vmul.f32 %v253, %v66
  %v270 = vmul.f32 %v254, %v66
  %v271 = vmul.f32 %v255, %v66
  %v272 = vmul.f32 %v256, %v66
  %v273 = vmul.f32 %v257, %v66
  %v274 = vmul.f32 %v258, %v66
  %v275 = vmul.f32 %v259, %v66
  %v276 = vmul.f32 %v260, %v66
  %v277 = vmul.f32 %v261, %v66
  %v278 = vmul.f32 %v262, %v66
  %v279 = vmul.f32 %v263, %v66
  %v280 = vmul.f32 %v264, %v66
  %v281 = vmul.f32 %v265, %v66
  %v282 = vmul.f32 %v266, %v66
  %v283 = vmul.f32 %v267, %v66
  %v284 = vmul.f32 %v268, %v66
  %v285 = vadd.f32 %v269, %v85
  %v286 = vadd.f32 %v270, %v85
  %v287 = vadd.f32 %v271, %v85
  %v288 = vadd.f32 %v272, %v85
  %v289 = vadd.f32 %v273, %v85
  %v290 = vadd.f32 %v274, %v85
  %v291 = vadd.f32 %v275, %v85
  %v292 = vadd.f32 %v276, %v85
  %v293 = vadd.f32 %v277, %v85
  %v294 = vadd.f32 %v278, %v85
  %v295 = vadd.f32 %v279, %v85
  %v296 = vadd.f32 %v280, %v85
  %v297 = vadd.f32 %v281, %v85
  %v298 = vadd.f32 %v282, %v85
  %v299 = vadd.f32 %v283, %v85
  %v300 = vadd.f32 %v284, %v85
  %v301 = vmax.f32 %v285, 0.0
  %v302 = vmax.f32 %v286, 0.0
  %v303 = vmax.f32 %v287, 0.0
  %v304 = vmax.f32 %v288, 0.0
  %v305 = vmax.f32 %v289, 0.0
  %v306 = vmax.f32 %v290, 0.0
  %v307 = vmax.f32 %v291, 0.0
  %v308 = vmax.f32 %v292, 0.0
  %v309 = vmax.f32 %v293, 0.0
  %v310 = vmax.f32 %v294, 0.0
  %v311 = vmax.f32 %v295, 0.0
  %v312 = vmax.f32 %v296, 0.0
  %v313 = vmax.f32 %v297, 0.0
  %v314 = vmax.f32 %v298, 0.0
  %v315 = vmax.f32 %v299, 0.0
  %v316 = vmax.f32 %v300, 0.0
  %v317 = vadd.f32 %v237, %v301
  %v318 = vadd.f32 %v238, %v302
  %v319 = vadd.f32 %v239, %v303
  %v320 = vadd.f32 %v240, %v304
  %v321 = vadd.f32 %v241, %v305
  %v322 = vadd.f32 %v242, %v306
  %v323 = vadd.f32 %v243, %v307
  %v324 = vadd.f32 %v244, %v308
  %v325 = vadd.f32 %v245, %v309
  %v326 = vadd.f32 %v246, %v310
  %v327 = vadd.f32 %v247, %v311
  %v328 = vadd.f32 %v248, %v312
  %v329 = vadd.f32 %v249, %v313
  %v330 = vadd.f32 %v250, %v314
  %v331 = vadd.f32 %v251, %v315
  %v332 = vadd.f32 %v252, %v316
  %v333 = vmul.f32 %v253, %v120
  %v334 = vmul.f32 %v254, %v120
  %v335 = vmul.f32 %v255, %v120
  %v336 = vmul.f32 %v256, %v120
  %v337 = vmul.f32 %v257, %v120
  %v338 = vmul.f32 %v258, %v120
  %v339 = vmul.f32 %v259, %v120
  %v340 = vmul.f32 %v260, %v120
  %v341 = vmul.f32 %v261, %v120
  %v342 = vmul.f32 %v262, %v120
  %v343 = vmul.f32 %v263, %v120
  %v344 = vmul.f32 %v264, %v120
  %v345 = vmul.f32 %v265, %v120
  %v346 = vmul.f32 %v266, %v120
  %v347 = vmul.f32 %v267, %v120
  %v348 = vmul.f32 %v268, %v120
  %v349 = vadd.f32 %v333, %v139
  %v350 = vadd.f32 %v334, %v139
  %v351 = vadd.f32 %v335, %v139
  %v352 = vadd.f32 %v336, %v139
  %v353 = vadd.f32 %v337, %v139
  %v354 = vadd.f32 %v338, %v139
  %v355 = vadd.f32 %v339, %v139
  %v356 = vadd.f32 %v340, %v139
  %v357 = vadd.f32 %v341, %v139
  %v358 = vadd.f32 %v342, %v139
  %v359 = vadd.f32 %v343, %v139
  %v360 = vadd.f32 %v344, %v139
  %v361 = vadd.f32 %v345, %v139
  %v362 = vadd.f32 %v346, %v139
  %v363 = vadd.f32 %v347, %v139
  %v364 = vadd.f32 %v348, %v139
  %v365 = vmax.f32 %v349, 0.0
  %v366 = vmax.f32 %v350, 0.0
  %v367 = vmax.f32 %v351, 0.0
  %v368 = vmax.f32 %v352, 0.0
  %v369 = vmax.f32 %v353, 0.0
  %v370 = vmax.f32 %v354, 0.0
  %v371 = vmax.f32 %v355, 0.0
  %v372 = vmax.f32 %v356, 0.0
  %v373 = vmax.f32 %v357, 0.0
  %v374 = vmax.f32 %v358, 0.0
  %v375 = vmax.f32 %v359, 0.0
  %v376 = vmax.f32 %v360, 0.0
  %v377 = vmax.f32 %v361, 0.0
  %v378 = vmax.f32 %v362, 0.0
  %v379 = vmax.f32 %v363, 0.0
  %v380 = vmax.f32 %v364, 0.0
  %397 = vrot.lane.b32.xlu0 %v365, 112
  %v398 = vpop.permute.xlu0 %397
  %399 = vrot.lane.b32.xlu0 %v366, 112
  %v400 = vpop.permute.xlu0 %399
  %401 = vrot.lane.b32.xlu0 %v367, 112
  %v402 = vpop.permute.xlu0 %401
  %403 = vrot.lane.b32.xlu0 %v368, 112
  %v404 = vpop.permute.xlu0 %403
  %405 = vrot.lane.b32.xlu0 %v369, 112
  %v406 = vpop.permute.xlu0 %405
  %407 = vrot.lane.b32.xlu0 %v370, 112
  %v408 = vpop.permute.xlu0 %407
  %409 = vrot.lane.b32.xlu0 %v371, 112
  %v410 = vpop.permute.xlu0 %409
  %411 = vrot.lane.b32.xlu0 %v372, 112
  %v412 = vpop.permute.xlu0 %411
  %413 = vrot.lane.b32.xlu0 %v373, 112
  %v414 = vpop.permute.xlu0 %413
  %415 = vrot.lane.b32.xlu0 %v374, 112
  %v416 = vpop.permute.xlu0 %415
  %417 = vrot.lane.b32.xlu0 %v375, 112
  %v418 = vpop.permute.xlu0 %417
  %419 = vrot.lane.b32.xlu0 %v376, 112
  %v420 = vpop.permute.xlu0 %419
  %421 = vrot.lane.b32.xlu0 %v377, 112
  %v422 = vpop.permute.xlu0 %421
  %423 = vrot.lane.b32.xlu0 %v378, 112
  %v424 = vpop.permute.xlu0 %423
  %425 = vrot.lane.b32.xlu0 %v379, 112
  %v426 = vpop.permute.xlu0 %425
  %427 = vrot.lane.b32.xlu0 %v380, 112
  %v428 = vpop.permute.xlu0 %427
  %v445 = vadd.f32 %v317, %v398
  %v446 = vadd.f32 %v318, %v400
  %v447 = vadd.f32 %v319, %v402
  %v448 = vadd.f32 %v320, %v404
  %v449 = vadd.f32 %v321, %v406
  %v450 = vadd.f32 %v322, %v408
  %v451 = vadd.f32 %v323, %v410
  %v452 = vadd.f32 %v324, %v412
  %v453 = vadd.f32 %v325, %v414
  %v454 = vadd.f32 %v326, %v416
  %v455 = vadd.f32 %v327, %v418
  %v456 = vadd.f32 %v328, %v420
  %v457 = vadd.f32 %v329, %v422
  %v458 = vadd.f32 %v330, %v424
  %v459 = vadd.f32 %v331, %v426
  %v460 = vadd.f32 %v332, %v428
  %v461 = vmul.f32 %v445, 0.25
  %v462 = vmul.f32 %v446, 0.25
  %v463 = vmul.f32 %v447, 0.25
  %v464 = vmul.f32 %v448, 0.25
  %v465 = vmul.f32 %v449, 0.25
  %v466 = vmul.f32 %v450, 0.25
  %v467 = vmul.f32 %v451, 0.25
  %v468 = vmul.f32 %v452, 0.25
  %v469 = vmul.f32 %v453, 0.25
  %v470 = vmul.f32 %v454, 0.25
  %v471 = vmul.f32 %v455, 0.25
  %v472 = vmul.f32 %v456, 0.25
  %v473 = vmul.f32 %v457, 0.25
  %v474 = vmul.f32 %v458, 0.25
  %v475 = vmul.f32 %v459, 0.25
  %v476 = vmul.f32 %v460, 0.25
  %v477 = vpack.c.bf16 %v461, %v461
  %v478 = vpack.c.bf16 %v462, %v462
  %v479 = vpack.c.bf16 %v463, %v463
  %v480 = vpack.c.bf16 %v464, %v464
  %v481 = vpack.c.bf16 %v465, %v465
  %v482 = vpack.c.bf16 %v466, %v466
  %v483 = vpack.c.bf16 %v467, %v467
  %v484 = vpack.c.bf16 %v468, %v468
  %v485 = vpack.c.bf16 %v469, %v469
  %v486 = vpack.c.bf16 %v470, %v470
  %v487 = vpack.c.bf16 %v471, %v471
  %v488 = vpack.c.bf16 %v472, %v472
  %v489 = vpack.c.bf16 %v473, %v473
  %v490 = vpack.c.bf16 %v474, %v474
  %v491 = vpack.c.bf16 %v475, %v475
  %v492 = vpack.c.bf16 %v476, %v476
  %vm493 = vcmask 125952
  %494 = vst.msk [vmem:[%s3] sm:$0xf] %vm493, %v477
  %495 = vst.msk [vmem:[%s3 + $0x4] sm:$0xf] %vm493, %v478
  %496 = vst.msk [vmem:[%s3 + $0x8] sm:$0xf] %vm493, %v479
  %497 = vst.msk [vmem:[%s3 + $0xc] sm:$0xf] %vm493, %v480
  %498 = vst.msk [vmem:[%s3 + $0x10] sm:$0xf] %vm493, %v481
  %499 = vst.msk [vmem:[%s3 + $0x14] sm:$0xf] %vm493, %v482
  %500 = vst.msk [vmem:[%s3 + $0x18] sm:$0xf] %vm493, %v483
  %501 = vst.msk [vmem:[%s3 + $0x1c] sm:$0xf] %vm493, %v484
  %502 = vst.msk [vmem:[%s3 + $0x20] sm:$0xf] %vm493, %v485
  %503 = vst.msk [vmem:[%s3 + $0x24] sm:$0xf] %vm493, %v486
  %504 = vst.msk [vmem:[%s3 + $0x28] sm:$0xf] %vm493, %v487
  %505 = vst.msk [vmem:[%s3 + $0x2c] sm:$0xf] %vm493, %v488
  %506 = vst.msk [vmem:[%s3 + $0x30] sm:$0xf] %vm493, %v489
  %507 = vst.msk [vmem:[%s3 + $0x34] sm:$0xf] %vm493, %v490
  %508 = vst.msk [vmem:[%s3 + $0x38] sm:$0xf] %vm493, %v491
  %509 = vst.msk [vmem:[%s3 + $0x3c] sm:$0xf] %vm493, %v492
  // Predicated region
  $region14: #{forward.58} parent=0 // pred_check
    _
  $region15: #{forward.58} parent=0 // pred_check_branch
    %511 = sbr.rel (0) target = $region17
  $region16: #{forward.58} parent=0 // pred_region
    _
  $region17: #{forward.58} parent=0 // pred_fallthru
    _
  // Predicated region
  $region18: #{forward.58} parent=0 // pred_check
    _
  $region19: #{forward.58} parent=0 // pred_check_branch
    %513 = sbr.rel (0) target = $region21
  $region20: #{forward.58} parent=0 // pred_region
    _
  $region21: #{forward.58} parent=0 // pred_fallthru
    _

// kernel: forward.59
$region0: #{forward.59}
  #allocation0 [shape = 'u32[]', space=smem, size = 0x4, offset = 0x4, fixed_abs, tag = 'smem constant byte address 0x4 - core index']
  #allocation1 [shape = 'u32[72,128]{1,0:T(1,128)}', space=vmem, size = 0x9000, scoped, tag = 'internal scratch']
  #allocation2 [shape = 'f32[128,128]{1,0:T(8,128)}', space=vmem, size = 0x10000, scoped, tag = 'scratch operand']
  %s0 = inlined_call_operand.vmem [shape: bf16[128,128], index: 0, kind: input, shape index: {}]
  %s1 = inlined_call_operand.vmem [shape: bf16[128,128], index: 1, kind: input, shape index: {}]
  %s2 = inlined_call_operand.vmem [shape: f32[1,128], index: 2, kind: input, shape index: {}]
  %s3 = inlined_call_operand.vmem [shape: f32[1,128], index: 3, kind: input, shape index: {}]
  %s4 = inlined_call_operand.vmem [shape: f32[1,128], index: 4, kind: input, shape index: {}]
  %s5 = inlined_call_operand.vmem [shape: f32[1,128], index: 5, kind: input, shape index: {}]
  %s6 = inlined_call_operand.vmem [shape: bf16[128,128], index: 6, kind: output, shape index: {}]
  %s7 = sld [smem:[#allocation0]]
  $region42: #{forward.59} parent=0
    _
  %s9 = ssub.s32 1, %s7
  %s10 = scalar_select 0, %s9, %s7
  // Predicated region
  $region2: #{forward.59} parent=0 // pred_check
    _
  $region3: #{forward.59} parent=0 // pred_check_branch
    %12 = sbr.rel (0) target = $region5
  $region4: #{forward.59} parent=0 // pred_region
    _
  $region5: #{forward.59} parent=0 // pred_fallthru
    _
  // Predicated region
  $region6: #{forward.59} parent=0 // pred_check
    _
  $region7: #{forward.59} parent=0 // pred_check_branch
    %14 = sbr.rel (0) target = $region9
  $region8: #{forward.59} parent=0 // pred_region
    _
  $region9: #{forward.59} parent=0 // pred_fallthru
    _
  // Predicated region
  $region10: #{forward.59} parent=0 // pred_check
    _
  $region11: #{forward.59} parent=0 // pred_check_branch
    %16 = sbr.rel (0) target = $region13
  $region12: #{forward.59} parent=0 // pred_region
    _
  $region13: #{forward.59} parent=0 // pred_fallthru
    _
  // Predicated region
  $region14: #{forward.59} parent=0 // pred_check
    _
  $region15: #{forward.59} parent=0 // pred_check_branch
    %18 = sbr.rel (0) target = $region17
  $region16: #{forward.59} parent=0 // pred_region
    _
  $region17: #{forward.59} parent=0 // pred_fallthru
    _
  // Predicated region
  $region18: #{forward.59} parent=0 // pred_check
    _
  $region19: #{forward.59} parent=0 // pred_check_branch
    %20 = sbr.rel (0) target = $region21
  $region20: #{forward.59} parent=0 // pred_region
    _
  $region21: #{forward.59} parent=0 // pred_fallthru
    _
  // Predicated region
  $region22: #{forward.59} parent=0 // pred_check
    _
  $region23: #{forward.59} parent=0 // pred_check_branch
    %22 = sbr.rel (0) target = $region25
  $region24: #{forward.59} parent=0 // pred_region
    _
  $region25: #{forward.59} parent=0 // pred_fallthru
    _
  %p23 = scmp.eq.s32.totalorder 0, 0
  // Predicated region
  $region26: #{forward.59} parent=0 // pred_check
    %p24 = pneg %p23
  $region27: #{forward.59} parent=0 // pred_check_branch
    %26 = sbr.rel (%p24) target = $region29
  $region28: #{forward.59} parent=0 // pred_region
    %27 = vst [vmem:[#allocation2] sm:$0xff] 0.0
    %28 = vst [vmem:[#allocation2 + $0x8] sm:$0xff] 0.0
    %29 = vst [vmem:[#allocation2 + $0x10] sm:$0xff] 0.0
    %30 = vst [vmem:[#allocation2 + $0x18] sm:$0xff] 0.0
    %31 = vst [vmem:[#allocation2 + $0x20] sm:$0xff] 0.0
    %32 = vst [vmem:[#allocation2 + $0x28] sm:$0xff] 0.0
    %33 = vst [vmem:[#allocation2 + $0x30] sm:$0xff] 0.0
    %34 = vst [vmem:[#allocation2 + $0x38] sm:$0xff] 0.0
    %35 = vst [vmem:[#allocation2 + $0x40] sm:$0xff] 0.0
    %36 = vst [vmem:[#allocation2 + $0x48] sm:$0xff] 0.0
    %37 = vst [vmem:[#allocation2 + $0x50] sm:$0xff] 0.0
    %38 = vst [vmem:[#allocation2 + $0x58] sm:$0xff] 0.0
    %39 = vst [vmem:[#allocation2 + $0x60] sm:$0xff] 0.0
    %40 = vst [vmem:[#allocation2 + $0x68] sm:$0xff] 0.0
    %41 = vst [vmem:[#allocation2 + $0x70] sm:$0xff] 0.0
    %42 = vst [vmem:[#allocation2 + $0x78] sm:$0xff] 0.0
  $region29: #{forward.59} parent=0 // pred_fallthru
    _
  %v43 = vld [vmem:[%s0] sm:$0xf]
  %v44 = vld [vmem:[%s0 + $0x4] sm:$0xf]
  %v45 = vld [vmem:[%s0 + $0x8] sm:$0xf]
  %v46 = vld [vmem:[%s0 + $0xc] sm:$0xf]
  %v47 = vld [vmem:[%s0 + $0x10] sm:$0xf]
  %v48 = vld [vmem:[%s0 + $0x14] sm:$0xf]
  %v49 = vld [vmem:[%s0 + $0x18] sm:$0xf]
  %v50 = vld [vmem:[%s0 + $0x1c] sm:$0xf]
  %v51 = vld [vmem:[%s0 + $0x20] sm:$0xf]
  %v52 = vld [vmem:[%s0 + $0x24] sm:$0xf]
  %v53 = vld [vmem:[%s0 + $0x28] sm:$0xf]
  %v54 = vld [vmem:[%s0 + $0x2c] sm:$0xf]
  %v55 = vld [vmem:[%s0 + $0x30] sm:$0xf]
  %v56 = vld [vmem:[%s0 + $0x34] sm:$0xf]
  %v57 = vld [vmem:[%s0 + $0x38] sm:$0xf]
  %v58 = vld [vmem:[%s0 + $0x3c] sm:$0xf]
  %v59 = vld [vmem:[#allocation2] sm:$0xff]
  %v60 = vld [vmem:[#allocation2 + $0x8] sm:$0xff]
  %v61 = vld [vmem:[#allocation2 + $0x10] sm:$0xff]
  %v62 = vld [vmem:[#allocation2 + $0x18] sm:$0xff]
  %v63 = vld [vmem:[#allocation2 + $0x20] sm:$0xff]
  %v64 = vld [vmem:[#allocation2 + $0x28] sm:$0xff]
  %v65 = vld [vmem:[#allocation2 + $0x30] sm:$0xff]
  %v66 = vld [vmem:[#allocation2 + $0x38] sm:$0xff]
  %v67 = vld [vmem:[#allocation2 + $0x40] sm:$0xff]
  %v68 = vld [vmem:[#allocation2 + $0x48] sm:$0xff]
  %v69 = vld [vmem:[#allocation2 + $0x50] sm:$0xff]
  %v70 = vld [vmem:[#allocation2 + $0x58] sm:$0xff]
  %v71 = vld [vmem:[#allocation2 + $0x60] sm:$0xff]
  %v72 = vld [vmem:[#allocation2 + $0x68] sm:$0xff]
  %v73 = vld [vmem:[#allocation2 + $0x70] sm:$0xff]
  %v74 = vld [vmem:[#allocation2 + $0x78] sm:$0xff]
  %v75 = vld [vmem:[%s1] sm:$0xf]
  %v76 = vld [vmem:[%s1 + $0x4] sm:$0xf]
  %v77 = vld [vmem:[%s1 + $0x8] sm:$0xf]
  %v78 = vld [vmem:[%s1 + $0xc] sm:$0xf]
  %v79 = vld [vmem:[%s1 + $0x10] sm:$0xf]
  %v80 = vld [vmem:[%s1 + $0x14] sm:$0xf]
  %v81 = vld [vmem:[%s1 + $0x18] sm:$0xf]
  %v82 = vld [vmem:[%s1 + $0x1c] sm:$0xf]
  %v83 = vld [vmem:[%s1 + $0x20] sm:$0xf]
  %v84 = vld [vmem:[%s1 + $0x24] sm:$0xf]
  %v85 = vld [vmem:[%s1 + $0x28] sm:$0xf]
  %v86 = vld [vmem:[%s1 + $0x2c] sm:$0xf]
  %v87 = vld [vmem:[%s1 + $0x30] sm:$0xf]
  %v88 = vld [vmem:[%s1 + $0x34] sm:$0xf]
  %v89 = vld [vmem:[%s1 + $0x38] sm:$0xf]
  %v90 = vld [vmem:[%s1 + $0x3c] sm:$0xf]
  %v107 = vunpack.c.l.b16 %v43
  %v108 = vunpack.c.l.b16 %v44
  %v109 = vunpack.c.l.b16 %v45
  %v110 = vunpack.c.l.b16 %v46
  %v111 = vunpack.c.l.b16 %v47
  %v112 = vunpack.c.l.b16 %v48
  %v113 = vunpack.c.l.b16 %v49
  %v114 = vunpack.c.l.b16 %v50
  %v115 = vunpack.c.l.b16 %v51
  %v116 = vunpack.c.l.b16 %v52
  %v117 = vunpack.c.l.b16 %v53
  %v118 = vunpack.c.l.b16 %v54
  %v119 = vunpack.c.l.b16 %v55
  %v120 = vunpack.c.l.b16 %v56
  %v121 = vunpack.c.l.b16 %v57
  %v122 = vunpack.c.l.b16 %v58
  %v123 = vpack.c.b16 %v108, %v107
  %v124 = vpack.c.b16 %v110, %v109
  %v125 = vpack.c.b16 %v112, %v111
  %v126 = vpack.c.b16 %v114, %v113
  %v127 = vpack.c.b16 %v116, %v115
  %v128 = vpack.c.b16 %v118, %v117
  %v129 = vpack.c.b16 %v120, %v119
  %v130 = vpack.c.b16 %v122, %v121
  %v155 = vunpack.c.l.b16 %v75
  %v156 = vunpack.c.l.b16 %v76
  %v157 = vunpack.c.l.b16 %v77
  %v158 = vunpack.c.l.b16 %v78
  %v159 = vunpack.c.l.b16 %v79
  %v160 = vunpack.c.l.b16 %v80
  %v161 = vunpack.c.l.b16 %v81
  %v162 = vunpack.c.l.b16 %v82
  %v163 = vunpack.c.l.b16 %v83
  %v164 = vunpack.c.l.b16 %v84
  %v165 = vunpack.c.l.b16 %v85
  %v166 = vunpack.c.l.b16 %v86
  %v167 = vunpack.c.l.b16 %v87
  %v168 = vunpack.c.l.b16 %v88
  %v169 = vunpack.c.l.b16 %v89
  %v170 = vunpack.c.l.b16 %v90
  %v171 = vpack.c.b16 %v156, %v155
  %v172 = vpack.c.b16 %v158, %v157
  %v173 = vpack.c.b16 %v160, %v159
  %v174 = vpack.c.b16 %v162, %v161
  %v175 = vpack.c.b16 %v164, %v163
  %v176 = vpack.c.b16 %v166, %v165
  %v177 = vpack.c.b16 %v168, %v167
  %v178 = vpack.c.b16 %v170, %v169
  %187 = vmatpush.bf16.msra.mxu0 %v178
  %188 = vmatpush.bf16.msra.mxu0 %v177
  %189 = vmatpush.bf16.msra.mxu0 %v176
  %190 = vmatpush.bf16.msra.mxu0 %v175
  %191 = vmatpush.bf16.msra.mxu0 %v174
  %192 = vmatpush.bf16.msra.mxu0 %v173
  %193 = vmatpush.bf16.msra.mxu0 %v172
  %194 = vmatpush.bf16.msra.mxu0 %v171
  %195 = vmatmul.bf16.gmra.mxu0 %v123
  %v196 = vpop.f32.mrf.mxu0
  %v197 = vadd.f32 0.0, %v196
  %v198 = vpop.f32.mrf.mxu0
  %v199 = vadd.f32 0.0, %v198
  %200 = vmatmul.bf16.gmra.mxu0 %v124
  %v201 = vpop.f32.mrf.mxu0
  %v202 = vadd.f32 0.0, %v201
  %v203 = vpop.f32.mrf.mxu0
  %v204 = vadd.f32 0.0, %v203
  %205 = vmatmul.bf16.gmra.mxu0 %v125
  %v206 = vpop.f32.mrf.mxu0
  %v207 = vadd.f32 0.0, %v206
  %v208 = vpop.f32.mrf.mxu0
  %v209 = vadd.f32 0.0, %v208
  %210 = vmatmul.bf16.gmra.mxu0 %v126
  %v211 = vpop.f32.mrf.mxu0
  %v212 = vadd.f32 0.0, %v211
  %v213 = vpop.f32.mrf.mxu0
  %v214 = vadd.f32 0.0, %v213
  %215 = vmatmul.bf16.gmra.mxu0 %v127
  %v216 = vpop.f32.mrf.mxu0
  %v217 = vadd.f32 0.0, %v216
  %v218 = vpop.f32.mrf.mxu0
  %v219 = vadd.f32 0.0, %v218
  %220 = vmatmul.bf16.gmra.mxu0 %v128
  %v221 = vpop.f32.mrf.mxu0
  %v222 = vadd.f32 0.0, %v221
  %v223 = vpop.f32.mrf.mxu0
  %v224 = vadd.f32 0.0, %v223
  %225 = vmatmul.bf16.gmra.mxu0 %v129
  %v226 = vpop.f32.mrf.mxu0
  %v227 = vadd.f32 0.0, %v226
  %v228 = vpop.f32.mrf.mxu0
  %v229 = vadd.f32 0.0, %v228
  %230 = vmatmul.bf16.gmra.mxu0 %v130
  %v231 = vpop.f32.mrf.mxu0
  %v232 = vadd.f32 0.0, %v231
  %v233 = vpop.f32.mrf.mxu0
  %v234 = vadd.f32 0.0, %v233
  %235 = vdwg.mxu0
  %v236 = vadd.f32 %v59, %v197
  %v237 = vadd.f32 %v60, %v199
  %v238 = vadd.f32 %v61, %v202
  %v239 = vadd.f32 %v62, %v204
  %v240 = vadd.f32 %v63, %v207
  %v241 = vadd.f32 %v64, %v209
  %v242 = vadd.f32 %v65, %v212
  %v243 = vadd.f32 %v66, %v214
  %v244 = vadd.f32 %v67, %v217
  %v245 = vadd.f32 %v68, %v219
  %v246 = vadd.f32 %v69, %v222
  %v247 = vadd.f32 %v70, %v224
  %v248 = vadd.f32 %v71, %v227
  %v249 = vadd.f32 %v72, %v229
  %v250 = vadd.f32 %v73, %v232
  %v251 = vadd.f32 %v74, %v234
  %252 = vst [vmem:[#allocation2] sm:$0xff] %v236
  %253 = vst [vmem:[#allocation2 + $0x8] sm:$0xff] %v237
  %254 = vst [vmem:[#allocation2 + $0x10] sm:$0xff] %v238
  %255 = vst [vmem:[#allocation2 + $0x18] sm:$0xff] %v239
  %256 = vst [vmem:[#allocation2 + $0x20] sm:$0xff] %v240
  %257 = vst [vmem:[#allocation2 + $0x28] sm:$0xff] %v241
  %258 = vst [vmem:[#allocation2 + $0x30] sm:$0xff] %v242
  %259 = vst [vmem:[#allocation2 + $0x38] sm:$0xff] %v243
  %260 = vst [vmem:[#allocation2 + $0x40] sm:$0xff] %v244
  %261 = vst [vmem:[#allocation2 + $0x48] sm:$0xff] %v245
  %262 = vst [vmem:[#allocation2 + $0x50] sm:$0xff] %v246
  %263 = vst [vmem:[#allocation2 + $0x58] sm:$0xff] %v247
  %264 = vst [vmem:[#allocation2 + $0x60] sm:$0xff] %v248
  %265 = vst [vmem:[#allocation2 + $0x68] sm:$0xff] %v249
  %266 = vst [vmem:[#allocation2 + $0x70] sm:$0xff] %v250
  %267 = vst [vmem:[#allocation2 + $0x78] sm:$0xff] %v251
  // Predicated region
  $region30: #{forward.59} parent=0 // pred_check
    %p268 = pneg %p23
  $region31: #{forward.59} parent=0 // pred_check_branch
    %270 = sbr.rel (%p268) target = $region33
  $region32: #{forward.59} parent=0 // pred_region
    %v271 = vld [vmem:[#allocation2] sm:$0xff]
    %v272 = vld [vmem:[#allocation2 + $0x8] sm:$0xff]
    %v273 = vld [vmem:[#allocation2 + $0x10] sm:$0xff]
    %v274 = vld [vmem:[#allocation2 + $0x18] sm:$0xff]
    %v275 = vld [vmem:[#allocation2 + $0x20] sm:$0xff]
    %v276 = vld [vmem:[#allocation2 + $0x28] sm:$0xff]
    %v277 = vld [vmem:[#allocation2 + $0x30] sm:$0xff]
    %v278 = vld [vmem:[#allocation2 + $0x38] sm:$0xff]
    %v279 = vld [vmem:[#allocation2 + $0x40] sm:$0xff]
    %v280 = vld [vmem:[#allocation2 + $0x48] sm:$0xff]
    %v281 = vld [vmem:[#allocation2 + $0x50] sm:$0xff]
    %v282 = vld [vmem:[#allocation2 + $0x58] sm:$0xff]
    %v283 = vld [vmem:[#allocation2 + $0x60] sm:$0xff]
    %v284 = vld [vmem:[#allocation2 + $0x68] sm:$0xff]
    %v285 = vld [vmem:[#allocation2 + $0x70] sm:$0xff]
    %v286 = vld [vmem:[#allocation2 + $0x78] sm:$0xff]
    %v287 = vpack.c.bf16 %v271, %v271
    %v288 = vpack.c.bf16 %v272, %v272
    %v289 = vpack.c.bf16 %v273, %v273
    %v290 = vpack.c.bf16 %v274, %v274
    %v291 = vpack.c.bf16 %v275, %v275
    %v292 = vpack.c.bf16 %v276, %v276
    %v293 = vpack.c.bf16 %v277, %v277
    %v294 = vpack.c.bf16 %v278, %v278
    %v295 = vpack.c.bf16 %v279, %v279
    %v296 = vpack.c.bf16 %v280, %v280
    %v297 = vpack.c.bf16 %v281, %v281
    %v298 = vpack.c.bf16 %v282, %v282
    %v299 = vpack.c.bf16 %v283, %v283
    %v300 = vpack.c.bf16 %v284, %v284
    %v301 = vpack.c.bf16 %v285, %v285
    %v302 = vpack.c.bf16 %v286, %v286
    %303 = vst [vmem:[%s6] sm:$0xf] %v287
    %304 = vst [vmem:[%s6 + $0x4] sm:$0xf] %v288
    %305 = vst [vmem:[%s6 + $0x8] sm:$0xf] %v289
    %306 = vst [vmem:[%s6 + $0xc] sm:$0xf] %v290
    %307 = vst [vmem:[%s6 + $0x10] sm:$0xf] %v291
    %308 = vst [vmem:[%s6 + $0x14] sm:$0xf] %v292
    %309 = vst [vmem:[%s6 + $0x18] sm:$0xf] %v293
    %310 = vst [vmem:[%s6 + $0x1c] sm:$0xf] %v294
    %311 = vst [vmem:[%s6 + $0x20] sm:$0xf] %v295
    %312 = vst [vmem:[%s6 + $0x24] sm:$0xf] %v296
    %313 = vst [vmem:[%s6 + $0x28] sm:$0xf] %v297
    %314 = vst [vmem:[%s6 + $0x2c] sm:$0xf] %v298
    %315 = vst [vmem:[%s6 + $0x30] sm:$0xf] %v299
    %316 = vst [vmem:[%s6 + $0x34] sm:$0xf] %v300
    %317 = vst [vmem:[%s6 + $0x38] sm:$0xf] %v301
    %318 = vst [vmem:[%s6 + $0x3c] sm:$0xf] %v302
  $region33: #{forward.59} parent=0 // pred_fallthru
    _
  // Predicated region
  $region34: #{forward.59} parent=0 // pred_check
    _
  $region35: #{forward.59} parent=0 // pred_check_branch
    %320 = sbr.rel (0) target = $region37
  $region36: #{forward.59} parent=0 // pred_region
    _
  $region37: #{forward.59} parent=0 // pred_fallthru
    _
  // Predicated region
  $region38: #{forward.59} parent=0 // pred_check
    _
  $region39: #{forward.59} parent=0 // pred_check_branch
    %322 = sbr.rel (0) target = $region41
  $region40: #{forward.59} parent=0 // pred_region
    _
  $region41: #{forward.59} parent=0 // pred_fallthru
    _

// kernel: forward.66
$region0: #{forward.66}
  #allocation0 [shape = 'u32[]', space=smem, size = 0x4, offset = 0x4, fixed_abs, tag = 'smem constant byte address 0x4 - core index']
  #allocation1 [shape = 'u32[72,128]{1,0:T(1,128)}', space=vmem, size = 0x9000, scoped, tag = 'internal scratch']
  #allocation2 [shape = 'f32[128,128]{1,0:T(8,128)}', space=vmem, size = 0x10000, scoped, tag = 'scratch operand']
  %s0 = inlined_call_operand.vmem [shape: bf16[128,128], index: 0, kind: input, shape index: {}]
  %s1 = inlined_call_operand.vmem [shape: bf16[128,128], index: 1, kind: input, shape index: {}]
  %s2 = inlined_call_operand.vmem [shape: f32[1,128], index: 2, kind: input, shape index: {}]
  %s3 = inlined_call_operand.vmem [shape: f32[1,128], index: 3, kind: input, shape index: {}]
  %s4 = inlined_call_operand.vmem [shape: f32[1,128], index: 4, kind: input, shape index: {}]
  %s5 = inlined_call_operand.vmem [shape: f32[1,128], index: 5, kind: input, shape index: {}]
  %s6 = inlined_call_operand.vmem [shape: bf16[128,128], index: 6, kind: output, shape index: {}]
  %s7 = sld [smem:[#allocation0]]
  $region42: #{forward.66} parent=0
    _
  %s9 = ssub.s32 1, %s7
  %s10 = scalar_select 0, %s9, %s7
  // Predicated region
  $region2: #{forward.66} parent=0 // pred_check
    _
  $region3: #{forward.66} parent=0 // pred_check_branch
    %12 = sbr.rel (0) target = $region5
  $region4: #{forward.66} parent=0 // pred_region
    _
  $region5: #{forward.66} parent=0 // pred_fallthru
    _
  // Predicated region
  $region6: #{forward.66} parent=0 // pred_check
    _
  $region7: #{forward.66} parent=0 // pred_check_branch
    %14 = sbr.rel (0) target = $region9
  $region8: #{forward.66} parent=0 // pred_region
    _
  $region9: #{forward.66} parent=0 // pred_fallthru
    _
  // Predicated region
  $region10: #{forward.66} parent=0 // pred_check
    _
  $region11: #{forward.66} parent=0 // pred_check_branch
    %16 = sbr.rel (0) target = $region13
  $region12: #{forward.66} parent=0 // pred_region
    _
  $region13: #{forward.66} parent=0 // pred_fallthru
    _
  // Predicated region
  $region14: #{forward.66} parent=0 // pred_check
    _
  $region15: #{forward.66} parent=0 // pred_check_branch
    %18 = sbr.rel (0) target = $region17
  $region16: #{forward.66} parent=0 // pred_region
    _
  $region17: #{forward.66} parent=0 // pred_fallthru
    _
  // Predicated region
  $region18: #{forward.66} parent=0 // pred_check
    _
  $region19: #{forward.66} parent=0 // pred_check_branch
    %20 = sbr.rel (0) target = $region21
  $region20: #{forward.66} parent=0 // pred_region
    _
  $region21: #{forward.66} parent=0 // pred_fallthru
    _
  // Predicated region
  $region22: #{forward.66} parent=0 // pred_check
    _
  $region23: #{forward.66} parent=0 // pred_check_branch
    %22 = sbr.rel (0) target = $region25
  $region24: #{forward.66} parent=0 // pred_region
    _
  $region25: #{forward.66} parent=0 // pred_fallthru
    _
  %p23 = scmp.eq.s32.totalorder 0, 0
  // Predicated region
  $region26: #{forward.66} parent=0 // pred_check
    %p24 = pneg %p23
  $region27: #{forward.66} parent=0 // pred_check_branch
    %26 = sbr.rel (%p24) target = $region29
  $region28: #{forward.66} parent=0 // pred_region
    %27 = vst [vmem:[#allocation2] sm:$0xff] 0.0
    %28 = vst [vmem:[#allocation2 + $0x8] sm:$0xff] 0.0
    %29 = vst [vmem:[#allocation2 + $0x10] sm:$0xff] 0.0
    %30 = vst [vmem:[#allocation2 + $0x18] sm:$0xff] 0.0
    %31 = vst [vmem:[#allocation2 + $0x20] sm:$0xff] 0.0
    %32 = vst [vmem:[#allocation2 + $0x28] sm:$0xff] 0.0
    %33 = vst [vmem:[#allocation2 + $0x30] sm:$0xff] 0.0
    %34 = vst [vmem:[#allocation2 + $0x38] sm:$0xff] 0.0
    %35 = vst [vmem:[#allocation2 + $0x40] sm:$0xff] 0.0
    %36 = vst [vmem:[#allocation2 + $0x48] sm:$0xff] 0.0
    %37 = vst [vmem:[#allocation2 + $0x50] sm:$0xff] 0.0
    %38 = vst [vmem:[#allocation2 + $0x58] sm:$0xff] 0.0
    %39 = vst [vmem:[#allocation2 + $0x60] sm:$0xff] 0.0
    %40 = vst [vmem:[#allocation2 + $0x68] sm:$0xff] 0.0
    %41 = vst [vmem:[#allocation2 + $0x70] sm:$0xff] 0.0
    %42 = vst [vmem:[#allocation2 + $0x78] sm:$0xff] 0.0
  $region29: #{forward.66} parent=0 // pred_fallthru
    _
  %v43 = vld [vmem:[%s0] sm:$0xf]
  %v44 = vld [vmem:[%s0 + $0x4] sm:$0xf]
  %v45 = vld [vmem:[%s0 + $0x8] sm:$0xf]
  %v46 = vld [vmem:[%s0 + $0xc] sm:$0xf]
  %v47 = vld [vmem:[%s0 + $0x10] sm:$0xf]
  %v48 = vld [vmem:[%s0 + $0x14] sm:$0xf]
  %v49 = vld [vmem:[%s0 + $0x18] sm:$0xf]
  %v50 = vld [vmem:[%s0 + $0x1c] sm:$0xf]
  %v51 = vld [vmem:[%s0 + $0x20] sm:$0xf]
  %v52 = vld [vmem:[%s0 + $0x24] sm:$0xf]
  %v53 = vld [vmem:[%s0 + $0x28] sm:$0xf]
  %v54 = vld [vmem:[%s0 + $0x2c] sm:$0xf]
  %v55 = vld [vmem:[%s0 + $0x30] sm:$0xf]
  %v56 = vld [vmem:[%s0 + $0x34] sm:$0xf]
  %v57 = vld [vmem:[%s0 + $0x38] sm:$0xf]
  %v58 = vld [vmem:[%s0 + $0x3c] sm:$0xf]
  %v59 = vld [vmem:[#allocation2] sm:$0xff]
  %v60 = vld [vmem:[#allocation2 + $0x8] sm:$0xff]
  %v61 = vld [vmem:[#allocation2 + $0x10] sm:$0xff]
  %v62 = vld [vmem:[#allocation2 + $0x18] sm:$0xff]
  %v63 = vld [vmem:[#allocation2 + $0x20] sm:$0xff]
  %v64 = vld [vmem:[#allocation2 + $0x28] sm:$0xff]
  %v65 = vld [vmem:[#allocation2 + $0x30] sm:$0xff]
  %v66 = vld [vmem:[#allocation2 + $0x38] sm:$0xff]
  %v67 = vld [vmem:[#allocation2 + $0x40] sm:$0xff]
  %v68 = vld [vmem:[#allocation2 + $0x48] sm:$0xff]
  %v69 = vld [vmem:[#allocation2 + $0x50] sm:$0xff]
  %v70 = vld [vmem:[#allocation2 + $0x58] sm:$0xff]
  %v71 = vld [vmem:[#allocation2 + $0x60] sm:$0xff]
  %v72 = vld [vmem:[#allocation2 + $0x68] sm:$0xff]
  %v73 = vld [vmem:[#allocation2 + $0x70] sm:$0xff]
  %v74 = vld [vmem:[#allocation2 + $0x78] sm:$0xff]
  %v75 = vld [vmem:[%s1] sm:$0xf]
  %v76 = vld [vmem:[%s1 + $0x4] sm:$0xf]
  %v77 = vld [vmem:[%s1 + $0x8] sm:$0xf]
  %v78 = vld [vmem:[%s1 + $0xc] sm:$0xf]
  %v79 = vld [vmem:[%s1 + $0x10] sm:$0xf]
  %v80 = vld [vmem:[%s1 + $0x14] sm:$0xf]
  %v81 = vld [vmem:[%s1 + $0x18] sm:$0xf]
  %v82 = vld [vmem:[%s1 + $0x1c] sm:$0xf]
  %v83 = vld [vmem:[%s1 + $0x20] sm:$0xf]
  %v84 = vld [vmem:[%s1 + $0x24] sm:$0xf]
  %v85 = vld [vmem:[%s1 + $0x28] sm:$0xf]
  %v86 = vld [vmem:[%s1 + $0x2c] sm:$0xf]
  %v87 = vld [vmem:[%s1 + $0x30] sm:$0xf]
  %v88 = vld [vmem:[%s1 + $0x34] sm:$0xf]
  %v89 = vld [vmem:[%s1 + $0x38] sm:$0xf]
  %v90 = vld [vmem:[%s1 + $0x3c] sm:$0xf]
  %v107 = vunpack.c.l.b16 %v43
  %v108 = vunpack.c.l.b16 %v44
  %v109 = vunpack.c.l.b16 %v45
  %v110 = vunpack.c.l.b16 %v46
  %v111 = vunpack.c.l.b16 %v47
  %v112 = vunpack.c.l.b16 %v48
  %v113 = vunpack.c.l.b16 %v49
  %v114 = vunpack.c.l.b16 %v50
  %v115 = vunpack.c.l.b16 %v51
  %v116 = vunpack.c.l.b16 %v52
  %v117 = vunpack.c.l.b16 %v53
  %v118 = vunpack.c.l.b16 %v54
  %v119 = vunpack.c.l.b16 %v55
  %v120 = vunpack.c.l.b16 %v56
  %v121 = vunpack.c.l.b16 %v57
  %v122 = vunpack.c.l.b16 %v58
  %v123 = vpack.c.b16 %v108, %v107
  %v124 = vpack.c.b16 %v110, %v109
  %v125 = vpack.c.b16 %v112, %v111
  %v126 = vpack.c.b16 %v114, %v113
  %v127 = vpack.c.b16 %v116, %v115
  %v128 = vpack.c.b16 %v118, %v117
  %v129 = vpack.c.b16 %v120, %v119
  %v130 = vpack.c.b16 %v122, %v121
  %v155 = vunpack.c.l.b16 %v75
  %v156 = vunpack.c.l.b16 %v76
  %v157 = vunpack.c.l.b16 %v77
  %v158 = vunpack.c.l.b16 %v78
  %v159 = vunpack.c.l.b16 %v79
  %v160 = vunpack.c.l.b16 %v80
  %v161 = vunpack.c.l.b16 %v81
  %v162 = vunpack.c.l.b16 %v82
  %v163 = vunpack.c.l.b16 %v83
  %v164 = vunpack.c.l.b16 %v84
  %v165 = vunpack.c.l.b16 %v85
  %v166 = vunpack.c.l.b16 %v86
  %v167 = vunpack.c.l.b16 %v87
  %v168 = vunpack.c.l.b16 %v88
  %v169 = vunpack.c.l.b16 %v89
  %v170 = vunpack.c.l.b16 %v90
  %v171 = vpack.c.b16 %v156, %v155
  %v172 = vpack.c.b16 %v158, %v157
  %v173 = vpack.c.b16 %v160, %v159
  %v174 = vpack.c.b16 %v162, %v161
  %v175 = vpack.c.b16 %v164, %v163
  %v176 = vpack.c.b16 %v166, %v165
  %v177 = vpack.c.b16 %v168, %v167
  %v178 = vpack.c.b16 %v170, %v169
  %187 = vmatpush.bf16.msra.mxu0 %v178
  %188 = vmatpush.bf16.msra.mxu0 %v177
  %189 = vmatpush.bf16.msra.mxu0 %v176
  %190 = vmatpush.bf16.msra.mxu0 %v175
  %191 = vmatpush.bf16.msra.mxu0 %v174
  %192 = vmatpush.bf16.msra.mxu0 %v173
  %193 = vmatpush.bf16.msra.mxu0 %v172
  %194 = vmatpush.bf16.msra.mxu0 %v171
  %195 = vmatmul.bf16.gmra.mxu0 %v123
  %v196 = vpop.f32.mrf.mxu0
  %v197 = vadd.f32 0.0, %v196
  %v198 = vpop.f32.mrf.mxu0
  %v199 = vadd.f32 0.0, %v198
  %200 = vmatmul.bf16.gmra.mxu0 %v124
  %v201 = vpop.f32.mrf.mxu0
  %v202 = vadd.f32 0.0, %v201
  %v203 = vpop.f32.mrf.mxu0
  %v204 = vadd.f32 0.0, %v203
  %205 = vmatmul.bf16.gmra.mxu0 %v125
  %v206 = vpop.f32.mrf.mxu0
  %v207 = vadd.f32 0.0, %v206
  %v208 = vpop.f32.mrf.mxu0
  %v209 = vadd.f32 0.0, %v208
  %210 = vmatmul.bf16.gmra.mxu0 %v126
  %v211 = vpop.f32.mrf.mxu0
  %v212 = vadd.f32 0.0, %v211
  %v213 = vpop.f32.mrf.mxu0
  %v214 = vadd.f32 0.0, %v213
  %215 = vmatmul.bf16.gmra.mxu0 %v127
  %v216 = vpop.f32.mrf.mxu0
  %v217 = vadd.f32 0.0, %v216
  %v218 = vpop.f32.mrf.mxu0
  %v219 = vadd.f32 0.0, %v218
  %220 = vmatmul.bf16.gmra.mxu0 %v128
  %v221 = vpop.f32.mrf.mxu0
  %v222 = vadd.f32 0.0, %v221
  %v223 = vpop.f32.mrf.mxu0
  %v224 = vadd.f32 0.0, %v223
  %225 = vmatmul.bf16.gmra.mxu0 %v129
  %v226 = vpop.f32.mrf.mxu0
  %v227 = vadd.f32 0.0, %v226
  %v228 = vpop.f32.mrf.mxu0
  %v229 = vadd.f32 0.0, %v228
  %230 = vmatmul.bf16.gmra.mxu0 %v130
  %v231 = vpop.f32.mrf.mxu0
  %v232 = vadd.f32 0.0, %v231
  %v233 = vpop.f32.mrf.mxu0
  %v234 = vadd.f32 0.0, %v233
  %235 = vdwg.mxu0
  %v236 = vadd.f32 %v59, %v197
  %v237 = vadd.f32 %v60, %v199
  %v238 = vadd.f32 %v61, %v202
  %v239 = vadd.f32 %v62, %v204
  %v240 = vadd.f32 %v63, %v207
  %v241 = vadd.f32 %v64, %v209
  %v242 = vadd.f32 %v65, %v212
  %v243 = vadd.f32 %v66, %v214
  %v244 = vadd.f32 %v67, %v217
  %v245 = vadd.f32 %v68, %v219
  %v246 = vadd.f32 %v69, %v222
  %v247 = vadd.f32 %v70, %v224
  %v248 = vadd.f32 %v71, %v227
  %v249 = vadd.f32 %v72, %v229
  %v250 = vadd.f32 %v73, %v232
  %v251 = vadd.f32 %v74, %v234
  %252 = vst [vmem:[#allocation2] sm:$0xff] %v236
  %253 = vst [vmem:[#allocation2 + $0x8] sm:$0xff] %v237
  %254 = vst [vmem:[#allocation2 + $0x10] sm:$0xff] %v238
  %255 = vst [vmem:[#allocation2 + $0x18] sm:$0xff] %v239
  %256 = vst [vmem:[#allocation2 + $0x20] sm:$0xff] %v240
  %257 = vst [vmem:[#allocation2 + $0x28] sm:$0xff] %v241
  %258 = vst [vmem:[#allocation2 + $0x30] sm:$0xff] %v242
  %259 = vst [vmem:[#allocation2 + $0x38] sm:$0xff] %v243
  %260 = vst [vmem:[#allocation2 + $0x40] sm:$0xff] %v244
  %261 = vst [vmem:[#allocation2 + $0x48] sm:$0xff] %v245
  %262 = vst [vmem:[#allocation2 + $0x50] sm:$0xff] %v246
  %263 = vst [vmem:[#allocation2 + $0x58] sm:$0xff] %v247
  %264 = vst [vmem:[#allocation2 + $0x60] sm:$0xff] %v248
  %265 = vst [vmem:[#allocation2 + $0x68] sm:$0xff] %v249
  %266 = vst [vmem:[#allocation2 + $0x70] sm:$0xff] %v250
  %267 = vst [vmem:[#allocation2 + $0x78] sm:$0xff] %v251
  // Predicated region
  $region30: #{forward.66} parent=0 // pred_check
    %p268 = pneg %p23
  $region31: #{forward.66} parent=0 // pred_check_branch
    %270 = sbr.rel (%p268) target = $region33
  $region32: #{forward.66} parent=0 // pred_region
    %v271 = vld [vmem:[#allocation2] sm:$0xff]
    %v272 = vld [vmem:[#allocation2 + $0x8] sm:$0xff]
    %v273 = vld [vmem:[#allocation2 + $0x10] sm:$0xff]
    %v274 = vld [vmem:[#allocation2 + $0x18] sm:$0xff]
    %v275 = vld [vmem:[#allocation2 + $0x20] sm:$0xff]
    %v276 = vld [vmem:[#allocation2 + $0x28] sm:$0xff]
    %v277 = vld [vmem:[#allocation2 + $0x30] sm:$0xff]
    %v278 = vld [vmem:[#allocation2 + $0x38] sm:$0xff]
    %v279 = vld [vmem:[#allocation2 + $0x40] sm:$0xff]
    %v280 = vld [vmem:[#allocation2 + $0x48] sm:$0xff]
    %v281 = vld [vmem:[#allocation2 + $0x50] sm:$0xff]
    %v282 = vld [vmem:[#allocation2 + $0x58] sm:$0xff]
    %v283 = vld [vmem:[#allocation2 + $0x60] sm:$0xff]
    %v284 = vld [vmem:[#allocation2 + $0x68] sm:$0xff]
    %v285 = vld [vmem:[#allocation2 + $0x70] sm:$0xff]
    %v286 = vld [vmem:[#allocation2 + $0x78] sm:$0xff]
    %v287 = vld [vmem:[%s4] sm:$0x1]
    %v289 = vperm.slane %v287, 0
    %v291 = vmul.f32 %v271, %v289
    %v292 = vmul.f32 %v272, %v289
    %v293 = vmul.f32 %v273, %v289
    %v294 = vmul.f32 %v274, %v289
    %v295 = vmul.f32 %v275, %v289
    %v296 = vmul.f32 %v276, %v289
    %v297 = vmul.f32 %v277, %v289
    %v298 = vmul.f32 %v278, %v289
    %v299 = vmul.f32 %v279, %v289
    %v300 = vmul.f32 %v280, %v289
    %v301 = vmul.f32 %v281, %v289
    %v302 = vmul.f32 %v282, %v289
    %v303 = vmul.f32 %v283, %v289
    %v304 = vmul.f32 %v284, %v289
    %v305 = vmul.f32 %v285, %v289
    %v306 = vmul.f32 %v286, %v289
    %v307 = vld [vmem:[%s5] sm:$0x1]
    %v309 = vperm.slane %v307, 0
    %v311 = vadd.f32 %v291, %v309
    %v312 = vadd.f32 %v292, %v309
    %v313 = vadd.f32 %v293, %v309
    %v314 = vadd.f32 %v294, %v309
    %v315 = vadd.f32 %v295, %v309
    %v316 = vadd.f32 %v296, %v309
    %v317 = vadd.f32 %v297, %v309
    %v318 = vadd.f32 %v298, %v309
    %v319 = vadd.f32 %v299, %v309
    %v320 = vadd.f32 %v300, %v309
    %v321 = vadd.f32 %v301, %v309
    %v322 = vadd.f32 %v302, %v309
    %v323 = vadd.f32 %v303, %v309
    %v324 = vadd.f32 %v304, %v309
    %v325 = vadd.f32 %v305, %v309
    %v326 = vadd.f32 %v306, %v309
    %v327 = vmax.f32 %v311, 0.0
    %v328 = vmax.f32 %v312, 0.0
    %v329 = vmax.f32 %v313, 0.0
    %v330 = vmax.f32 %v314, 0.0
    %v331 = vmax.f32 %v315, 0.0
    %v332 = vmax.f32 %v316, 0.0
    %v333 = vmax.f32 %v317, 0.0
    %v334 = vmax.f32 %v318, 0.0
    %v335 = vmax.f32 %v319, 0.0
    %v336 = vmax.f32 %v320, 0.0
    %v337 = vmax.f32 %v321, 0.0
    %v338 = vmax.f32 %v322, 0.0
    %v339 = vmax.f32 %v323, 0.0
    %v340 = vmax.f32 %v324, 0.0
    %v341 = vmax.f32 %v325, 0.0
    %v342 = vmax.f32 %v326, 0.0
    %v343 = vpack.c.bf16 %v327, %v327
    %v344 = vpack.c.bf16 %v328, %v328
    %v345 = vpack.c.bf16 %v329, %v329
    %v346 = vpack.c.bf16 %v330, %v330
    %v347 = vpack.c.bf16 %v331, %v331
    %v348 = vpack.c.bf16 %v332, %v332
    %v349 = vpack.c.bf16 %v333, %v333
    %v350 = vpack.c.bf16 %v334, %v334
    %v351 = vpack.c.bf16 %v335, %v335
    %v352 = vpack.c.bf16 %v336, %v336
    %v353 = vpack.c.bf16 %v337, %v337
    %v354 = vpack.c.bf16 %v338, %v338
    %v355 = vpack.c.bf16 %v339, %v339
    %v356 = vpack.c.bf16 %v340, %v340
    %v357 = vpack.c.bf16 %v341, %v341
    %v358 = vpack.c.bf16 %v342, %v342
    %359 = vst [vmem:[%s6] sm:$0xf] %v343
    %360 = vst [vmem:[%s6 + $0x4] sm:$0xf] %v344
    %361 = vst [vmem:[%s6 + $0x8] sm:$0xf] %v345
    %362 = vst [vmem:[%s6 + $0xc] sm:$0xf] %v346
    %363 = vst [vmem:[%s6 + $0x10] sm:$0xf] %v347
    %364 = vst [vmem:[%s6 + $0x14] sm:$0xf] %v348
    %365 = vst [vmem:[%s6 + $0x18] sm:$0xf] %v349
    %366 = vst [vmem:[%s6 + $0x1c] sm:$0xf] %v350
    %367 = vst [vmem:[%s6 + $0x20] sm:$0xf] %v351
    %368 = vst [vmem:[%s6 + $0x24] sm:$0xf] %v352
    %369 = vst [vmem:[%s6 + $0x28] sm:$0xf] %v353
    %370 = vst [vmem:[%s6 + $0x2c] sm:$0xf] %v354
    %371 = vst [vmem:[%s6 + $0x30] sm:$0xf] %v355
    %372 = vst [vmem:[%s6 + $0x34] sm:$0xf] %v356
    %373 = vst [vmem:[%s6 + $0x38] sm:$0xf] %v357
    %374 = vst [vmem:[%s6 + $0x3c] sm:$0xf] %v358
  $region33: #{forward.66} parent=0 // pred_fallthru
    _
  // Predicated region
  $region34: #{forward.66} parent=0 // pred_check
    _
  $region35: #{forward.66} parent=0 // pred_check_branch
    %376 = sbr.rel (0) target = $region37
  $region36: #{forward.66} parent=0 // pred_region
    _
  $region37: #{forward.66} parent=0 // pred_fallthru
    _
  // Predicated region
  $region38: #{forward.66} parent=0 // pred_check
    _
  $region39: #{forward.66} parent=0 // pred_check_branch
    %378 = sbr.rel (0) target = $region41
  $region40: #{forward.66} parent=0 // pred_region
    _
  $region41: #{forward.66} parent=0 // pred_fallthru
    _

// kernel: forward.73
$region0: #{forward.73}
  #allocation0 [shape = 'u32[]', space=smem, size = 0x4, offset = 0x4, fixed_abs, tag = 'smem constant byte address 0x4 - core index']
  #allocation1 [shape = 'u32[72,128]{1,0:T(1,128)}', space=vmem, size = 0x9000, scoped, tag = 'internal scratch']
  #allocation2 [shape = 'f32[128,128]{1,0:T(8,128)}', space=vmem, size = 0x10000, scoped, tag = 'scratch operand']
  %s0 = inlined_call_operand.vmem [shape: bf16[128,128], index: 0, kind: input, shape index: {}]
  %s1 = inlined_call_operand.vmem [shape: bf16[128,128], index: 1, kind: input, shape index: {}]
  %s2 = inlined_call_operand.vmem [shape: f32[1,128], index: 2, kind: input, shape index: {}]
  %s3 = inlined_call_operand.vmem [shape: f32[1,128], index: 3, kind: input, shape index: {}]
  %s4 = inlined_call_operand.vmem [shape: f32[1,128], index: 4, kind: input, shape index: {}]
  %s5 = inlined_call_operand.vmem [shape: f32[1,128], index: 5, kind: input, shape index: {}]
  %s6 = inlined_call_operand.vmem [shape: bf16[128,128], index: 6, kind: output, shape index: {}]
  %s7 = sld [smem:[#allocation0]]
  $region42: #{forward.73} parent=0
    _
  %s9 = ssub.s32 1, %s7
  %s10 = scalar_select 0, %s9, %s7
  // Predicated region
  $region2: #{forward.73} parent=0 // pred_check
    _
  $region3: #{forward.73} parent=0 // pred_check_branch
    %12 = sbr.rel (0) target = $region5
  $region4: #{forward.73} parent=0 // pred_region
    _
  $region5: #{forward.73} parent=0 // pred_fallthru
    _
  // Predicated region
  $region6: #{forward.73} parent=0 // pred_check
    _
  $region7: #{forward.73} parent=0 // pred_check_branch
    %14 = sbr.rel (0) target = $region9
  $region8: #{forward.73} parent=0 // pred_region
    _
  $region9: #{forward.73} parent=0 // pred_fallthru
    _
  // Predicated region
  $region10: #{forward.73} parent=0 // pred_check
    _
  $region11: #{forward.73} parent=0 // pred_check_branch
    %16 = sbr.rel (0) target = $region13
  $region12: #{forward.73} parent=0 // pred_region
    _
  $region13: #{forward.73} parent=0 // pred_fallthru
    _
  // Predicated region
  $region14: #{forward.73} parent=0 // pred_check
    _
  $region15: #{forward.73} parent=0 // pred_check_branch
    %18 = sbr.rel (0) target = $region17
  $region16: #{forward.73} parent=0 // pred_region
    _
  $region17: #{forward.73} parent=0 // pred_fallthru
    _
  // Predicated region
  $region18: #{forward.73} parent=0 // pred_check
    _
  $region19: #{forward.73} parent=0 // pred_check_branch
    %20 = sbr.rel (0) target = $region21
  $region20: #{forward.73} parent=0 // pred_region
    _
  $region21: #{forward.73} parent=0 // pred_fallthru
    _
  // Predicated region
  $region22: #{forward.73} parent=0 // pred_check
    _
  $region23: #{forward.73} parent=0 // pred_check_branch
    %22 = sbr.rel (0) target = $region25
  $region24: #{forward.73} parent=0 // pred_region
    _
  $region25: #{forward.73} parent=0 // pred_fallthru
    _
  %p23 = scmp.eq.s32.totalorder 0, 0
  // Predicated region
  $region26: #{forward.73} parent=0 // pred_check
    %p24 = pneg %p23
  $region27: #{forward.73} parent=0 // pred_check_branch
    %26 = sbr.rel (%p24) target = $region29
  $region28: #{forward.73} parent=0 // pred_region
    %27 = vst [vmem:[#allocation2] sm:$0xff] 0.0
    %28 = vst [vmem:[#allocation2 + $0x8] sm:$0xff] 0.0
    %29 = vst [vmem:[#allocation2 + $0x10] sm:$0xff] 0.0
    %30 = vst [vmem:[#allocation2 + $0x18] sm:$0xff] 0.0
    %31 = vst [vmem:[#allocation2 + $0x20] sm:$0xff] 0.0
    %32 = vst [vmem:[#allocation2 + $0x28] sm:$0xff] 0.0
    %33 = vst [vmem:[#allocation2 + $0x30] sm:$0xff] 0.0
    %34 = vst [vmem:[#allocation2 + $0x38] sm:$0xff] 0.0
    %35 = vst [vmem:[#allocation2 + $0x40] sm:$0xff] 0.0
    %36 = vst [vmem:[#allocation2 + $0x48] sm:$0xff] 0.0
    %37 = vst [vmem:[#allocation2 + $0x50] sm:$0xff] 0.0
    %38 = vst [vmem:[#allocation2 + $0x58] sm:$0xff] 0.0
    %39 = vst [vmem:[#allocation2 + $0x60] sm:$0xff] 0.0
    %40 = vst [vmem:[#allocation2 + $0x68] sm:$0xff] 0.0
    %41 = vst [vmem:[#allocation2 + $0x70] sm:$0xff] 0.0
    %42 = vst [vmem:[#allocation2 + $0x78] sm:$0xff] 0.0
  $region29: #{forward.73} parent=0 // pred_fallthru
    _
  %v43 = vld [vmem:[%s0] sm:$0xf]
  %v44 = vld [vmem:[%s0 + $0x4] sm:$0xf]
  %v45 = vld [vmem:[%s0 + $0x8] sm:$0xf]
  %v46 = vld [vmem:[%s0 + $0xc] sm:$0xf]
  %v47 = vld [vmem:[%s0 + $0x10] sm:$0xf]
  %v48 = vld [vmem:[%s0 + $0x14] sm:$0xf]
  %v49 = vld [vmem:[%s0 + $0x18] sm:$0xf]
  %v50 = vld [vmem:[%s0 + $0x1c] sm:$0xf]
  %v51 = vld [vmem:[%s0 + $0x20] sm:$0xf]
  %v52 = vld [vmem:[%s0 + $0x24] sm:$0xf]
  %v53 = vld [vmem:[%s0 + $0x28] sm:$0xf]
  %v54 = vld [vmem:[%s0 + $0x2c] sm:$0xf]
  %v55 = vld [vmem:[%s0 + $0x30] sm:$0xf]
  %v56 = vld [vmem:[%s0 + $0x34] sm:$0xf]
  %v57 = vld [vmem:[%s0 + $0x38] sm:$0xf]
  %v58 = vld [vmem:[%s0 + $0x3c] sm:$0xf]
  %v59 = vunpack.c.l.bf16 %v43
  %v60 = vunpack.c.l.bf16 %v44
  %v61 = vunpack.c.l.bf16 %v45
  %v62 = vunpack.c.l.bf16 %v46
  %v63 = vunpack.c.l.bf16 %v47
  %v64 = vunpack.c.l.bf16 %v48
  %v65 = vunpack.c.l.bf16 %v49
  %v66 = vunpack.c.l.bf16 %v50
  %v67 = vunpack.c.l.bf16 %v51
  %v68 = vunpack.c.l.bf16 %v52
  %v69 = vunpack.c.l.bf16 %v53
  %v70 = vunpack.c.l.bf16 %v54
  %v71 = vunpack.c.l.bf16 %v55
  %v72 = vunpack.c.l.bf16 %v56
  %v73 = vunpack.c.l.bf16 %v57
  %v74 = vunpack.c.l.bf16 %v58
  %v75 = vld [vmem:[%s2] sm:$0x1]
  %v77 = vperm.slane %v75, 0
  %v79 = vmul.f32 %v59, %v77
  %v80 = vmul.f32 %v60, %v77
  %v81 = vmul.f32 %v61, %v77
  %v82 = vmul.f32 %v62, %v77
  %v83 = vmul.f32 %v63, %v77
  %v84 = vmul.f32 %v64, %v77
  %v85 = vmul.f32 %v65, %v77
  %v86 = vmul.f32 %v66, %v77
  %v87 = vmul.f32 %v67, %v77
  %v88 = vmul.f32 %v68, %v77
  %v89 = vmul.f32 %v69, %v77
  %v90 = vmul.f32 %v70, %v77
  %v91 = vmul.f32 %v71, %v77
  %v92 = vmul.f32 %v72, %v77
  %v93 = vmul.f32 %v73, %v77
  %v94 = vmul.f32 %v74, %v77
  %v95 = vld [vmem:[%s3] sm:$0x1]
  %v97 = vperm.slane %v95, 0
  %v99 = vadd.f32 %v79, %v97
  %v100 = vadd.f32 %v80, %v97
  %v101 = vadd.f32 %v81, %v97
  %v102 = vadd.f32 %v82, %v97
  %v103 = vadd.f32 %v83, %v97
  %v104 = vadd.f32 %v84, %v97
  %v105 = vadd.f32 %v85, %v97
  %v106 = vadd.f32 %v86, %v97
  %v107 = vadd.f32 %v87, %v97
  %v108 = vadd.f32 %v88, %v97
  %v109 = vadd.f32 %v89, %v97
  %v110 = vadd.f32 %v90, %v97
  %v111 = vadd.f32 %v91, %v97
  %v112 = vadd.f32 %v92, %v97
  %v113 = vadd.f32 %v93, %v97
  %v114 = vadd.f32 %v94, %v97
  %v115 = vmax.f32 %v99, 0.0
  %v116 = vmax.f32 %v100, 0.0
  %v117 = vmax.f32 %v101, 0.0
  %v118 = vmax.f32 %v102, 0.0
  %v119 = vmax.f32 %v103, 0.0
  %v120 = vmax.f32 %v104, 0.0
  %v121 = vmax.f32 %v105, 0.0
  %v122 = vmax.f32 %v106, 0.0
  %v123 = vmax.f32 %v107, 0.0
  %v124 = vmax.f32 %v108, 0.0
  %v125 = vmax.f32 %v109, 0.0
  %v126 = vmax.f32 %v110, 0.0
  %v127 = vmax.f32 %v111, 0.0
  %v128 = vmax.f32 %v112, 0.0
  %v129 = vmax.f32 %v113, 0.0
  %v130 = vmax.f32 %v114, 0.0
  %v131 = vpack.c.bf16 %v116, %v115
  %v132 = vpack.c.bf16 %v118, %v117
  %v133 = vpack.c.bf16 %v120, %v119
  %v134 = vpack.c.bf16 %v122, %v121
  %v135 = vpack.c.bf16 %v124, %v123
  %v136 = vpack.c.bf16 %v126, %v125
  %v137 = vpack.c.bf16 %v128, %v127
  %v138 = vpack.c.bf16 %v130, %v129
  %v139 = vld [vmem:[#allocation2] sm:$0xff]
  %v140 = vld [vmem:[#allocation2 + $0x8] sm:$0xff]
  %v141 = vld [vmem:[#allocation2 + $0x10] sm:$0xff]
  %v142 = vld [vmem:[#allocation2 + $0x18] sm:$0xff]
  %v143 = vld [vmem:[#allocation2 + $0x20] sm:$0xff]
  %v144 = vld [vmem:[#allocation2 + $0x28] sm:$0xff]
  %v145 = vld [vmem:[#allocation2 + $0x30] sm:$0xff]
  %v146 = vld [vmem:[#allocation2 + $0x38] sm:$0xff]
  %v147 = vld [vmem:[#allocation2 + $0x40] sm:$0xff]
  %v148 = vld [vmem:[#allocation2 + $0x48] sm:$0xff]
  %v149 = vld [vmem:[#allocation2 + $0x50] sm:$0xff]
  %v150 = vld [vmem:[#allocation2 + $0x58] sm:$0xff]
  %v151 = vld [vmem:[#allocation2 + $0x60] sm:$0xff]
  %v152 = vld [vmem:[#allocation2 + $0x68] sm:$0xff]
  %v153 = vld [vmem:[#allocation2 + $0x70] sm:$0xff]
  %v154 = vld [vmem:[#allocation2 + $0x78] sm:$0xff]
  %v155 = vld [vmem:[%s1] sm:$0xf]
  %v156 = vld [vmem:[%s1 + $0x4] sm:$0xf]
  %v157 = vld [vmem:[%s1 + $0x8] sm:$0xf]
  %v158 = vld [vmem:[%s1 + $0xc] sm:$0xf]
  %v159 = vld [vmem:[%s1 + $0x10] sm:$0xf]
  %v160 = vld [vmem:[%s1 + $0x14] sm:$0xf]
  %v161 = vld [vmem:[%s1 + $0x18] sm:$0xf]
  %v162 = vld [vmem:[%s1 + $0x1c] sm:$0xf]
  %v163 = vld [vmem:[%s1 + $0x20] sm:$0xf]
  %v164 = vld [vmem:[%s1 + $0x24] sm:$0xf]
  %v165 = vld [vmem:[%s1 + $0x28] sm:$0xf]
  %v166 = vld [vmem:[%s1 + $0x2c] sm:$0xf]
  %v167 = vld [vmem:[%s1 + $0x30] sm:$0xf]
  %v168 = vld [vmem:[%s1 + $0x34] sm:$0xf]
  %v169 = vld [vmem:[%s1 + $0x38] sm:$0xf]
  %v170 = vld [vmem:[%s1 + $0x3c] sm:$0xf]
  %v187 = vunpack.c.l.b16 %v155
  %v188 = vunpack.c.l.b16 %v156
  %v189 = vunpack.c.l.b16 %v157
  %v190 = vunpack.c.l.b16 %v158
  %v191 = vunpack.c.l.b16 %v159
  %v192 = vunpack.c.l.b16 %v160
  %v193 = vunpack.c.l.b16 %v161
  %v194 = vunpack.c.l.b16 %v162
  %v195 = vunpack.c.l.b16 %v163
  %v196 = vunpack.c.l.b16 %v164
  %v197 = vunpack.c.l.b16 %v165
  %v198 = vunpack.c.l.b16 %v166
  %v199 = vunpack.c.l.b16 %v167
  %v200 = vunpack.c.l.b16 %v168
  %v201 = vunpack.c.l.b16 %v169
  %v202 = vunpack.c.l.b16 %v170
  %v203 = vpack.c.b16 %v188, %v187
  %v204 = vpack.c.b16 %v190, %v189
  %v205 = vpack.c.b16 %v192, %v191
  %v206 = vpack.c.b16 %v194, %v193
  %v207 = vpack.c.b16 %v196, %v195
  %v208 = vpack.c.b16 %v198, %v197
  %v209 = vpack.c.b16 %v200, %v199
  %v210 = vpack.c.b16 %v202, %v201
  %219 = vmatpush.bf16.msra.mxu0 %v210
  %220 = vmatpush.bf16.msra.mxu0 %v209
  %221 = vmatpush.bf16.msra.mxu0 %v208
  %222 = vmatpush.bf16.msra.mxu0 %v207
  %223 = vmatpush.bf16.msra.mxu0 %v206
  %224 = vmatpush.bf16.msra.mxu0 %v205
  %225 = vmatpush.bf16.msra.mxu0 %v204
  %226 = vmatpush.bf16.msra.mxu0 %v203
  %227 = vmatmul.bf16.gmra.mxu0 %v131
  %v228 = vpop.f32.mrf.mxu0
  %v229 = vadd.f32 0.0, %v228
  %v230 = vpop.f32.mrf.mxu0
  %v231 = vadd.f32 0.0, %v230
  %232 = vmatmul.bf16.gmra.mxu0 %v132
  %v233 = vpop.f32.mrf.mxu0
  %v234 = vadd.f32 0.0, %v233
  %v235 = vpop.f32.mrf.mxu0
  %v236 = vadd.f32 0.0, %v235
  %237 = vmatmul.bf16.gmra.mxu0 %v133
  %v238 = vpop.f32.mrf.mxu0
  %v239 = vadd.f32 0.0, %v238
  %v240 = vpop.f32.mrf.mxu0
  %v241 = vadd.f32 0.0, %v240
  %242 = vmatmul.bf16.gmra.mxu0 %v134
  %v243 = vpop.f32.mrf.mxu0
  %v244 = vadd.f32 0.0, %v243
  %v245 = vpop.f32.mrf.mxu0
  %v246 = vadd.f32 0.0, %v245
  %247 = vmatmul.bf16.gmra.mxu0 %v135
  %v248 = vpop.f32.mrf.mxu0
  %v249 = vadd.f32 0.0, %v248
  %v250 = vpop.f32.mrf.mxu0
  %v251 = vadd.f32 0.0, %v250
  %252 = vmatmul.bf16.gmra.mxu0 %v136
  %v253 = vpop.f32.mrf.mxu0
  %v254 = vadd.f32 0.0, %v253
  %v255 = vpop.f32.mrf.mxu0
  %v256 = vadd.f32 0.0, %v255
  %257 = vmatmul.bf16.gmra.mxu0 %v137
  %v258 = vpop.f32.mrf.mxu0
  %v259 = vadd.f32 0.0, %v258
  %v260 = vpop.f32.mrf.mxu0
  %v261 = vadd.f32 0.0, %v260
  %262 = vmatmul.bf16.gmra.mxu0 %v138
  %v263 = vpop.f32.mrf.mxu0
  %v264 = vadd.f32 0.0, %v263
  %v265 = vpop.f32.mrf.mxu0
  %v266 = vadd.f32 0.0, %v265
  %267 = vdwg.mxu0
  %v268 = vadd.f32 %v139, %v229
  %v269 = vadd.f32 %v140, %v231
  %v270 = vadd.f32 %v141, %v234
  %v271 = vadd.f32 %v142, %v236
  %v272 = vadd.f32 %v143, %v239
  %v273 = vadd.f32 %v144, %v241
  %v274 = vadd.f32 %v145, %v244
  %v275 = vadd.f32 %v146, %v246
  %v276 = vadd.f32 %v147, %v249
  %v277 = vadd.f32 %v148, %v251
  %v278 = vadd.f32 %v149, %v254
  %v279 = vadd.f32 %v150, %v256
  %v280 = vadd.f32 %v151, %v259
  %v281 = vadd.f32 %v152, %v261
  %v282 = vadd.f32 %v153, %v264
  %v283 = vadd.f32 %v154, %v266
  %284 = vst [vmem:[#allocation2] sm:$0xff] %v268
  %285 = vst [vmem:[#allocation2 + $0x8] sm:$0xff] %v269
  %286 = vst [vmem:[#allocation2 + $0x10] sm:$0xff] %v270
  %287 = vst [vmem:[#allocation2 + $0x18] sm:$0xff] %v271
  %288 = vst [vmem:[#allocation2 + $0x20] sm:$0xff] %v272
  %289 = vst [vmem:[#allocation2 + $0x28] sm:$0xff] %v273
  %290 = vst [vmem:[#allocation2 + $0x30] sm:$0xff] %v274
  %291 = vst [vmem:[#allocation2 + $0x38] sm:$0xff] %v275
  %292 = vst [vmem:[#allocation2 + $0x40] sm:$0xff] %v276
  %293 = vst [vmem:[#allocation2 + $0x48] sm:$0xff] %v277
  %294 = vst [vmem:[#allocation2 + $0x50] sm:$0xff] %v278
  %295 = vst [vmem:[#allocation2 + $0x58] sm:$0xff] %v279
  %296 = vst [vmem:[#allocation2 + $0x60] sm:$0xff] %v280
  %297 = vst [vmem:[#allocation2 + $0x68] sm:$0xff] %v281
  %298 = vst [vmem:[#allocation2 + $0x70] sm:$0xff] %v282
  %299 = vst [vmem:[#allocation2 + $0x78] sm:$0xff] %v283
  // Predicated region
  $region30: #{forward.73} parent=0 // pred_check
    %p300 = pneg %p23
  $region31: #{forward.73} parent=0 // pred_check_branch
    %302 = sbr.rel (%p300) target = $region33
  $region32: #{forward.73} parent=0 // pred_region
    %v303 = vld [vmem:[#allocation2] sm:$0xff]
    %v304 = vld [vmem:[#allocation2 + $0x8] sm:$0xff]
    %v305 = vld [vmem:[#allocation2 + $0x10] sm:$0xff]
    %v306 = vld [vmem:[#allocation2 + $0x18] sm:$0xff]
    %v307 = vld [vmem:[#allocation2 + $0x20] sm:$0xff]
    %v308 = vld [vmem:[#allocation2 + $0x28] sm:$0xff]
    %v309 = vld [vmem:[#allocation2 + $0x30] sm:$0xff]
    %v310 = vld [vmem:[#allocation2 + $0x38] sm:$0xff]
    %v311 = vld [vmem:[#allocation2 + $0x40] sm:$0xff]
    %v312 = vld [vmem:[#allocation2 + $0x48] sm:$0xff]
    %v313 = vld [vmem:[#allocation2 + $0x50] sm:$0xff]
    %v314 = vld [vmem:[#allocation2 + $0x58] sm:$0xff]
    %v315 = vld [vmem:[#allocation2 + $0x60] sm:$0xff]
    %v316 = vld [vmem:[#allocation2 + $0x68] sm:$0xff]
    %v317 = vld [vmem:[#allocation2 + $0x70] sm:$0xff]
    %v318 = vld [vmem:[#allocation2 + $0x78] sm:$0xff]
    %v319 = vld [vmem:[%s4] sm:$0x1]
    %v321 = vperm.slane %v319, 0
    %v323 = vmul.f32 %v303, %v321
    %v324 = vmul.f32 %v304, %v321
    %v325 = vmul.f32 %v305, %v321
    %v326 = vmul.f32 %v306, %v321
    %v327 = vmul.f32 %v307, %v321
    %v328 = vmul.f32 %v308, %v321
    %v329 = vmul.f32 %v309, %v321
    %v330 = vmul.f32 %v310, %v321
    %v331 = vmul.f32 %v311, %v321
    %v332 = vmul.f32 %v312, %v321
    %v333 = vmul.f32 %v313, %v321
    %v334 = vmul.f32 %v314, %v321
    %v335 = vmul.f32 %v315, %v321
    %v336 = vmul.f32 %v316, %v321
    %v337 = vmul.f32 %v317, %v321
    %v338 = vmul.f32 %v318, %v321
    %v339 = vld [vmem:[%s5] sm:$0x1]
    %v341 = vperm.slane %v339, 0
    %v343 = vadd.f32 %v323, %v341
    %v344 = vadd.f32 %v324, %v341
    %v345 = vadd.f32 %v325, %v341
    %v346 = vadd.f32 %v326, %v341
    %v347 = vadd.f32 %v327, %v341
    %v348 = vadd.f32 %v328, %v341
    %v349 = vadd.f32 %v329, %v341
    %v350 = vadd.f32 %v330, %v341
    %v351 = vadd.f32 %v331, %v341
    %v352 = vadd.f32 %v332, %v341
    %v353 = vadd.f32 %v333, %v341
    %v354 = vadd.f32 %v334, %v341
    %v355 = vadd.f32 %v335, %v341
    %v356 = vadd.f32 %v336, %v341
    %v357 = vadd.f32 %v337, %v341
    %v358 = vadd.f32 %v338, %v341
    %v359 = vmax.f32 %v343, 0.0
    %v360 = vmax.f32 %v344, 0.0
    %v361 = vmax.f32 %v345, 0.0
    %v362 = vmax.f32 %v346, 0.0
    %v363 = vmax.f32 %v347, 0.0
    %v364 = vmax.f32 %v348, 0.0
    %v365 = vmax.f32 %v349, 0.0
    %v366 = vmax.f32 %v350, 0.0
    %v367 = vmax.f32 %v351, 0.0
    %v368 = vmax.f32 %v352, 0.0
    %v369 = vmax.f32 %v353, 0.0
    %v370 = vmax.f32 %v354, 0.0
    %v371 = vmax.f32 %v355, 0.0
    %v372 = vmax.f32 %v356, 0.0
    %v373 = vmax.f32 %v357, 0.0
    %v374 = vmax.f32 %v358, 0.0
    %v375 = vpack.c.bf16 %v359, %v359
    %v376 = vpack.c.bf16 %v360, %v360
    %v377 = vpack.c.bf16 %v361, %v361
    %v378 = vpack.c.bf16 %v362, %v362
    %v379 = vpack.c.bf16 %v363, %v363
    %v380 = vpack.c.bf16 %v364, %v364
    %v381 = vpack.c.bf16 %v365, %v365
    %v382 = vpack.c.bf16 %v366, %v366
    %v383 = vpack.c.bf16 %v367, %v367
    %v384 = vpack.c.bf16 %v368, %v368
    %v385 = vpack.c.bf16 %v369, %v369
    %v386 = vpack.c.bf16 %v370, %v370
    %v387 = vpack.c.bf16 %v371, %v371
    %v388 = vpack.c.bf16 %v372, %v372
    %v389 = vpack.c.bf16 %v373, %v373
    %v390 = vpack.c.bf16 %v374, %v374
    %391 = vst [vmem:[%s6] sm:$0xf] %v375
    %392 = vst [vmem:[%s6 + $0x4] sm:$0xf] %v376
    %393 = vst [vmem:[%s6 + $0x8] sm:$0xf] %v377
    %394 = vst [vmem:[%s6 + $0xc] sm:$0xf] %v378
    %395 = vst [vmem:[%s6 + $0x10] sm:$0xf] %v379
    %396 = vst [vmem:[%s6 + $0x14] sm:$0xf] %v380
    %397 = vst [vmem:[%s6 + $0x18] sm:$0xf] %v381
    %398 = vst [vmem:[%s6 + $0x1c] sm:$0xf] %v382
    %399 = vst [vmem:[%s6 + $0x20] sm:$0xf] %v383
    %400 = vst [vmem:[%s6 + $0x24] sm:$0xf] %v384
    %401 = vst [vmem:[%s6 + $0x28] sm:$0xf] %v385
    %402 = vst [vmem:[%s6 + $0x2c] sm:$0xf] %v386
    %403 = vst [vmem:[%s6 + $0x30] sm:$0xf] %v387
    %404 = vst [vmem:[%s6 + $0x34] sm:$0xf] %v388
    %405 = vst [vmem:[%s6 + $0x38] sm:$0xf] %v389
    %406 = vst [vmem:[%s6 + $0x3c] sm:$0xf] %v390
  $region33: #{forward.73} parent=0 // pred_fallthru
    _
  // Predicated region
  $region34: #{forward.73} parent=0 // pred_check
    _
  $region35: #{forward.73} parent=0 // pred_check_branch
    %408 = sbr.rel (0) target = $region37
  $region36: #{forward.73} parent=0 // pred_region
    _
  $region37: #{forward.73} parent=0 // pred_fallthru
    _
  // Predicated region
  $region38: #{forward.73} parent=0 // pred_check
    _
  $region39: #{forward.73} parent=0 // pred_check_branch
    %410 = sbr.rel (0) target = $region41
  $region40: #{forward.73} parent=0 // pred_region
    _
  $region41: #{forward.73} parent=0 // pred_fallthru
    _

// kernel: forward.78
$region0: #{forward.78}
  #allocation0 [shape = 'u32[]', space=smem, size = 0x4, offset = 0x4, fixed_abs, tag = 'smem constant byte address 0x4 - core index']
  #allocation1 [shape = 'u32[72,128]{1,0:T(1,128)}', space=vmem, size = 0x9000, scoped, tag = 'internal scratch']
  #allocation2 [shape = 'f32[32,128]{1,0:T(8,128)}', space=vmem, size = 0x4000, scoped, tag = 'scratch operand']
  %s0 = inlined_call_operand.vmem [shape: bf16[32,128], index: 0, kind: input, shape index: {}]
  %s1 = inlined_call_operand.vmem [shape: bf16[128,128], index: 1, kind: input, shape index: {}]
  %s2 = inlined_call_operand.vmem [shape: f32[1,128], index: 2, kind: input, shape index: {}]
  %s3 = inlined_call_operand.vmem [shape: f32[1,128], index: 3, kind: input, shape index: {}]
  %s4 = inlined_call_operand.vmem [shape: f32[1,128], index: 4, kind: input, shape index: {}]
  %s5 = inlined_call_operand.vmem [shape: f32[1,128], index: 5, kind: input, shape index: {}]
  %s6 = inlined_call_operand.vmem [shape: bf16[32,128], index: 6, kind: output, shape index: {}]
  %s7 = sld [smem:[#allocation0]]
  $region42: #{forward.78} parent=0
    _
  %s9 = ssub.s32 1, %s7
  %s10 = scalar_select 0, %s9, %s7
  // Predicated region
  $region2: #{forward.78} parent=0 // pred_check
    _
  $region3: #{forward.78} parent=0 // pred_check_branch
    %12 = sbr.rel (0) target = $region5
  $region4: #{forward.78} parent=0 // pred_region
    _
  $region5: #{forward.78} parent=0 // pred_fallthru
    _
  // Predicated region
  $region6: #{forward.78} parent=0 // pred_check
    _
  $region7: #{forward.78} parent=0 // pred_check_branch
    %14 = sbr.rel (0) target = $region9
  $region8: #{forward.78} parent=0 // pred_region
    _
  $region9: #{forward.78} parent=0 // pred_fallthru
    _
  // Predicated region
  $region10: #{forward.78} parent=0 // pred_check
    _
  $region11: #{forward.78} parent=0 // pred_check_branch
    %16 = sbr.rel (0) target = $region13
  $region12: #{forward.78} parent=0 // pred_region
    _
  $region13: #{forward.78} parent=0 // pred_fallthru
    _
  // Predicated region
  $region14: #{forward.78} parent=0 // pred_check
    _
  $region15: #{forward.78} parent=0 // pred_check_branch
    %18 = sbr.rel (0) target = $region17
  $region16: #{forward.78} parent=0 // pred_region
    _
  $region17: #{forward.78} parent=0 // pred_fallthru
    _
  // Predicated region
  $region18: #{forward.78} parent=0 // pred_check
    _
  $region19: #{forward.78} parent=0 // pred_check_branch
    %20 = sbr.rel (0) target = $region21
  $region20: #{forward.78} parent=0 // pred_region
    _
  $region21: #{forward.78} parent=0 // pred_fallthru
    _
  // Predicated region
  $region22: #{forward.78} parent=0 // pred_check
    _
  $region23: #{forward.78} parent=0 // pred_check_branch
    %22 = sbr.rel (0) target = $region25
  $region24: #{forward.78} parent=0 // pred_region
    _
  $region25: #{forward.78} parent=0 // pred_fallthru
    _
  %p23 = scmp.eq.s32.totalorder 0, 0
  // Predicated region
  $region26: #{forward.78} parent=0 // pred_check
    %p24 = pneg %p23
  $region27: #{forward.78} parent=0 // pred_check_branch
    %26 = sbr.rel (%p24) target = $region29
  $region28: #{forward.78} parent=0 // pred_region
    %27 = vst [vmem:[#allocation2] sm:$0xff] 0.0
    %28 = vst [vmem:[#allocation2 + $0x8] sm:$0xff] 0.0
    %29 = vst [vmem:[#allocation2 + $0x10] sm:$0xff] 0.0
    %30 = vst [vmem:[#allocation2 + $0x18] sm:$0xff] 0.0
  $region29: #{forward.78} parent=0 // pred_fallthru
    _
  %v31 = vld [vmem:[%s0] sm:$0xf]
  %v32 = vld [vmem:[%s0 + $0x4] sm:$0xf]
  %v33 = vld [vmem:[%s0 + $0x8] sm:$0xf]
  %v34 = vld [vmem:[%s0 + $0xc] sm:$0xf]
  %v35 = vld [vmem:[#allocation2] sm:$0xff]
  %v36 = vld [vmem:[#allocation2 + $0x8] sm:$0xff]
  %v37 = vld [vmem:[#allocation2 + $0x10] sm:$0xff]
  %v38 = vld [vmem:[#allocation2 + $0x18] sm:$0xff]
  %v39 = vld [vmem:[%s1] sm:$0xf]
  %v40 = vld [vmem:[%s1 + $0x4] sm:$0xf]
  %v41 = vld [vmem:[%s1 + $0x8] sm:$0xf]
  %v42 = vld [vmem:[%s1 + $0xc] sm:$0xf]
  %v43 = vld [vmem:[%s1 + $0x10] sm:$0xf]
  %v44 = vld [vmem:[%s1 + $0x14] sm:$0xf]
  %v45 = vld [vmem:[%s1 + $0x18] sm:$0xf]
  %v46 = vld [vmem:[%s1 + $0x1c] sm:$0xf]
  %v47 = vld [vmem:[%s1 + $0x20] sm:$0xf]
  %v48 = vld [vmem:[%s1 + $0x24] sm:$0xf]
  %v49 = vld [vmem:[%s1 + $0x28] sm:$0xf]
  %v50 = vld [vmem:[%s1 + $0x2c] sm:$0xf]
  %v51 = vld [vmem:[%s1 + $0x30] sm:$0xf]
  %v52 = vld [vmem:[%s1 + $0x34] sm:$0xf]
  %v53 = vld [vmem:[%s1 + $0x38] sm:$0xf]
  %v54 = vld [vmem:[%s1 + $0x3c] sm:$0xf]
  %v59 = vunpack.c.l.b16 %v31
  %v60 = vunpack.c.l.b16 %v32
  %v61 = vunpack.c.l.b16 %v33
  %v62 = vunpack.c.l.b16 %v34
  %v63 = vpack.c.b16 %v60, %v59
  %v64 = vpack.c.b16 %v62, %v61
  %v83 = vunpack.c.l.b16 %v39
  %v84 = vunpack.c.l.b16 %v40
  %v85 = vunpack.c.l.b16 %v41
  %v86 = vunpack.c.l.b16 %v42
  %v87 = vunpack.c.l.b16 %v43
  %v88 = vunpack.c.l.b16 %v44
  %v89 = vunpack.c.l.b16 %v45
  %v90 = vunpack.c.l.b16 %v46
  %v91 = vunpack.c.l.b16 %v47
  %v92 = vunpack.c.l.b16 %v48
  %v93 = vunpack.c.l.b16 %v49
  %v94 = vunpack.c.l.b16 %v50
  %v95 = vunpack.c.l.b16 %v51
  %v96 = vunpack.c.l.b16 %v52
  %v97 = vunpack.c.l.b16 %v53
  %v98 = vunpack.c.l.b16 %v54
  %v99 = vpack.c.b16 %v84, %v83
  %v100 = vpack.c.b16 %v86, %v85
  %v101 = vpack.c.b16 %v88, %v87
  %v102 = vpack.c.b16 %v90, %v89
  %v103 = vpack.c.b16 %v92, %v91
  %v104 = vpack.c.b16 %v94, %v93
  %v105 = vpack.c.b16 %v96, %v95
  %v106 = vpack.c.b16 %v98, %v97
  %115 = vmatpush.bf16.msra.mxu0 %v106
  %116 = vmatpush.bf16.msra.mxu0 %v105
  %117 = vmatpush.bf16.msra.mxu0 %v104
  %118 = vmatpush.bf16.msra.mxu0 %v103
  %119 = vmatpush.bf16.msra.mxu0 %v102
  %120 = vmatpush.bf16.msra.mxu0 %v101
  %121 = vmatpush.bf16.msra.mxu0 %v100
  %122 = vmatpush.bf16.msra.mxu0 %v99
  %123 = vmatmul.bf16.gmra.mxu0 %v63
  %v124 = vpop.f32.mrf.mxu0
  %v125 = vadd.f32 0.0, %v124
  %v126 = vpop.f32.mrf.mxu0
  %v127 = vadd.f32 0.0, %v126
  %128 = vmatmul.bf16.gmra.mxu0 %v64
  %v129 = vpop.f32.mrf.mxu0
  %v130 = vadd.f32 0.0, %v129
  %v131 = vpop.f32.mrf.mxu0
  %v132 = vadd.f32 0.0, %v131
  %133 = vdwg.mxu0
  %v134 = vadd.f32 %v35, %v125
  %v135 = vadd.f32 %v36, %v127
  %v136 = vadd.f32 %v37, %v130
  %v137 = vadd.f32 %v38, %v132
  %138 = vst [vmem:[#allocation2] sm:$0xff] %v134
  %139 = vst [vmem:[#allocation2 + $0x8] sm:$0xff] %v135
  %140 = vst [vmem:[#allocation2 + $0x10] sm:$0xff] %v136
  %141 = vst [vmem:[#allocation2 + $0x18] sm:$0xff] %v137
  // Predicated region
  $region30: #{forward.78} parent=0 // pred_check
    %p142 = pneg %p23
  $region31: #{forward.78} parent=0 // pred_check_branch
    %144 = sbr.rel (%p142) target = $region33
  $region32: #{forward.78} parent=0 // pred_region
    %v145 = vld [vmem:[#allocation2] sm:$0xff]
    %v146 = vld [vmem:[#allocation2 + $0x8] sm:$0xff]
    %v147 = vld [vmem:[#allocation2 + $0x10] sm:$0xff]
    %v148 = vld [vmem:[#allocation2 + $0x18] sm:$0xff]
    %v149 = vpack.c.bf16 %v145, %v145
    %v150 = vpack.c.bf16 %v146, %v146
    %v151 = vpack.c.bf16 %v147, %v147
    %v152 = vpack.c.bf16 %v148, %v148
    %153 = vst [vmem:[%s6] sm:$0xf] %v149
    %154 = vst [vmem:[%s6 + $0x4] sm:$0xf] %v150
    %155 = vst [vmem:[%s6 + $0x8] sm:$0xf] %v151
    %156 = vst [vmem:[%s6 + $0xc] sm:$0xf] %v152
  $region33: #{forward.78} parent=0 // pred_fallthru
    _
  // Predicated region
  $region34: #{forward.78} parent=0 // pred_check
    _
  $region35: #{forward.78} parent=0 // pred_check_branch
    %158 = sbr.rel (0) target = $region37
  $region36: #{forward.78} parent=0 // pred_region
    _
  $region37: #{forward.78} parent=0 // pred_fallthru
    _
  // Predicated region
  $region38: #{forward.78} parent=0 // pred_check
    _
  $region39: #{forward.78} parent=0 // pred_check_branch
    %160 = sbr.rel (0) target = $region41
  $region40: #{forward.78} parent=0 // pred_region
    _
  $region41: #{forward.78} parent=0 // pred_fallthru
    _

// kernel: forward.77
$region0: #{forward.77}
  #allocation0 [shape = 'u32[]', space=smem, size = 0x4, offset = 0x4, fixed_abs, tag = 'smem constant byte address 0x4 - core index']
  #allocation1 [shape = 'u32[72,128]{1,0:T(1,128)}', space=vmem, size = 0x9000, scoped, tag = 'internal scratch']
  %s0 = inlined_call_operand.vmem [shape: bf16[8,2,4,32], index: 0, kind: input, shape index: {}]
  %s1 = inlined_call_operand.vmem [shape: f32[1,16], index: 1, kind: input, shape index: {}]
  %s2 = inlined_call_operand.vmem [shape: f32[1,16], index: 2, kind: input, shape index: {}]
  %s3 = inlined_call_operand.vmem [shape: bf16[8,4,16], index: 3, kind: output, shape index: {}]
  %s4 = sld [smem:[#allocation0]]
  $region22: #{forward.77} parent=0
    _
  %s6 = ssub.s32 1, %s4
  %s7 = scalar_select 0, %s6, %s4
  // Predicated region
  $region2: #{forward.77} parent=0 // pred_check
    _
  $region3: #{forward.77} parent=0 // pred_check_branch
    %9 = sbr.rel (0) target = $region5
  $region4: #{forward.77} parent=0 // pred_region
    _
  $region5: #{forward.77} parent=0 // pred_fallthru
    _
  // Predicated region
  $region6: #{forward.77} parent=0 // pred_check
    _
  $region7: #{forward.77} parent=0 // pred_check_branch
    %11 = sbr.rel (0) target = $region9
  $region8: #{forward.77} parent=0 // pred_region
    _
  $region9: #{forward.77} parent=0 // pred_fallthru
    _
  // Predicated region
  $region10: #{forward.77} parent=0 // pred_check
    _
  $region11: #{forward.77} parent=0 // pred_check_branch
    %13 = sbr.rel (0) target = $region13
  $region12: #{forward.77} parent=0 // pred_region
    _
  $region13: #{forward.77} parent=0 // pred_fallthru
    _
  %v14 = vld [vmem:[%s1] sm:$0x1]
  %v15 = vld [vmem:[%s2] sm:$0x1]
  %v16 = vld [vmem:[%s0] sm:$0x3]
  %v17 = vld [vmem:[%s0 + $0x4] sm:$0x3]
  %v18 = vld [vmem:[%s0 + $0x8] sm:$0x3]
  %v19 = vld [vmem:[%s0 + $0xc] sm:$0x3]
  %v20 = vld [vmem:[%s0 + $0x10] sm:$0x3]
  %v21 = vld [vmem:[%s0 + $0x14] sm:$0x3]
  %v22 = vld [vmem:[%s0 + $0x18] sm:$0x3]
  %v23 = vld [vmem:[%s0 + $0x1c] sm:$0x3]
  %s24 = scalar_lea.vmem %s0, 2
  %v25 = vld [vmem:[%s24] sm:$0x3]
  %v26 = vld [vmem:[%s24 + $0x4] sm:$0x3]
  %v27 = vld [vmem:[%s24 + $0x8] sm:$0x3]
  %v28 = vld [vmem:[%s24 + $0xc] sm:$0x3]
  %v29 = vld [vmem:[%s24 + $0x10] sm:$0x3]
  %v30 = vld [vmem:[%s24 + $0x14] sm:$0x3]
  %v31 = vld [vmem:[%s24 + $0x18] sm:$0x3]
  %v32 = vld [vmem:[%s24 + $0x1c] sm:$0x3]
  %v33 = vunpack.c.l.bf16 %v16
  %v34 = vunpack.c.l.bf16 %v17
  %v35 = vunpack.c.l.bf16 %v18
  %v36 = vunpack.c.l.bf16 %v19
  %v37 = vunpack.c.l.bf16 %v20
  %v38 = vunpack.c.l.bf16 %v21
  %v39 = vunpack.c.l.bf16 %v22
  %v40 = vunpack.c.l.bf16 %v23
  %v42 = vperm.slane %v14, 0
  %v44 = vmul.f32 %v33, %v42
  %v45 = vmul.f32 %v34, %v42
  %v46 = vmul.f32 %v35, %v42
  %v47 = vmul.f32 %v36, %v42
  %v48 = vmul.f32 %v37, %v42
  %v49 = vmul.f32 %v38, %v42
  %v50 = vmul.f32 %v39, %v42
  %v51 = vmul.f32 %v40, %v42
  %v53 = vperm.slane %v15, 0
  %v55 = vadd.f32 %v44, %v53
  %v56 = vadd.f32 %v45, %v53
  %v57 = vadd.f32 %v46, %v53
  %v58 = vadd.f32 %v47, %v53
  %v59 = vadd.f32 %v48, %v53
  %v60 = vadd.f32 %v49, %v53
  %v61 = vadd.f32 %v50, %v53
  %v62 = vadd.f32 %v51, %v53
  %v63 = vmax.f32 %v55, 0.0
  %v64 = vmax.f32 %v56, 0.0
  %v65 = vmax.f32 %v57, 0.0
  %v66 = vmax.f32 %v58, 0.0
  %v67 = vmax.f32 %v59, 0.0
  %v68 = vmax.f32 %v60, 0.0
  %v69 = vmax.f32 %v61, 0.0
  %v70 = vmax.f32 %v62, 0.0
  %71 = vrot.lane.b32.xlu0 %v42, 16
  %v72 = vpop.permute.xlu0 %71
  %v74 = vmul.f32 %v33, %v72
  %v75 = vmul.f32 %v34, %v72
  %v76 = vmul.f32 %v35, %v72
  %v77 = vmul.f32 %v36, %v72
  %v78 = vmul.f32 %v37, %v72
  %v79 = vmul.f32 %v38, %v72
  %v80 = vmul.f32 %v39, %v72
  %v81 = vmul.f32 %v40, %v72
  %82 = vrot.lane.b32.xlu0 %v53, 16
  %v83 = vpop.permute.xlu0 %82
  %v85 = vadd.f32 %v74, %v83
  %v86 = vadd.f32 %v75, %v83
  %v87 = vadd.f32 %v76, %v83
  %v88 = vadd.f32 %v77, %v83
  %v89 = vadd.f32 %v78, %v83
  %v90 = vadd.f32 %v79, %v83
  %v91 = vadd.f32 %v80, %v83
  %v92 = vadd.f32 %v81, %v83
  %v93 = vmax.f32 %v85, 0.0
  %v94 = vmax.f32 %v86, 0.0
  %v95 = vmax.f32 %v87, 0.0
  %v96 = vmax.f32 %v88, 0.0
  %v97 = vmax.f32 %v89, 0.0
  %v98 = vmax.f32 %v90, 0.0
  %v99 = vmax.f32 %v91, 0.0
  %v100 = vmax.f32 %v92, 0.0
  %109 = vrot.lane.b32.xlu0 %v93, 112
  %v110 = vpop.permute.xlu0 %109
  %111 = vrot.lane.b32.xlu0 %v94, 112
  %v112 = vpop.permute.xlu0 %111
  %113 = vrot.lane.b32.xlu0 %v95, 112
  %v114 = vpop.permute.xlu0 %113
  %115 = vrot.lane.b32.xlu0 %v96, 112
  %v116 = vpop.permute.xlu0 %115
  %117 = vrot.lane.b32.xlu0 %v97, 112
  %v118 = vpop.permute.xlu0 %117
  %119 = vrot.lane.b32.xlu0 %v98, 112
  %v120 = vpop.permute.xlu0 %119
  %121 = vrot.lane.b32.xlu0 %v99, 112
  %v122 = vpop.permute.xlu0 %121
  %123 = vrot.lane.b32.xlu0 %v100, 112
  %v124 = vpop.permute.xlu0 %123
  %v133 = vadd.f32 %v63, %v110
  %v134 = vadd.f32 %v64, %v112
  %v135 = vadd.f32 %v65, %v114
  %v136 = vadd.f32 %v66, %v116
  %v137 = vadd.f32 %v67, %v118
  %v138 = vadd.f32 %v68, %v120
  %v139 = vadd.f32 %v69, %v122
  %v140 = vadd.f32 %v70, %v124
  %v141 = vunpack.c.l.bf16 %v25
  %v142 = vunpack.c.l.bf16 %v26
  %v143 = vunpack.c.l.bf16 %v27
  %v144 = vunpack.c.l.bf16 %v28
  %v145 = vunpack.c.l.bf16 %v29
  %v146 = vunpack.c.l.bf16 %v30
  %v147 = vunpack.c.l.bf16 %v31
  %v148 = vunpack.c.l.bf16 %v32
  %v149 = vmul.f32 %v141, %v42
  %v150 = vmul.f32 %v142, %v42
  %v151 = vmul.f32 %v143, %v42
  %v152 = vmul.f32 %v144, %v42
  %v153 = vmul.f32 %v145, %v42
  %v154 = vmul.f32 %v146, %v42
  %v155 = vmul.f32 %v147, %v42
  %v156 = vmul.f32 %v148, %v42
  %v157 = vadd.f32 %v149, %v53
  %v158 = vadd.f32 %v150, %v53
  %v159 = vadd.f32 %v151, %v53
  %v160 = vadd.f32 %v152, %v53
  %v161 = vadd.f32 %v153, %v53
  %v162 = vadd.f32 %v154, %v53
  %v163 = vadd.f32 %v155, %v53
  %v164 = vadd.f32 %v156, %v53
  %v165 = vmax.f32 %v157, 0.0
  %v166 = vmax.f32 %v158, 0.0
  %v167 = vmax.f32 %v159, 0.0
  %v168 = vmax.f32 %v160, 0.0
  %v169 = vmax.f32 %v161, 0.0
  %v170 = vmax.f32 %v162, 0.0
  %v171 = vmax.f32 %v163, 0.0
  %v172 = vmax.f32 %v164, 0.0
  %v173 = vadd.f32 %v133, %v165
  %v174 = vadd.f32 %v134, %v166
  %v175 = vadd.f32 %v135, %v167
  %v176 = vadd.f32 %v136, %v168
  %v177 = vadd.f32 %v137, %v169
  %v178 = vadd.f32 %v138, %v170
  %v179 = vadd.f32 %v139, %v171
  %v180 = vadd.f32 %v140, %v172
  %v181 = vmul.f32 %v141, %v72
  %v182 = vmul.f32 %v142, %v72
  %v183 = vmul.f32 %v143, %v72
  %v184 = vmul.f32 %v144, %v72
  %v185 = vmul.f32 %v145, %v72
  %v186 = vmul.f32 %v146, %v72
  %v187 = vmul.f32 %v147, %v72
  %v188 = vmul.f32 %v148, %v72
  %v189 = vadd.f32 %v181, %v83
  %v190 = vadd.f32 %v182, %v83
  %v191 = vadd.f32 %v183, %v83
  %v192 = vadd.f32 %v184, %v83
  %v193 = vadd.f32 %v185, %v83
  %v194 = vadd.f32 %v186, %v83
  %v195 = vadd.f32 %v187, %v83
  %v196 = vadd.f32 %v188, %v83
  %v197 = vmax.f32 %v189, 0.0
  %v198 = vmax.f32 %v190, 0.0
  %v199 = vmax.f32 %v191, 0.0
  %v200 = vmax.f32 %v192, 0.0
  %v201 = vmax.f32 %v193, 0.0
  %v202 = vmax.f32 %v194, 0.0
  %v203 = vmax.f32 %v195, 0.0
  %v204 = vmax.f32 %v196, 0.0
  %213 = vrot.lane.b32.xlu0 %v197, 112
  %v214 = vpop.permute.xlu0 %213
  %215 = vrot.lane.b32.xlu0 %v198, 112
  %v216 = vpop.permute.xlu0 %215
  %217 = vrot.lane.b32.xlu0 %v199, 112
  %v218 = vpop.permute.xlu0 %217
  %219 = vrot.lane.b32.xlu0 %v200, 112
  %v220 = vpop.permute.xlu0 %219
  %221 = vrot.lane.b32.xlu0 %v201, 112
  %v222 = vpop.permute.xlu0 %221
  %223 = vrot.lane.b32.xlu0 %v202, 112
  %v224 = vpop.permute.xlu0 %223
  %225 = vrot.lane.b32.xlu0 %v203, 112
  %v226 = vpop.permute.xlu0 %225
  %227 = vrot.lane.b32.xlu0 %v204, 112
  %v228 = vpop.permute.xlu0 %227
  %v237 = vadd.f32 %v173, %v214
  %v238 = vadd.f32 %v174, %v216
  %v239 = vadd.f32 %v175, %v218
  %v240 = vadd.f32 %v176, %v220
  %v241 = vadd.f32 %v177, %v222
  %v242 = vadd.f32 %v178, %v224
  %v243 = vadd.f32 %v179, %v226
  %v244 = vadd.f32 %v180, %v228
  %v245 = vmul.f32 %v237, 0.25
  %v246 = vmul.f32 %v238, 0.25
  %v247 = vmul.f32 %v239, 0.25
  %v248 = vmul.f32 %v240, 0.25
  %v249 = vmul.f32 %v241, 0.25
  %v250 = vmul.f32 %v242, 0.25
  %v251 = vmul.f32 %v243, 0.25
  %v252 = vmul.f32 %v244, 0.25
  %v253 = vpack.c.bf16 %v245, %v245
  %v254 = vpack.c.bf16 %v246, %v246
  %v255 = vpack.c.bf16 %v247, %v247
  %v256 = vpack.c.bf16 %v248, %v248
  %v257 = vpack.c.bf16 %v249, %v249
  %v258 = vpack.c.bf16 %v250, %v250
  %v259 = vpack.c.bf16 %v251, %v251
  %v260 = vpack.c.bf16 %v252, %v252
  %vm261 = vcmask 123904
  %262 = vst.msk [vmem:[%s3] sm:$0x3] %vm261, %v253
  %263 = vst.msk [vmem:[%s3 + $0x2] sm:$0x3] %vm261, %v254
  %264 = vst.msk [vmem:[%s3 + $0x4] sm:$0x3] %vm261, %v255
  %265 = vst.msk [vmem:[%s3 + $0x6] sm:$0x3] %vm261, %v256
  %266 = vst.msk [vmem:[%s3 + $0x8] sm:$0x3] %vm261, %v257
  %267 = vst.msk [vmem:[%s3 + $0xa] sm:$0x3] %vm261, %v258
  %268 = vst.msk [vmem:[%s3 + $0xc] sm:$0x3] %vm261, %v259
  %269 = vst.msk [vmem:[%s3 + $0xe] sm:$0x3] %vm261, %v260
  // Predicated region
  $region14: #{forward.77} parent=0 // pred_check
    _
  $region15: #{forward.77} parent=0 // pred_check_branch
    %271 = sbr.rel (0) target = $region17
  $region16: #{forward.77} parent=0 // pred_region
    _
  $region17: #{forward.77} parent=0 // pred_fallthru
    _
  // Predicated region
  $region18: #{forward.77} parent=0 // pred_check
    _
  $region19: #{forward.77} parent=0 // pred_check_branch
    %273 = sbr.rel (0) target = $region21
  $region20: #{forward.77} parent=0 // pred_region
    _
  $region21: #{forward.77} parent=0 // pred_fallthru
    _

// kernel: forward.79
$region0: #{forward.79}
  #allocation0 [shape = 'u32[]', space=smem, size = 0x4, offset = 0x4, fixed_abs, tag = 'smem constant byte address 0x4 - core index']
  #allocation1 [shape = 'u32[72,128]{1,0:T(1,128)}', space=vmem, size = 0x9000, scoped, tag = 'internal scratch']
  #allocation2 [shape = 'f32[32,128]{1,0:T(8,128)}', space=vmem, size = 0x4000, scoped, tag = 'scratch operand']
  %s0 = inlined_call_operand.vmem [shape: bf16[32,128], index: 0, kind: input, shape index: {}]
  %s1 = inlined_call_operand.vmem [shape: bf16[128,128], index: 1, kind: input, shape index: {}]
  %s2 = inlined_call_operand.vmem [shape: f32[1,128], index: 2, kind: input, shape index: {}]
  %s3 = inlined_call_operand.vmem [shape: f32[1,128], index: 3, kind: input, shape index: {}]
  %s4 = inlined_call_operand.vmem [shape: f32[1,128], index: 4, kind: input, shape index: {}]
  %s5 = inlined_call_operand.vmem [shape: f32[1,128], index: 5, kind: input, shape index: {}]
  %s6 = inlined_call_operand.vmem [shape: bf16[32,128], index: 6, kind: output, shape index: {}]
  %s7 = sld [smem:[#allocation0]]
  $region42: #{forward.79} parent=0
    _
  %s9 = ssub.s32 1, %s7
  %s10 = scalar_select 0, %s9, %s7
  // Predicated region
  $region2: #{forward.79} parent=0 // pred_check
    _
  $region3: #{forward.79} parent=0 // pred_check_branch
    %12 = sbr.rel (0) target = $region5
  $region4: #{forward.79} parent=0 // pred_region
    _
  $region5: #{forward.79} parent=0 // pred_fallthru
    _
  // Predicated region
  $region6: #{forward.79} parent=0 // pred_check
    _
  $region7: #{forward.79} parent=0 // pred_check_branch
    %14 = sbr.rel (0) target = $region9
  $region8: #{forward.79} parent=0 // pred_region
    _
  $region9: #{forward.79} parent=0 // pred_fallthru
    _
  // Predicated region
  $region10: #{forward.79} parent=0 // pred_check
    _
  $region11: #{forward.79} parent=0 // pred_check_branch
    %16 = sbr.rel (0) target = $region13
  $region12: #{forward.79} parent=0 // pred_region
    _
  $region13: #{forward.79} parent=0 // pred_fallthru
    _
  // Predicated region
  $region14: #{forward.79} parent=0 // pred_check
    _
  $region15: #{forward.79} parent=0 // pred_check_branch
    %18 = sbr.rel (0) target = $region17
  $region16: #{forward.79} parent=0 // pred_region
    _
  $region17: #{forward.79} parent=0 // pred_fallthru
    _
  // Predicated region
  $region18: #{forward.79} parent=0 // pred_check
    _
  $region19: #{forward.79} parent=0 // pred_check_branch
    %20 = sbr.rel (0) target = $region21
  $region20: #{forward.79} parent=0 // pred_region
    _
  $region21: #{forward.79} parent=0 // pred_fallthru
    _
  // Predicated region
  $region22: #{forward.79} parent=0 // pred_check
    _
  $region23: #{forward.79} parent=0 // pred_check_branch
    %22 = sbr.rel (0) target = $region25
  $region24: #{forward.79} parent=0 // pred_region
    _
  $region25: #{forward.79} parent=0 // pred_fallthru
    _
  %p23 = scmp.eq.s32.totalorder 0, 0
  // Predicated region
  $region26: #{forward.79} parent=0 // pred_check
    %p24 = pneg %p23
  $region27: #{forward.79} parent=0 // pred_check_branch
    %26 = sbr.rel (%p24) target = $region29
  $region28: #{forward.79} parent=0 // pred_region
    %27 = vst [vmem:[#allocation2] sm:$0xff] 0.0
    %28 = vst [vmem:[#allocation2 + $0x8] sm:$0xff] 0.0
    %29 = vst [vmem:[#allocation2 + $0x10] sm:$0xff] 0.0
    %30 = vst [vmem:[#allocation2 + $0x18] sm:$0xff] 0.0
  $region29: #{forward.79} parent=0 // pred_fallthru
    _
  %v31 = vld [vmem:[%s0] sm:$0xf]
  %v32 = vld [vmem:[%s0 + $0x4] sm:$0xf]
  %v33 = vld [vmem:[%s0 + $0x8] sm:$0xf]
  %v34 = vld [vmem:[%s0 + $0xc] sm:$0xf]
  %v35 = vld [vmem:[#allocation2] sm:$0xff]
  %v36 = vld [vmem:[#allocation2 + $0x8] sm:$0xff]
  %v37 = vld [vmem:[#allocation2 + $0x10] sm:$0xff]
  %v38 = vld [vmem:[#allocation2 + $0x18] sm:$0xff]
  %v39 = vld [vmem:[%s1] sm:$0xf]
  %v40 = vld [vmem:[%s1 + $0x4] sm:$0xf]
  %v41 = vld [vmem:[%s1 + $0x8] sm:$0xf]
  %v42 = vld [vmem:[%s1 + $0xc] sm:$0xf]
  %v43 = vld [vmem:[%s1 + $0x10] sm:$0xf]
  %v44 = vld [vmem:[%s1 + $0x14] sm:$0xf]
  %v45 = vld [vmem:[%s1 + $0x18] sm:$0xf]
  %v46 = vld [vmem:[%s1 + $0x1c] sm:$0xf]
  %v47 = vld [vmem:[%s1 + $0x20] sm:$0xf]
  %v48 = vld [vmem:[%s1 + $0x24] sm:$0xf]
  %v49 = vld [vmem:[%s1 + $0x28] sm:$0xf]
  %v50 = vld [vmem:[%s1 + $0x2c] sm:$0xf]
  %v51 = vld [vmem:[%s1 + $0x30] sm:$0xf]
  %v52 = vld [vmem:[%s1 + $0x34] sm:$0xf]
  %v53 = vld [vmem:[%s1 + $0x38] sm:$0xf]
  %v54 = vld [vmem:[%s1 + $0x3c] sm:$0xf]
  %v59 = vunpack.c.l.b16 %v31
  %v60 = vunpack.c.l.b16 %v32
  %v61 = vunpack.c.l.b16 %v33
  %v62 = vunpack.c.l.b16 %v34
  %v63 = vpack.c.b16 %v60, %v59
  %v64 = vpack.c.b16 %v62, %v61
  %v83 = vunpack.c.l.b16 %v39
  %v84 = vunpack.c.l.b16 %v40
  %v85 = vunpack.c.l.b16 %v41
  %v86 = vunpack.c.l.b16 %v42
  %v87 = vunpack.c.l.b16 %v43
  %v88 = vunpack.c.l.b16 %v44
  %v89 = vunpack.c.l.b16 %v45
  %v90 = vunpack.c.l.b16 %v46
  %v91 = vunpack.c.l.b16 %v47
  %v92 = vunpack.c.l.b16 %v48
  %v93 = vunpack.c.l.b16 %v49
  %v94 = vunpack.c.l.b16 %v50
  %v95 = vunpack.c.l.b16 %v51
  %v96 = vunpack.c.l.b16 %v52
  %v97 = vunpack.c.l.b16 %v53
  %v98 = vunpack.c.l.b16 %v54
  %v99 = vpack.c.b16 %v84, %v83
  %v100 = vpack.c.b16 %v86, %v85
  %v101 = vpack.c.b16 %v88, %v87
  %v102 = vpack.c.b16 %v90, %v89
  %v103 = vpack.c.b16 %v92, %v91
  %v104 = vpack.c.b16 %v94, %v93
  %v105 = vpack.c.b16 %v96, %v95
  %v106 = vpack.c.b16 %v98, %v97
  %115 = vmatpush.bf16.msra.mxu0 %v106
  %116 = vmatpush.bf16.msra.mxu0 %v105
  %117 = vmatpush.bf16.msra.mxu0 %v104
  %118 = vmatpush.bf16.msra.mxu0 %v103
  %119 = vmatpush.bf16.msra.mxu0 %v102
  %120 = vmatpush.bf16.msra.mxu0 %v101
  %121 = vmatpush.bf16.msra.mxu0 %v100
  %122 = vmatpush.bf16.msra.mxu0 %v99
  %123 = vmatmul.bf16.gmra.mxu0 %v63
  %v124 = vpop.f32.mrf.mxu0
  %v125 = vadd.f32 0.0, %v124
  %v126 = vpop.f32.mrf.mxu0
  %v127 = vadd.f32 0.0, %v126
  %128 = vmatmul.bf16.gmra.mxu0 %v64
  %v129 = vpop.f32.mrf.mxu0
  %v130 = vadd.f32 0.0, %v129
  %v131 = vpop.f32.mrf.mxu0
  %v132 = vadd.f32 0.0, %v131
  %133 = vdwg.mxu0
  %v134 = vadd.f32 %v35, %v125
  %v135 = vadd.f32 %v36, %v127
  %v136 = vadd.f32 %v37, %v130
  %v137 = vadd.f32 %v38, %v132
  %138 = vst [vmem:[#allocation2] sm:$0xff] %v134
  %139 = vst [vmem:[#allocation2 + $0x8] sm:$0xff] %v135
  %140 = vst [vmem:[#allocation2 + $0x10] sm:$0xff] %v136
  %141 = vst [vmem:[#allocation2 + $0x18] sm:$0xff] %v137
  // Predicated region
  $region30: #{forward.79} parent=0 // pred_check
    %p142 = pneg %p23
  $region31: #{forward.79} parent=0 // pred_check_branch
    %144 = sbr.rel (%p142) target = $region33
  $region32: #{forward.79} parent=0 // pred_region
    %v145 = vld [vmem:[#allocation2] sm:$0xff]
    %v146 = vld [vmem:[#allocation2 + $0x8] sm:$0xff]
    %v147 = vld [vmem:[#allocation2 + $0x10] sm:$0xff]
    %v148 = vld [vmem:[#allocation2 + $0x18] sm:$0xff]
    %v149 = vld [vmem:[%s4] sm:$0x1]
    %v151 = vperm.slane %v149, 0
    %v153 = vmul.f32 %v145, %v151
    %v154 = vmul.f32 %v146, %v151
    %v155 = vmul.f32 %v147, %v151
    %v156 = vmul.f32 %v148, %v151
    %v157 = vld [vmem:[%s5] sm:$0x1]
    %v159 = vperm.slane %v157, 0
    %v161 = vadd.f32 %v153, %v159
    %v162 = vadd.f32 %v154, %v159
    %v163 = vadd.f32 %v155, %v159
    %v164 = vadd.f32 %v156, %v159
    %v165 = vmax.f32 %v161, 0.0
    %v166 = vmax.f32 %v162, 0.0
    %v167 = vmax.f32 %v163, 0.0
    %v168 = vmax.f32 %v164, 0.0
    %v169 = vpack.c.bf16 %v165, %v165
    %v170 = vpack.c.bf16 %v166, %v166
    %v171 = vpack.c.bf16 %v167, %v167
    %v172 = vpack.c.bf16 %v168, %v168
    %173 = vst [vmem:[%s6] sm:$0xf] %v169
    %174 = vst [vmem:[%s6 + $0x4] sm:$0xf] %v170
    %175 = vst [vmem:[%s6 + $0x8] sm:$0xf] %v171
    %176 = vst [vmem:[%s6 + $0xc] sm:$0xf] %v172
  $region33: #{forward.79} parent=0 // pred_fallthru
    _
  // Predicated region
  $region34: #{forward.79} parent=0 // pred_check
    _
  $region35: #{forward.79} parent=0 // pred_check_branch
    %178 = sbr.rel (0) target = $region37
  $region36: #{forward.79} parent=0 // pred_region
    _
  $region37: #{forward.79} parent=0 // pred_fallthru
    _
  // Predicated region
  $region38: #{forward.79} parent=0 // pred_check
    _
  $region39: #{forward.79} parent=0 // pred_check_branch
    %180 = sbr.rel (0) target = $region41
  $region40: #{forward.79} parent=0 // pred_region
    _
  $region41: #{forward.79} parent=0 // pred_fallthru
    _

// kernel: forward.80
$region0: #{forward.80}
  #allocation0 [shape = 'u32[]', space=smem, size = 0x4, offset = 0x4, fixed_abs, tag = 'smem constant byte address 0x4 - core index']
  #allocation1 [shape = 'u32[72,128]{1,0:T(1,128)}', space=vmem, size = 0x9000, scoped, tag = 'internal scratch']
  #allocation2 [shape = 'f32[32,128]{1,0:T(8,128)}', space=vmem, size = 0x4000, scoped, tag = 'scratch operand']
  %s0 = inlined_call_operand.vmem [shape: bf16[32,128], index: 0, kind: input, shape index: {}]
  %s1 = inlined_call_operand.vmem [shape: bf16[128,128], index: 1, kind: input, shape index: {}]
  %s2 = inlined_call_operand.vmem [shape: f32[1,128], index: 2, kind: input, shape index: {}]
  %s3 = inlined_call_operand.vmem [shape: f32[1,128], index: 3, kind: input, shape index: {}]
  %s4 = inlined_call_operand.vmem [shape: f32[1,128], index: 4, kind: input, shape index: {}]
  %s5 = inlined_call_operand.vmem [shape: f32[1,128], index: 5, kind: input, shape index: {}]
  %s6 = inlined_call_operand.vmem [shape: bf16[32,128], index: 6, kind: output, shape index: {}]
  %s7 = sld [smem:[#allocation0]]
  $region42: #{forward.80} parent=0
    _
  %s9 = ssub.s32 1, %s7
  %s10 = scalar_select 0, %s9, %s7
  // Predicated region
  $region2: #{forward.80} parent=0 // pred_check
    _
  $region3: #{forward.80} parent=0 // pred_check_branch
    %12 = sbr.rel (0) target = $region5
  $region4: #{forward.80} parent=0 // pred_region
    _
  $region5: #{forward.80} parent=0 // pred_fallthru
    _
  // Predicated region
  $region6: #{forward.80} parent=0 // pred_check
    _
  $region7: #{forward.80} parent=0 // pred_check_branch
    %14 = sbr.rel (0) target = $region9
  $region8: #{forward.80} parent=0 // pred_region
    _
  $region9: #{forward.80} parent=0 // pred_fallthru
    _
  // Predicated region
  $region10: #{forward.80} parent=0 // pred_check
    _
  $region11: #{forward.80} parent=0 // pred_check_branch
    %16 = sbr.rel (0) target = $region13
  $region12: #{forward.80} parent=0 // pred_region
    _
  $region13: #{forward.80} parent=0 // pred_fallthru
    _
  // Predicated region
  $region14: #{forward.80} parent=0 // pred_check
    _
  $region15: #{forward.80} parent=0 // pred_check_branch
    %18 = sbr.rel (0) target = $region17
  $region16: #{forward.80} parent=0 // pred_region
    _
  $region17: #{forward.80} parent=0 // pred_fallthru
    _
  // Predicated region
  $region18: #{forward.80} parent=0 // pred_check
    _
  $region19: #{forward.80} parent=0 // pred_check_branch
    %20 = sbr.rel (0) target = $region21
  $region20: #{forward.80} parent=0 // pred_region
    _
  $region21: #{forward.80} parent=0 // pred_fallthru
    _
  // Predicated region
  $region22: #{forward.80} parent=0 // pred_check
    _
  $region23: #{forward.80} parent=0 // pred_check_branch
    %22 = sbr.rel (0) target = $region25
  $region24: #{forward.80} parent=0 // pred_region
    _
  $region25: #{forward.80} parent=0 // pred_fallthru
    _
  %p23 = scmp.eq.s32.totalorder 0, 0
  // Predicated region
  $region26: #{forward.80} parent=0 // pred_check
    %p24 = pneg %p23
  $region27: #{forward.80} parent=0 // pred_check_branch
    %26 = sbr.rel (%p24) target = $region29
  $region28: #{forward.80} parent=0 // pred_region
    %27 = vst [vmem:[#allocation2] sm:$0xff] 0.0
    %28 = vst [vmem:[#allocation2 + $0x8] sm:$0xff] 0.0
    %29 = vst [vmem:[#allocation2 + $0x10] sm:$0xff] 0.0
    %30 = vst [vmem:[#allocation2 + $0x18] sm:$0xff] 0.0
  $region29: #{forward.80} parent=0 // pred_fallthru
    _
  %v31 = vld [vmem:[%s0] sm:$0xf]
  %v32 = vld [vmem:[%s0 + $0x4] sm:$0xf]
  %v33 = vld [vmem:[%s0 + $0x8] sm:$0xf]
  %v34 = vld [vmem:[%s0 + $0xc] sm:$0xf]
  %v35 = vunpack.c.l.bf16 %v31
  %v36 = vunpack.c.l.bf16 %v32
  %v37 = vunpack.c.l.bf16 %v33
  %v38 = vunpack.c.l.bf16 %v34
  %v39 = vld [vmem:[%s2] sm:$0x1]
  %v41 = vperm.slane %v39, 0
  %v43 = vmul.f32 %v35, %v41
  %v44 = vmul.f32 %v36, %v41
  %v45 = vmul.f32 %v37, %v41
  %v46 = vmul.f32 %v38, %v41
  %v47 = vld [vmem:[%s3] sm:$0x1]
  %v49 = vperm.slane %v47, 0
  %v51 = vadd.f32 %v43, %v49
  %v52 = vadd.f32 %v44, %v49
  %v53 = vadd.f32 %v45, %v49
  %v54 = vadd.f32 %v46, %v49
  %v55 = vmax.f32 %v51, 0.0
  %v56 = vmax.f32 %v52, 0.0
  %v57 = vmax.f32 %v53, 0.0
  %v58 = vmax.f32 %v54, 0.0
  %v59 = vpack.c.bf16 %v56, %v55
  %v60 = vpack.c.bf16 %v58, %v57
  %v61 = vld [vmem:[#allocation2] sm:$0xff]
  %v62 = vld [vmem:[#allocation2 + $0x8] sm:$0xff]
  %v63 = vld [vmem:[#allocation2 + $0x10] sm:$0xff]
  %v64 = vld [vmem:[#allocation2 + $0x18] sm:$0xff]
  %v65 = vld [vmem:[%s1] sm:$0xf]
  %v66 = vld [vmem:[%s1 + $0x4] sm:$0xf]
  %v67 = vld [vmem:[%s1 + $0x8] sm:$0xf]
  %v68 = vld [vmem:[%s1 + $0xc] sm:$0xf]
  %v69 = vld [vmem:[%s1 + $0x10] sm:$0xf]
  %v70 = vld [vmem:[%s1 + $0x14] sm:$0xf]
  %v71 = vld [vmem:[%s1 + $0x18] sm:$0xf]
  %v72 = vld [vmem:[%s1 + $0x1c] sm:$0xf]
  %v73 = vld [vmem:[%s1 + $0x20] sm:$0xf]
  %v74 = vld [vmem:[%s1 + $0x24] sm:$0xf]
  %v75 = vld [vmem:[%s1 + $0x28] sm:$0xf]
  %v76 = vld [vmem:[%s1 + $0x2c] sm:$0xf]
  %v77 = vld [vmem:[%s1 + $0x30] sm:$0xf]
  %v78 = vld [vmem:[%s1 + $0x34] sm:$0xf]
  %v79 = vld [vmem:[%s1 + $0x38] sm:$0xf]
  %v80 = vld [vmem:[%s1 + $0x3c] sm:$0xf]
  %v97 = vunpack.c.l.b16 %v65
  %v98 = vunpack.c.l.b16 %v66
  %v99 = vunpack.c.l.b16 %v67
  %v100 = vunpack.c.l.b16 %v68
  %v101 = vunpack.c.l.b16 %v69
  %v102 = vunpack.c.l.b16 %v70
  %v103 = vunpack.c.l.b16 %v71
  %v104 = vunpack.c.l.b16 %v72
  %v105 = vunpack.c.l.b16 %v73
  %v106 = vunpack.c.l.b16 %v74
  %v107 = vunpack.c.l.b16 %v75
  %v108 = vunpack.c.l.b16 %v76
  %v109 = vunpack.c.l.b16 %v77
  %v110 = vunpack.c.l.b16 %v78
  %v111 = vunpack.c.l.b16 %v79
  %v112 = vunpack.c.l.b16 %v80
  %v113 = vpack.c.b16 %v98, %v97
  %v114 = vpack.c.b16 %v100, %v99
  %v115 = vpack.c.b16 %v102, %v101
  %v116 = vpack.c.b16 %v104, %v103
  %v117 = vpack.c.b16 %v106, %v105
  %v118 = vpack.c.b16 %v108, %v107
  %v119 = vpack.c.b16 %v110, %v109
  %v120 = vpack.c.b16 %v112, %v111
  %129 = vmatpush.bf16.msra.mxu0 %v120
  %130 = vmatpush.bf16.msra.mxu0 %v119
  %131 = vmatpush.bf16.msra.mxu0 %v118
  %132 = vmatpush.bf16.msra.mxu0 %v117
  %133 = vmatpush.bf16.msra.mxu0 %v116
  %134 = vmatpush.bf16.msra.mxu0 %v115
  %135 = vmatpush.bf16.msra.mxu0 %v114
  %136 = vmatpush.bf16.msra.mxu0 %v113
  %137 = vmatmul.bf16.gmra.mxu0 %v59
  %v138 = vpop.f32.mrf.mxu0
  %v139 = vadd.f32 0.0, %v138
  %v140 = vpop.f32.mrf.mxu0
  %v141 = vadd.f32 0.0, %v140
  %142 = vmatmul.bf16.gmra.mxu0 %v60
  %v143 = vpop.f32.mrf.mxu0
  %v144 = vadd.f32 0.0, %v143
  %v145 = vpop.f32.mrf.mxu0
  %v146 = vadd.f32 0.0, %v145
  %147 = vdwg.mxu0
  %v148 = vadd.f32 %v61, %v139
  %v149 = vadd.f32 %v62, %v141
  %v150 = vadd.f32 %v63, %v144
  %v151 = vadd.f32 %v64, %v146
  %152 = vst [vmem:[#allocation2] sm:$0xff] %v148
  %153 = vst [vmem:[#allocation2 + $0x8] sm:$0xff] %v149
  %154 = vst [vmem:[#allocation2 + $0x10] sm:$0xff] %v150
  %155 = vst [vmem:[#allocation2 + $0x18] sm:$0xff] %v151
  // Predicated region
  $region30: #{forward.80} parent=0 // pred_check
    %p156 = pneg %p23
  $region31: #{forward.80} parent=0 // pred_check_branch
    %158 = sbr.rel (%p156) target = $region33
  $region32: #{forward.80} parent=0 // pred_region
    %v159 = vld [vmem:[#allocation2] sm:$0xff]
    %v160 = vld [vmem:[#allocation2 + $0x8] sm:$0xff]
    %v161 = vld [vmem:[#allocation2 + $0x10] sm:$0xff]
    %v162 = vld [vmem:[#allocation2 + $0x18] sm:$0xff]
    %v163 = vld [vmem:[%s4] sm:$0x1]
    %v165 = vperm.slane %v163, 0
    %v167 = vmul.f32 %v159, %v165
    %v168 = vmul.f32 %v160, %v165
    %v169 = vmul.f32 %v161, %v165
    %v170 = vmul.f32 %v162, %v165
    %v171 = vld [vmem:[%s5] sm:$0x1]
    %v173 = vperm.slane %v171, 0
    %v175 = vadd.f32 %v167, %v173
    %v176 = vadd.f32 %v168, %v173
    %v177 = vadd.f32 %v169, %v173
    %v178 = vadd.f32 %v170, %v173
    %v179 = vmax.f32 %v175, 0.0
    %v180 = vmax.f32 %v176, 0.0
    %v181 = vmax.f32 %v177, 0.0
    %v182 = vmax.f32 %v178, 0.0
    %v183 = vpack.c.bf16 %v179, %v179
    %v184 = vpack.c.bf16 %v180, %v180
    %v185 = vpack.c.bf16 %v181, %v181
    %v186 = vpack.c.bf16 %v182, %v182
    %187 = vst [vmem:[%s6] sm:$0xf] %v183
    %188 = vst [vmem:[%s6 + $0x4] sm:$0xf] %v184
    %189 = vst [vmem:[%s6 + $0x8] sm:$0xf] %v185
    %190 = vst [vmem:[%s6 + $0xc] sm:$0xf] %v186
  $region33: #{forward.80} parent=0 // pred_fallthru
    _
  // Predicated region
  $region34: #{forward.80} parent=0 // pred_check
    _
  $region35: #{forward.80} parent=0 // pred_check_branch
    %192 = sbr.rel (0) target = $region37
  $region36: #{forward.80} parent=0 // pred_region
    _
  $region37: #{forward.80} parent=0 // pred_fallthru
    _
  // Predicated region
  $region38: #{forward.80} parent=0 // pred_check
    _
  $region39: #{forward.80} parent=0 // pred_check_branch
    %194 = sbr.rel (0) target = $region41
  $region40: #{forward.80} parent=0 // pred_region
    _
  $region41: #{forward.80} parent=0 // pred_fallthru
    _

// kernel: forward.84
$region0: #{forward.84}
  #allocation0 [shape = 'u32[]', space=smem, size = 0x4, offset = 0x4, fixed_abs, tag = 'smem constant byte address 0x4 - core index']
  #allocation1 [shape = 'u32[72,128]{1,0:T(1,128)}', space=vmem, size = 0x9000, scoped, tag = 'internal scratch']
  %s0 = inlined_call_operand.vmem [shape: bf16[4,2,2,32], index: 0, kind: input, shape index: {}]
  %s1 = inlined_call_operand.vmem [shape: f32[1,16], index: 1, kind: input, shape index: {}]
  %s2 = inlined_call_operand.vmem [shape: f32[1,16], index: 2, kind: input, shape index: {}]
  %s3 = inlined_call_operand.vmem [shape: bf16[4,2,16], index: 3, kind: output, shape index: {}]
  %s4 = sld [smem:[#allocation0]]
  $region22: #{forward.84} parent=0
    _
  %s6 = ssub.s32 1, %s4
  %s7 = scalar_select 0, %s6, %s4
  // Predicated region
  $region2: #{forward.84} parent=0 // pred_check
    _
  $region3: #{forward.84} parent=0 // pred_check_branch
    %9 = sbr.rel (0) target = $region5
  $region4: #{forward.84} parent=0 // pred_region
    _
  $region5: #{forward.84} parent=0 // pred_fallthru
    _
  // Predicated region
  $region6: #{forward.84} parent=0 // pred_check
    _
  $region7: #{forward.84} parent=0 // pred_check_branch
    %11 = sbr.rel (0) target = $region9
  $region8: #{forward.84} parent=0 // pred_region
    _
  $region9: #{forward.84} parent=0 // pred_fallthru
    _
  // Predicated region
  $region10: #{forward.84} parent=0 // pred_check
    _
  $region11: #{forward.84} parent=0 // pred_check_branch
    %13 = sbr.rel (0) target = $region13
  $region12: #{forward.84} parent=0 // pred_region
    _
  $region13: #{forward.84} parent=0 // pred_fallthru
    _
  %v14 = vld [vmem:[%s1] sm:$0x1]
  %v15 = vld [vmem:[%s2] sm:$0x1]
  %v16 = vld [vmem:[%s0] sm:$0x1]
  %v17 = vld [vmem:[%s0 + $0x2] sm:$0x1]
  %v18 = vld [vmem:[%s0 + $0x4] sm:$0x1]
  %v19 = vld [vmem:[%s0 + $0x6] sm:$0x1]
  %s20 = scalar_lea.vmem %s0, 1
  %v21 = vld [vmem:[%s20] sm:$0x1]
  %v22 = vld [vmem:[%s20 + $0x2] sm:$0x1]
  %v23 = vld [vmem:[%s20 + $0x4] sm:$0x1]
  %v24 = vld [vmem:[%s20 + $0x6] sm:$0x1]
  %v25 = vunpack.c.l.bf16 %v16
  %v26 = vunpack.c.l.bf16 %v17
  %v27 = vunpack.c.l.bf16 %v18
  %v28 = vunpack.c.l.bf16 %v19
  %v30 = vperm.slane %v14, 0
  %v32 = vmul.f32 %v25, %v30
  %v33 = vmul.f32 %v26, %v30
  %v34 = vmul.f32 %v27, %v30
  %v35 = vmul.f32 %v28, %v30
  %v37 = vperm.slane %v15, 0
  %v39 = vadd.f32 %v32, %v37
  %v40 = vadd.f32 %v33, %v37
  %v41 = vadd.f32 %v34, %v37
  %v42 = vadd.f32 %v35, %v37
  %v43 = vmax.f32 %v39, 0.0
  %v44 = vmax.f32 %v40, 0.0
  %v45 = vmax.f32 %v41, 0.0
  %v46 = vmax.f32 %v42, 0.0
  %47 = vrot.lane.b32.xlu0 %v30, 16
  %v48 = vpop.permute.xlu0 %47
  %v50 = vmul.f32 %v25, %v48
  %v51 = vmul.f32 %v26, %v48
  %v52 = vmul.f32 %v27, %v48
  %v53 = vmul.f32 %v28, %v48
  %54 = vrot.lane.b32.xlu0 %v37, 16
  %v55 = vpop.permute.xlu0 %54
  %v57 = vadd.f32 %v50, %v55
  %v58 = vadd.f32 %v51, %v55
  %v59 = vadd.f32 %v52, %v55
  %v60 = vadd.f32 %v53, %v55
  %v61 = vmax.f32 %v57, 0.0
  %v62 = vmax.f32 %v58, 0.0
  %v63 = vmax.f32 %v59, 0.0
  %v64 = vmax.f32 %v60, 0.0
  %69 = vrot.lane.b32.xlu0 %v61, 112
  %v70 = vpop.permute.xlu0 %69
  %71 = vrot.lane.b32.xlu0 %v62, 112
  %v72 = vpop.permute.xlu0 %71
  %73 = vrot.lane.b32.xlu0 %v63, 112
  %v74 = vpop.permute.xlu0 %73
  %75 = vrot.lane.b32.xlu0 %v64, 112
  %v76 = vpop.permute.xlu0 %75
  %v81 = vadd.f32 %v43, %v70
  %v82 = vadd.f32 %v44, %v72
  %v83 = vadd.f32 %v45, %v74
  %v84 = vadd.f32 %v46, %v76
  %v85 = vunpack.c.l.bf16 %v21
  %v86 = vunpack.c.l.bf16 %v22
  %v87 = vunpack.c.l.bf16 %v23
  %v88 = vunpack.c.l.bf16 %v24
  %v89 = vmul.f32 %v85, %v30
  %v90 = vmul.f32 %v86, %v30
  %v91 = vmul.f32 %v87, %v30
  %v92 = vmul.f32 %v88, %v30
  %v93 = vadd.f32 %v89, %v37
  %v94 = vadd.f32 %v90, %v37
  %v95 = vadd.f32 %v91, %v37
  %v96 = vadd.f32 %v92, %v37
  %v97 = vmax.f32 %v93, 0.0
  %v98 = vmax.f32 %v94, 0.0
  %v99 = vmax.f32 %v95, 0.0
  %v100 = vmax.f32 %v96, 0.0
  %v101 = vadd.f32 %v81, %v97
  %v102 = vadd.f32 %v82, %v98
  %v103 = vadd.f32 %v83, %v99
  %v104 = vadd.f32 %v84, %v100
  %v105 = vmul.f32 %v85, %v48
  %v106 = vmul.f32 %v86, %v48
  %v107 = vmul.f32 %v87, %v48
  %v108 = vmul.f32 %v88, %v48
  %v109 = vadd.f32 %v105, %v55
  %v110 = vadd.f32 %v106, %v55
  %v111 = vadd.f32 %v107, %v55
  %v112 = vadd.f32 %v108, %v55
  %v113 = vmax.f32 %v109, 0.0
  %v114 = vmax.f32 %v110, 0.0
  %v115 = vmax.f32 %v111, 0.0
  %v116 = vmax.f32 %v112, 0.0
  %121 = vrot.lane.b32.xlu0 %v113, 112
  %v122 = vpop.permute.xlu0 %121
  %123 = vrot.lane.b32.xlu0 %v114, 112
  %v124 = vpop.permute.xlu0 %123
  %125 = vrot.lane.b32.xlu0 %v115, 112
  %v126 = vpop.permute.xlu0 %125
  %127 = vrot.lane.b32.xlu0 %v116, 112
  %v128 = vpop.permute.xlu0 %127
  %v133 = vadd.f32 %v101, %v122
  %v134 = vadd.f32 %v102, %v124
  %v135 = vadd.f32 %v103, %v126
  %v136 = vadd.f32 %v104, %v128
  %v137 = vmul.f32 %v133, 0.25
  %v138 = vmul.f32 %v134, 0.25
  %v139 = vmul.f32 %v135, 0.25
  %v140 = vmul.f32 %v136, 0.25
  %v141 = vpack.c.bf16 %v137, %v137
  %v142 = vpack.c.bf16 %v138, %v138
  %v143 = vpack.c.bf16 %v139, %v139
  %v144 = vpack.c.bf16 %v140, %v140
  %vm145 = vcmask 122880
  %146 = vst.msk [vmem:[%s3] sm:$0x1] %vm145, %v141
  %147 = vst.msk [vmem:[%s3 + $0x1] sm:$0x1] %vm145, %v142
  %148 = vst.msk [vmem:[%s3 + $0x2] sm:$0x1] %vm145, %v143
  %149 = vst.msk [vmem:[%s3 + $0x3] sm:$0x1] %vm145, %v144
  // Predicated region
  $region14: #{forward.84} parent=0 // pred_check
    _
  $region15: #{forward.84} parent=0 // pred_check_branch
    %151 = sbr.rel (0) target = $region17
  $region16: #{forward.84} parent=0 // pred_region
    _
  $region17: #{forward.84} parent=0 // pred_fallthru
    _
  // Predicated region
  $region18: #{forward.84} parent=0 // pred_check
    _
  $region19: #{forward.84} parent=0 // pred_check_branch
    %153 = sbr.rel (0) target = $region21
  $region20: #{forward.84} parent=0 // pred_region
    _
  $region21: #{forward.84} parent=0 // pred_fallthru
    _

// kernel: forward.85
$region0: #{forward.85}
  #allocation0 [shape = 'u32[]', space=smem, size = 0x4, offset = 0x4, fixed_abs, tag = 'smem constant byte address 0x4 - core index']
  #allocation1 [shape = 'u32[72,128]{1,0:T(1,128)}', space=vmem, size = 0x9000, scoped, tag = 'internal scratch']
  #allocation2 [shape = 'f32[8,128]{1,0:T(8,128)}', space=vmem, size = 0x1000, scoped, tag = 'scratch operand']
  %s0 = inlined_call_operand.vmem [shape: bf16[8,128], index: 0, kind: input, shape index: {}]
  %s1 = inlined_call_operand.vmem [shape: bf16[128,128], index: 1, kind: input, shape index: {}]
  %s2 = inlined_call_operand.vmem [shape: f32[1,128], index: 2, kind: input, shape index: {}]
  %s3 = inlined_call_operand.vmem [shape: f32[1,128], index: 3, kind: input, shape index: {}]
  %s4 = inlined_call_operand.vmem [shape: f32[1,128], index: 4, kind: input, shape index: {}]
  %s5 = inlined_call_operand.vmem [shape: f32[1,128], index: 5, kind: input, shape index: {}]
  %s6 = inlined_call_operand.vmem [shape: bf16[8,128], index: 6, kind: output, shape index: {}]
  %s7 = sld [smem:[#allocation0]]
  $region42: #{forward.85} parent=0
    _
  %s9 = ssub.s32 1, %s7
  %s10 = scalar_select 0, %s9, %s7
  // Predicated region
  $region2: #{forward.85} parent=0 // pred_check
    _
  $region3: #{forward.85} parent=0 // pred_check_branch
    %12 = sbr.rel (0) target = $region5
  $region4: #{forward.85} parent=0 // pred_region
    _
  $region5: #{forward.85} parent=0 // pred_fallthru
    _
  // Predicated region
  $region6: #{forward.85} parent=0 // pred_check
    _
  $region7: #{forward.85} parent=0 // pred_check_branch
    %14 = sbr.rel (0) target = $region9
  $region8: #{forward.85} parent=0 // pred_region
    _
  $region9: #{forward.85} parent=0 // pred_fallthru
    _
  // Predicated region
  $region10: #{forward.85} parent=0 // pred_check
    _
  $region11: #{forward.85} parent=0 // pred_check_branch
    %16 = sbr.rel (0) target = $region13
  $region12: #{forward.85} parent=0 // pred_region
    _
  $region13: #{forward.85} parent=0 // pred_fallthru
    _
  // Predicated region
  $region14: #{forward.85} parent=0 // pred_check
    _
  $region15: #{forward.85} parent=0 // pred_check_branch
    %18 = sbr.rel (0) target = $region17
  $region16: #{forward.85} parent=0 // pred_region
    _
  $region17: #{forward.85} parent=0 // pred_fallthru
    _
  // Predicated region
  $region18: #{forward.85} parent=0 // pred_check
    _
  $region19: #{forward.85} parent=0 // pred_check_branch
    %20 = sbr.rel (0) target = $region21
  $region20: #{forward.85} parent=0 // pred_region
    _
  $region21: #{forward.85} parent=0 // pred_fallthru
    _
  // Predicated region
  $region22: #{forward.85} parent=0 // pred_check
    _
  $region23: #{forward.85} parent=0 // pred_check_branch
    %22 = sbr.rel (0) target = $region25
  $region24: #{forward.85} parent=0 // pred_region
    _
  $region25: #{forward.85} parent=0 // pred_fallthru
    _
  %p23 = scmp.eq.s32.totalorder 0, 0
  // Predicated region
  $region26: #{forward.85} parent=0 // pred_check
    %p24 = pneg %p23
  $region27: #{forward.85} parent=0 // pred_check_branch
    %26 = sbr.rel (%p24) target = $region29
  $region28: #{forward.85} parent=0 // pred_region
    %27 = vst [vmem:[#allocation2] sm:$0xff] 0.0
  $region29: #{forward.85} parent=0 // pred_fallthru
    _
  %v28 = vld [vmem:[%s0] sm:$0xf]
  %v29 = vld [vmem:[#allocation2] sm:$0xff]
  %v30 = vld [vmem:[%s1] sm:$0xf]
  %v31 = vld [vmem:[%s1 + $0x4] sm:$0xf]
  %v32 = vld [vmem:[%s1 + $0x8] sm:$0xf]
  %v33 = vld [vmem:[%s1 + $0xc] sm:$0xf]
  %v34 = vld [vmem:[%s1 + $0x10] sm:$0xf]
  %v35 = vld [vmem:[%s1 + $0x14] sm:$0xf]
  %v36 = vld [vmem:[%s1 + $0x18] sm:$0xf]
  %v37 = vld [vmem:[%s1 + $0x1c] sm:$0xf]
  %v38 = vld [vmem:[%s1 + $0x20] sm:$0xf]
  %v39 = vld [vmem:[%s1 + $0x24] sm:$0xf]
  %v40 = vld [vmem:[%s1 + $0x28] sm:$0xf]
  %v41 = vld [vmem:[%s1 + $0x2c] sm:$0xf]
  %v42 = vld [vmem:[%s1 + $0x30] sm:$0xf]
  %v43 = vld [vmem:[%s1 + $0x34] sm:$0xf]
  %v44 = vld [vmem:[%s1 + $0x38] sm:$0xf]
  %v45 = vld [vmem:[%s1 + $0x3c] sm:$0xf]
  %v62 = vunpack.c.l.b16 %v30
  %v63 = vunpack.c.l.b16 %v31
  %v64 = vunpack.c.l.b16 %v32
  %v65 = vunpack.c.l.b16 %v33
  %v66 = vunpack.c.l.b16 %v34
  %v67 = vunpack.c.l.b16 %v35
  %v68 = vunpack.c.l.b16 %v36
  %v69 = vunpack.c.l.b16 %v37
  %v70 = vunpack.c.l.b16 %v38
  %v71 = vunpack.c.l.b16 %v39
  %v72 = vunpack.c.l.b16 %v40
  %v73 = vunpack.c.l.b16 %v41
  %v74 = vunpack.c.l.b16 %v42
  %v75 = vunpack.c.l.b16 %v43
  %v76 = vunpack.c.l.b16 %v44
  %v77 = vunpack.c.l.b16 %v45
  %v78 = vpack.c.b16 %v63, %v62
  %v79 = vpack.c.b16 %v65, %v64
  %v80 = vpack.c.b16 %v67, %v66
  %v81 = vpack.c.b16 %v69, %v68
  %v82 = vpack.c.b16 %v71, %v70
  %v83 = vpack.c.b16 %v73, %v72
  %v84 = vpack.c.b16 %v75, %v74
  %v85 = vpack.c.b16 %v77, %v76
  %94 = vmatpush.bf16.msra.mxu0 %v85
  %95 = vmatpush.bf16.msra.mxu0 %v84
  %96 = vmatpush.bf16.msra.mxu0 %v83
  %97 = vmatpush.bf16.msra.mxu0 %v82
  %98 = vmatpush.bf16.msra.mxu0 %v81
  %99 = vmatpush.bf16.msra.mxu0 %v80
  %100 = vmatpush.bf16.msra.mxu0 %v79
  %101 = vmatpush.bf16.msra.mxu0 %v78
  %102 = vmatmul.bf16.gmra.mxu0 %v28
  %v103 = vpop.f32.mrf.mxu0
  %v104 = vadd.f32 0.0, %v103
  %v105 = vpop.f32.mrf.mxu0
  %106 = vdwg.mxu0
  %v107 = vadd.f32 %v29, %v104
  %108 = vst [vmem:[#allocation2] sm:$0xff] %v107
  // Predicated region
  $region30: #{forward.85} parent=0 // pred_check
    %p109 = pneg %p23
  $region31: #{forward.85} parent=0 // pred_check_branch
    %111 = sbr.rel (%p109) target = $region33
  $region32: #{forward.85} parent=0 // pred_region
    %v112 = vld [vmem:[#allocation2] sm:$0xff]
    %v113 = vpack.c.bf16 %v112, %v112
    %114 = vst [vmem:[%s6] sm:$0xf] %v113
  $region33: #{forward.85} parent=0 // pred_fallthru
    _
  // Predicated region
  $region34: #{forward.85} parent=0 // pred_check
    _
  $region35: #{forward.85} parent=0 // pred_check_branch
    %116 = sbr.rel (0) target = $region37
  $region36: #{forward.85} parent=0 // pred_region
    _
  $region37: #{forward.85} parent=0 // pred_fallthru
    _
  // Predicated region
  $region38: #{forward.85} parent=0 // pred_check
    _
  $region39: #{forward.85} parent=0 // pred_check_branch
    %118 = sbr.rel (0) target = $region41
  $region40: #{forward.85} parent=0 // pred_region
    _
  $region41: #{forward.85} parent=0 // pred_fallthru
    _

// kernel: forward.92
$region0: #{forward.92}
  #allocation0 [shape = 'u32[]', space=smem, size = 0x4, offset = 0x4, fixed_abs, tag = 'smem constant byte address 0x4 - core index']
  #allocation1 [shape = 'u32[72,128]{1,0:T(1,128)}', space=vmem, size = 0x9000, scoped, tag = 'internal scratch']
  #allocation2 [shape = 'f32[8,128]{1,0:T(8,128)}', space=vmem, size = 0x1000, scoped, tag = 'scratch operand']
  %s0 = inlined_call_operand.vmem [shape: bf16[8,128], index: 0, kind: input, shape index: {}]
  %s1 = inlined_call_operand.vmem [shape: bf16[128,128], index: 1, kind: input, shape index: {}]
  %s2 = inlined_call_operand.vmem [shape: f32[1,128], index: 2, kind: input, shape index: {}]
  %s3 = inlined_call_operand.vmem [shape: f32[1,128], index: 3, kind: input, shape index: {}]
  %s4 = inlined_call_operand.vmem [shape: f32[1,128], index: 4, kind: input, shape index: {}]
  %s5 = inlined_call_operand.vmem [shape: f32[1,128], index: 5, kind: input, shape index: {}]
  %s6 = inlined_call_operand.vmem [shape: bf16[8,128], index: 6, kind: output, shape index: {}]
  %s7 = sld [smem:[#allocation0]]
  $region42: #{forward.92} parent=0
    _
  %s9 = ssub.s32 1, %s7
  %s10 = scalar_select 0, %s9, %s7
  // Predicated region
  $region2: #{forward.92} parent=0 // pred_check
    _
  $region3: #{forward.92} parent=0 // pred_check_branch
    %12 = sbr.rel (0) target = $region5
  $region4: #{forward.92} parent=0 // pred_region
    _
  $region5: #{forward.92} parent=0 // pred_fallthru
    _
  // Predicated region
  $region6: #{forward.92} parent=0 // pred_check
    _
  $region7: #{forward.92} parent=0 // pred_check_branch
    %14 = sbr.rel (0) target = $region9
  $region8: #{forward.92} parent=0 // pred_region
    _
  $region9: #{forward.92} parent=0 // pred_fallthru
    _
  // Predicated region
  $region10: #{forward.92} parent=0 // pred_check
    _
  $region11: #{forward.92} parent=0 // pred_check_branch
    %16 = sbr.rel (0) target = $region13
  $region12: #{forward.92} parent=0 // pred_region
    _
  $region13: #{forward.92} parent=0 // pred_fallthru
    _
  // Predicated region
  $region14: #{forward.92} parent=0 // pred_check
    _
  $region15: #{forward.92} parent=0 // pred_check_branch
    %18 = sbr.rel (0) target = $region17
  $region16: #{forward.92} parent=0 // pred_region
    _
  $region17: #{forward.92} parent=0 // pred_fallthru
    _
  // Predicated region
  $region18: #{forward.92} parent=0 // pred_check
    _
  $region19: #{forward.92} parent=0 // pred_check_branch
    %20 = sbr.rel (0) target = $region21
  $region20: #{forward.92} parent=0 // pred_region
    _
  $region21: #{forward.92} parent=0 // pred_fallthru
    _
  // Predicated region
  $region22: #{forward.92} parent=0 // pred_check
    _
  $region23: #{forward.92} parent=0 // pred_check_branch
    %22 = sbr.rel (0) target = $region25
  $region24: #{forward.92} parent=0 // pred_region
    _
  $region25: #{forward.92} parent=0 // pred_fallthru
    _
  %p23 = scmp.eq.s32.totalorder 0, 0
  // Predicated region
  $region26: #{forward.92} parent=0 // pred_check
    %p24 = pneg %p23
  $region27: #{forward.92} parent=0 // pred_check_branch
    %26 = sbr.rel (%p24) target = $region29
  $region28: #{forward.92} parent=0 // pred_region
    %27 = vst [vmem:[#allocation2] sm:$0xff] 0.0
  $region29: #{forward.92} parent=0 // pred_fallthru
    _
  %v28 = vld [vmem:[%s0] sm:$0xf]
  %v29 = vld [vmem:[#allocation2] sm:$0xff]
  %v30 = vld [vmem:[%s1] sm:$0xf]
  %v31 = vld [vmem:[%s1 + $0x4] sm:$0xf]
  %v32 = vld [vmem:[%s1 + $0x8] sm:$0xf]
  %v33 = vld [vmem:[%s1 + $0xc] sm:$0xf]
  %v34 = vld [vmem:[%s1 + $0x10] sm:$0xf]
  %v35 = vld [vmem:[%s1 + $0x14] sm:$0xf]
  %v36 = vld [vmem:[%s1 + $0x18] sm:$0xf]
  %v37 = vld [vmem:[%s1 + $0x1c] sm:$0xf]
  %v38 = vld [vmem:[%s1 + $0x20] sm:$0xf]
  %v39 = vld [vmem:[%s1 + $0x24] sm:$0xf]
  %v40 = vld [vmem:[%s1 + $0x28] sm:$0xf]
  %v41 = vld [vmem:[%s1 + $0x2c] sm:$0xf]
  %v42 = vld [vmem:[%s1 + $0x30] sm:$0xf]
  %v43 = vld [vmem:[%s1 + $0x34] sm:$0xf]
  %v44 = vld [vmem:[%s1 + $0x38] sm:$0xf]
  %v45 = vld [vmem:[%s1 + $0x3c] sm:$0xf]
  %v62 = vunpack.c.l.b16 %v30
  %v63 = vunpack.c.l.b16 %v31
  %v64 = vunpack.c.l.b16 %v32
  %v65 = vunpack.c.l.b16 %v33
  %v66 = vunpack.c.l.b16 %v34
  %v67 = vunpack.c.l.b16 %v35
  %v68 = vunpack.c.l.b16 %v36
  %v69 = vunpack.c.l.b16 %v37
  %v70 = vunpack.c.l.b16 %v38
  %v71 = vunpack.c.l.b16 %v39
  %v72 = vunpack.c.l.b16 %v40
  %v73 = vunpack.c.l.b16 %v41
  %v74 = vunpack.c.l.b16 %v42
  %v75 = vunpack.c.l.b16 %v43
  %v76 = vunpack.c.l.b16 %v44
  %v77 = vunpack.c.l.b16 %v45
  %v78 = vpack.c.b16 %v63, %v62
  %v79 = vpack.c.b16 %v65, %v64
  %v80 = vpack.c.b16 %v67, %v66
  %v81 = vpack.c.b16 %v69, %v68
  %v82 = vpack.c.b16 %v71, %v70
  %v83 = vpack.c.b16 %v73, %v72
  %v84 = vpack.c.b16 %v75, %v74
  %v85 = vpack.c.b16 %v77, %v76
  %94 = vmatpush.bf16.msra.mxu0 %v85
  %95 = vmatpush.bf16.msra.mxu0 %v84
  %96 = vmatpush.bf16.msra.mxu0 %v83
  %97 = vmatpush.bf16.msra.mxu0 %v82
  %98 = vmatpush.bf16.msra.mxu0 %v81
  %99 = vmatpush.bf16.msra.mxu0 %v80
  %100 = vmatpush.bf16.msra.mxu0 %v79
  %101 = vmatpush.bf16.msra.mxu0 %v78
  %102 = vmatmul.bf16.gmra.mxu0 %v28
  %v103 = vpop.f32.mrf.mxu0
  %v104 = vadd.f32 0.0, %v103
  %v105 = vpop.f32.mrf.mxu0
  %106 = vdwg.mxu0
  %v107 = vadd.f32 %v29, %v104
  %108 = vst [vmem:[#allocation2] sm:$0xff] %v107
  // Predicated region
  $region30: #{forward.92} parent=0 // pred_check
    %p109 = pneg %p23
  $region31: #{forward.92} parent=0 // pred_check_branch
    %111 = sbr.rel (%p109) target = $region33
  $region32: #{forward.92} parent=0 // pred_region
    %v112 = vld [vmem:[#allocation2] sm:$0xff]
    %v113 = vld [vmem:[%s4] sm:$0x1]
    %v115 = vperm.slane %v113, 0
    %v117 = vmul.f32 %v112, %v115
    %v118 = vld [vmem:[%s5] sm:$0x1]
    %v120 = vperm.slane %v118, 0
    %v122 = vadd.f32 %v117, %v120
    %v123 = vmax.f32 %v122, 0.0
    %v124 = vpack.c.bf16 %v123, %v123
    %125 = vst [vmem:[%s6] sm:$0xf] %v124
  $region33: #{forward.92} parent=0 // pred_fallthru
    _
  // Predicated region
  $region34: #{forward.92} parent=0 // pred_check
    _
  $region35: #{forward.92} parent=0 // pred_check_branch
    %127 = sbr.rel (0) target = $region37
  $region36: #{forward.92} parent=0 // pred_region
    _
  $region37: #{forward.92} parent=0 // pred_fallthru
    _
  // Predicated region
  $region38: #{forward.92} parent=0 // pred_check
    _
  $region39: #{forward.92} parent=0 // pred_check_branch
    %129 = sbr.rel (0) target = $region41
  $region40: #{forward.92} parent=0 // pred_region
    _
  $region41: #{forward.92} parent=0 // pred_fallthru
    _

// kernel: forward.97
$region0: #{forward.97}
  #allocation0 [shape = 'u32[]', space=smem, size = 0x4, offset = 0x4, fixed_abs, tag = 'smem constant byte address 0x4 - core index']
  #allocation1 [shape = 'u32[72,128]{1,0:T(1,128)}', space=vmem, size = 0x9000, scoped, tag = 'internal scratch']
  #allocation2 [shape = 'f32[8,128]{1,0:T(8,128)}', space=vmem, size = 0x1000, scoped, tag = 'scratch operand']
  %s0 = inlined_call_operand.vmem [shape: bf16[8,128], index: 0, kind: input, shape index: {}]
  %s1 = inlined_call_operand.vmem [shape: bf16[128,128], index: 1, kind: input, shape index: {}]
  %s2 = inlined_call_operand.vmem [shape: f32[1,128], index: 2, kind: input, shape index: {}]
  %s3 = inlined_call_operand.vmem [shape: f32[1,128], index: 3, kind: input, shape index: {}]
  %s4 = inlined_call_operand.vmem [shape: f32[1,128], index: 4, kind: input, shape index: {}]
  %s5 = inlined_call_operand.vmem [shape: f32[1,128], index: 5, kind: input, shape index: {}]
  %s6 = inlined_call_operand.vmem [shape: bf16[8,128], index: 6, kind: output, shape index: {}]
  %s7 = sld [smem:[#allocation0]]
  $region42: #{forward.97} parent=0
    _
  %s9 = ssub.s32 1, %s7
  %s10 = scalar_select 0, %s9, %s7
  // Predicated region
  $region2: #{forward.97} parent=0 // pred_check
    _
  $region3: #{forward.97} parent=0 // pred_check_branch
    %12 = sbr.rel (0) target = $region5
  $region4: #{forward.97} parent=0 // pred_region
    _
  $region5: #{forward.97} parent=0 // pred_fallthru
    _
  // Predicated region
  $region6: #{forward.97} parent=0 // pred_check
    _
  $region7: #{forward.97} parent=0 // pred_check_branch
    %14 = sbr.rel (0) target = $region9
  $region8: #{forward.97} parent=0 // pred_region
    _
  $region9: #{forward.97} parent=0 // pred_fallthru
    _
  // Predicated region
  $region10: #{forward.97} parent=0 // pred_check
    _
  $region11: #{forward.97} parent=0 // pred_check_branch
    %16 = sbr.rel (0) target = $region13
  $region12: #{forward.97} parent=0 // pred_region
    _
  $region13: #{forward.97} parent=0 // pred_fallthru
    _
  // Predicated region
  $region14: #{forward.97} parent=0 // pred_check
    _
  $region15: #{forward.97} parent=0 // pred_check_branch
    %18 = sbr.rel (0) target = $region17
  $region16: #{forward.97} parent=0 // pred_region
    _
  $region17: #{forward.97} parent=0 // pred_fallthru
    _
  // Predicated region
  $region18: #{forward.97} parent=0 // pred_check
    _
  $region19: #{forward.97} parent=0 // pred_check_branch
    %20 = sbr.rel (0) target = $region21
  $region20: #{forward.97} parent=0 // pred_region
    _
  $region21: #{forward.97} parent=0 // pred_fallthru
    _
  // Predicated region
  $region22: #{forward.97} parent=0 // pred_check
    _
  $region23: #{forward.97} parent=0 // pred_check_branch
    %22 = sbr.rel (0) target = $region25
  $region24: #{forward.97} parent=0 // pred_region
    _
  $region25: #{forward.97} parent=0 // pred_fallthru
    _
  %p23 = scmp.eq.s32.totalorder 0, 0
  // Predicated region
  $region26: #{forward.97} parent=0 // pred_check
    %p24 = pneg %p23
  $region27: #{forward.97} parent=0 // pred_check_branch
    %26 = sbr.rel (%p24) target = $region29
  $region28: #{forward.97} parent=0 // pred_region
    %27 = vst [vmem:[#allocation2] sm:$0xff] 0.0
  $region29: #{forward.97} parent=0 // pred_fallthru
    _
  %v28 = vld [vmem:[%s0] sm:$0xf]
  %v29 = vunpack.c.l.bf16 %v28
  %v30 = vld [vmem:[%s2] sm:$0x1]
  %v32 = vperm.slane %v30, 0
  %v34 = vmul.f32 %v29, %v32
  %v35 = vld [vmem:[%s3] sm:$0x1]
  %v37 = vperm.slane %v35, 0
  %v39 = vadd.f32 %v34, %v37
  %v40 = vmax.f32 %v39, 0.0
  %v41 = vpack.c.bf16 %v40, %v40
  %v42 = vld [vmem:[#allocation2] sm:$0xff]
  %v43 = vld [vmem:[%s1] sm:$0xf]
  %v44 = vld [vmem:[%s1 + $0x4] sm:$0xf]
  %v45 = vld [vmem:[%s1 + $0x8] sm:$0xf]
  %v46 = vld [vmem:[%s1 + $0xc] sm:$0xf]
  %v47 = vld [vmem:[%s1 + $0x10] sm:$0xf]
  %v48 = vld [vmem:[%s1 + $0x14] sm:$0xf]
  %v49 = vld [vmem:[%s1 + $0x18] sm:$0xf]
  %v50 = vld [vmem:[%s1 + $0x1c] sm:$0xf]
  %v51 = vld [vmem:[%s1 + $0x20] sm:$0xf]
  %v52 = vld [vmem:[%s1 + $0x24] sm:$0xf]
  %v53 = vld [vmem:[%s1 + $0x28] sm:$0xf]
  %v54 = vld [vmem:[%s1 + $0x2c] sm:$0xf]
  %v55 = vld [vmem:[%s1 + $0x30] sm:$0xf]
  %v56 = vld [vmem:[%s1 + $0x34] sm:$0xf]
  %v57 = vld [vmem:[%s1 + $0x38] sm:$0xf]
  %v58 = vld [vmem:[%s1 + $0x3c] sm:$0xf]
  %v75 = vunpack.c.l.b16 %v43
  %v76 = vunpack.c.l.b16 %v44
  %v77 = vunpack.c.l.b16 %v45
  %v78 = vunpack.c.l.b16 %v46
  %v79 = vunpack.c.l.b16 %v47
  %v80 = vunpack.c.l.b16 %v48
  %v81 = vunpack.c.l.b16 %v49
  %v82 = vunpack.c.l.b16 %v50
  %v83 = vunpack.c.l.b16 %v51
  %v84 = vunpack.c.l.b16 %v52
  %v85 = vunpack.c.l.b16 %v53
  %v86 = vunpack.c.l.b16 %v54
  %v87 = vunpack.c.l.b16 %v55
  %v88 = vunpack.c.l.b16 %v56
  %v89 = vunpack.c.l.b16 %v57
  %v90 = vunpack.c.l.b16 %v58
  %v91 = vpack.c.b16 %v76, %v75
  %v92 = vpack.c.b16 %v78, %v77
  %v93 = vpack.c.b16 %v80, %v79
  %v94 = vpack.c.b16 %v82, %v81
  %v95 = vpack.c.b16 %v84, %v83
  %v96 = vpack.c.b16 %v86, %v85
  %v97 = vpack.c.b16 %v88, %v87
  %v98 = vpack.c.b16 %v90, %v89
  %107 = vmatpush.bf16.msra.mxu0 %v98
  %108 = vmatpush.bf16.msra.mxu0 %v97
  %109 = vmatpush.bf16.msra.mxu0 %v96
  %110 = vmatpush.bf16.msra.mxu0 %v95
  %111 = vmatpush.bf16.msra.mxu0 %v94
  %112 = vmatpush.bf16.msra.mxu0 %v93
  %113 = vmatpush.bf16.msra.mxu0 %v92
  %114 = vmatpush.bf16.msra.mxu0 %v91
  %115 = vmatmul.bf16.gmra.mxu0 %v41
  %v116 = vpop.f32.mrf.mxu0
  %v117 = vadd.f32 0.0, %v116
  %v118 = vpop.f32.mrf.mxu0
  %119 = vdwg.mxu0
  %v120 = vadd.f32 %v42, %v117
  %121 = vst [vmem:[#allocation2] sm:$0xff] %v120
  // Predicated region
  $region30: #{forward.97} parent=0 // pred_check
    %p122 = pneg %p23
  $region31: #{forward.97} parent=0 // pred_check_branch
    %124 = sbr.rel (%p122) target = $region33
  $region32: #{forward.97} parent=0 // pred_region
    %v125 = vld [vmem:[#allocation2] sm:$0xff]
    %v126 = vld [vmem:[%s4] sm:$0x1]
    %v128 = vperm.slane %v126, 0
    %v130 = vmul.f32 %v125, %v128
    %v131 = vld [vmem:[%s5] sm:$0x1]
    %v133 = vperm.slane %v131, 0
    %v135 = vadd.f32 %v130, %v133
    %v136 = vmax.f32 %v135, 0.0
    %v137 = vpack.c.bf16 %v136, %v136
    %138 = vst [vmem:[%s6] sm:$0xf] %v137
  $region33: #{forward.97} parent=0 // pred_fallthru
    _
  // Predicated region
  $region34: #{forward.97} parent=0 // pred_check
    _
  $region35: #{forward.97} parent=0 // pred_check_branch
    %140 = sbr.rel (0) target = $region37
  $region36: #{forward.97} parent=0 // pred_region
    _
  $region37: #{forward.97} parent=0 // pred_fallthru
    _
  // Predicated region
  $region38: #{forward.97} parent=0 // pred_check
    _
  $region39: #{forward.97} parent=0 // pred_check_branch
    %142 = sbr.rel (0) target = $region41
  $region40: #{forward.97} parent=0 // pred_region
    _
  $region41: #{forward.97} parent=0 // pred_fallthru
    _

// kernel: forward.101
$region0: #{forward.101}
  #allocation0 [shape = 'u32[]', space=smem, size = 0x4, offset = 0x4, fixed_abs, tag = 'smem constant byte address 0x4 - core index']
  #allocation1 [shape = 'u32[72,128]{1,0:T(1,128)}', space=vmem, size = 0x9000, scoped, tag = 'internal scratch']
  #allocation2 [shape = 'f32[8,128]{1,0:T(8,128)}', space=vmem, size = 0x1000, scoped, tag = 'scratch operand']
  #allocation3 [shape = 'f32[8,128]{1,0:T(8,128)}', space=vmem, size = 0x1000, scoped, tag = 'scratch operand']
  %s0 = inlined_call_operand.vmem [shape: bf16[8,128], index: 0, kind: input, shape index: {}]
  %s1 = inlined_call_operand.vmem [shape: bf16[128,128], index: 1, kind: input, shape index: {}]
  %s2 = inlined_call_operand.vmem [shape: bf16[128,128], index: 2, kind: input, shape index: {}]
  %s3 = inlined_call_operand.vmem [shape: f32[1,128], index: 3, kind: input, shape index: {}]
  %s4 = inlined_call_operand.vmem [shape: f32[1,128], index: 4, kind: input, shape index: {}]
  %s5 = inlined_call_operand.vmem [shape: f32[1,128], index: 5, kind: input, shape index: {}]
  %s6 = inlined_call_operand.vmem [shape: f32[1,128], index: 6, kind: input, shape index: {}]
  %s7 = inlined_call_operand.vmem [shape: f32[1,128], index: 7, kind: input, shape index: {}]
  %s8 = inlined_call_operand.vmem [shape: f32[1,128], index: 8, kind: input, shape index: {}]
  %s9 = inlined_call_operand.vmem [shape: f32[1,128], index: 9, kind: input, shape index: {}]
  %s10 = inlined_call_operand.vmem [shape: f32[1,128], index: 10, kind: input, shape index: {}]
  %s11 = inlined_call_operand.hbm [shape: f32[8,128], index: 11, kind: output, shape index: {}]
  %s12 = sld [smem:[#allocation0]]
  $region62: #{forward.101} parent=0
    _
  %s14 = ssub.s32 1, %s12
  %s15 = scalar_select 0, %s14, %s12
  $region1: #{forward.101} parent=0
    #allocation4 [shape = 'u8[4096]{0}', space=vmem, size = 0x1000, scoped, tag = 'output window, operand 0, single buffered']
    #allocation5 [shape = 's32[1]{0}', space=sflag, size = 0x4, scoped, tag = 'scoped memory for forward.101']
    %16 = vsyncpa [#allocation5], 0
    // Predicated region
    $region2: #{forward.101} parent=1 // pred_check
      _
    $region3: #{forward.101} parent=1 // pred_check_branch
      %18 = sbr.rel (0) target = $region5
    $region4: #{forward.101} parent=1 // pred_region
      _
    $region5: #{forward.101} parent=1 // pred_fallthru
      _
    // Predicated region
    $region6: #{forward.101} parent=1 // pred_check
      _
    $region7: #{forward.101} parent=1 // pred_check_branch
      %20 = sbr.rel (0) target = $region9
    $region8: #{forward.101} parent=1 // pred_region
      _
    $region9: #{forward.101} parent=1 // pred_fallthru
      _
    // Predicated region
    $region10: #{forward.101} parent=1 // pred_check
      _
    $region11: #{forward.101} parent=1 // pred_check_branch
      %22 = sbr.rel (0) target = $region13
    $region12: #{forward.101} parent=1 // pred_region
      _
    $region13: #{forward.101} parent=1 // pred_fallthru
      _
    // Predicated region
    $region14: #{forward.101} parent=1 // pred_check
      _
    $region15: #{forward.101} parent=1 // pred_check_branch
      %24 = sbr.rel (0) target = $region17
    $region16: #{forward.101} parent=1 // pred_region
      _
    $region17: #{forward.101} parent=1 // pred_fallthru
      _
    // Predicated region
    $region18: #{forward.101} parent=1 // pred_check
      _
    $region19: #{forward.101} parent=1 // pred_check_branch
      %26 = sbr.rel (0) target = $region21
    $region20: #{forward.101} parent=1 // pred_region
      _
    $region21: #{forward.101} parent=1 // pred_fallthru
      _
    // Predicated region
    $region22: #{forward.101} parent=1 // pred_check
      _
    $region23: #{forward.101} parent=1 // pred_check_branch
      %28 = sbr.rel (0) target = $region25
    $region24: #{forward.101} parent=1 // pred_region
      _
    $region25: #{forward.101} parent=1 // pred_fallthru
      _
    // Predicated region
    $region26: #{forward.101} parent=1 // pred_check
      _
    $region27: #{forward.101} parent=1 // pred_check_branch
      %30 = sbr.rel (0) target = $region29
    $region28: #{forward.101} parent=1 // pred_region
      _
    $region29: #{forward.101} parent=1 // pred_fallthru
      _
    // Predicated region
    $region30: #{forward.101} parent=1 // pred_check
      _
    $region31: #{forward.101} parent=1 // pred_check_branch
      %32 = sbr.rel (0) target = $region33
    $region32: #{forward.101} parent=1 // pred_region
      _
    $region33: #{forward.101} parent=1 // pred_fallthru
      _
    // Predicated region
    $region34: #{forward.101} parent=1 // pred_check
      _
    $region35: #{forward.101} parent=1 // pred_check_branch
      %34 = sbr.rel (0) target = $region37
    $region36: #{forward.101} parent=1 // pred_region
      _
    $region37: #{forward.101} parent=1 // pred_fallthru
      _
    // Predicated region
    $region38: #{forward.101} parent=1 // pred_check
      _
    $region39: #{forward.101} parent=1 // pred_check_branch
      %36 = sbr.rel (0) target = $region41
    $region40: #{forward.101} parent=1 // pred_region
      _
    $region41: #{forward.101} parent=1 // pred_fallthru
      _
    // Predicated region
    $region42: #{forward.101} parent=1 // pred_check
      _
    $region43: #{forward.101} parent=1 // pred_check_branch
      %38 = sbr.rel (0) target = $region45
    $region44: #{forward.101} parent=1 // pred_region
      _
    $region45: #{forward.101} parent=1 // pred_fallthru
      _
    %p39 = scmp.eq.s32.totalorder 0, 0
    // Predicated region
    $region46: #{forward.101} parent=1 // pred_check
      %p40 = pneg %p39
    $region47: #{forward.101} parent=1 // pred_check_branch
      %42 = sbr.rel (%p40) target = $region49
    $region48: #{forward.101} parent=1 // pred_region
      %43 = vst [vmem:[#allocation2] sm:$0xff] 0.0
      %44 = vst [vmem:[#allocation3] sm:$0xff] 0.0
    $region49: #{forward.101} parent=1 // pred_fallthru
      _
    %v45 = vld [vmem:[%s0] sm:$0xf]
    %v46 = vunpack.c.l.bf16 %v45
    %v47 = vld [vmem:[%s3] sm:$0x1]
    %v49 = vperm.slane %v47, 0
    %v51 = vmul.f32 %v46, %v49
    %v52 = vld [vmem:[%s4] sm:$0x1]
    %v54 = vperm.slane %v52, 0
    %v56 = vadd.f32 %v51, %v54
    %v57 = vpack.c.bf16 %v56, %v56
    %v58 = vld [vmem:[#allocation2] sm:$0xff]
    %v59 = vld [vmem:[%s1] sm:$0xf]
    %v60 = vld [vmem:[%s1 + $0x4] sm:$0xf]
    %v61 = vld [vmem:[%s1 + $0x8] sm:$0xf]
    %v62 = vld [vmem:[%s1 + $0xc] sm:$0xf]
    %v63 = vld [vmem:[%s1 + $0x10] sm:$0xf]
    %v64 = vld [vmem:[%s1 + $0x14] sm:$0xf]
    %v65 = vld [vmem:[%s1 + $0x18] sm:$0xf]
    %v66 = vld [vmem:[%s1 + $0x1c] sm:$0xf]
    %v67 = vld [vmem:[%s1 + $0x20] sm:$0xf]
    %v68 = vld [vmem:[%s1 + $0x24] sm:$0xf]
    %v69 = vld [vmem:[%s1 + $0x28] sm:$0xf]
    %v70 = vld [vmem:[%s1 + $0x2c] sm:$0xf]
    %v71 = vld [vmem:[%s1 + $0x30] sm:$0xf]
    %v72 = vld [vmem:[%s1 + $0x34] sm:$0xf]
    %v73 = vld [vmem:[%s1 + $0x38] sm:$0xf]
    %v74 = vld [vmem:[%s1 + $0x3c] sm:$0xf]
    %v91 = vunpack.c.l.b16 %v59
    %v92 = vunpack.c.l.b16 %v60
    %v93 = vunpack.c.l.b16 %v61
    %v94 = vunpack.c.l.b16 %v62
    %v95 = vunpack.c.l.b16 %v63
    %v96 = vunpack.c.l.b16 %v64
    %v97 = vunpack.c.l.b16 %v65
    %v98 = vunpack.c.l.b16 %v66
    %v99 = vunpack.c.l.b16 %v67
    %v100 = vunpack.c.l.b16 %v68
    %v101 = vunpack.c.l.b16 %v69
    %v102 = vunpack.c.l.b16 %v70
    %v103 = vunpack.c.l.b16 %v71
    %v104 = vunpack.c.l.b16 %v72
    %v105 = vunpack.c.l.b16 %v73
    %v106 = vunpack.c.l.b16 %v74
    %v107 = vpack.c.b16 %v92, %v91
    %v108 = vpack.c.b16 %v94, %v93
    %v109 = vpack.c.b16 %v96, %v95
    %v110 = vpack.c.b16 %v98, %v97
    %v111 = vpack.c.b16 %v100, %v99
    %v112 = vpack.c.b16 %v102, %v101
    %v113 = vpack.c.b16 %v104, %v103
    %v114 = vpack.c.b16 %v106, %v105
    %123 = vmatpush.bf16.msra.mxu0 %v114
    %124 = vmatpush.bf16.msra.mxu0 %v113
    %125 = vmatpush.bf16.msra.mxu0 %v112
    %126 = vmatpush.bf16.msra.mxu0 %v111
    %127 = vmatpush.bf16.msra.mxu0 %v110
    %128 = vmatpush.bf16.msra.mxu0 %v109
    %129 = vmatpush.bf16.msra.mxu0 %v108
    %130 = vmatpush.bf16.msra.mxu0 %v107
    %131 = vmatmul.bf16.gmra.mxu0 %v57
    %v132 = vpop.f32.mrf.mxu0
    %v133 = vadd.f32 0.0, %v132
    %v134 = vpop.f32.mrf.mxu0
    %135 = vdwg.mxu0
    %v136 = vadd.f32 %v58, %v133
    %137 = vst [vmem:[#allocation2] sm:$0xff] %v136
    %v138 = vld [vmem:[#allocation3] sm:$0xff]
    %v139 = vld [vmem:[%s2] sm:$0xf]
    %v140 = vld [vmem:[%s2 + $0x4] sm:$0xf]
    %v141 = vld [vmem:[%s2 + $0x8] sm:$0xf]
    %v142 = vld [vmem:[%s2 + $0xc] sm:$0xf]
    %v143 = vld [vmem:[%s2 + $0x10] sm:$0xf]
    %v144 = vld [vmem:[%s2 + $0x14] sm:$0xf]
    %v145 = vld [vmem:[%s2 + $0x18] sm:$0xf]
    %v146 = vld [vmem:[%s2 + $0x1c] sm:$0xf]
    %v147 = vld [vmem:[%s2 + $0x20] sm:$0xf]
    %v148 = vld [vmem:[%s2 + $0x24] sm:$0xf]
    %v149 = vld [vmem:[%s2 + $0x28] sm:$0xf]
    %v150 = vld [vmem:[%s2 + $0x2c] sm:$0xf]
    %v151 = vld [vmem:[%s2 + $0x30] sm:$0xf]
    %v152 = vld [vmem:[%s2 + $0x34] sm:$0xf]
    %v153 = vld [vmem:[%s2 + $0x38] sm:$0xf]
    %v154 = vld [vmem:[%s2 + $0x3c] sm:$0xf]
    %v171 = vunpack.c.l.b16 %v139
    %v172 = vunpack.c.l.b16 %v140
    %v173 = vunpack.c.l.b16 %v141
    %v174 = vunpack.c.l.b16 %v142
    %v175 = vunpack.c.l.b16 %v143
    %v176 = vunpack.c.l.b16 %v144
    %v177 = vunpack.c.l.b16 %v145
    %v178 = vunpack.c.l.b16 %v146
    %v179 = vunpack.c.l.b16 %v147
    %v180 = vunpack.c.l.b16 %v148
    %v181 = vunpack.c.l.b16 %v149
    %v182 = vunpack.c.l.b16 %v150
    %v183 = vunpack.c.l.b16 %v151
    %v184 = vunpack.c.l.b16 %v152
    %v185 = vunpack.c.l.b16 %v153
    %v186 = vunpack.c.l.b16 %v154
    %v187 = vpack.c.b16 %v172, %v171
    %v188 = vpack.c.b16 %v174, %v173
    %v189 = vpack.c.b16 %v176, %v175
    %v190 = vpack.c.b16 %v178, %v177
    %v191 = vpack.c.b16 %v180, %v179
    %v192 = vpack.c.b16 %v182, %v181
    %v193 = vpack.c.b16 %v184, %v183
    %v194 = vpack.c.b16 %v186, %v185
    %203 = vmatpush.bf16.msra.mxu0 %v194
    %204 = vmatpush.bf16.msra.mxu0 %v193
    %205 = vmatpush.bf16.msra.mxu0 %v192
    %206 = vmatpush.bf16.msra.mxu0 %v191
    %207 = vmatpush.bf16.msra.mxu0 %v190
    %208 = vmatpush.bf16.msra.mxu0 %v189
    %209 = vmatpush.bf16.msra.mxu0 %v188
    %210 = vmatpush.bf16.msra.mxu0 %v187
    %211 = vmatmul.bf16.gmra.mxu0 %v57
    %v212 = vpop.f32.mrf.mxu0
    %v213 = vadd.f32 0.0, %v212
    %v214 = vpop.f32.mrf.mxu0
    %215 = vdwg.mxu0
    %v216 = vadd.f32 %v138, %v213
    %217 = vst [vmem:[#allocation3] sm:$0xff] %v216
    // Predicated region
    $region50: #{forward.101} parent=1 // pred_check
      %p218 = pneg %p39
    $region51: #{forward.101} parent=1 // pred_check_branch
      %220 = sbr.rel (%p218) target = $region53
    $region52: #{forward.101} parent=1 // pred_region
      %v221 = vld [vmem:[#allocation2] sm:$0xff]
      %v222 = vld [vmem:[%s5] sm:$0x1]
      %v224 = vperm.slane %v222, 0
      %v226 = vmul.f32 %v221, %v224
      %v227 = vld [vmem:[%s6] sm:$0x1]
      %v229 = vperm.slane %v227, 0
      %v231 = vadd.f32 %v226, %v229
      %v232 = vmax.f32 %v231, 0.0
      %v233 = vld [vmem:[#allocation3] sm:$0xff]
      %v234 = vld [vmem:[%s7] sm:$0x1]
      %v236 = vperm.slane %v234, 0
      %v238 = vmul.f32 %v233, %v236
      %v239 = vld [vmem:[%s8] sm:$0x1]
      %v241 = vperm.slane %v239, 0
      %v243 = vadd.f32 %v238, %v241
      %v244 = vmax.f32 %v243, 0.0
      %v245 = vld [vmem:[%s9] sm:$0x1]
      %v247 = vperm.slane %v245, 0
      %v249 = vmul.f32 %v232, %v247
      %v250 = vld [vmem:[%s10] sm:$0x1]
      %v252 = vperm.slane %v250, 0
      %v254 = vmul.f32 %v244, %v252
      %v255 = vadd.f32 %v249, %v254
      %256 = vst [vmem:[#allocation4] sm:$0xff] %v255
    $region53: #{forward.101} parent=1 // pred_fallthru
      _
    // Predicated region
    $region54: #{forward.101} parent=1 // pred_check
      _
    $region55: #{forward.101} parent=1 // pred_check_branch
      %258 = sbr.rel (0) target = $region57
    $region56: #{forward.101} parent=1 // pred_region
      %260 = vsyncadd [#allocation5], 0
      %s262 = sshll.u32 [#allocation4], 4
      %s263 = int_to_ptr.vmem [resolvable:$true] %s262
      %s264 = sshll.u32 %s11, 4
      %s265 = int_to_ptr.hbm [resolvable:$true] %s264
      %267 = dma.vmem_to_hbm [thread:$0]  %s263, 128, %s265, [#allocation5]
    $region57: #{forward.101} parent=1 // pred_fallthru
      _
    // Predicated region
    $region58: #{forward.101} parent=1 // pred_check
      _
    $region59: #{forward.101} parent=1 // pred_check_branch
      %269 = sbr.rel (0) target = $region61
    $region60: #{forward.101} parent=1 // pred_region
      %271 = dma.done [#allocation5], 128
    $region61: #{forward.101} parent=1 // pred_fallthru
      _
    %272 = vsyncpa [#allocation5], 1

</llo_original>
